<compile_context>
chip_gen: v5e
topology: v5e:2x2
jax: 0.10.0
libtpu: 0.0.40
codegen_flags: <defaults>
</compile_context>

<pallas_src>
import functools
import math

import jax
import jax.numpy as jnp
from jax.experimental import pallas as pl
from jax.experimental.pallas import tpu as pltpu


# ---------------------------------------------------------------------------
# Tiling helper
# ---------------------------------------------------------------------------

def _choose_tm(M):
    """Row tile: split M into 2 blocks when cheaply divisible (keeps both v7x
    TensorCores busy via the 'parallel' grid axis), capped at 256 rows for large M;
    otherwise a single full-M block (v5e/v6e single-TC: one block is optimal)."""
    if M % 16 == 0:
        tm = M // 2
        while tm > 256 and tm % 16 == 0:
            tm //= 2
        return tm
    return M


# ---------------------------------------------------------------------------
# Pallas kernels
# ---------------------------------------------------------------------------

def _matmul_bias_kernel(x_ref, w_ref, b_ref, o_ref, *, activation):
    acc = jnp.dot(x_ref[...], w_ref[...], preferred_element_type=jnp.float32)
    acc = acc + b_ref[...]
    if activation == "relu":
        acc = jnp.maximum(acc, 0.0)
    o_ref[...] = acc


def pallas_linear(x2d, w, b, activation=None):
    """out = act(x2d @ w + b).  bf16 MXU operands, f32 accumulation + epilogue."""
    M, K = x2d.shape
    N = w.shape[1]
    TM = _choose_tm(M)
    return pl.pallas_call(
        functools.partial(_matmul_bias_kernel, activation=activation),
        out_shape=jax.ShapeDtypeStruct((M, N), jnp.float32),
        grid=(M // TM,),
        in_specs=[
            pl.BlockSpec((TM, K), lambda i: (i, 0)),
            pl.BlockSpec((K, N), lambda i: (0, 0)),
            pl.BlockSpec((1, N), lambda i: (0, 0)),
        ],
        out_specs=pl.BlockSpec((TM, N), lambda i: (i, 0)),
        compiler_params=pltpu.CompilerParams(dimension_semantics=("parallel",)),
    )(x2d.astype(jnp.bfloat16), w.astype(jnp.bfloat16),
      b.reshape(1, N).astype(jnp.float32))


def _dual_proj_kernel(x_ref, pos_ref, wp_ref, wn_ref, b_ref, o_ref):
    """out = [ (x + pos) @ w_pos | x @ w_nopos ] + b   (positional add fused in-kernel)."""
    x = x_ref[0]                                       # (L, D) f32
    xp = (x + pos_ref[0]).astype(jnp.bfloat16)
    a = jnp.dot(xp, wp_ref[...], preferred_element_type=jnp.float32)
    c = jnp.dot(x.astype(jnp.bfloat16), wn_ref[...], preferred_element_type=jnp.float32)
    o_ref[0] = jnp.concatenate([a, c], axis=-1) + b_ref[...]


def pallas_dual_proj(x, pos, w_pos, w_nopos, b):
    """Fused projections: columns [ (x+pos)@w_pos | x@w_nopos ] + b, grid over batch."""
    B, L, D = x.shape
    Np, Nn = w_pos.shape[1], w_nopos.shape[1]
    N = Np + Nn
    return pl.pallas_call(
        _dual_proj_kernel,
        out_shape=jax.ShapeDtypeStruct((B, L, N), jnp.float32),
        grid=(B,),
        in_specs=[
            pl.BlockSpec((1, L, D), lambda bi: (bi, 0, 0)),
            pl.BlockSpec((1, L, D), lambda bi: (0, 0, 0)),
            pl.BlockSpec((D, Np), lambda bi: (0, 0)),
            pl.BlockSpec((D, Nn), lambda bi: (0, 0)),
            pl.BlockSpec((1, N), lambda bi: (0, 0)),
        ],
        out_specs=pl.BlockSpec((1, L, N), lambda bi: (bi, 0, 0)),
        compiler_params=pltpu.CompilerParams(dimension_semantics=("parallel",)),
    )(x.astype(jnp.float32), pos.astype(jnp.float32),
      w_pos.astype(jnp.bfloat16), w_nopos.astype(jnp.bfloat16),
      b.reshape(1, N).astype(jnp.float32))


def _pos_proj_kernel(x_ref, pos_ref, w_ref, b_ref, o_ref):
    xp = (x_ref[0] + pos_ref[0]).astype(jnp.bfloat16)
    o_ref[0] = jnp.dot(xp, w_ref[...], preferred_element_type=jnp.float32) + b_ref[...]


def pallas_pos_proj(x, pos, w, b):
    """out = (x + pos) @ w + b, grid over batch (used for cross-attention Q)."""
    B, L, D = x.shape
    N = w.shape[1]
    return pl.pallas_call(
        _pos_proj_kernel,
        out_shape=jax.ShapeDtypeStruct((B, L, N), jnp.float32),
        grid=(B,),
        in_specs=[
            pl.BlockSpec((1, L, D), lambda bi: (bi, 0, 0)),
            pl.BlockSpec((1, L, D), lambda bi: (0, 0, 0)),
            pl.BlockSpec((D, N), lambda bi: (0, 0)),
            pl.BlockSpec((1, N), lambda bi: (0, 0)),
        ],
        out_specs=pl.BlockSpec((1, L, N), lambda bi: (bi, 0, 0)),
        compiler_params=pltpu.CompilerParams(dimension_semantics=("parallel",)),
    )(x.astype(jnp.float32), pos.astype(jnp.float32),
      w.astype(jnp.bfloat16), b.reshape(1, N).astype(jnp.float32))


def _ln_math(x, g, b, eps):
    mu = jnp.mean(x, axis=-1, keepdims=True)
    xc = x - mu
    var = jnp.mean(xc * xc, axis=-1, keepdims=True)
    return xc * jax.lax.rsqrt(var + eps) * g + b


def _layernorm_kernel(x_ref, g_ref, b_ref, o_ref, *, eps):
    o_ref[...] = _ln_math(x_ref[...], g_ref[...], b_ref[...], eps)


def _add_layernorm_kernel(x_ref, r_ref, g_ref, b_ref, o_ref, *, eps):
    o_ref[...] = _ln_math(x_ref[...] + r_ref[...], g_ref[...], b_ref[...], eps)


def pallas_layernorm(x, g, b, residual=None, eps=1e-5):
    """LayerNorm(x [+ residual]) — residual add fused into the kernel.  All f32."""
    shape = x.shape
    D = shape[-1]
    x2 = x.reshape(-1, D).astype(jnp.float32)
    M = x2.shape[0]
    TM = _choose_tm(M)
    g2 = g.reshape(1, D).astype(jnp.float32)
    b2 = b.reshape(1, D).astype(jnp.float32)
    row_spec = pl.BlockSpec((TM, D), lambda i: (i, 0))
    vec_spec = pl.BlockSpec((1, D), lambda i: (0, 0))
    cp = pltpu.CompilerParams(dimension_semantics=("parallel",))
    if residual is None:
        out = pl.pallas_call(
            functools.partial(_layernorm_kernel, eps=eps),
            out_shape=jax.ShapeDtypeStruct((M, D), jnp.float32),
            grid=(M // TM,),
            in_specs=[row_spec, vec_spec, vec_spec],
            out_specs=row_spec, compiler_params=cp,
        )(x2, g2, b2)
    else:
        r2 = residual.reshape(-1, D).astype(jnp.float32)
        out = pl.pallas_call(
            functools.partial(_add_layernorm_kernel, eps=eps),
            out_shape=jax.ShapeDtypeStruct((M, D), jnp.float32),
            grid=(M // TM,),
            in_specs=[row_spec, row_spec, vec_spec, vec_spec],
            out_specs=row_spec, compiler_params=cp,
        )(x2, r2, g2, b2)
    return out.reshape(shape)


def _attention_kernel(q_ref, k_ref, v_ref, o_ref, *, n_heads, scale, causal):
    """All heads of one batch element in one body; lane-dense (L, H*E) store."""
    q = q_ref[0]            # (L, D) bf16
    k = k_ref[0]            # (S, D) bf16
    v = v_ref[0]            # (S, D) bf16
    L, D = q.shape
    S = k.shape[0]
    E = D // n_heads
    if causal:
        row = jax.lax.broadcasted_iota(jnp.int32, (L, S), 0)
        col = jax.lax.broadcasted_iota(jnp.int32, (L, S), 1)
        mask = col > row
    outs = []
    for h in range(n_heads):                       # static unroll over heads
        qh = q[:, h * E:(h + 1) * E]
        kh = k[:, h * E:(h + 1) * E]
        vh = v[:, h * E:(h + 1) * E]
        s = jax.lax.dot_general(qh, kh, (((1,), (1,)), ((), ())),
                                preferred_element_type=jnp.float32)    # (L, S)
        if causal:
            s = jnp.where(mask, -jnp.inf, s)       # masked_fill before scaling (torch order)
        s = s * scale
        m = jnp.max(s, axis=-1, keepdims=True)
        p = jnp.exp(s - m)
        p = p * pl.reciprocal(jnp.sum(p, axis=-1, keepdims=True), approx=True)
        outs.append(jnp.dot(p.astype(vh.dtype), vh, preferred_element_type=jnp.float32))
    o_ref[0] = jnp.concatenate(outs, axis=-1)      # single dense (L, D) store


def pallas_attention(q, k, v, n_heads, causal):
    """q/k/v: (B, L/S, D=H*E) -> (B, L, D) in head-concat layout (FullAttention)."""
    B, L, D = q.shape
    S = k.shape[1]
    E = D // n_heads
    scale = 1.0 / math.sqrt(E)
    # TODO(synk): for production sequence lengths (96-720) tile the S axis
    # flash-style to bound VMEM on v7x (64 MiB); full (S, D) blocks are fine here.
    return pl.pallas_call(
        functools.partial(_attention_kernel, n_heads=n_heads, scale=scale, causal=causal),
        out_shape=jax.ShapeDtypeStruct((B, L, D), jnp.float32),
        grid=(B,),
        in_specs=[
            pl.BlockSpec((1, L, D), lambda bi: (bi, 0, 0)),
            pl.BlockSpec((1, S, D), lambda bi: (bi, 0, 0)),
            pl.BlockSpec((1, S, D), lambda bi: (bi, 0, 0)),
        ],
        out_specs=pl.BlockSpec((1, L, D), lambda bi: (bi, 0, 0)),
        compiler_params=pltpu.CompilerParams(dimension_semantics=("parallel",)),
    )(q.astype(jnp.bfloat16), k.astype(jnp.bfloat16), v.astype(jnp.bfloat16))


def _cconv3_kernel(xp_ref, w_ref, b_ref, o_ref):
    L = o_ref.shape[1]
    C = xp_ref.shape[2]
    acc = jnp.dot(xp_ref[0, 0:L, :], w_ref[0:C, :],
                  preferred_element_type=jnp.float32)
    acc = acc + jnp.dot(xp_ref[0, 1:L + 1, :], w_ref[C:2 * C, :],
                        preferred_element_type=jnp.float32)
    acc = acc + jnp.dot(xp_ref[0, 2:L + 2, :], w_ref[2 * C:3 * C, :],
                        preferred_element_type=jnp.float32)
    o_ref[0] = acc + b_ref[...]


def pallas_cconv3(x_bld, w, b):
    """Conv1d(kernel=3, padding=1, padding_mode='circular') on channels-last (B, L, C),
    computed as three shifted matmuls accumulated in one kernel (no im2col)."""
    B, L, C = x_bld.shape
    Cout = w.shape[1]
    xp = jnp.concatenate([x_bld[:, -1:, :], x_bld, x_bld[:, :1, :]], axis=1)  # (B, L+2, C)
    return pl.pallas_call(
        _cconv3_kernel,
        out_shape=jax.ShapeDtypeStruct((B, L, Cout), jnp.float32),
        grid=(B,),
        in_specs=[
            pl.BlockSpec((1, L + 2, C), lambda bi: (bi, 0, 0)),
            pl.BlockSpec((3 * C, Cout), lambda bi: (0, 0)),
            pl.BlockSpec((1, Cout), lambda bi: (0, 0)),
        ],
        out_specs=pl.BlockSpec((1, L, Cout), lambda bi: (bi, 0, 0)),
        compiler_params=pltpu.CompilerParams(dimension_semantics=("parallel",)),
    )(xp.astype(jnp.bfloat16), w.astype(jnp.bfloat16),
      b.reshape(1, Cout).astype(jnp.float32))


# ---------------------------------------------------------------------------
# Plain-JAX glue (elementwise / gathers / layout)
# ---------------------------------------------------------------------------

def gelu(x):            # exact (erf) GELU, matching torch.nn.functional.gelu default
    return 0.5 * x * (1.0 + jax.lax.erf(x / math.sqrt(2.0)))


def elu(x):
    return jnp.where(x > 0, x, jnp.expm1(x))


def sinusoid_table(n_pos, d_model):
    position = jnp.arange(n_pos, dtype=jnp.float32)[:, None]
    div_term = jnp.exp(jnp.arange(0, d_model, 2, dtype=jnp.float32)
                       * -(math.log(10000.0) / d_model))
    pe = jnp.zeros((n_pos, d_model), dtype=jnp.float32)
    pe = pe.at[:, 0::2].set(jnp.sin(position * div_term))
    pe = pe.at[:, 1::2].set(jnp.cos(position * div_term))
    return pe


def pope_embedding(L, d_model):
    # TODO(synk): PoPEEmbedding source is not provided; implemented as a Legendre
    # orthogonal-polynomial positional encoding added to attention queries/keys.
    t = jnp.linspace(-1.0, 1.0, L)
    polys = [jnp.ones_like(t), t]
    for n in range(1, d_model - 1):
        polys.append(((2 * n + 1) * t * polys[n] - n * polys[n - 1]) / (n + 1))
    pe = jnp.stack(polys[:d_model], axis=-1)   # (L, d_model)
    return pe[None]                             # (1, L, d_model)


def data_embedding(p, x, x_mark, d_model):
    """DataEmbedding = TokenEmbedding(circular conv) + PositionalEmbedding
    + TemporalEmbedding(fixed, freq='h').  dropout p=0 -> identity."""
    B, L, _ = x.shape
    val = pallas_cconv3(x, p['tok_w'], p['tok_b'])
    pos = sinusoid_table(L, d_model)[None]
    xm = x_mark.astype(jnp.int32)
    month = jnp.take(p['month_tab'], xm[:, :, 0], axis=0)
    day = jnp.take(p['day_tab'], xm[:, :, 1], axis=0)
    weekday = jnp.take(p['weekday_tab'], xm[:, :, 2], axis=0)
    hour = jnp.take(p['hour_tab'], xm[:, :, 3], axis=0)
    return val + pos + (month + day + weekday + hour)


# ---------------------------------------------------------------------------
# Transformer blocks
# ---------------------------------------------------------------------------

def attention_layer(p, x_q, x_kv, q_pos, k_pos, n_heads, causal, mix, self_attn):
    B, L, D = x_q.shape
    S = x_kv.shape[1]
    E = D // n_heads
    qp = q_pos[:, :L]
    kp = k_pos[:, :S]
    # TODO(synk): exact use of PoPE positions inside Encoder/Decoder is unknown;
    # assumed additive to the attention query/key inputs (not values).
    if self_attn:
        # One launch: [Q | K] from (x + pos), V from x.
        wqk = jnp.concatenate([p['q_w'], p['k_w']], axis=1)
        bqkv = jnp.concatenate([p['q_b'], p['k_b'], p['v_b']])
        qkv = pallas_dual_proj(x_q, qp, wqk, p['v_w'], bqkv)       # (B, L, 3D)
        q, k, v = qkv[..., :D], qkv[..., D:2 * D], qkv[..., 2 * D:]
    else:
        q = pallas_pos_proj(x_q, qp, p['q_w'], p['q_b'])           # (B, L, D)
        bkv = jnp.concatenate([p['k_b'], p['v_b']])
        kv = pallas_dual_proj(x_kv, kp, p['k_w'], p['v_w'], bkv)   # (B, S, 2D)
        k, v = kv[..., :D], kv[..., D:]
    o = pallas_attention(q, k, v, n_heads, causal)                 # (B, L, D), head-concat
    if mix:  # PyTorch quirk: (B,L,H,E).transpose(2,1).contiguous().view(B,L,-1)
        o = o.reshape(B, L, n_heads, E).transpose(0, 2, 1, 3).reshape(B, L, D)
    return pallas_linear(o.reshape(B * L, D), p['o_w'], p['o_b']).reshape(B, L, D)


def ffn(p, x, activation):
    B, L, D = x.shape
    x2 = x.reshape(B * L, D)
    if activation == 'relu':
        y = pallas_linear(x2, p['ff1_w'], p['ff1_b'], activation='relu')  # fused epilogue
    else:
        # TODO(synk): exact-erf GELU kept in plain JAX (erf lowering inside Mosaic
        # kernels is not guaranteed); bias is still fused in the matmul kernel.
        y = gelu(pallas_linear(x2, p['ff1_w'], p['ff1_b']))
    return pallas_linear(y, p['ff2_w'], p['ff2_b']).reshape(B, L, D)


def encoder_layer(p, x, pos, n_heads, activation):
    new_x = attention_layer(p['attn'], x, x, pos, pos, n_heads,
                            causal=False, mix=False, self_attn=True)
    x = pallas_layernorm(x, p['ln1_g'], p['ln1_b'], residual=new_x)
    y = ffn(p, x, activation)
    return pallas_layernorm(x, p['ln2_g'], p['ln2_b'], residual=y)


def conv_layer(p, x):
    """Informer distilling ConvLayer: circular conv3 -> BatchNorm1d -> ELU -> MaxPool1d(3,2,1)."""
    B, L, D = x.shape
    y = pallas_cconv3(x, p['conv_w'], p['conv_b'])
    # BatchNorm1d in (default) training mode: per-channel batch statistics.
    mu = jnp.mean(y, axis=(0, 1), keepdims=True)
    var = jnp.mean((y - mu) ** 2, axis=(0, 1), keepdims=True)
    y = (y - mu) * jax.lax.rsqrt(var + 1e-5) * p['bn_g'] + p['bn_b']
    y = elu(y)
    L_out = (L - 1) // 2 + 1
    neg = jnp.full((B, 1, D), -jnp.inf, dtype=y.dtype)
    yp = jnp.concatenate([neg, y, neg], axis=1)              # pad=-inf both sides
    a = yp[:, 0:2 * L_out:2, :]
    b_ = yp[:, 1:2 * L_out + 1:2, :]
    c = yp[:, 2:2 * L_out + 2:2, :]
    return jnp.maximum(jnp.maximum(a, b_), c)                # (B, L_out, D)


def encoder(p, x, pos, n_heads, activation, d_model):
    n_layers = len(p['layers'])
    for i in range(n_layers - 1):
        x = encoder_layer(p['layers'][i], x, pos, n_heads, activation)
        x = conv_layer(p['convs'][i], x)
        pos = pope_embedding(x.shape[1], d_model)   # positions at the distilled length
    x = encoder_layer(p['layers'][-1], x, pos, n_heads, activation)
    return pallas_layernorm(x, p['norm_g'], p['norm_b'])


def decoder_layer(p, x, cross, self_pos, cross_pos, n_heads, activation):
    sa = attention_layer(p['self_attn'], x, x, self_pos, self_pos, n_heads,
                         causal=True, mix=True, self_attn=True)
    x = pallas_layernorm(x, p['ln1_g'], p['ln1_b'], residual=sa)
    ca = attention_layer(p['cross_attn'], x, cross, self_pos, cross_pos, n_heads,
                         causal=False, mix=False, self_attn=False)
    x = pallas_layernorm(x, p['ln2_g'], p['ln2_b'], residual=ca)
    y = ffn(p, x, activation)
    return pallas_layernorm(x, p['ln3_g'], p['ln3_b'], residual=y)


def decoder(p, x, cross, self_pos, cross_pos, n_heads, activation):
    for lp in p['layers']:
        x = decoder_layer(lp, x, cross, self_pos, cross_pos, n_heads, activation)
    return pallas_layernorm(x, p['norm_g'], p['norm_b'])


def informer_forward(params, x_enc, x_mark_enc, x_dec, x_mark_dec, cfg):
    d_model, n_heads, act = cfg['d_model'], cfg['n_heads'], cfg['activation']
    enc_out = data_embedding(params['enc_emb'], x_enc, x_mark_enc, d_model)
    dec_out = data_embedding(params['dec_emb'], x_dec, x_mark_dec, d_model)
    pos_enc = pope_embedding(enc_out.shape[1], d_model)
    pos_dec = pope_embedding(dec_out.shape[1], d_model)
    enc_out = encoder(params['encoder'], enc_out, pos_enc, n_heads, act, d_model)
    dec_out = decoder(params['decoder'], dec_out, enc_out, pos_dec, pos_enc, n_heads, act)
    B, L, D = dec_out.shape
    dec_out = pallas_linear(dec_out.reshape(B * L, D),
                            params['proj_w'], params['proj_b']).reshape(B, L, -1)
    return dec_out[:, -cfg['pred_len']:, :]


# ---------------------------------------------------------------------------
# Deterministic parameter init
# ---------------------------------------------------------------------------

def init_params(key, cfg):
    d_model, d_ff = cfg['d_model'], cfg['d_ff']
    enc_in, dec_in, c_out = cfg['enc_in'], cfg['dec_in'], cfg['c_out']
    keys = iter(jax.random.split(key, 512))

    def nk():
        return next(keys)

    def dense(shape, scale=0.05):
        return scale * jax.random.normal(nk(), shape, dtype=jnp.float32)

    def attn_params():
        return dict(q_w=dense((d_model, d_model)), q_b=jnp.zeros(d_model),
                    k_w=dense((d_model, d_model)), k_b=jnp.zeros(d_model),
                    v_w=dense((d_model, d_model)), v_b=jnp.zeros(d_model),
                    o_w=dense((d_model, d_model)), o_b=jnp.zeros(d_model))

    def enc_layer_params():
        return dict(attn=attn_params(),
                    ff1_w=dense((d_model, d_ff)), ff1_b=jnp.zeros(d_ff),
                    ff2_w=dense((d_ff, d_model)), ff2_b=jnp.zeros(d_model),
                    ln1_g=jnp.ones(d_model), ln1_b=jnp.zeros(d_model),
                    ln2_g=jnp.ones(d_model), ln2_b=jnp.zeros(d_model))

    def dec_layer_params():
        return dict(self_attn=attn_params(), cross_attn=attn_params(),
                    ff1_w=dense((d_model, d_ff)), ff1_b=jnp.zeros(d_ff),
                    ff2_w=dense((d_ff, d_model)), ff2_b=jnp.zeros(d_model),
                    ln1_g=jnp.ones(d_model), ln1_b=jnp.zeros(d_model),
                    ln2_g=jnp.ones(d_model), ln2_b=jnp.zeros(d_model),
                    ln3_g=jnp.ones(d_model), ln3_b=jnp.zeros(d_model))

    def emb_params(c_in):
        return dict(tok_w=dense((3 * c_in, d_model)), tok_b=jnp.zeros(d_model),
                    month_tab=sinusoid_table(13, d_model),
                    day_tab=sinusoid_table(32, d_model),
                    weekday_tab=sinusoid_table(7, d_model),
                    hour_tab=sinusoid_table(24, d_model))

    def conv_params():
        return dict(conv_w=dense((3 * d_model, d_model)), conv_b=jnp.zeros(d_model),
                    bn_g=jnp.ones(d_model), bn_b=jnp.zeros(d_model))

    return dict(
        enc_emb=emb_params(enc_in),
        dec_emb=emb_params(dec_in),
        encoder=dict(layers=[enc_layer_params() for _ in range(cfg['e_layers'])],
                     convs=[conv_params() for _ in range(cfg['e_layers'] - 1)],
                     norm_g=jnp.ones(d_model), norm_b=jnp.zeros(d_model)),
        decoder=dict(layers=[dec_layer_params() for _ in range(cfg['d_layers'])],
                     norm_g=jnp.ones(d_model), norm_b=jnp.zeros(d_model)),
        proj_w=dense((d_model, c_out)), proj_b=jnp.zeros(c_out),
    )


# ---------------------------------------------------------------------------

if __name__ == "__main__":
    cfg = dict(enc_in=4, dec_in=4, c_out=4, seq_len=16, label_len=8, pred_len=8,
               d_model=32, n_heads=4, e_layers=2, d_layers=1, d_ff=32,
               activation='gelu')

    key = jax.random.PRNGKey(0)
    kp, k1, k2, k3, k4 = jax.random.split(key, 5)
    params = init_params(kp, cfg)

    B = 2
    L_dec = cfg['label_len'] + cfg['pred_len']
    x_enc = jax.random.normal(k1, (B, cfg['seq_len'], cfg['enc_in']), dtype=jnp.float32)
    x_dec = jax.random.normal(k2, (B, L_dec, cfg['dec_in']), dtype=jnp.float32)

    def make_marks(k, L):
        km, kd, kw, kh = jax.random.split(k, 4)
        month = jax.random.randint(km, (B, L, 1), 1, 13)
        day = jax.random.randint(kd, (B, L, 1), 1, 32)
        weekday = jax.random.randint(kw, (B, L, 1), 0, 7)
        hour = jax.random.randint(kh, (B, L, 1), 0, 24)
        return jnp.concatenate([month, day, weekday, hour], axis=-1).astype(jnp.float32)

    x_mark_enc = make_marks(k3, cfg['seq_len'])
    x_mark_dec = make_marks(k4, L_dec)

    fwd = jax.jit(functools.partial(informer_forward, cfg=cfg))
    out = fwd(params, x_enc, x_mark_enc, x_dec, x_mark_dec)
    out = jax.block_until_ready(out)
    assert out.shape == (B, cfg['pred_len'], cfg['c_out']), out.shape
    assert bool(jnp.all(jnp.isfinite(out)))
    print("KERNEL_OK")
</pallas_src>

<mosaic_0001>
module attributes {stable_mosaic.version = 11 : i64} {
  func.func @_cconv3_kernel(%arg0: i32, %arg1: memref<1x18x4xbf16, #tpu.memory_space<vmem>>, %arg2: memref<12x32xbf16, #tpu.memory_space<vmem>>, %arg3: memref<1x32xf32, #tpu.memory_space<vmem>>, %arg4: memref<1x16x32xf32, #tpu.memory_space<vmem>>) attributes {dimension_semantics = [#tpu.dimension_semantics<parallel>], iteration_bounds = array<i64: 2>, scalar_prefetch = 0 : i64, scratch_operands = 0 : i64, tpu.core_type = #tpu.core_type<tc>, window_params = [{transform_indices = @transform_0, window_bounds = array<i64: 1, 18, 4>}, {pipeline_mode = #tpu.pipeline_mode<synchronous>, transform_indices = @transform_1, window_bounds = array<i64: 12, 32>}, {pipeline_mode = #tpu.pipeline_mode<synchronous>, transform_indices = @transform_2, window_bounds = array<i64: 1, 32>}, {transform_indices = @transform_3, window_bounds = array<i64: 1, 16, 32>}]} {
    %c0 = arith.constant 0 : index
    %c0_0 = arith.constant 0 : index
    %c0_1 = arith.constant 0 : index
    %0 = vector.load %arg1[%c0, %c0_0, %c0_1] : memref<1x18x4xbf16, #tpu.memory_space<vmem>>, vector<1x16x4xbf16>
    %1 = vector.shape_cast %0 : vector<1x16x4xbf16> to vector<16x4xbf16>
    %c0_2 = arith.constant 0 : index
    %c0_3 = arith.constant 0 : index
    %2 = vector.load %arg2[%c0_2, %c0_3] : memref<12x32xbf16, #tpu.memory_space<vmem>>, vector<4x32xbf16>
    %cst = arith.constant dense<0.000000e+00> : vector<16x32xf32>
    %3 = tpu.matmul %1, %2, %cst {dimension_numbers = #tpu.dot_dimension_numbers<[1], [0], [0], [1], [0, 0, 1, 1], [], []>} : vector<16x4xbf16>, vector<4x32xbf16>, vector<16x32xf32> -> vector<16x32xf32>
    %c0_4 = arith.constant 0 : index
    %c1 = arith.constant 1 : index
    %c0_5 = arith.constant 0 : index
    %4 = vector.load %arg1[%c0_4, %c1, %c0_5] : memref<1x18x4xbf16, #tpu.memory_space<vmem>>, vector<1x16x4xbf16>
    %5 = vector.shape_cast %4 : vector<1x16x4xbf16> to vector<16x4xbf16>
    %c4 = arith.constant 4 : index
    %c0_6 = arith.constant 0 : index
    %6 = vector.load %arg2[%c4, %c0_6] : memref<12x32xbf16, #tpu.memory_space<vmem>>, vector<4x32xbf16>
    %cst_7 = arith.constant dense<0.000000e+00> : vector<16x32xf32>
    %7 = tpu.matmul %5, %6, %cst_7 {dimension_numbers = #tpu.dot_dimension_numbers<[1], [0], [0], [1], [0, 0, 1, 1], [], []>} : vector<16x4xbf16>, vector<4x32xbf16>, vector<16x32xf32> -> vector<16x32xf32>
    %8 = arith.addf %3, %7 : vector<16x32xf32>
    %c0_8 = arith.constant 0 : index
    %c2 = arith.constant 2 : index
    %c0_9 = arith.constant 0 : index
    %9 = vector.load %arg1[%c0_8, %c2, %c0_9] : memref<1x18x4xbf16, #tpu.memory_space<vmem>>, vector<1x16x4xbf16>
    %10 = vector.shape_cast %9 : vector<1x16x4xbf16> to vector<16x4xbf16>
    %c8 = arith.constant 8 : index
    %c0_10 = arith.constant 0 : index
    %11 = vector.load %arg2[%c8, %c0_10] : memref<12x32xbf16, #tpu.memory_space<vmem>>, vector<4x32xbf16>
    %cst_11 = arith.constant dense<0.000000e+00> : vector<16x32xf32>
    %12 = tpu.matmul %10, %11, %cst_11 {dimension_numbers = #tpu.dot_dimension_numbers<[1], [0], [0], [1], [0, 0, 1, 1], [], []>} : vector<16x4xbf16>, vector<4x32xbf16>, vector<16x32xf32> -> vector<16x32xf32>
    %13 = arith.addf %8, %12 : vector<16x32xf32>
    %c0_12 = arith.constant 0 : index
    %c0_13 = arith.constant 0 : index
    %14 = vector.load %arg3[%c0_12, %c0_13] : memref<1x32xf32, #tpu.memory_space<vmem>>, vector<1x32xf32>
    %15 = vector.broadcast %14 : vector<1x32xf32> to vector<16x32xf32>
    %16 = arith.addf %13, %15 : vector<16x32xf32>
    %c0_14 = arith.constant 0 : index
    %c0_15 = arith.constant 0 : index
    %c0_16 = arith.constant 0 : index
    %17 = vector.load %arg4[%c0_14, %c0_15, %c0_16] : memref<1x16x32xf32, #tpu.memory_space<vmem>>, vector<1x16x32xf32>
    %18 = vector.shape_cast %17 : vector<1x16x32xf32> to vector<16x32xf32>
    %19 = vector.shape_cast %16 : vector<16x32xf32> to vector<1x16x32xf32>
    tpu.vector_store %arg4[%c0_14, %c0_15, %c0_16], %19 {strides = array<i32>} : memref<1x16x32xf32, #tpu.memory_space<vmem>>, vector<1x16x32xf32>,
    return
  }
  func.func @transform_0(%arg0: i32) -> (i32, i32, i32) {
    %c0_i32 = arith.constant 0 : i32
    %c0_i32_0 = arith.constant 0 : i32
    %c0_i32_1 = arith.constant 0 : i32
    return %arg0, %c0_i32, %c0_i32_0 : i32, i32, i32
  }
  func.func @transform_1(%arg0: i32) -> (i32, i32) {
    %c0_i32 = arith.constant 0 : i32
    %c0_i32_0 = arith.constant 0 : i32
    %c0_i32_1 = arith.constant 0 : i32
    return %c0_i32, %c0_i32_0 : i32, i32
  }
  func.func @transform_2(%arg0: i32) -> (i32, i32) {
    %c0_i32 = arith.constant 0 : i32
    %c0_i32_0 = arith.constant 0 : i32
    %c0_i32_1 = arith.constant 0 : i32
    return %c0_i32, %c0_i32_0 : i32, i32
  }
  func.func @transform_3(%arg0: i32) -> (i32, i32, i32) {
    %c0_i32 = arith.constant 0 : i32
    %c0_i32_0 = arith.constant 0 : i32
    %c0_i32_1 = arith.constant 0 : i32
    return %arg0, %c0_i32, %c0_i32_0 : i32, i32, i32
  }
}

module attributes {stable_mosaic.version = 11 : i64} {
  func.func @_dual_proj_kernel(%arg0: i32, %arg1: memref<1x16x32xf32, #tpu.memory_space<vmem>>, %arg2: memref<1x16x32xf32, #tpu.memory_space<vmem>>, %arg3: memref<32x64xbf16, #tpu.memory_space<vmem>>, %arg4: memref<32x32xbf16, #tpu.memory_space<vmem>>, %arg5: memref<1x96xf32, #tpu.memory_space<vmem>>, %arg6: memref<1x16x96xf32, #tpu.memory_space<vmem>>) attributes {dimension_semantics = [#tpu.dimension_semantics<parallel>], iteration_bounds = array<i64: 2>, scalar_prefetch = 0 : i64, scratch_operands = 0 : i64, tpu.core_type = #tpu.core_type<tc>, window_params = [{transform_indices = @transform_0, window_bounds = array<i64: 1, 16, 32>}, {pipeline_mode = #tpu.pipeline_mode<synchronous>, transform_indices = @transform_1, window_bounds = array<i64: 1, 16, 32>}, {pipeline_mode = #tpu.pipeline_mode<synchronous>, transform_indices = @transform_2, window_bounds = array<i64: 32, 64>}, {pipeline_mode = #tpu.pipeline_mode<synchronous>, transform_indices = @transform_3, window_bounds = array<i64: 32, 32>}, {pipeline_mode = #tpu.pipeline_mode<synchronous>, transform_indices = @transform_4, window_bounds = array<i64: 1, 96>}, {transform_indices = @transform_5, window_bounds = array<i64: 1, 16, 96>}]} {
    %c0 = arith.constant 0 : index
    %c0_0 = arith.constant 0 : index
    %c0_1 = arith.constant 0 : index
    %0 = vector.load %arg1[%c0, %c0_0, %c0_1] : memref<1x16x32xf32, #tpu.memory_space<vmem>>, vector<1x16x32xf32>
    %1 = vector.shape_cast %0 : vector<1x16x32xf32> to vector<16x32xf32>
    %c0_2 = arith.constant 0 : index
    %c0_3 = arith.constant 0 : index
    %c0_4 = arith.constant 0 : index
    %2 = vector.load %arg2[%c0_2, %c0_3, %c0_4] : memref<1x16x32xf32, #tpu.memory_space<vmem>>, vector<1x16x32xf32>
    %3 = vector.shape_cast %2 : vector<1x16x32xf32> to vector<16x32xf32>
    %4 = arith.addf %1, %3 : vector<16x32xf32>
    %5 = arith.truncf %4 : vector<16x32xf32> to vector<16x32xbf16>
    %c0_5 = arith.constant 0 : index
    %c0_6 = arith.constant 0 : index
    %6 = vector.load %arg3[%c0_5, %c0_6] : memref<32x64xbf16, #tpu.memory_space<vmem>>, vector<32x64xbf16>
    %cst = arith.constant dense<0.000000e+00> : vector<16x64xf32>
    %7 = tpu.matmul %5, %6, %cst {dimension_numbers = #tpu.dot_dimension_numbers<[1], [0], [0], [1], [0, 0, 1, 1], [], []>} : vector<16x32xbf16>, vector<32x64xbf16>, vector<16x64xf32> -> vector<16x64xf32>
    %8 = arith.truncf %1 : vector<16x32xf32> to vector<16x32xbf16>
    %c0_7 = arith.constant 0 : index
    %c0_8 = arith.constant 0 : index
    %9 = vector.load %arg4[%c0_7, %c0_8] : memref<32x32xbf16, #tpu.memory_space<vmem>>, vector<32x32xbf16>
    %cst_9 = arith.constant dense<0.000000e+00> : vector<16x32xf32>
    %10 = tpu.matmul %8, %9, %cst_9 {dimension_numbers = #tpu.dot_dimension_numbers<[1], [0], [0], [1], [0, 0, 1, 1], [], []>} : vector<16x32xbf16>, vector<32x32xbf16>, vector<16x32xf32> -> vector<16x32xf32>
    %11 = tpu.concatenate %7, %10 in 1 : vector<16x64xf32>, vector<16x32xf32> -> vector<16x96xf32>
    %c0_10 = arith.constant 0 : index
    %c0_11 = arith.constant 0 : index
    %12 = vector.load %arg5[%c0_10, %c0_11] : memref<1x96xf32, #tpu.memory_space<vmem>>, vector<1x96xf32>
    %13 = vector.broadcast %12 : vector<1x96xf32> to vector<16x96xf32>
    %14 = arith.addf %11, %13 : vector<16x96xf32>
    %c0_12 = arith.constant 0 : index
    %c0_13 = arith.constant 0 : index
    %c0_14 = arith.constant 0 : index
    %15 = vector.load %arg6[%c0_12, %c0_13, %c0_14] : memref<1x16x96xf32, #tpu.memory_space<vmem>>, vector<1x16x96xf32>
    %16 = vector.shape_cast %15 : vector<1x16x96xf32> to vector<16x96xf32>
    %17 = vector.shape_cast %14 : vector<16x96xf32> to vector<1x16x96xf32>
    tpu.vector_store %arg6[%c0_12, %c0_13, %c0_14], %17 {strides = array<i32>} : memref<1x16x96xf32, #tpu.memory_space<vmem>>, vector<1x16x96xf32>,
    return
  }
  func.func @transform_0(%arg0: i32) -> (i32, i32, i32) {
    %c0_i32 = arith.constant 0 : i32
    %c0_i32_0 = arith.constant 0 : i32
    %c0_i32_1 = arith.constant 0 : i32
    return %arg0, %c0_i32, %c0_i32_0 : i32, i32, i32
  }
  func.func @transform_1(%arg0: i32) -> (i32, i32, i32) {
    %c0_i32 = arith.constant 0 : i32
    %c0_i32_0 = arith.constant 0 : i32
    %c0_i32_1 = arith.constant 0 : i32
    %c0_i32_2 = arith.constant 0 : i32
    return %c0_i32, %c0_i32_0, %c0_i32_1 : i32, i32, i32
  }
  func.func @transform_2(%arg0: i32) -> (i32, i32) {
    %c0_i32 = arith.constant 0 : i32
    %c0_i32_0 = arith.constant 0 : i32
    %c0_i32_1 = arith.constant 0 : i32
    return %c0_i32, %c0_i32_0 : i32, i32
  }
  func.func @transform_3(%arg0: i32) -> (i32, i32) {
    %c0_i32 = arith.constant 0 : i32
    %c0_i32_0 = arith.constant 0 : i32
    %c0_i32_1 = arith.constant 0 : i32
    return %c0_i32, %c0_i32_0 : i32, i32
  }
  func.func @transform_4(%arg0: i32) -> (i32, i32) {
    %c0_i32 = arith.constant 0 : i32
    %c0_i32_0 = arith.constant 0 : i32
    %c0_i32_1 = arith.constant 0 : i32
    return %c0_i32, %c0_i32_0 : i32, i32
  }
  func.func @transform_5(%arg0: i32) -> (i32, i32, i32) {
    %c0_i32 = arith.constant 0 : i32
    %c0_i32_0 = arith.constant 0 : i32
    %c0_i32_1 = arith.constant 0 : i32
    return %arg0, %c0_i32, %c0_i32_0 : i32, i32, i32
  }
}

module attributes {stable_mosaic.version = 11 : i64} {
  func.func @_add_layernorm_kernel(%arg0: i32, %arg1: memref<16x32xf32, #tpu.memory_space<vmem>>, %arg2: memref<16x32xf32, #tpu.memory_space<vmem>>, %arg3: memref<1x32xf32, #tpu.memory_space<vmem>>, %arg4: memref<1x32xf32, #tpu.memory_space<vmem>>, %arg5: memref<16x32xf32, #tpu.memory_space<vmem>>) attributes {dimension_semantics = [#tpu.dimension_semantics<parallel>], iteration_bounds = array<i64: 2>, scalar_prefetch = 0 : i64, scratch_operands = 0 : i64, tpu.core_type = #tpu.core_type<tc>, window_params = [{transform_indices = @transform_0, window_bounds = array<i64: 16, 32>}, {transform_indices = @transform_1, window_bounds = array<i64: 16, 32>}, {pipeline_mode = #tpu.pipeline_mode<synchronous>, transform_indices = @transform_2, window_bounds = array<i64: 1, 32>}, {pipeline_mode = #tpu.pipeline_mode<synchronous>, transform_indices = @transform_3, window_bounds = array<i64: 1, 32>}, {transform_indices = @transform_4, window_bounds = array<i64: 16, 32>}]} {
    %c0 = arith.constant 0 : index
    %c0_0 = arith.constant 0 : index
    %0 = vector.load %arg1[%c0, %c0_0] : memref<16x32xf32, #tpu.memory_space<vmem>>, vector<16x32xf32>
    %c0_1 = arith.constant 0 : index
    %c0_2 = arith.constant 0 : index
    %1 = vector.load %arg2[%c0_1, %c0_2] : memref<16x32xf32, #tpu.memory_space<vmem>>, vector<16x32xf32>
    %2 = arith.addf %0, %1 : vector<16x32xf32>
    %c0_3 = arith.constant 0 : index
    %c0_4 = arith.constant 0 : index
    %3 = vector.load %arg3[%c0_3, %c0_4] : memref<1x32xf32, #tpu.memory_space<vmem>>, vector<1x32xf32>
    %c0_5 = arith.constant 0 : index
    %c0_6 = arith.constant 0 : index
    %4 = vector.load %arg4[%c0_5, %c0_6] : memref<1x32xf32, #tpu.memory_space<vmem>>, vector<1x32xf32>
    %cst = arith.constant dense<0.000000e+00> : vector<16xf32>
    %5 = vector.multi_reduction <add>, %2, %cst [1] : vector<16x32xf32> to vector<16xf32>
    %6 = vector.shape_cast %5 : vector<16xf32> to vector<16x1xf32>
    %cst_7 = arith.constant 3.200000e+01 : f32
    %7 = vector.broadcast %cst_7 : f32 to vector<16x1xf32>
    %8 = arith.divf %6, %7 : vector<16x1xf32>
    %9 = vector.broadcast %8 : vector<16x1xf32> to vector<16x32xf32>
    %10 = arith.subf %2, %9 : vector<16x32xf32>
    %11 = arith.mulf %10, %10 : vector<16x32xf32>
    %cst_8 = arith.constant dense<0.000000e+00> : vector<16xf32>
    %12 = vector.multi_reduction <add>, %11, %cst_8 [1] : vector<16x32xf32> to vector<16xf32>
    %13 = vector.shape_cast %12 : vector<16xf32> to vector<16x1xf32>
    %cst_9 = arith.constant 3.200000e+01 : f32
    %14 = vector.broadcast %cst_9 : f32 to vector<16x1xf32>
    %15 = arith.divf %13, %14 : vector<16x1xf32>
    %cst_10 = arith.constant 9.99999974E-6 : f32
    %16 = vector.broadcast %cst_10 : f32 to vector<16x1xf32>
    %17 = arith.addf %15, %16 : vector<16x1xf32>
    %18 = math.rsqrt %17 : vector<16x1xf32>
    %19 = vector.broadcast %18 : vector<16x1xf32> to vector<16x32xf32>
    %20 = arith.mulf %10, %19 : vector<16x32xf32>
    %21 = vector.broadcast %3 : vector<1x32xf32> to vector<16x32xf32>
    %22 = arith.mulf %20, %21 : vector<16x32xf32>
    %23 = vector.broadcast %4 : vector<1x32xf32> to vector<16x32xf32>
    %24 = arith.addf %22, %23 : vector<16x32xf32>
    %c0_11 = arith.constant 0 : index
    %c0_12 = arith.constant 0 : index
    %25 = vector.load %arg5[%c0_11, %c0_12] : memref<16x32xf32, #tpu.memory_space<vmem>>, vector<16x32xf32>
    tpu.vector_store %arg5[%c0_11, %c0_12], %24 {strides = array<i32>} : memref<16x32xf32, #tpu.memory_space<vmem>>, vector<16x32xf32>,
    return
  }
  func.func @transform_0(%arg0: i32) -> (i32, i32) {
    %c0_i32 = arith.constant 0 : i32
    %c0_i32_0 = arith.constant 0 : i32
    return %arg0, %c0_i32 : i32, i32
  }
  func.func @transform_1(%arg0: i32) -> (i32, i32) {
    %c0_i32 = arith.constant 0 : i32
    %c0_i32_0 = arith.constant 0 : i32
    return %arg0, %c0_i32 : i32, i32
  }
  func.func @transform_2(%arg0: i32) -> (i32, i32) {
    %c0_i32 = arith.constant 0 : i32
    %c0_i32_0 = arith.constant 0 : i32
    %c0_i32_1 = arith.constant 0 : i32
    return %c0_i32, %c0_i32_0 : i32, i32
  }
  func.func @transform_3(%arg0: i32) -> (i32, i32) {
    %c0_i32 = arith.constant 0 : i32
    %c0_i32_0 = arith.constant 0 : i32
    %c0_i32_1 = arith.constant 0 : i32
    return %c0_i32, %c0_i32_0 : i32, i32
  }
  func.func @transform_4(%arg0: i32) -> (i32, i32) {
    %c0_i32 = arith.constant 0 : i32
    %c0_i32_0 = arith.constant 0 : i32
    return %arg0, %c0_i32 : i32, i32
  }
}

module attributes {stable_mosaic.version = 11 : i64} {
  func.func @_attention_kernel(%arg0: i32, %arg1: memref<1x16x32xbf16, #tpu.memory_space<vmem>>, %arg2: memref<1x16x32xbf16, #tpu.memory_space<vmem>>, %arg3: memref<1x16x32xbf16, #tpu.memory_space<vmem>>, %arg4: memref<1x16x32xf32, #tpu.memory_space<vmem>>) attributes {dimension_semantics = [#tpu.dimension_semantics<parallel>], iteration_bounds = array<i64: 2>, scalar_prefetch = 0 : i64, scratch_operands = 0 : i64, tpu.core_type = #tpu.core_type<tc>, window_params = [{transform_indices = @transform_0, window_bounds = array<i64: 1, 16, 32>}, {transform_indices = @transform_1, window_bounds = array<i64: 1, 16, 32>}, {transform_indices = @transform_2, window_bounds = array<i64: 1, 16, 32>}, {transform_indices = @transform_3, window_bounds = array<i64: 1, 16, 32>}]} {
    %c0 = arith.constant 0 : index
    %c0_0 = arith.constant 0 : index
    %c0_1 = arith.constant 0 : index
    %0 = vector.load %arg1[%c0, %c0_0, %c0_1] : memref<1x16x32xbf16, #tpu.memory_space<vmem>>, vector<1x16x32xbf16>
    %1 = vector.shape_cast %0 : vector<1x16x32xbf16> to vector<16x32xbf16>
    %c0_2 = arith.constant 0 : index
    %c0_3 = arith.constant 0 : index
    %c0_4 = arith.constant 0 : index
    %2 = vector.load %arg2[%c0_2, %c0_3, %c0_4] : memref<1x16x32xbf16, #tpu.memory_space<vmem>>, vector<1x16x32xbf16>
    %3 = vector.shape_cast %2 : vector<1x16x32xbf16> to vector<16x32xbf16>
    %c0_5 = arith.constant 0 : index
    %c0_6 = arith.constant 0 : index
    %c0_7 = arith.constant 0 : index
    %4 = vector.load %arg3[%c0_5, %c0_6, %c0_7] : memref<1x16x32xbf16, #tpu.memory_space<vmem>>, vector<1x16x32xbf16>
    %5 = vector.shape_cast %4 : vector<1x16x32xbf16> to vector<16x32xbf16>
    %6 = vector.extract_strided_slice %1 {offsets = [0, 0], sizes = [16, 8], strides = [1, 1]} : vector<16x32xbf16> to vector<16x8xbf16>
    %7 = vector.extract_strided_slice %3 {offsets = [0, 0], sizes = [16, 8], strides = [1, 1]} : vector<16x32xbf16> to vector<16x8xbf16>
    %8 = vector.extract_strided_slice %5 {offsets = [0, 0], sizes = [16, 8], strides = [1, 1]} : vector<16x32xbf16> to vector<16x8xbf16>
    %cst = arith.constant dense<0.000000e+00> : vector<16x16xf32>
    %9 = tpu.matmul %6, %7, %cst {dimension_numbers = #tpu.dot_dimension_numbers<[1], [1], [0], [0], [0, 0, 1, 0], [], []>} : vector<16x8xbf16>, vector<16x8xbf16>, vector<16x16xf32> -> vector<16x16xf32>
    %cst_8 = arith.constant 0.353553385 : f32
    %10 = vector.broadcast %cst_8 : f32 to vector<16x16xf32>
    %11 = arith.mulf %9, %10 : vector<16x16xf32>
    %cst_9 = arith.constant dense<0xFF800000> : vector<16xf32>
    %12 = vector.multi_reduction <maximumf>, %11, %cst_9 [1] : vector<16x16xf32> to vector<16xf32>
    %13 = vector.shape_cast %12 : vector<16xf32> to vector<16x1xf32>
    %14 = vector.broadcast %13 : vector<16x1xf32> to vector<16x16xf32>
    %15 = arith.subf %11, %14 : vector<16x16xf32>
    %16 = math.exp %15 : vector<16x16xf32>
    %cst_10 = arith.constant dense<0.000000e+00> : vector<16xf32>
    %17 = vector.multi_reduction <add>, %16, %cst_10 [1] : vector<16x16xf32> to vector<16xf32>
    %18 = vector.shape_cast %17 : vector<16xf32> to vector<16x1xf32>
    %19 = tpu.reciprocal %18 {approx = true} : vector<16x1xf32> -> vector<16x1xf32>
    %20 = vector.broadcast %19 : vector<16x1xf32> to vector<16x16xf32>
    %21 = arith.mulf %16, %20 : vector<16x16xf32>
    %22 = arith.truncf %21 : vector<16x16xf32> to vector<16x16xbf16>
    %cst_11 = arith.constant dense<0.000000e+00> : vector<16x8xf32>
    %23 = tpu.matmul %22, %8, %cst_11 {dimension_numbers = #tpu.dot_dimension_numbers<[1], [0], [0], [1], [0, 0, 1, 1], [], []>} : vector<16x16xbf16>, vector<16x8xbf16>, vector<16x8xf32> -> vector<16x8xf32>
    %24 = vector.extract_strided_slice %1 {offsets = [0, 8], sizes = [16, 8], strides = [1, 1]} : vector<16x32xbf16> to vector<16x8xbf16>
    %25 = vector.extract_strided_slice %3 {offsets = [0, 8], sizes = [16, 8], strides = [1, 1]} : vector<16x32xbf16> to vector<16x8xbf16>
    %26 = vector.extract_strided_slice %5 {offsets = [0, 8], sizes = [16, 8], strides = [1, 1]} : vector<16x32xbf16> to vector<16x8xbf16>
    %cst_12 = arith.constant dense<0.000000e+00> : vector<16x16xf32>
    %27 = tpu.matmul %24, %25, %cst_12 {dimension_numbers = #tpu.dot_dimension_numbers<[1], [1], [0], [0], [0, 0, 1, 0], [], []>} : vector<16x8xbf16>, vector<16x8xbf16>, vector<16x16xf32> -> vector<16x16xf32>
    %cst_13 = arith.constant 0.353553385 : f32
    %28 = vector.broadcast %cst_13 : f32 to vector<16x16xf32>
    %29 = arith.mulf %27, %28 : vector<16x16xf32>
    %cst_14 = arith.constant dense<0xFF800000> : vector<16xf32>
    %30 = vector.multi_reduction <maximumf>, %29, %cst_14 [1] : vector<16x16xf32> to vector<16xf32>
    %31 = vector.shape_cast %30 : vector<16xf32> to vector<16x1xf32>
    %32 = vector.broadcast %31 : vector<16x1xf32> to vector<16x16xf32>
    %33 = arith.subf %29, %32 : vector<16x16xf32>
    %34 = math.exp %33 : vector<16x16xf32>
    %cst_15 = arith.constant dense<0.000000e+00> : vector<16xf32>
    %35 = vector.multi_reduction <add>, %34, %cst_15 [1] : vector<16x16xf32> to vector<16xf32>
    %36 = vector.shape_cast %35 : vector<16xf32> to vector<16x1xf32>
    %37 = tpu.reciprocal %36 {approx = true} : vector<16x1xf32> -> vector<16x1xf32>
    %38 = vector.broadcast %37 : vector<16x1xf32> to vector<16x16xf32>
    %39 = arith.mulf %34, %38 : vector<16x16xf32>
    %40 = arith.truncf %39 : vector<16x16xf32> to vector<16x16xbf16>
    %cst_16 = arith.constant dense<0.000000e+00> : vector<16x8xf32>
    %41 = tpu.matmul %40, %26, %cst_16 {dimension_numbers = #tpu.dot_dimension_numbers<[1], [0], [0], [1], [0, 0, 1, 1], [], []>} : vector<16x16xbf16>, vector<16x8xbf16>, vector<16x8xf32> -> vector<16x8xf32>
    %42 = vector.extract_strided_slice %1 {offsets = [0, 16], sizes = [16, 8], strides = [1, 1]} : vector<16x32xbf16> to vector<16x8xbf16>
    %43 = vector.extract_strided_slice %3 {offsets = [0, 16], sizes = [16, 8], strides = [1, 1]} : vector<16x32xbf16> to vector<16x8xbf16>
    %44 = vector.extract_strided_slice %5 {offsets = [0, 16], sizes = [16, 8], strides = [1, 1]} : vector<16x32xbf16> to vector<16x8xbf16>
    %cst_17 = arith.constant dense<0.000000e+00> : vector<16x16xf32>
    %45 = tpu.matmul %42, %43, %cst_17 {dimension_numbers = #tpu.dot_dimension_numbers<[1], [1], [0], [0], [0, 0, 1, 0], [], []>} : vector<16x8xbf16>, vector<16x8xbf16>, vector<16x16xf32> -> vector<16x16xf32>
    %cst_18 = arith.constant 0.353553385 : f32
    %46 = vector.broadcast %cst_18 : f32 to vector<16x16xf32>
    %47 = arith.mulf %45, %46 : vector<16x16xf32>
    %cst_19 = arith.constant dense<0xFF800000> : vector<16xf32>
    %48 = vector.multi_reduction <maximumf>, %47, %cst_19 [1] : vector<16x16xf32> to vector<16xf32>
    %49 = vector.shape_cast %48 : vector<16xf32> to vector<16x1xf32>
    %50 = vector.broadcast %49 : vector<16x1xf32> to vector<16x16xf32>
    %51 = arith.subf %47, %50 : vector<16x16xf32>
    %52 = math.exp %51 : vector<16x16xf32>
    %cst_20 = arith.constant dense<0.000000e+00> : vector<16xf32>
    %53 = vector.multi_reduction <add>, %52, %cst_20 [1] : vector<16x16xf32> to vector<16xf32>
    %54 = vector.shape_cast %53 : vector<16xf32> to vector<16x1xf32>
    %55 = tpu.reciprocal %54 {approx = true} : vector<16x1xf32> -> vector<16x1xf32>
    %56 = vector.broadcast %55 : vector<16x1xf32> to vector<16x16xf32>
    %57 = arith.mulf %52, %56 : vector<16x16xf32>
    %58 = arith.truncf %57 : vector<16x16xf32> to vector<16x16xbf16>
    %cst_21 = arith.constant dense<0.000000e+00> : vector<16x8xf32>
    %59 = tpu.matmul %58, %44, %cst_21 {dimension_numbers = #tpu.dot_dimension_numbers<[1], [0], [0], [1], [0, 0, 1, 1], [], []>} : vector<16x16xbf16>, vector<16x8xbf16>, vector<16x8xf32> -> vector<16x8xf32>
    %60 = vector.extract_strided_slice %1 {offsets = [0, 24], sizes = [16, 8], strides = [1, 1]} : vector<16x32xbf16> to vector<16x8xbf16>
    %61 = vector.extract_strided_slice %3 {offsets = [0, 24], sizes = [16, 8], strides = [1, 1]} : vector<16x32xbf16> to vector<16x8xbf16>
    %62 = vector.extract_strided_slice %5 {offsets = [0, 24], sizes = [16, 8], strides = [1, 1]} : vector<16x32xbf16> to vector<16x8xbf16>
    %cst_22 = arith.constant dense<0.000000e+00> : vector<16x16xf32>
    %63 = tpu.matmul %60, %61, %cst_22 {dimension_numbers = #tpu.dot_dimension_numbers<[1], [1], [0], [0], [0, 0, 1, 0], [], []>} : vector<16x8xbf16>, vector<16x8xbf16>, vector<16x16xf32> -> vector<16x16xf32>
    %cst_23 = arith.constant 0.353553385 : f32
    %64 = vector.broadcast %cst_23 : f32 to vector<16x16xf32>
    %65 = arith.mulf %63, %64 : vector<16x16xf32>
    %cst_24 = arith.constant dense<0xFF800000> : vector<16xf32>
    %66 = vector.multi_reduction <maximumf>, %65, %cst_24 [1] : vector<16x16xf32> to vector<16xf32>
    %67 = vector.shape_cast %66 : vector<16xf32> to vector<16x1xf32>
    %68 = vector.broadcast %67 : vector<16x1xf32> to vector<16x16xf32>
    %69 = arith.subf %65, %68 : vector<16x16xf32>
    %70 = math.exp %69 : vector<16x16xf32>
    %cst_25 = arith.constant dense<0.000000e+00> : vector<16xf32>
    %71 = vector.multi_reduction <add>, %70, %cst_25 [1] : vector<16x16xf32> to vector<16xf32>
    %72 = vector.shape_cast %71 : vector<16xf32> to vector<16x1xf32>
    %73 = tpu.reciprocal %72 {approx = true} : vector<16x1xf32> -> vector<16x1xf32>
    %74 = vector.broadcast %73 : vector<16x1xf32> to vector<16x16xf32>
    %75 = arith.mulf %70, %74 : vector<16x16xf32>
    %76 = arith.truncf %75 : vector<16x16xf32> to vector<16x16xbf16>
    %cst_26 = arith.constant dense<0.000000e+00> : vector<16x8xf32>
    %77 = tpu.matmul %76, %62, %cst_26 {dimension_numbers = #tpu.dot_dimension_numbers<[1], [0], [0], [1], [0, 0, 1, 1], [], []>} : vector<16x16xbf16>, vector<16x8xbf16>, vector<16x8xf32> -> vector<16x8xf32>
    %78 = tpu.concatenate %23, %41, %59, %77 in 1 : vector<16x8xf32>, vector<16x8xf32>, vector<16x8xf32>, vector<16x8xf32> -> vector<16x32xf32>
    %c0_27 = arith.constant 0 : index
    %c0_28 = arith.constant 0 : index
    %c0_29 = arith.constant 0 : index
    %79 = vector.load %arg4[%c0_27, %c0_28, %c0_29] : memref<1x16x32xf32, #tpu.memory_space<vmem>>, vector<1x16x32xf32>
    %80 = vector.shape_cast %79 : vector<1x16x32xf32> to vector<16x32xf32>
    %81 = vector.shape_cast %78 : vector<16x32xf32> to vector<1x16x32xf32>
    tpu.vector_store %arg4[%c0_27, %c0_28, %c0_29], %81 {strides = array<i32>} : memref<1x16x32xf32, #tpu.memory_space<vmem>>, vector<1x16x32xf32>,
    return
  }
  func.func @transform_0(%arg0: i32) -> (i32, i32, i32) {
    %c0_i32 = arith.constant 0 : i32
    %c0_i32_0 = arith.constant 0 : i32
    %c0_i32_1 = arith.constant 0 : i32
    return %arg0, %c0_i32, %c0_i32_0 : i32, i32, i32
  }
  func.func @transform_1(%arg0: i32) -> (i32, i32, i32) {
    %c0_i32 = arith.constant 0 : i32
    %c0_i32_0 = arith.constant 0 : i32
    %c0_i32_1 = arith.constant 0 : i32
    return %arg0, %c0_i32, %c0_i32_0 : i32, i32, i32
  }
  func.func @transform_2(%arg0: i32) -> (i32, i32, i32) {
    %c0_i32 = arith.constant 0 : i32
    %c0_i32_0 = arith.constant 0 : i32
    %c0_i32_1 = arith.constant 0 : i32
    return %arg0, %c0_i32, %c0_i32_0 : i32, i32, i32
  }
  func.func @transform_3(%arg0: i32) -> (i32, i32, i32) {
    %c0_i32 = arith.constant 0 : i32
    %c0_i32_0 = arith.constant 0 : i32
    %c0_i32_1 = arith.constant 0 : i32
    return %arg0, %c0_i32, %c0_i32_0 : i32, i32, i32
  }
}

module attributes {stable_mosaic.version = 11 : i64} {
  func.func @_matmul_bias_kernel(%arg0: i32, %arg1: memref<16x32xbf16, #tpu.memory_space<vmem>>, %arg2: memref<32x32xbf16, #tpu.memory_space<vmem>>, %arg3: memref<1x32xf32, #tpu.memory_space<vmem>>, %arg4: memref<16x32xf32, #tpu.memory_space<vmem>>) attributes {dimension_semantics = [#tpu.dimension_semantics<parallel>], iteration_bounds = array<i64: 2>, scalar_prefetch = 0 : i64, scratch_operands = 0 : i64, tpu.core_type = #tpu.core_type<tc>, window_params = [{transform_indices = @transform_0, window_bounds = array<i64: 16, 32>}, {pipeline_mode = #tpu.pipeline_mode<synchronous>, transform_indices = @transform_1, window_bounds = array<i64: 32, 32>}, {pipeline_mode = #tpu.pipeline_mode<synchronous>, transform_indices = @transform_2, window_bounds = array<i64: 1, 32>}, {transform_indices = @transform_3, window_bounds = array<i64: 16, 32>}]} {
    %c0 = arith.constant 0 : index
    %c0_0 = arith.constant 0 : index
    %0 = vector.load %arg1[%c0, %c0_0] : memref<16x32xbf16, #tpu.memory_space<vmem>>, vector<16x32xbf16>
    %c0_1 = arith.constant 0 : index
    %c0_2 = arith.constant 0 : index
    %1 = vector.load %arg2[%c0_1, %c0_2] : memref<32x32xbf16, #tpu.memory_space<vmem>>, vector<32x32xbf16>
    %cst = arith.constant dense<0.000000e+00> : vector<16x32xf32>
    %2 = tpu.matmul %0, %1, %cst {dimension_numbers = #tpu.dot_dimension_numbers<[1], [0], [0], [1], [0, 0, 1, 1], [], []>} : vector<16x32xbf16>, vector<32x32xbf16>, vector<16x32xf32> -> vector<16x32xf32>
    %c0_3 = arith.constant 0 : index
    %c0_4 = arith.constant 0 : index
    %3 = vector.load %arg3[%c0_3, %c0_4] : memref<1x32xf32, #tpu.memory_space<vmem>>, vector<1x32xf32>
    %4 = vector.broadcast %3 : vector<1x32xf32> to vector<16x32xf32>
    %5 = arith.addf %2, %4 : vector<16x32xf32>
    %c0_5 = arith.constant 0 : index
    %c0_6 = arith.constant 0 : index
    %6 = vector.load %arg4[%c0_5, %c0_6] : memref<16x32xf32, #tpu.memory_space<vmem>>, vector<16x32xf32>
    tpu.vector_store %arg4[%c0_5, %c0_6], %5 {strides = array<i32>} : memref<16x32xf32, #tpu.memory_space<vmem>>, vector<16x32xf32>,
    return
  }
  func.func @transform_0(%arg0: i32) -> (i32, i32) {
    %c0_i32 = arith.constant 0 : i32
    %c0_i32_0 = arith.constant 0 : i32
    return %arg0, %c0_i32 : i32, i32
  }
  func.func @transform_1(%arg0: i32) -> (i32, i32) {
    %c0_i32 = arith.constant 0 : i32
    %c0_i32_0 = arith.constant 0 : i32
    %c0_i32_1 = arith.constant 0 : i32
    return %c0_i32, %c0_i32_0 : i32, i32
  }
  func.func @transform_2(%arg0: i32) -> (i32, i32) {
    %c0_i32 = arith.constant 0 : i32
    %c0_i32_0 = arith.constant 0 : i32
    %c0_i32_1 = arith.constant 0 : i32
    return %c0_i32, %c0_i32_0 : i32, i32
  }
  func.func @transform_3(%arg0: i32) -> (i32, i32) {
    %c0_i32 = arith.constant 0 : i32
    %c0_i32_0 = arith.constant 0 : i32
    return %arg0, %c0_i32 : i32, i32
  }
}

module attributes {stable_mosaic.version = 11 : i64} {
  func.func @_cconv3_kernel(%arg0: i32, %arg1: memref<1x18x32xbf16, #tpu.memory_space<vmem>>, %arg2: memref<96x32xbf16, #tpu.memory_space<vmem>>, %arg3: memref<1x32xf32, #tpu.memory_space<vmem>>, %arg4: memref<1x16x32xf32, #tpu.memory_space<vmem>>) attributes {dimension_semantics = [#tpu.dimension_semantics<parallel>], iteration_bounds = array<i64: 2>, scalar_prefetch = 0 : i64, scratch_operands = 0 : i64, tpu.core_type = #tpu.core_type<tc>, window_params = [{transform_indices = @transform_0, window_bounds = array<i64: 1, 18, 32>}, {pipeline_mode = #tpu.pipeline_mode<synchronous>, transform_indices = @transform_1, window_bounds = array<i64: 96, 32>}, {pipeline_mode = #tpu.pipeline_mode<synchronous>, transform_indices = @transform_2, window_bounds = array<i64: 1, 32>}, {transform_indices = @transform_3, window_bounds = array<i64: 1, 16, 32>}]} {
    %c0 = arith.constant 0 : index
    %c0_0 = arith.constant 0 : index
    %c0_1 = arith.constant 0 : index
    %0 = vector.load %arg1[%c0, %c0_0, %c0_1] : memref<1x18x32xbf16, #tpu.memory_space<vmem>>, vector<1x16x32xbf16>
    %1 = vector.shape_cast %0 : vector<1x16x32xbf16> to vector<16x32xbf16>
    %c0_2 = arith.constant 0 : index
    %c0_3 = arith.constant 0 : index
    %2 = vector.load %arg2[%c0_2, %c0_3] : memref<96x32xbf16, #tpu.memory_space<vmem>>, vector<32x32xbf16>
    %cst = arith.constant dense<0.000000e+00> : vector<16x32xf32>
    %3 = tpu.matmul %1, %2, %cst {dimension_numbers = #tpu.dot_dimension_numbers<[1], [0], [0], [1], [0, 0, 1, 1], [], []>} : vector<16x32xbf16>, vector<32x32xbf16>, vector<16x32xf32> -> vector<16x32xf32>
    %c0_4 = arith.constant 0 : index
    %c1 = arith.constant 1 : index
    %c0_5 = arith.constant 0 : index
    %4 = vector.load %arg1[%c0_4, %c1, %c0_5] : memref<1x18x32xbf16, #tpu.memory_space<vmem>>, vector<1x16x32xbf16>
    %5 = vector.shape_cast %4 : vector<1x16x32xbf16> to vector<16x32xbf16>
    %c32 = arith.constant 32 : index
    %c0_6 = arith.constant 0 : index
    %6 = vector.load %arg2[%c32, %c0_6] : memref<96x32xbf16, #tpu.memory_space<vmem>>, vector<32x32xbf16>
    %cst_7 = arith.constant dense<0.000000e+00> : vector<16x32xf32>
    %7 = tpu.matmul %5, %6, %cst_7 {dimension_numbers = #tpu.dot_dimension_numbers<[1], [0], [0], [1], [0, 0, 1, 1], [], []>} : vector<16x32xbf16>, vector<32x32xbf16>, vector<16x32xf32> -> vector<16x32xf32>
    %8 = arith.addf %3, %7 : vector<16x32xf32>
    %c0_8 = arith.constant 0 : index
    %c2 = arith.constant 2 : index
    %c0_9 = arith.constant 0 : index
    %9 = vector.load %arg1[%c0_8, %c2, %c0_9] : memref<1x18x32xbf16, #tpu.memory_space<vmem>>, vector<1x16x32xbf16>
    %10 = vector.shape_cast %9 : vector<1x16x32xbf16> to vector<16x32xbf16>
    %c64 = arith.constant 64 : index
    %c0_10 = arith.constant 0 : index
    %11 = vector.load %arg2[%c64, %c0_10] : memref<96x32xbf16, #tpu.memory_space<vmem>>, vector<32x32xbf16>
    %cst_11 = arith.constant dense<0.000000e+00> : vector<16x32xf32>
    %12 = tpu.matmul %10, %11, %cst_11 {dimension_numbers = #tpu.dot_dimension_numbers<[1], [0], [0], [1], [0, 0, 1, 1], [], []>} : vector<16x32xbf16>, vector<32x32xbf16>, vector<16x32xf32> -> vector<16x32xf32>
    %13 = arith.addf %8, %12 : vector<16x32xf32>
    %c0_12 = arith.constant 0 : index
    %c0_13 = arith.constant 0 : index
    %14 = vector.load %arg3[%c0_12, %c0_13] : memref<1x32xf32, #tpu.memory_space<vmem>>, vector<1x32xf32>
    %15 = vector.broadcast %14 : vector<1x32xf32> to vector<16x32xf32>
    %16 = arith.addf %13, %15 : vector<16x32xf32>
    %c0_14 = arith.constant 0 : index
    %c0_15 = arith.constant 0 : index
    %c0_16 = arith.constant 0 : index
    %17 = vector.load %arg4[%c0_14, %c0_15, %c0_16] : memref<1x16x32xf32, #tpu.memory_space<vmem>>, vector<1x16x32xf32>
    %18 = vector.shape_cast %17 : vector<1x16x32xf32> to vector<16x32xf32>
    %19 = vector.shape_cast %16 : vector<16x32xf32> to vector<1x16x32xf32>
    tpu.vector_store %arg4[%c0_14, %c0_15, %c0_16], %19 {strides = array<i32>} : memref<1x16x32xf32, #tpu.memory_space<vmem>>, vector<1x16x32xf32>,
    return
  }
  func.func @transform_0(%arg0: i32) -> (i32, i32, i32) {
    %c0_i32 = arith.constant 0 : i32
    %c0_i32_0 = arith.constant 0 : i32
    %c0_i32_1 = arith.constant 0 : i32
    return %arg0, %c0_i32, %c0_i32_0 : i32, i32, i32
  }
  func.func @transform_1(%arg0: i32) -> (i32, i32) {
    %c0_i32 = arith.constant 0 : i32
    %c0_i32_0 = arith.constant 0 : i32
    %c0_i32_1 = arith.constant 0 : i32
    return %c0_i32, %c0_i32_0 : i32, i32
  }
  func.func @transform_2(%arg0: i32) -> (i32, i32) {
    %c0_i32 = arith.constant 0 : i32
    %c0_i32_0 = arith.constant 0 : i32
    %c0_i32_1 = arith.constant 0 : i32
    return %c0_i32, %c0_i32_0 : i32, i32
  }
  func.func @transform_3(%arg0: i32) -> (i32, i32, i32) {
    %c0_i32 = arith.constant 0 : i32
    %c0_i32_0 = arith.constant 0 : i32
    %c0_i32_1 = arith.constant 0 : i32
    return %arg0, %c0_i32, %c0_i32_0 : i32, i32, i32
  }
}

module attributes {stable_mosaic.version = 11 : i64} {
  func.func @_dual_proj_kernel(%arg0: i32, %arg1: memref<1x8x32xf32, #tpu.memory_space<vmem>>, %arg2: memref<1x8x32xf32, #tpu.memory_space<vmem>>, %arg3: memref<32x64xbf16, #tpu.memory_space<vmem>>, %arg4: memref<32x32xbf16, #tpu.memory_space<vmem>>, %arg5: memref<1x96xf32, #tpu.memory_space<vmem>>, %arg6: memref<1x8x96xf32, #tpu.memory_space<vmem>>) attributes {dimension_semantics = [#tpu.dimension_semantics<parallel>], iteration_bounds = array<i64: 2>, scalar_prefetch = 0 : i64, scratch_operands = 0 : i64, tpu.core_type = #tpu.core_type<tc>, window_params = [{transform_indices = @transform_0, window_bounds = array<i64: 1, 8, 32>}, {pipeline_mode = #tpu.pipeline_mode<synchronous>, transform_indices = @transform_1, window_bounds = array<i64: 1, 8, 32>}, {pipeline_mode = #tpu.pipeline_mode<synchronous>, transform_indices = @transform_2, window_bounds = array<i64: 32, 64>}, {pipeline_mode = #tpu.pipeline_mode<synchronous>, transform_indices = @transform_3, window_bounds = array<i64: 32, 32>}, {pipeline_mode = #tpu.pipeline_mode<synchronous>, transform_indices = @transform_4, window_bounds = array<i64: 1, 96>}, {transform_indices = @transform_5, window_bounds = array<i64: 1, 8, 96>}]} {
    %c0 = arith.constant 0 : index
    %c0_0 = arith.constant 0 : index
    %c0_1 = arith.constant 0 : index
    %0 = vector.load %arg1[%c0, %c0_0, %c0_1] : memref<1x8x32xf32, #tpu.memory_space<vmem>>, vector<1x8x32xf32>
    %1 = vector.shape_cast %0 : vector<1x8x32xf32> to vector<8x32xf32>
    %c0_2 = arith.constant 0 : index
    %c0_3 = arith.constant 0 : index
    %c0_4 = arith.constant 0 : index
    %2 = vector.load %arg2[%c0_2, %c0_3, %c0_4] : memref<1x8x32xf32, #tpu.memory_space<vmem>>, vector<1x8x32xf32>
    %3 = vector.shape_cast %2 : vector<1x8x32xf32> to vector<8x32xf32>
    %4 = arith.addf %1, %3 : vector<8x32xf32>
    %5 = arith.truncf %4 : vector<8x32xf32> to vector<8x32xbf16>
    %c0_5 = arith.constant 0 : index
    %c0_6 = arith.constant 0 : index
    %6 = vector.load %arg3[%c0_5, %c0_6] : memref<32x64xbf16, #tpu.memory_space<vmem>>, vector<32x64xbf16>
    %cst = arith.constant dense<0.000000e+00> : vector<8x64xf32>
    %7 = tpu.matmul %5, %6, %cst {dimension_numbers = #tpu.dot_dimension_numbers<[1], [0], [0], [1], [0, 0, 1, 1], [], []>} : vector<8x32xbf16>, vector<32x64xbf16>, vector<8x64xf32> -> vector<8x64xf32>
    %8 = arith.truncf %1 : vector<8x32xf32> to vector<8x32xbf16>
    %c0_7 = arith.constant 0 : index
    %c0_8 = arith.constant 0 : index
    %9 = vector.load %arg4[%c0_7, %c0_8] : memref<32x32xbf16, #tpu.memory_space<vmem>>, vector<32x32xbf16>
    %cst_9 = arith.constant dense<0.000000e+00> : vector<8x32xf32>
    %10 = tpu.matmul %8, %9, %cst_9 {dimension_numbers = #tpu.dot_dimension_numbers<[1], [0], [0], [1], [0, 0, 1, 1], [], []>} : vector<8x32xbf16>, vector<32x32xbf16>, vector<8x32xf32> -> vector<8x32xf32>
    %11 = tpu.concatenate %7, %10 in 1 : vector<8x64xf32>, vector<8x32xf32> -> vector<8x96xf32>
    %c0_10 = arith.constant 0 : index
    %c0_11 = arith.constant 0 : index
    %12 = vector.load %arg5[%c0_10, %c0_11] : memref<1x96xf32, #tpu.memory_space<vmem>>, vector<1x96xf32>
    %13 = vector.broadcast %12 : vector<1x96xf32> to vector<8x96xf32>
    %14 = arith.addf %11, %13 : vector<8x96xf32>
    %c0_12 = arith.constant 0 : index
    %c0_13 = arith.constant 0 : index
    %c0_14 = arith.constant 0 : index
    %15 = vector.load %arg6[%c0_12, %c0_13, %c0_14] : memref<1x8x96xf32, #tpu.memory_space<vmem>>, vector<1x8x96xf32>
    %16 = vector.shape_cast %15 : vector<1x8x96xf32> to vector<8x96xf32>
    %17 = vector.shape_cast %14 : vector<8x96xf32> to vector<1x8x96xf32>
    tpu.vector_store %arg6[%c0_12, %c0_13, %c0_14], %17 {strides = array<i32>} : memref<1x8x96xf32, #tpu.memory_space<vmem>>, vector<1x8x96xf32>,
    return
  }
  func.func @transform_0(%arg0: i32) -> (i32, i32, i32) {
    %c0_i32 = arith.constant 0 : i32
    %c0_i32_0 = arith.constant 0 : i32
    %c0_i32_1 = arith.constant 0 : i32
    return %arg0, %c0_i32, %c0_i32_0 : i32, i32, i32
  }
  func.func @transform_1(%arg0: i32) -> (i32, i32, i32) {
    %c0_i32 = arith.constant 0 : i32
    %c0_i32_0 = arith.constant 0 : i32
    %c0_i32_1 = arith.constant 0 : i32
    %c0_i32_2 = arith.constant 0 : i32
    return %c0_i32, %c0_i32_0, %c0_i32_1 : i32, i32, i32
  }
  func.func @transform_2(%arg0: i32) -> (i32, i32) {
    %c0_i32 = arith.constant 0 : i32
    %c0_i32_0 = arith.constant 0 : i32
    %c0_i32_1 = arith.constant 0 : i32
    return %c0_i32, %c0_i32_0 : i32, i32
  }
  func.func @transform_3(%arg0: i32) -> (i32, i32) {
    %c0_i32 = arith.constant 0 : i32
    %c0_i32_0 = arith.constant 0 : i32
    %c0_i32_1 = arith.constant 0 : i32
    return %c0_i32, %c0_i32_0 : i32, i32
  }
  func.func @transform_4(%arg0: i32) -> (i32, i32) {
    %c0_i32 = arith.constant 0 : i32
    %c0_i32_0 = arith.constant 0 : i32
    %c0_i32_1 = arith.constant 0 : i32
    return %c0_i32, %c0_i32_0 : i32, i32
  }
  func.func @transform_5(%arg0: i32) -> (i32, i32, i32) {
    %c0_i32 = arith.constant 0 : i32
    %c0_i32_0 = arith.constant 0 : i32
    %c0_i32_1 = arith.constant 0 : i32
    return %arg0, %c0_i32, %c0_i32_0 : i32, i32, i32
  }
}

module attributes {stable_mosaic.version = 11 : i64} {
  func.func @_attention_kernel(%arg0: i32, %arg1: memref<1x8x32xbf16, #tpu.memory_space<vmem>>, %arg2: memref<1x8x32xbf16, #tpu.memory_space<vmem>>, %arg3: memref<1x8x32xbf16, #tpu.memory_space<vmem>>, %arg4: memref<1x8x32xf32, #tpu.memory_space<vmem>>) attributes {dimension_semantics = [#tpu.dimension_semantics<parallel>], iteration_bounds = array<i64: 2>, scalar_prefetch = 0 : i64, scratch_operands = 0 : i64, tpu.core_type = #tpu.core_type<tc>, window_params = [{transform_indices = @transform_0, window_bounds = array<i64: 1, 8, 32>}, {transform_indices = @transform_1, window_bounds = array<i64: 1, 8, 32>}, {transform_indices = @transform_2, window_bounds = array<i64: 1, 8, 32>}, {transform_indices = @transform_3, window_bounds = array<i64: 1, 8, 32>}]} {
    %c0 = arith.constant 0 : index
    %c0_0 = arith.constant 0 : index
    %c0_1 = arith.constant 0 : index
    %0 = vector.load %arg1[%c0, %c0_0, %c0_1] : memref<1x8x32xbf16, #tpu.memory_space<vmem>>, vector<1x8x32xbf16>
    %1 = vector.shape_cast %0 : vector<1x8x32xbf16> to vector<8x32xbf16>
    %c0_2 = arith.constant 0 : index
    %c0_3 = arith.constant 0 : index
    %c0_4 = arith.constant 0 : index
    %2 = vector.load %arg2[%c0_2, %c0_3, %c0_4] : memref<1x8x32xbf16, #tpu.memory_space<vmem>>, vector<1x8x32xbf16>
    %3 = vector.shape_cast %2 : vector<1x8x32xbf16> to vector<8x32xbf16>
    %c0_5 = arith.constant 0 : index
    %c0_6 = arith.constant 0 : index
    %c0_7 = arith.constant 0 : index
    %4 = vector.load %arg3[%c0_5, %c0_6, %c0_7] : memref<1x8x32xbf16, #tpu.memory_space<vmem>>, vector<1x8x32xbf16>
    %5 = vector.shape_cast %4 : vector<1x8x32xbf16> to vector<8x32xbf16>
    %6 = vector.extract_strided_slice %1 {offsets = [0, 0], sizes = [8, 8], strides = [1, 1]} : vector<8x32xbf16> to vector<8x8xbf16>
    %7 = vector.extract_strided_slice %3 {offsets = [0, 0], sizes = [8, 8], strides = [1, 1]} : vector<8x32xbf16> to vector<8x8xbf16>
    %8 = vector.extract_strided_slice %5 {offsets = [0, 0], sizes = [8, 8], strides = [1, 1]} : vector<8x32xbf16> to vector<8x8xbf16>
    %cst = arith.constant dense<0.000000e+00> : vector<8x8xf32>
    %9 = tpu.matmul %6, %7, %cst {dimension_numbers = #tpu.dot_dimension_numbers<[1], [1], [0], [0], [0, 0, 1, 0], [], []>} : vector<8x8xbf16>, vector<8x8xbf16>, vector<8x8xf32> -> vector<8x8xf32>
    %cst_8 = arith.constant 0.353553385 : f32
    %10 = vector.broadcast %cst_8 : f32 to vector<8x8xf32>
    %11 = arith.mulf %9, %10 : vector<8x8xf32>
    %cst_9 = arith.constant dense<0xFF800000> : vector<8xf32>
    %12 = vector.multi_reduction <maximumf>, %11, %cst_9 [1] : vector<8x8xf32> to vector<8xf32>
    %13 = vector.shape_cast %12 : vector<8xf32> to vector<8x1xf32>
    %14 = vector.broadcast %13 : vector<8x1xf32> to vector<8x8xf32>
    %15 = arith.subf %11, %14 : vector<8x8xf32>
    %16 = math.exp %15 : vector<8x8xf32>
    %cst_10 = arith.constant dense<0.000000e+00> : vector<8xf32>
    %17 = vector.multi_reduction <add>, %16, %cst_10 [1] : vector<8x8xf32> to vector<8xf32>
    %18 = vector.shape_cast %17 : vector<8xf32> to vector<8x1xf32>
    %19 = tpu.reciprocal %18 {approx = true} : vector<8x1xf32> -> vector<8x1xf32>
    %20 = vector.broadcast %19 : vector<8x1xf32> to vector<8x8xf32>
    %21 = arith.mulf %16, %20 : vector<8x8xf32>
    %22 = arith.truncf %21 : vector<8x8xf32> to vector<8x8xbf16>
    %cst_11 = arith.constant dense<0.000000e+00> : vector<8x8xf32>
    %23 = tpu.matmul %22, %8, %cst_11 {dimension_numbers = #tpu.dot_dimension_numbers<[1], [0], [0], [1], [0, 0, 1, 1], [], []>} : vector<8x8xbf16>, vector<8x8xbf16>, vector<8x8xf32> -> vector<8x8xf32>
    %24 = vector.extract_strided_slice %1 {offsets = [0, 8], sizes = [8, 8], strides = [1, 1]} : vector<8x32xbf16> to vector<8x8xbf16>
    %25 = vector.extract_strided_slice %3 {offsets = [0, 8], sizes = [8, 8], strides = [1, 1]} : vector<8x32xbf16> to vector<8x8xbf16>
    %26 = vector.extract_strided_slice %5 {offsets = [0, 8], sizes = [8, 8], strides = [1, 1]} : vector<8x32xbf16> to vector<8x8xbf16>
    %cst_12 = arith.constant dense<0.000000e+00> : vector<8x8xf32>
    %27 = tpu.matmul %24, %25, %cst_12 {dimension_numbers = #tpu.dot_dimension_numbers<[1], [1], [0], [0], [0, 0, 1, 0], [], []>} : vector<8x8xbf16>, vector<8x8xbf16>, vector<8x8xf32> -> vector<8x8xf32>
    %cst_13 = arith.constant 0.353553385 : f32
    %28 = vector.broadcast %cst_13 : f32 to vector<8x8xf32>
    %29 = arith.mulf %27, %28 : vector<8x8xf32>
    %cst_14 = arith.constant dense<0xFF800000> : vector<8xf32>
    %30 = vector.multi_reduction <maximumf>, %29, %cst_14 [1] : vector<8x8xf32> to vector<8xf32>
    %31 = vector.shape_cast %30 : vector<8xf32> to vector<8x1xf32>
    %32 = vector.broadcast %31 : vector<8x1xf32> to vector<8x8xf32>
    %33 = arith.subf %29, %32 : vector<8x8xf32>
    %34 = math.exp %33 : vector<8x8xf32>
    %cst_15 = arith.constant dense<0.000000e+00> : vector<8xf32>
    %35 = vector.multi_reduction <add>, %34, %cst_15 [1] : vector<8x8xf32> to vector<8xf32>
    %36 = vector.shape_cast %35 : vector<8xf32> to vector<8x1xf32>
    %37 = tpu.reciprocal %36 {approx = true} : vector<8x1xf32> -> vector<8x1xf32>
    %38 = vector.broadcast %37 : vector<8x1xf32> to vector<8x8xf32>
    %39 = arith.mulf %34, %38 : vector<8x8xf32>
    %40 = arith.truncf %39 : vector<8x8xf32> to vector<8x8xbf16>
    %cst_16 = arith.constant dense<0.000000e+00> : vector<8x8xf32>
    %41 = tpu.matmul %40, %26, %cst_16 {dimension_numbers = #tpu.dot_dimension_numbers<[1], [0], [0], [1], [0, 0, 1, 1], [], []>} : vector<8x8xbf16>, vector<8x8xbf16>, vector<8x8xf32> -> vector<8x8xf32>
    %42 = vector.extract_strided_slice %1 {offsets = [0, 16], sizes = [8, 8], strides = [1, 1]} : vector<8x32xbf16> to vector<8x8xbf16>
    %43 = vector.extract_strided_slice %3 {offsets = [0, 16], sizes = [8, 8], strides = [1, 1]} : vector<8x32xbf16> to vector<8x8xbf16>
    %44 = vector.extract_strided_slice %5 {offsets = [0, 16], sizes = [8, 8], strides = [1, 1]} : vector<8x32xbf16> to vector<8x8xbf16>
    %cst_17 = arith.constant dense<0.000000e+00> : vector<8x8xf32>
    %45 = tpu.matmul %42, %43, %cst_17 {dimension_numbers = #tpu.dot_dimension_numbers<[1], [1], [0], [0], [0, 0, 1, 0], [], []>} : vector<8x8xbf16>, vector<8x8xbf16>, vector<8x8xf32> -> vector<8x8xf32>
    %cst_18 = arith.constant 0.353553385 : f32
    %46 = vector.broadcast %cst_18 : f32 to vector<8x8xf32>
    %47 = arith.mulf %45, %46 : vector<8x8xf32>
    %cst_19 = arith.constant dense<0xFF800000> : vector<8xf32>
    %48 = vector.multi_reduction <maximumf>, %47, %cst_19 [1] : vector<8x8xf32> to vector<8xf32>
    %49 = vector.shape_cast %48 : vector<8xf32> to vector<8x1xf32>
    %50 = vector.broadcast %49 : vector<8x1xf32> to vector<8x8xf32>
    %51 = arith.subf %47, %50 : vector<8x8xf32>
    %52 = math.exp %51 : vector<8x8xf32>
    %cst_20 = arith.constant dense<0.000000e+00> : vector<8xf32>
    %53 = vector.multi_reduction <add>, %52, %cst_20 [1] : vector<8x8xf32> to vector<8xf32>
    %54 = vector.shape_cast %53 : vector<8xf32> to vector<8x1xf32>
    %55 = tpu.reciprocal %54 {approx = true} : vector<8x1xf32> -> vector<8x1xf32>
    %56 = vector.broadcast %55 : vector<8x1xf32> to vector<8x8xf32>
    %57 = arith.mulf %52, %56 : vector<8x8xf32>
    %58 = arith.truncf %57 : vector<8x8xf32> to vector<8x8xbf16>
    %cst_21 = arith.constant dense<0.000000e+00> : vector<8x8xf32>
    %59 = tpu.matmul %58, %44, %cst_21 {dimension_numbers = #tpu.dot_dimension_numbers<[1], [0], [0], [1], [0, 0, 1, 1], [], []>} : vector<8x8xbf16>, vector<8x8xbf16>, vector<8x8xf32> -> vector<8x8xf32>
    %60 = vector.extract_strided_slice %1 {offsets = [0, 24], sizes = [8, 8], strides = [1, 1]} : vector<8x32xbf16> to vector<8x8xbf16>
    %61 = vector.extract_strided_slice %3 {offsets = [0, 24], sizes = [8, 8], strides = [1, 1]} : vector<8x32xbf16> to vector<8x8xbf16>
    %62 = vector.extract_strided_slice %5 {offsets = [0, 24], sizes = [8, 8], strides = [1, 1]} : vector<8x32xbf16> to vector<8x8xbf16>
    %cst_22 = arith.constant dense<0.000000e+00> : vector<8x8xf32>
    %63 = tpu.matmul %60, %61, %cst_22 {dimension_numbers = #tpu.dot_dimension_numbers<[1], [1], [0], [0], [0, 0, 1, 0], [], []>} : vector<8x8xbf16>, vector<8x8xbf16>, vector<8x8xf32> -> vector<8x8xf32>
    %cst_23 = arith.constant 0.353553385 : f32
    %64 = vector.broadcast %cst_23 : f32 to vector<8x8xf32>
    %65 = arith.mulf %63, %64 : vector<8x8xf32>
    %cst_24 = arith.constant dense<0xFF800000> : vector<8xf32>
    %66 = vector.multi_reduction <maximumf>, %65, %cst_24 [1] : vector<8x8xf32> to vector<8xf32>
    %67 = vector.shape_cast %66 : vector<8xf32> to vector<8x1xf32>
    %68 = vector.broadcast %67 : vector<8x1xf32> to vector<8x8xf32>
    %69 = arith.subf %65, %68 : vector<8x8xf32>
    %70 = math.exp %69 : vector<8x8xf32>
    %cst_25 = arith.constant dense<0.000000e+00> : vector<8xf32>
    %71 = vector.multi_reduction <add>, %70, %cst_25 [1] : vector<8x8xf32> to vector<8xf32>
    %72 = vector.shape_cast %71 : vector<8xf32> to vector<8x1xf32>
    %73 = tpu.reciprocal %72 {approx = true} : vector<8x1xf32> -> vector<8x1xf32>
    %74 = vector.broadcast %73 : vector<8x1xf32> to vector<8x8xf32>
    %75 = arith.mulf %70, %74 : vector<8x8xf32>
    %76 = arith.truncf %75 : vector<8x8xf32> to vector<8x8xbf16>
    %cst_26 = arith.constant dense<0.000000e+00> : vector<8x8xf32>
    %77 = tpu.matmul %76, %62, %cst_26 {dimension_numbers = #tpu.dot_dimension_numbers<[1], [0], [0], [1], [0, 0, 1, 1], [], []>} : vector<8x8xbf16>, vector<8x8xbf16>, vector<8x8xf32> -> vector<8x8xf32>
    %78 = tpu.concatenate %23, %41, %59, %77 in 1 : vector<8x8xf32>, vector<8x8xf32>, vector<8x8xf32>, vector<8x8xf32> -> vector<8x32xf32>
    %c0_27 = arith.constant 0 : index
    %c0_28 = arith.constant 0 : index
    %c0_29 = arith.constant 0 : index
    %79 = vector.load %arg4[%c0_27, %c0_28, %c0_29] : memref<1x8x32xf32, #tpu.memory_space<vmem>>, vector<1x8x32xf32>
    %80 = vector.shape_cast %79 : vector<1x8x32xf32> to vector<8x32xf32>
    %81 = vector.shape_cast %78 : vector<8x32xf32> to vector<1x8x32xf32>
    tpu.vector_store %arg4[%c0_27, %c0_28, %c0_29], %81 {strides = array<i32>} : memref<1x8x32xf32, #tpu.memory_space<vmem>>, vector<1x8x32xf32>,
    return
  }
  func.func @transform_0(%arg0: i32) -> (i32, i32, i32) {
    %c0_i32 = arith.constant 0 : i32
    %c0_i32_0 = arith.constant 0 : i32
    %c0_i32_1 = arith.constant 0 : i32
    return %arg0, %c0_i32, %c0_i32_0 : i32, i32, i32
  }
  func.func @transform_1(%arg0: i32) -> (i32, i32, i32) {
    %c0_i32 = arith.constant 0 : i32
    %c0_i32_0 = arith.constant 0 : i32
    %c0_i32_1 = arith.constant 0 : i32
    return %arg0, %c0_i32, %c0_i32_0 : i32, i32, i32
  }
  func.func @transform_2(%arg0: i32) -> (i32, i32, i32) {
    %c0_i32 = arith.constant 0 : i32
    %c0_i32_0 = arith.constant 0 : i32
    %c0_i32_1 = arith.constant 0 : i32
    return %arg0, %c0_i32, %c0_i32_0 : i32, i32, i32
  }
  func.func @transform_3(%arg0: i32) -> (i32, i32, i32) {
    %c0_i32 = arith.constant 0 : i32
    %c0_i32_0 = arith.constant 0 : i32
    %c0_i32_1 = arith.constant 0 : i32
    return %arg0, %c0_i32, %c0_i32_0 : i32, i32, i32
  }
}

module attributes {stable_mosaic.version = 11 : i64} {
  func.func @_matmul_bias_kernel(%arg0: i32, %arg1: memref<8x32xbf16, #tpu.memory_space<vmem>>, %arg2: memref<32x32xbf16, #tpu.memory_space<vmem>>, %arg3: memref<1x32xf32, #tpu.memory_space<vmem>>, %arg4: memref<8x32xf32, #tpu.memory_space<vmem>>) attributes {dimension_semantics = [#tpu.dimension_semantics<parallel>], iteration_bounds = array<i64: 2>, scalar_prefetch = 0 : i64, scratch_operands = 0 : i64, tpu.core_type = #tpu.core_type<tc>, window_params = [{transform_indices = @transform_0, window_bounds = array<i64: 8, 32>}, {pipeline_mode = #tpu.pipeline_mode<synchronous>, transform_indices = @transform_1, window_bounds = array<i64: 32, 32>}, {pipeline_mode = #tpu.pipeline_mode<synchronous>, transform_indices = @transform_2, window_bounds = array<i64: 1, 32>}, {transform_indices = @transform_3, window_bounds = array<i64: 8, 32>}]} {
    %c0 = arith.constant 0 : index
    %c0_0 = arith.constant 0 : index
    %0 = vector.load %arg1[%c0, %c0_0] : memref<8x32xbf16, #tpu.memory_space<vmem>>, vector<8x32xbf16>
    %c0_1 = arith.constant 0 : index
    %c0_2 = arith.constant 0 : index
    %1 = vector.load %arg2[%c0_1, %c0_2] : memref<32x32xbf16, #tpu.memory_space<vmem>>, vector<32x32xbf16>
    %cst = arith.constant dense<0.000000e+00> : vector<8x32xf32>
    %2 = tpu.matmul %0, %1, %cst {dimension_numbers = #tpu.dot_dimension_numbers<[1], [0], [0], [1], [0, 0, 1, 1], [], []>} : vector<8x32xbf16>, vector<32x32xbf16>, vector<8x32xf32> -> vector<8x32xf32>
    %c0_3 = arith.constant 0 : index
    %c0_4 = arith.constant 0 : index
    %3 = vector.load %arg3[%c0_3, %c0_4] : memref<1x32xf32, #tpu.memory_space<vmem>>, vector<1x32xf32>
    %4 = vector.broadcast %3 : vector<1x32xf32> to vector<8x32xf32>
    %5 = arith.addf %2, %4 : vector<8x32xf32>
    %c0_5 = arith.constant 0 : index
    %c0_6 = arith.constant 0 : index
    %6 = vector.load %arg4[%c0_5, %c0_6] : memref<8x32xf32, #tpu.memory_space<vmem>>, vector<8x32xf32>
    tpu.vector_store %arg4[%c0_5, %c0_6], %5 {strides = array<i32>} : memref<8x32xf32, #tpu.memory_space<vmem>>, vector<8x32xf32>,
    return
  }
  func.func @transform_0(%arg0: i32) -> (i32, i32) {
    %c0_i32 = arith.constant 0 : i32
    %c0_i32_0 = arith.constant 0 : i32
    return %arg0, %c0_i32 : i32, i32
  }
  func.func @transform_1(%arg0: i32) -> (i32, i32) {
    %c0_i32 = arith.constant 0 : i32
    %c0_i32_0 = arith.constant 0 : i32
    %c0_i32_1 = arith.constant 0 : i32
    return %c0_i32, %c0_i32_0 : i32, i32
  }
  func.func @transform_2(%arg0: i32) -> (i32, i32) {
    %c0_i32 = arith.constant 0 : i32
    %c0_i32_0 = arith.constant 0 : i32
    %c0_i32_1 = arith.constant 0 : i32
    return %c0_i32, %c0_i32_0 : i32, i32
  }
  func.func @transform_3(%arg0: i32) -> (i32, i32) {
    %c0_i32 = arith.constant 0 : i32
    %c0_i32_0 = arith.constant 0 : i32
    return %arg0, %c0_i32 : i32, i32
  }
}

module attributes {stable_mosaic.version = 11 : i64} {
  func.func @_add_layernorm_kernel(%arg0: i32, %arg1: memref<8x32xf32, #tpu.memory_space<vmem>>, %arg2: memref<8x32xf32, #tpu.memory_space<vmem>>, %arg3: memref<1x32xf32, #tpu.memory_space<vmem>>, %arg4: memref<1x32xf32, #tpu.memory_space<vmem>>, %arg5: memref<8x32xf32, #tpu.memory_space<vmem>>) attributes {dimension_semantics = [#tpu.dimension_semantics<parallel>], iteration_bounds = array<i64: 2>, scalar_prefetch = 0 : i64, scratch_operands = 0 : i64, tpu.core_type = #tpu.core_type<tc>, window_params = [{transform_indices = @transform_0, window_bounds = array<i64: 8, 32>}, {transform_indices = @transform_1, window_bounds = array<i64: 8, 32>}, {pipeline_mode = #tpu.pipeline_mode<synchronous>, transform_indices = @transform_2, window_bounds = array<i64: 1, 32>}, {pipeline_mode = #tpu.pipeline_mode<synchronous>, transform_indices = @transform_3, window_bounds = array<i64: 1, 32>}, {transform_indices = @transform_4, window_bounds = array<i64: 8, 32>}]} {
    %c0 = arith.constant 0 : index
    %c0_0 = arith.constant 0 : index
    %0 = vector.load %arg1[%c0, %c0_0] : memref<8x32xf32, #tpu.memory_space<vmem>>, vector<8x32xf32>
    %c0_1 = arith.constant 0 : index
    %c0_2 = arith.constant 0 : index
    %1 = vector.load %arg2[%c0_1, %c0_2] : memref<8x32xf32, #tpu.memory_space<vmem>>, vector<8x32xf32>
    %2 = arith.addf %0, %1 : vector<8x32xf32>
    %c0_3 = arith.constant 0 : index
    %c0_4 = arith.constant 0 : index
    %3 = vector.load %arg3[%c0_3, %c0_4] : memref<1x32xf32, #tpu.memory_space<vmem>>, vector<1x32xf32>
    %c0_5 = arith.constant 0 : index
    %c0_6 = arith.constant 0 : index
    %4 = vector.load %arg4[%c0_5, %c0_6] : memref<1x32xf32, #tpu.memory_space<vmem>>, vector<1x32xf32>
    %cst = arith.constant dense<0.000000e+00> : vector<8xf32>
    %5 = vector.multi_reduction <add>, %2, %cst [1] : vector<8x32xf32> to vector<8xf32>
    %6 = vector.shape_cast %5 : vector<8xf32> to vector<8x1xf32>
    %cst_7 = arith.constant 3.200000e+01 : f32
    %7 = vector.broadcast %cst_7 : f32 to vector<8x1xf32>
    %8 = arith.divf %6, %7 : vector<8x1xf32>
    %9 = vector.broadcast %8 : vector<8x1xf32> to vector<8x32xf32>
    %10 = arith.subf %2, %9 : vector<8x32xf32>
    %11 = arith.mulf %10, %10 : vector<8x32xf32>
    %cst_8 = arith.constant dense<0.000000e+00> : vector<8xf32>
    %12 = vector.multi_reduction <add>, %11, %cst_8 [1] : vector<8x32xf32> to vector<8xf32>
    %13 = vector.shape_cast %12 : vector<8xf32> to vector<8x1xf32>
    %cst_9 = arith.constant 3.200000e+01 : f32
    %14 = vector.broadcast %cst_9 : f32 to vector<8x1xf32>
    %15 = arith.divf %13, %14 : vector<8x1xf32>
    %cst_10 = arith.constant 9.99999974E-6 : f32
    %16 = vector.broadcast %cst_10 : f32 to vector<8x1xf32>
    %17 = arith.addf %15, %16 : vector<8x1xf32>
    %18 = math.rsqrt %17 : vector<8x1xf32>
    %19 = vector.broadcast %18 : vector<8x1xf32> to vector<8x32xf32>
    %20 = arith.mulf %10, %19 : vector<8x32xf32>
    %21 = vector.broadcast %3 : vector<1x32xf32> to vector<8x32xf32>
    %22 = arith.mulf %20, %21 : vector<8x32xf32>
    %23 = vector.broadcast %4 : vector<1x32xf32> to vector<8x32xf32>
    %24 = arith.addf %22, %23 : vector<8x32xf32>
    %c0_11 = arith.constant 0 : index
    %c0_12 = arith.constant 0 : index
    %25 = vector.load %arg5[%c0_11, %c0_12] : memref<8x32xf32, #tpu.memory_space<vmem>>, vector<8x32xf32>
    tpu.vector_store %arg5[%c0_11, %c0_12], %24 {strides = array<i32>} : memref<8x32xf32, #tpu.memory_space<vmem>>, vector<8x32xf32>,
    return
  }
  func.func @transform_0(%arg0: i32) -> (i32, i32) {
    %c0_i32 = arith.constant 0 : i32
    %c0_i32_0 = arith.constant 0 : i32
    return %arg0, %c0_i32 : i32, i32
  }
  func.func @transform_1(%arg0: i32) -> (i32, i32) {
    %c0_i32 = arith.constant 0 : i32
    %c0_i32_0 = arith.constant 0 : i32
    return %arg0, %c0_i32 : i32, i32
  }
  func.func @transform_2(%arg0: i32) -> (i32, i32) {
    %c0_i32 = arith.constant 0 : i32
    %c0_i32_0 = arith.constant 0 : i32
    %c0_i32_1 = arith.constant 0 : i32
    return %c0_i32, %c0_i32_0 : i32, i32
  }
  func.func @transform_3(%arg0: i32) -> (i32, i32) {
    %c0_i32 = arith.constant 0 : i32
    %c0_i32_0 = arith.constant 0 : i32
    %c0_i32_1 = arith.constant 0 : i32
    return %c0_i32, %c0_i32_0 : i32, i32
  }
  func.func @transform_4(%arg0: i32) -> (i32, i32) {
    %c0_i32 = arith.constant 0 : i32
    %c0_i32_0 = arith.constant 0 : i32
    return %arg0, %c0_i32 : i32, i32
  }
}

module attributes {stable_mosaic.version = 11 : i64} {
  func.func @_layernorm_kernel(%arg0: i32, %arg1: memref<8x32xf32, #tpu.memory_space<vmem>>, %arg2: memref<1x32xf32, #tpu.memory_space<vmem>>, %arg3: memref<1x32xf32, #tpu.memory_space<vmem>>, %arg4: memref<8x32xf32, #tpu.memory_space<vmem>>) attributes {dimension_semantics = [#tpu.dimension_semantics<parallel>], iteration_bounds = array<i64: 2>, scalar_prefetch = 0 : i64, scratch_operands = 0 : i64, tpu.core_type = #tpu.core_type<tc>, window_params = [{transform_indices = @transform_0, window_bounds = array<i64: 8, 32>}, {pipeline_mode = #tpu.pipeline_mode<synchronous>, transform_indices = @transform_1, window_bounds = array<i64: 1, 32>}, {pipeline_mode = #tpu.pipeline_mode<synchronous>, transform_indices = @transform_2, window_bounds = array<i64: 1, 32>}, {transform_indices = @transform_3, window_bounds = array<i64: 8, 32>}]} {
    %c0 = arith.constant 0 : index
    %c0_0 = arith.constant 0 : index
    %0 = vector.load %arg1[%c0, %c0_0] : memref<8x32xf32, #tpu.memory_space<vmem>>, vector<8x32xf32>
    %c0_1 = arith.constant 0 : index
    %c0_2 = arith.constant 0 : index
    %1 = vector.load %arg2[%c0_1, %c0_2] : memref<1x32xf32, #tpu.memory_space<vmem>>, vector<1x32xf32>
    %c0_3 = arith.constant 0 : index
    %c0_4 = arith.constant 0 : index
    %2 = vector.load %arg3[%c0_3, %c0_4] : memref<1x32xf32, #tpu.memory_space<vmem>>, vector<1x32xf32>
    %cst = arith.constant dense<0.000000e+00> : vector<8xf32>
    %3 = vector.multi_reduction <add>, %0, %cst [1] : vector<8x32xf32> to vector<8xf32>
    %4 = vector.shape_cast %3 : vector<8xf32> to vector<8x1xf32>
    %cst_5 = arith.constant 3.200000e+01 : f32
    %5 = vector.broadcast %cst_5 : f32 to vector<8x1xf32>
    %6 = arith.divf %4, %5 : vector<8x1xf32>
    %7 = vector.broadcast %6 : vector<8x1xf32> to vector<8x32xf32>
    %8 = arith.subf %0, %7 : vector<8x32xf32>
    %9 = arith.mulf %8, %8 : vector<8x32xf32>
    %cst_6 = arith.constant dense<0.000000e+00> : vector<8xf32>
    %10 = vector.multi_reduction <add>, %9, %cst_6 [1] : vector<8x32xf32> to vector<8xf32>
    %11 = vector.shape_cast %10 : vector<8xf32> to vector<8x1xf32>
    %cst_7 = arith.constant 3.200000e+01 : f32
    %12 = vector.broadcast %cst_7 : f32 to vector<8x1xf32>
    %13 = arith.divf %11, %12 : vector<8x1xf32>
    %cst_8 = arith.constant 9.99999974E-6 : f32
    %14 = vector.broadcast %cst_8 : f32 to vector<8x1xf32>
    %15 = arith.addf %13, %14 : vector<8x1xf32>
    %16 = math.rsqrt %15 : vector<8x1xf32>
    %17 = vector.broadcast %16 : vector<8x1xf32> to vector<8x32xf32>
    %18 = arith.mulf %8, %17 : vector<8x32xf32>
    %19 = vector.broadcast %1 : vector<1x32xf32> to vector<8x32xf32>
    %20 = arith.mulf %18, %19 : vector<8x32xf32>
    %21 = vector.broadcast %2 : vector<1x32xf32> to vector<8x32xf32>
    %22 = arith.addf %20, %21 : vector<8x32xf32>
    %c0_9 = arith.constant 0 : index
    %c0_10 = arith.constant 0 : index
    %23 = vector.load %arg4[%c0_9, %c0_10] : memref<8x32xf32, #tpu.memory_space<vmem>>, vector<8x32xf32>
    tpu.vector_store %arg4[%c0_9, %c0_10], %22 {strides = array<i32>} : memref<8x32xf32, #tpu.memory_space<vmem>>, vector<8x32xf32>,
    return
  }
  func.func @transform_0(%arg0: i32) -> (i32, i32) {
    %c0_i32 = arith.constant 0 : i32
    %c0_i32_0 = arith.constant 0 : i32
    return %arg0, %c0_i32 : i32, i32
  }
  func.func @transform_1(%arg0: i32) -> (i32, i32) {
    %c0_i32 = arith.constant 0 : i32
    %c0_i32_0 = arith.constant 0 : i32
    %c0_i32_1 = arith.constant 0 : i32
    return %c0_i32, %c0_i32_0 : i32, i32
  }
  func.func @transform_2(%arg0: i32) -> (i32, i32) {
    %c0_i32 = arith.constant 0 : i32
    %c0_i32_0 = arith.constant 0 : i32
    %c0_i32_1 = arith.constant 0 : i32
    return %c0_i32, %c0_i32_0 : i32, i32
  }
  func.func @transform_3(%arg0: i32) -> (i32, i32) {
    %c0_i32 = arith.constant 0 : i32
    %c0_i32_0 = arith.constant 0 : i32
    return %arg0, %c0_i32 : i32, i32
  }
}

module attributes {stable_mosaic.version = 11 : i64} {
  func.func @_dual_proj_kernel(%arg0: i32, %arg1: memref<1x8x32xf32, #tpu.memory_space<vmem>>, %arg2: memref<1x8x32xf32, #tpu.memory_space<vmem>>, %arg3: memref<32x32xbf16, #tpu.memory_space<vmem>>, %arg4: memref<32x32xbf16, #tpu.memory_space<vmem>>, %arg5: memref<1x64xf32, #tpu.memory_space<vmem>>, %arg6: memref<1x8x64xf32, #tpu.memory_space<vmem>>) attributes {dimension_semantics = [#tpu.dimension_semantics<parallel>], iteration_bounds = array<i64: 2>, scalar_prefetch = 0 : i64, scratch_operands = 0 : i64, tpu.core_type = #tpu.core_type<tc>, window_params = [{transform_indices = @transform_0, window_bounds = array<i64: 1, 8, 32>}, {pipeline_mode = #tpu.pipeline_mode<synchronous>, transform_indices = @transform_1, window_bounds = array<i64: 1, 8, 32>}, {pipeline_mode = #tpu.pipeline_mode<synchronous>, transform_indices = @transform_2, window_bounds = array<i64: 32, 32>}, {pipeline_mode = #tpu.pipeline_mode<synchronous>, transform_indices = @transform_3, window_bounds = array<i64: 32, 32>}, {pipeline_mode = #tpu.pipeline_mode<synchronous>, transform_indices = @transform_4, window_bounds = array<i64: 1, 64>}, {transform_indices = @transform_5, window_bounds = array<i64: 1, 8, 64>}]} {
    %c0 = arith.constant 0 : index
    %c0_0 = arith.constant 0 : index
    %c0_1 = arith.constant 0 : index
    %0 = vector.load %arg1[%c0, %c0_0, %c0_1] : memref<1x8x32xf32, #tpu.memory_space<vmem>>, vector<1x8x32xf32>
    %1 = vector.shape_cast %0 : vector<1x8x32xf32> to vector<8x32xf32>
    %c0_2 = arith.constant 0 : index
    %c0_3 = arith.constant 0 : index
    %c0_4 = arith.constant 0 : index
    %2 = vector.load %arg2[%c0_2, %c0_3, %c0_4] : memref<1x8x32xf32, #tpu.memory_space<vmem>>, vector<1x8x32xf32>
    %3 = vector.shape_cast %2 : vector<1x8x32xf32> to vector<8x32xf32>
    %4 = arith.addf %1, %3 : vector<8x32xf32>
    %5 = arith.truncf %4 : vector<8x32xf32> to vector<8x32xbf16>
    %c0_5 = arith.constant 0 : index
    %c0_6 = arith.constant 0 : index
    %6 = vector.load %arg3[%c0_5, %c0_6] : memref<32x32xbf16, #tpu.memory_space<vmem>>, vector<32x32xbf16>
    %cst = arith.constant dense<0.000000e+00> : vector<8x32xf32>
    %7 = tpu.matmul %5, %6, %cst {dimension_numbers = #tpu.dot_dimension_numbers<[1], [0], [0], [1], [0, 0, 1, 1], [], []>} : vector<8x32xbf16>, vector<32x32xbf16>, vector<8x32xf32> -> vector<8x32xf32>
    %8 = arith.truncf %1 : vector<8x32xf32> to vector<8x32xbf16>
    %c0_7 = arith.constant 0 : index
    %c0_8 = arith.constant 0 : index
    %9 = vector.load %arg4[%c0_7, %c0_8] : memref<32x32xbf16, #tpu.memory_space<vmem>>, vector<32x32xbf16>
    %cst_9 = arith.constant dense<0.000000e+00> : vector<8x32xf32>
    %10 = tpu.matmul %8, %9, %cst_9 {dimension_numbers = #tpu.dot_dimension_numbers<[1], [0], [0], [1], [0, 0, 1, 1], [], []>} : vector<8x32xbf16>, vector<32x32xbf16>, vector<8x32xf32> -> vector<8x32xf32>
    %11 = tpu.concatenate %7, %10 in 1 : vector<8x32xf32>, vector<8x32xf32> -> vector<8x64xf32>
    %c0_10 = arith.constant 0 : index
    %c0_11 = arith.constant 0 : index
    %12 = vector.load %arg5[%c0_10, %c0_11] : memref<1x64xf32, #tpu.memory_space<vmem>>, vector<1x64xf32>
    %13 = vector.broadcast %12 : vector<1x64xf32> to vector<8x64xf32>
    %14 = arith.addf %11, %13 : vector<8x64xf32>
    %c0_12 = arith.constant 0 : index
    %c0_13 = arith.constant 0 : index
    %c0_14 = arith.constant 0 : index
    %15 = vector.load %arg6[%c0_12, %c0_13, %c0_14] : memref<1x8x64xf32, #tpu.memory_space<vmem>>, vector<1x8x64xf32>
    %16 = vector.shape_cast %15 : vector<1x8x64xf32> to vector<8x64xf32>
    %17 = vector.shape_cast %14 : vector<8x64xf32> to vector<1x8x64xf32>
    tpu.vector_store %arg6[%c0_12, %c0_13, %c0_14], %17 {strides = array<i32>} : memref<1x8x64xf32, #tpu.memory_space<vmem>>, vector<1x8x64xf32>,
    return
  }
  func.func @transform_0(%arg0: i32) -> (i32, i32, i32) {
    %c0_i32 = arith.constant 0 : i32
    %c0_i32_0 = arith.constant 0 : i32
    %c0_i32_1 = arith.constant 0 : i32
    return %arg0, %c0_i32, %c0_i32_0 : i32, i32, i32
  }
  func.func @transform_1(%arg0: i32) -> (i32, i32, i32) {
    %c0_i32 = arith.constant 0 : i32
    %c0_i32_0 = arith.constant 0 : i32
    %c0_i32_1 = arith.constant 0 : i32
    %c0_i32_2 = arith.constant 0 : i32
    return %c0_i32, %c0_i32_0, %c0_i32_1 : i32, i32, i32
  }
  func.func @transform_2(%arg0: i32) -> (i32, i32) {
    %c0_i32 = arith.constant 0 : i32
    %c0_i32_0 = arith.constant 0 : i32
    %c0_i32_1 = arith.constant 0 : i32
    return %c0_i32, %c0_i32_0 : i32, i32
  }
  func.func @transform_3(%arg0: i32) -> (i32, i32) {
    %c0_i32 = arith.constant 0 : i32
    %c0_i32_0 = arith.constant 0 : i32
    %c0_i32_1 = arith.constant 0 : i32
    return %c0_i32, %c0_i32_0 : i32, i32
  }
  func.func @transform_4(%arg0: i32) -> (i32, i32) {
    %c0_i32 = arith.constant 0 : i32
    %c0_i32_0 = arith.constant 0 : i32
    %c0_i32_1 = arith.constant 0 : i32
    return %c0_i32, %c0_i32_0 : i32, i32
  }
  func.func @transform_5(%arg0: i32) -> (i32, i32, i32) {
    %c0_i32 = arith.constant 0 : i32
    %c0_i32_0 = arith.constant 0 : i32
    %c0_i32_1 = arith.constant 0 : i32
    return %arg0, %c0_i32, %c0_i32_0 : i32, i32, i32
  }
}

module attributes {stable_mosaic.version = 11 : i64} {
  func.func @_attention_kernel(%arg0: i32, %arg1: memref<1x16x32xbf16, #tpu.memory_space<vmem>>, %arg2: memref<1x16x32xbf16, #tpu.memory_space<vmem>>, %arg3: memref<1x16x32xbf16, #tpu.memory_space<vmem>>, %arg4: memref<1x16x32xf32, #tpu.memory_space<vmem>>) attributes {dimension_semantics = [#tpu.dimension_semantics<parallel>], iteration_bounds = array<i64: 2>, scalar_prefetch = 0 : i64, scratch_operands = 0 : i64, tpu.core_type = #tpu.core_type<tc>, window_params = [{transform_indices = @transform_0, window_bounds = array<i64: 1, 16, 32>}, {transform_indices = @transform_1, window_bounds = array<i64: 1, 16, 32>}, {transform_indices = @transform_2, window_bounds = array<i64: 1, 16, 32>}, {transform_indices = @transform_3, window_bounds = array<i64: 1, 16, 32>}]} {
    %c0 = arith.constant 0 : index
    %c0_0 = arith.constant 0 : index
    %c0_1 = arith.constant 0 : index
    %0 = vector.load %arg1[%c0, %c0_0, %c0_1] : memref<1x16x32xbf16, #tpu.memory_space<vmem>>, vector<1x16x32xbf16>
    %1 = vector.shape_cast %0 : vector<1x16x32xbf16> to vector<16x32xbf16>
    %c0_2 = arith.constant 0 : index
    %c0_3 = arith.constant 0 : index
    %c0_4 = arith.constant 0 : index
    %2 = vector.load %arg2[%c0_2, %c0_3, %c0_4] : memref<1x16x32xbf16, #tpu.memory_space<vmem>>, vector<1x16x32xbf16>
    %3 = vector.shape_cast %2 : vector<1x16x32xbf16> to vector<16x32xbf16>
    %c0_5 = arith.constant 0 : index
    %c0_6 = arith.constant 0 : index
    %c0_7 = arith.constant 0 : index
    %4 = vector.load %arg3[%c0_5, %c0_6, %c0_7] : memref<1x16x32xbf16, #tpu.memory_space<vmem>>, vector<1x16x32xbf16>
    %5 = vector.shape_cast %4 : vector<1x16x32xbf16> to vector<16x32xbf16>
    %6 = tpu.iota {dimensions = array<i32: 0>} : vector<16x16xi32>
    %7 = tpu.iota {dimensions = array<i32: 1>} : vector<16x16xi32>
    %8 = arith.cmpi sgt, %7, %6 : vector<16x16xi32>
    %9 = vector.extract_strided_slice %1 {offsets = [0, 0], sizes = [16, 8], strides = [1, 1]} : vector<16x32xbf16> to vector<16x8xbf16>
    %10 = vector.extract_strided_slice %3 {offsets = [0, 0], sizes = [16, 8], strides = [1, 1]} : vector<16x32xbf16> to vector<16x8xbf16>
    %11 = vector.extract_strided_slice %5 {offsets = [0, 0], sizes = [16, 8], strides = [1, 1]} : vector<16x32xbf16> to vector<16x8xbf16>
    %cst = arith.constant dense<0.000000e+00> : vector<16x16xf32>
    %12 = tpu.matmul %9, %10, %cst {dimension_numbers = #tpu.dot_dimension_numbers<[1], [1], [0], [0], [0, 0, 1, 0], [], []>} : vector<16x8xbf16>, vector<16x8xbf16>, vector<16x16xf32> -> vector<16x16xf32>
    %cst_8 = arith.constant 0xFF800000 : f32
    %13 = vector.broadcast %cst_8 : f32 to vector<16x16xf32>
    %14 = arith.select %8, %13, %12 : vector<16x16xi1>, vector<16x16xf32>
    %cst_9 = arith.constant 0.353553385 : f32
    %15 = vector.broadcast %cst_9 : f32 to vector<16x16xf32>
    %16 = arith.mulf %14, %15 : vector<16x16xf32>
    %cst_10 = arith.constant dense<0xFF800000> : vector<16xf32>
    %17 = vector.multi_reduction <maximumf>, %16, %cst_10 [1] : vector<16x16xf32> to vector<16xf32>
    %18 = vector.shape_cast %17 : vector<16xf32> to vector<16x1xf32>
    %19 = vector.broadcast %18 : vector<16x1xf32> to vector<16x16xf32>
    %20 = arith.subf %16, %19 : vector<16x16xf32>
    %21 = math.exp %20 : vector<16x16xf32>
    %cst_11 = arith.constant dense<0.000000e+00> : vector<16xf32>
    %22 = vector.multi_reduction <add>, %21, %cst_11 [1] : vector<16x16xf32> to vector<16xf32>
    %23 = vector.shape_cast %22 : vector<16xf32> to vector<16x1xf32>
    %24 = tpu.reciprocal %23 {approx = true} : vector<16x1xf32> -> vector<16x1xf32>
    %25 = vector.broadcast %24 : vector<16x1xf32> to vector<16x16xf32>
    %26 = arith.mulf %21, %25 : vector<16x16xf32>
    %27 = arith.truncf %26 : vector<16x16xf32> to vector<16x16xbf16>
    %cst_12 = arith.constant dense<0.000000e+00> : vector<16x8xf32>
    %28 = tpu.matmul %27, %11, %cst_12 {dimension_numbers = #tpu.dot_dimension_numbers<[1], [0], [0], [1], [0, 0, 1, 1], [], []>} : vector<16x16xbf16>, vector<16x8xbf16>, vector<16x8xf32> -> vector<16x8xf32>
    %29 = vector.extract_strided_slice %1 {offsets = [0, 8], sizes = [16, 8], strides = [1, 1]} : vector<16x32xbf16> to vector<16x8xbf16>
    %30 = vector.extract_strided_slice %3 {offsets = [0, 8], sizes = [16, 8], strides = [1, 1]} : vector<16x32xbf16> to vector<16x8xbf16>
    %31 = vector.extract_strided_slice %5 {offsets = [0, 8], sizes = [16, 8], strides = [1, 1]} : vector<16x32xbf16> to vector<16x8xbf16>
    %cst_13 = arith.constant dense<0.000000e+00> : vector<16x16xf32>
    %32 = tpu.matmul %29, %30, %cst_13 {dimension_numbers = #tpu.dot_dimension_numbers<[1], [1], [0], [0], [0, 0, 1, 0], [], []>} : vector<16x8xbf16>, vector<16x8xbf16>, vector<16x16xf32> -> vector<16x16xf32>
    %cst_14 = arith.constant 0xFF800000 : f32
    %33 = vector.broadcast %cst_14 : f32 to vector<16x16xf32>
    %34 = arith.select %8, %33, %32 : vector<16x16xi1>, vector<16x16xf32>
    %cst_15 = arith.constant 0.353553385 : f32
    %35 = vector.broadcast %cst_15 : f32 to vector<16x16xf32>
    %36 = arith.mulf %34, %35 : vector<16x16xf32>
    %cst_16 = arith.constant dense<0xFF800000> : vector<16xf32>
    %37 = vector.multi_reduction <maximumf>, %36, %cst_16 [1] : vector<16x16xf32> to vector<16xf32>
    %38 = vector.shape_cast %37 : vector<16xf32> to vector<16x1xf32>
    %39 = vector.broadcast %38 : vector<16x1xf32> to vector<16x16xf32>
    %40 = arith.subf %36, %39 : vector<16x16xf32>
    %41 = math.exp %40 : vector<16x16xf32>
    %cst_17 = arith.constant dense<0.000000e+00> : vector<16xf32>
    %42 = vector.multi_reduction <add>, %41, %cst_17 [1] : vector<16x16xf32> to vector<16xf32>
    %43 = vector.shape_cast %42 : vector<16xf32> to vector<16x1xf32>
    %44 = tpu.reciprocal %43 {approx = true} : vector<16x1xf32> -> vector<16x1xf32>
    %45 = vector.broadcast %44 : vector<16x1xf32> to vector<16x16xf32>
    %46 = arith.mulf %41, %45 : vector<16x16xf32>
    %47 = arith.truncf %46 : vector<16x16xf32> to vector<16x16xbf16>
    %cst_18 = arith.constant dense<0.000000e+00> : vector<16x8xf32>
    %48 = tpu.matmul %47, %31, %cst_18 {dimension_numbers = #tpu.dot_dimension_numbers<[1], [0], [0], [1], [0, 0, 1, 1], [], []>} : vector<16x16xbf16>, vector<16x8xbf16>, vector<16x8xf32> -> vector<16x8xf32>
    %49 = vector.extract_strided_slice %1 {offsets = [0, 16], sizes = [16, 8], strides = [1, 1]} : vector<16x32xbf16> to vector<16x8xbf16>
    %50 = vector.extract_strided_slice %3 {offsets = [0, 16], sizes = [16, 8], strides = [1, 1]} : vector<16x32xbf16> to vector<16x8xbf16>
    %51 = vector.extract_strided_slice %5 {offsets = [0, 16], sizes = [16, 8], strides = [1, 1]} : vector<16x32xbf16> to vector<16x8xbf16>
    %cst_19 = arith.constant dense<0.000000e+00> : vector<16x16xf32>
    %52 = tpu.matmul %49, %50, %cst_19 {dimension_numbers = #tpu.dot_dimension_numbers<[1], [1], [0], [0], [0, 0, 1, 0], [], []>} : vector<16x8xbf16>, vector<16x8xbf16>, vector<16x16xf32> -> vector<16x16xf32>
    %cst_20 = arith.constant 0xFF800000 : f32
    %53 = vector.broadcast %cst_20 : f32 to vector<16x16xf32>
    %54 = arith.select %8, %53, %52 : vector<16x16xi1>, vector<16x16xf32>
    %cst_21 = arith.constant 0.353553385 : f32
    %55 = vector.broadcast %cst_21 : f32 to vector<16x16xf32>
    %56 = arith.mulf %54, %55 : vector<16x16xf32>
    %cst_22 = arith.constant dense<0xFF800000> : vector<16xf32>
    %57 = vector.multi_reduction <maximumf>, %56, %cst_22 [1] : vector<16x16xf32> to vector<16xf32>
    %58 = vector.shape_cast %57 : vector<16xf32> to vector<16x1xf32>
    %59 = vector.broadcast %58 : vector<16x1xf32> to vector<16x16xf32>
    %60 = arith.subf %56, %59 : vector<16x16xf32>
    %61 = math.exp %60 : vector<16x16xf32>
    %cst_23 = arith.constant dense<0.000000e+00> : vector<16xf32>
    %62 = vector.multi_reduction <add>, %61, %cst_23 [1] : vector<16x16xf32> to vector<16xf32>
    %63 = vector.shape_cast %62 : vector<16xf32> to vector<16x1xf32>
    %64 = tpu.reciprocal %63 {approx = true} : vector<16x1xf32> -> vector<16x1xf32>
    %65 = vector.broadcast %64 : vector<16x1xf32> to vector<16x16xf32>
    %66 = arith.mulf %61, %65 : vector<16x16xf32>
    %67 = arith.truncf %66 : vector<16x16xf32> to vector<16x16xbf16>
    %cst_24 = arith.constant dense<0.000000e+00> : vector<16x8xf32>
    %68 = tpu.matmul %67, %51, %cst_24 {dimension_numbers = #tpu.dot_dimension_numbers<[1], [0], [0], [1], [0, 0, 1, 1], [], []>} : vector<16x16xbf16>, vector<16x8xbf16>, vector<16x8xf32> -> vector<16x8xf32>
    %69 = vector.extract_strided_slice %1 {offsets = [0, 24], sizes = [16, 8], strides = [1, 1]} : vector<16x32xbf16> to vector<16x8xbf16>
    %70 = vector.extract_strided_slice %3 {offsets = [0, 24], sizes = [16, 8], strides = [1, 1]} : vector<16x32xbf16> to vector<16x8xbf16>
    %71 = vector.extract_strided_slice %5 {offsets = [0, 24], sizes = [16, 8], strides = [1, 1]} : vector<16x32xbf16> to vector<16x8xbf16>
    %cst_25 = arith.constant dense<0.000000e+00> : vector<16x16xf32>
    %72 = tpu.matmul %69, %70, %cst_25 {dimension_numbers = #tpu.dot_dimension_numbers<[1], [1], [0], [0], [0, 0, 1, 0], [], []>} : vector<16x8xbf16>, vector<16x8xbf16>, vector<16x16xf32> -> vector<16x16xf32>
    %cst_26 = arith.constant 0xFF800000 : f32
    %73 = vector.broadcast %cst_26 : f32 to vector<16x16xf32>
    %74 = arith.select %8, %73, %72 : vector<16x16xi1>, vector<16x16xf32>
    %cst_27 = arith.constant 0.353553385 : f32
    %75 = vector.broadcast %cst_27 : f32 to vector<16x16xf32>
    %76 = arith.mulf %74, %75 : vector<16x16xf32>
    %cst_28 = arith.constant dense<0xFF800000> : vector<16xf32>
    %77 = vector.multi_reduction <maximumf>, %76, %cst_28 [1] : vector<16x16xf32> to vector<16xf32>
    %78 = vector.shape_cast %77 : vector<16xf32> to vector<16x1xf32>
    %79 = vector.broadcast %78 : vector<16x1xf32> to vector<16x16xf32>
    %80 = arith.subf %76, %79 : vector<16x16xf32>
    %81 = math.exp %80 : vector<16x16xf32>
    %cst_29 = arith.constant dense<0.000000e+00> : vector<16xf32>
    %82 = vector.multi_reduction <add>, %81, %cst_29 [1] : vector<16x16xf32> to vector<16xf32>
    %83 = vector.shape_cast %82 : vector<16xf32> to vector<16x1xf32>
    %84 = tpu.reciprocal %83 {approx = true} : vector<16x1xf32> -> vector<16x1xf32>
    %85 = vector.broadcast %84 : vector<16x1xf32> to vector<16x16xf32>
    %86 = arith.mulf %81, %85 : vector<16x16xf32>
    %87 = arith.truncf %86 : vector<16x16xf32> to vector<16x16xbf16>
    %cst_30 = arith.constant dense<0.000000e+00> : vector<16x8xf32>
    %88 = tpu.matmul %87, %71, %cst_30 {dimension_numbers = #tpu.dot_dimension_numbers<[1], [0], [0], [1], [0, 0, 1, 1], [], []>} : vector<16x16xbf16>, vector<16x8xbf16>, vector<16x8xf32> -> vector<16x8xf32>
    %89 = tpu.concatenate %28, %48, %68, %88 in 1 : vector<16x8xf32>, vector<16x8xf32>, vector<16x8xf32>, vector<16x8xf32> -> vector<16x32xf32>
    %c0_31 = arith.constant 0 : index
    %c0_32 = arith.constant 0 : index
    %c0_33 = arith.constant 0 : index
    %90 = vector.load %arg4[%c0_31, %c0_32, %c0_33] : memref<1x16x32xf32, #tpu.memory_space<vmem>>, vector<1x16x32xf32>
    %91 = vector.shape_cast %90 : vector<1x16x32xf32> to vector<16x32xf32>
    %92 = vector.shape_cast %89 : vector<16x32xf32> to vector<1x16x32xf32>
    tpu.vector_store %arg4[%c0_31, %c0_32, %c0_33], %92 {strides = array<i32>} : memref<1x16x32xf32, #tpu.memory_space<vmem>>, vector<1x16x32xf32>,
    return
  }
  func.func @transform_0(%arg0: i32) -> (i32, i32, i32) {
    %c0_i32 = arith.constant 0 : i32
    %c0_i32_0 = arith.constant 0 : i32
    %c0_i32_1 = arith.constant 0 : i32
    return %arg0, %c0_i32, %c0_i32_0 : i32, i32, i32
  }
  func.func @transform_1(%arg0: i32) -> (i32, i32, i32) {
    %c0_i32 = arith.constant 0 : i32
    %c0_i32_0 = arith.constant 0 : i32
    %c0_i32_1 = arith.constant 0 : i32
    return %arg0, %c0_i32, %c0_i32_0 : i32, i32, i32
  }
  func.func @transform_2(%arg0: i32) -> (i32, i32, i32) {
    %c0_i32 = arith.constant 0 : i32
    %c0_i32_0 = arith.constant 0 : i32
    %c0_i32_1 = arith.constant 0 : i32
    return %arg0, %c0_i32, %c0_i32_0 : i32, i32, i32
  }
  func.func @transform_3(%arg0: i32) -> (i32, i32, i32) {
    %c0_i32 = arith.constant 0 : i32
    %c0_i32_0 = arith.constant 0 : i32
    %c0_i32_1 = arith.constant 0 : i32
    return %arg0, %c0_i32, %c0_i32_0 : i32, i32, i32
  }
}

module attributes {stable_mosaic.version = 11 : i64} {
  func.func @_pos_proj_kernel(%arg0: i32, %arg1: memref<1x16x32xf32, #tpu.memory_space<vmem>>, %arg2: memref<1x16x32xf32, #tpu.memory_space<vmem>>, %arg3: memref<32x32xbf16, #tpu.memory_space<vmem>>, %arg4: memref<1x32xf32, #tpu.memory_space<vmem>>, %arg5: memref<1x16x32xf32, #tpu.memory_space<vmem>>) attributes {dimension_semantics = [#tpu.dimension_semantics<parallel>], iteration_bounds = array<i64: 2>, scalar_prefetch = 0 : i64, scratch_operands = 0 : i64, tpu.core_type = #tpu.core_type<tc>, window_params = [{transform_indices = @transform_0, window_bounds = array<i64: 1, 16, 32>}, {pipeline_mode = #tpu.pipeline_mode<synchronous>, transform_indices = @transform_1, window_bounds = array<i64: 1, 16, 32>}, {pipeline_mode = #tpu.pipeline_mode<synchronous>, transform_indices = @transform_2, window_bounds = array<i64: 32, 32>}, {pipeline_mode = #tpu.pipeline_mode<synchronous>, transform_indices = @transform_3, window_bounds = array<i64: 1, 32>}, {transform_indices = @transform_4, window_bounds = array<i64: 1, 16, 32>}]} {
    %c0 = arith.constant 0 : index
    %c0_0 = arith.constant 0 : index
    %c0_1 = arith.constant 0 : index
    %0 = vector.load %arg1[%c0, %c0_0, %c0_1] : memref<1x16x32xf32, #tpu.memory_space<vmem>>, vector<1x16x32xf32>
    %1 = vector.shape_cast %0 : vector<1x16x32xf32> to vector<16x32xf32>
    %c0_2 = arith.constant 0 : index
    %c0_3 = arith.constant 0 : index
    %c0_4 = arith.constant 0 : index
    %2 = vector.load %arg2[%c0_2, %c0_3, %c0_4] : memref<1x16x32xf32, #tpu.memory_space<vmem>>, vector<1x16x32xf32>
    %3 = vector.shape_cast %2 : vector<1x16x32xf32> to vector<16x32xf32>
    %4 = arith.addf %1, %3 : vector<16x32xf32>
    %5 = arith.truncf %4 : vector<16x32xf32> to vector<16x32xbf16>
    %c0_5 = arith.constant 0 : index
    %c0_6 = arith.constant 0 : index
    %6 = vector.load %arg3[%c0_5, %c0_6] : memref<32x32xbf16, #tpu.memory_space<vmem>>, vector<32x32xbf16>
    %cst = arith.constant dense<0.000000e+00> : vector<16x32xf32>
    %7 = tpu.matmul %5, %6, %cst {dimension_numbers = #tpu.dot_dimension_numbers<[1], [0], [0], [1], [0, 0, 1, 1], [], []>} : vector<16x32xbf16>, vector<32x32xbf16>, vector<16x32xf32> -> vector<16x32xf32>
    %c0_7 = arith.constant 0 : index
    %c0_8 = arith.constant 0 : index
    %8 = vector.load %arg4[%c0_7, %c0_8] : memref<1x32xf32, #tpu.memory_space<vmem>>, vector<1x32xf32>
    %9 = vector.broadcast %8 : vector<1x32xf32> to vector<16x32xf32>
    %10 = arith.addf %7, %9 : vector<16x32xf32>
    %c0_9 = arith.constant 0 : index
    %c0_10 = arith.constant 0 : index
    %c0_11 = arith.constant 0 : index
    %11 = vector.load %arg5[%c0_9, %c0_10, %c0_11] : memref<1x16x32xf32, #tpu.memory_space<vmem>>, vector<1x16x32xf32>
    %12 = vector.shape_cast %11 : vector<1x16x32xf32> to vector<16x32xf32>
    %13 = vector.shape_cast %10 : vector<16x32xf32> to vector<1x16x32xf32>
    tpu.vector_store %arg5[%c0_9, %c0_10, %c0_11], %13 {strides = array<i32>} : memref<1x16x32xf32, #tpu.memory_space<vmem>>, vector<1x16x32xf32>,
    return
  }
  func.func @transform_0(%arg0: i32) -> (i32, i32, i32) {
    %c0_i32 = arith.constant 0 : i32
    %c0_i32_0 = arith.constant 0 : i32
    %c0_i32_1 = arith.constant 0 : i32
    return %arg0, %c0_i32, %c0_i32_0 : i32, i32, i32
  }
  func.func @transform_1(%arg0: i32) -> (i32, i32, i32) {
    %c0_i32 = arith.constant 0 : i32
    %c0_i32_0 = arith.constant 0 : i32
    %c0_i32_1 = arith.constant 0 : i32
    %c0_i32_2 = arith.constant 0 : i32
    return %c0_i32, %c0_i32_0, %c0_i32_1 : i32, i32, i32
  }
  func.func @transform_2(%arg0: i32) -> (i32, i32) {
    %c0_i32 = arith.constant 0 : i32
    %c0_i32_0 = arith.constant 0 : i32
    %c0_i32_1 = arith.constant 0 : i32
    return %c0_i32, %c0_i32_0 : i32, i32
  }
  func.func @transform_3(%arg0: i32) -> (i32, i32) {
    %c0_i32 = arith.constant 0 : i32
    %c0_i32_0 = arith.constant 0 : i32
    %c0_i32_1 = arith.constant 0 : i32
    return %c0_i32, %c0_i32_0 : i32, i32
  }
  func.func @transform_4(%arg0: i32) -> (i32, i32, i32) {
    %c0_i32 = arith.constant 0 : i32
    %c0_i32_0 = arith.constant 0 : i32
    %c0_i32_1 = arith.constant 0 : i32
    return %arg0, %c0_i32, %c0_i32_0 : i32, i32, i32
  }
}

module attributes {stable_mosaic.version = 11 : i64} {
  func.func @_attention_kernel(%arg0: i32, %arg1: memref<1x16x32xbf16, #tpu.memory_space<vmem>>, %arg2: memref<1x8x32xbf16, #tpu.memory_space<vmem>>, %arg3: memref<1x8x32xbf16, #tpu.memory_space<vmem>>, %arg4: memref<1x16x32xf32, #tpu.memory_space<vmem>>) attributes {dimension_semantics = [#tpu.dimension_semantics<parallel>], iteration_bounds = array<i64: 2>, scalar_prefetch = 0 : i64, scratch_operands = 0 : i64, tpu.core_type = #tpu.core_type<tc>, window_params = [{transform_indices = @transform_0, window_bounds = array<i64: 1, 16, 32>}, {transform_indices = @transform_1, window_bounds = array<i64: 1, 8, 32>}, {transform_indices = @transform_2, window_bounds = array<i64: 1, 8, 32>}, {transform_indices = @transform_3, window_bounds = array<i64: 1, 16, 32>}]} {
    %c0 = arith.constant 0 : index
    %c0_0 = arith.constant 0 : index
    %c0_1 = arith.constant 0 : index
    %0 = vector.load %arg1[%c0, %c0_0, %c0_1] : memref<1x16x32xbf16, #tpu.memory_space<vmem>>, vector<1x16x32xbf16>
    %1 = vector.shape_cast %0 : vector<1x16x32xbf16> to vector<16x32xbf16>
    %c0_2 = arith.constant 0 : index
    %c0_3 = arith.constant 0 : index
    %c0_4 = arith.constant 0 : index
    %2 = vector.load %arg2[%c0_2, %c0_3, %c0_4] : memref<1x8x32xbf16, #tpu.memory_space<vmem>>, vector<1x8x32xbf16>
    %3 = vector.shape_cast %2 : vector<1x8x32xbf16> to vector<8x32xbf16>
    %c0_5 = arith.constant 0 : index
    %c0_6 = arith.constant 0 : index
    %c0_7 = arith.constant 0 : index
    %4 = vector.load %arg3[%c0_5, %c0_6, %c0_7] : memref<1x8x32xbf16, #tpu.memory_space<vmem>>, vector<1x8x32xbf16>
    %5 = vector.shape_cast %4 : vector<1x8x32xbf16> to vector<8x32xbf16>
    %6 = vector.extract_strided_slice %1 {offsets = [0, 0], sizes = [16, 8], strides = [1, 1]} : vector<16x32xbf16> to vector<16x8xbf16>
    %7 = vector.extract_strided_slice %3 {offsets = [0, 0], sizes = [8, 8], strides = [1, 1]} : vector<8x32xbf16> to vector<8x8xbf16>
    %8 = vector.extract_strided_slice %5 {offsets = [0, 0], sizes = [8, 8], strides = [1, 1]} : vector<8x32xbf16> to vector<8x8xbf16>
    %cst = arith.constant dense<0.000000e+00> : vector<16x8xf32>
    %9 = tpu.matmul %6, %7, %cst {dimension_numbers = #tpu.dot_dimension_numbers<[1], [1], [0], [0], [0, 0, 1, 0], [], []>} : vector<16x8xbf16>, vector<8x8xbf16>, vector<16x8xf32> -> vector<16x8xf32>
    %cst_8 = arith.constant 0.353553385 : f32
    %10 = vector.broadcast %cst_8 : f32 to vector<16x8xf32>
    %11 = arith.mulf %9, %10 : vector<16x8xf32>
    %cst_9 = arith.constant dense<0xFF800000> : vector<16xf32>
    %12 = vector.multi_reduction <maximumf>, %11, %cst_9 [1] : vector<16x8xf32> to vector<16xf32>
    %13 = vector.shape_cast %12 : vector<16xf32> to vector<16x1xf32>
    %14 = vector.broadcast %13 : vector<16x1xf32> to vector<16x8xf32>
    %15 = arith.subf %11, %14 : vector<16x8xf32>
    %16 = math.exp %15 : vector<16x8xf32>
    %cst_10 = arith.constant dense<0.000000e+00> : vector<16xf32>
    %17 = vector.multi_reduction <add>, %16, %cst_10 [1] : vector<16x8xf32> to vector<16xf32>
    %18 = vector.shape_cast %17 : vector<16xf32> to vector<16x1xf32>
    %19 = tpu.reciprocal %18 {approx = true} : vector<16x1xf32> -> vector<16x1xf32>
    %20 = vector.broadcast %19 : vector<16x1xf32> to vector<16x8xf32>
    %21 = arith.mulf %16, %20 : vector<16x8xf32>
    %22 = arith.truncf %21 : vector<16x8xf32> to vector<16x8xbf16>
    %cst_11 = arith.constant dense<0.000000e+00> : vector<16x8xf32>
    %23 = tpu.matmul %22, %8, %cst_11 {dimension_numbers = #tpu.dot_dimension_numbers<[1], [0], [0], [1], [0, 0, 1, 1], [], []>} : vector<16x8xbf16>, vector<8x8xbf16>, vector<16x8xf32> -> vector<16x8xf32>
    %24 = vector.extract_strided_slice %1 {offsets = [0, 8], sizes = [16, 8], strides = [1, 1]} : vector<16x32xbf16> to vector<16x8xbf16>
    %25 = vector.extract_strided_slice %3 {offsets = [0, 8], sizes = [8, 8], strides = [1, 1]} : vector<8x32xbf16> to vector<8x8xbf16>
    %26 = vector.extract_strided_slice %5 {offsets = [0, 8], sizes = [8, 8], strides = [1, 1]} : vector<8x32xbf16> to vector<8x8xbf16>
    %cst_12 = arith.constant dense<0.000000e+00> : vector<16x8xf32>
    %27 = tpu.matmul %24, %25, %cst_12 {dimension_numbers = #tpu.dot_dimension_numbers<[1], [1], [0], [0], [0, 0, 1, 0], [], []>} : vector<16x8xbf16>, vector<8x8xbf16>, vector<16x8xf32> -> vector<16x8xf32>
    %cst_13 = arith.constant 0.353553385 : f32
    %28 = vector.broadcast %cst_13 : f32 to vector<16x8xf32>
    %29 = arith.mulf %27, %28 : vector<16x8xf32>
    %cst_14 = arith.constant dense<0xFF800000> : vector<16xf32>
    %30 = vector.multi_reduction <maximumf>, %29, %cst_14 [1] : vector<16x8xf32> to vector<16xf32>
    %31 = vector.shape_cast %30 : vector<16xf32> to vector<16x1xf32>
    %32 = vector.broadcast %31 : vector<16x1xf32> to vector<16x8xf32>
    %33 = arith.subf %29, %32 : vector<16x8xf32>
    %34 = math.exp %33 : vector<16x8xf32>
    %cst_15 = arith.constant dense<0.000000e+00> : vector<16xf32>
    %35 = vector.multi_reduction <add>, %34, %cst_15 [1] : vector<16x8xf32> to vector<16xf32>
    %36 = vector.shape_cast %35 : vector<16xf32> to vector<16x1xf32>
    %37 = tpu.reciprocal %36 {approx = true} : vector<16x1xf32> -> vector<16x1xf32>
    %38 = vector.broadcast %37 : vector<16x1xf32> to vector<16x8xf32>
    %39 = arith.mulf %34, %38 : vector<16x8xf32>
    %40 = arith.truncf %39 : vector<16x8xf32> to vector<16x8xbf16>
    %cst_16 = arith.constant dense<0.000000e+00> : vector<16x8xf32>
    %41 = tpu.matmul %40, %26, %cst_16 {dimension_numbers = #tpu.dot_dimension_numbers<[1], [0], [0], [1], [0, 0, 1, 1], [], []>} : vector<16x8xbf16>, vector<8x8xbf16>, vector<16x8xf32> -> vector<16x8xf32>
    %42 = vector.extract_strided_slice %1 {offsets = [0, 16], sizes = [16, 8], strides = [1, 1]} : vector<16x32xbf16> to vector<16x8xbf16>
    %43 = vector.extract_strided_slice %3 {offsets = [0, 16], sizes = [8, 8], strides = [1, 1]} : vector<8x32xbf16> to vector<8x8xbf16>
    %44 = vector.extract_strided_slice %5 {offsets = [0, 16], sizes = [8, 8], strides = [1, 1]} : vector<8x32xbf16> to vector<8x8xbf16>
    %cst_17 = arith.constant dense<0.000000e+00> : vector<16x8xf32>
    %45 = tpu.matmul %42, %43, %cst_17 {dimension_numbers = #tpu.dot_dimension_numbers<[1], [1], [0], [0], [0, 0, 1, 0], [], []>} : vector<16x8xbf16>, vector<8x8xbf16>, vector<16x8xf32> -> vector<16x8xf32>
    %cst_18 = arith.constant 0.353553385 : f32
    %46 = vector.broadcast %cst_18 : f32 to vector<16x8xf32>
    %47 = arith.mulf %45, %46 : vector<16x8xf32>
    %cst_19 = arith.constant dense<0xFF800000> : vector<16xf32>
    %48 = vector.multi_reduction <maximumf>, %47, %cst_19 [1] : vector<16x8xf32> to vector<16xf32>
    %49 = vector.shape_cast %48 : vector<16xf32> to vector<16x1xf32>
    %50 = vector.broadcast %49 : vector<16x1xf32> to vector<16x8xf32>
    %51 = arith.subf %47, %50 : vector<16x8xf32>
    %52 = math.exp %51 : vector<16x8xf32>
    %cst_20 = arith.constant dense<0.000000e+00> : vector<16xf32>
    %53 = vector.multi_reduction <add>, %52, %cst_20 [1] : vector<16x8xf32> to vector<16xf32>
    %54 = vector.shape_cast %53 : vector<16xf32> to vector<16x1xf32>
    %55 = tpu.reciprocal %54 {approx = true} : vector<16x1xf32> -> vector<16x1xf32>
    %56 = vector.broadcast %55 : vector<16x1xf32> to vector<16x8xf32>
    %57 = arith.mulf %52, %56 : vector<16x8xf32>
    %58 = arith.truncf %57 : vector<16x8xf32> to vector<16x8xbf16>
    %cst_21 = arith.constant dense<0.000000e+00> : vector<16x8xf32>
    %59 = tpu.matmul %58, %44, %cst_21 {dimension_numbers = #tpu.dot_dimension_numbers<[1], [0], [0], [1], [0, 0, 1, 1], [], []>} : vector<16x8xbf16>, vector<8x8xbf16>, vector<16x8xf32> -> vector<16x8xf32>
    %60 = vector.extract_strided_slice %1 {offsets = [0, 24], sizes = [16, 8], strides = [1, 1]} : vector<16x32xbf16> to vector<16x8xbf16>
    %61 = vector.extract_strided_slice %3 {offsets = [0, 24], sizes = [8, 8], strides = [1, 1]} : vector<8x32xbf16> to vector<8x8xbf16>
    %62 = vector.extract_strided_slice %5 {offsets = [0, 24], sizes = [8, 8], strides = [1, 1]} : vector<8x32xbf16> to vector<8x8xbf16>
    %cst_22 = arith.constant dense<0.000000e+00> : vector<16x8xf32>
    %63 = tpu.matmul %60, %61, %cst_22 {dimension_numbers = #tpu.dot_dimension_numbers<[1], [1], [0], [0], [0, 0, 1, 0], [], []>} : vector<16x8xbf16>, vector<8x8xbf16>, vector<16x8xf32> -> vector<16x8xf32>
    %cst_23 = arith.constant 0.353553385 : f32
    %64 = vector.broadcast %cst_23 : f32 to vector<16x8xf32>
    %65 = arith.mulf %63, %64 : vector<16x8xf32>
    %cst_24 = arith.constant dense<0xFF800000> : vector<16xf32>
    %66 = vector.multi_reduction <maximumf>, %65, %cst_24 [1] : vector<16x8xf32> to vector<16xf32>
    %67 = vector.shape_cast %66 : vector<16xf32> to vector<16x1xf32>
    %68 = vector.broadcast %67 : vector<16x1xf32> to vector<16x8xf32>
    %69 = arith.subf %65, %68 : vector<16x8xf32>
    %70 = math.exp %69 : vector<16x8xf32>
    %cst_25 = arith.constant dense<0.000000e+00> : vector<16xf32>
    %71 = vector.multi_reduction <add>, %70, %cst_25 [1] : vector<16x8xf32> to vector<16xf32>
    %72 = vector.shape_cast %71 : vector<16xf32> to vector<16x1xf32>
    %73 = tpu.reciprocal %72 {approx = true} : vector<16x1xf32> -> vector<16x1xf32>
    %74 = vector.broadcast %73 : vector<16x1xf32> to vector<16x8xf32>
    %75 = arith.mulf %70, %74 : vector<16x8xf32>
    %76 = arith.truncf %75 : vector<16x8xf32> to vector<16x8xbf16>
    %cst_26 = arith.constant dense<0.000000e+00> : vector<16x8xf32>
    %77 = tpu.matmul %76, %62, %cst_26 {dimension_numbers = #tpu.dot_dimension_numbers<[1], [0], [0], [1], [0, 0, 1, 1], [], []>} : vector<16x8xbf16>, vector<8x8xbf16>, vector<16x8xf32> -> vector<16x8xf32>
    %78 = tpu.concatenate %23, %41, %59, %77 in 1 : vector<16x8xf32>, vector<16x8xf32>, vector<16x8xf32>, vector<16x8xf32> -> vector<16x32xf32>
    %c0_27 = arith.constant 0 : index
    %c0_28 = arith.constant 0 : index
    %c0_29 = arith.constant 0 : index
    %79 = vector.load %arg4[%c0_27, %c0_28, %c0_29] : memref<1x16x32xf32, #tpu.memory_space<vmem>>, vector<1x16x32xf32>
    %80 = vector.shape_cast %79 : vector<1x16x32xf32> to vector<16x32xf32>
    %81 = vector.shape_cast %78 : vector<16x32xf32> to vector<1x16x32xf32>
    tpu.vector_store %arg4[%c0_27, %c0_28, %c0_29], %81 {strides = array<i32>} : memref<1x16x32xf32, #tpu.memory_space<vmem>>, vector<1x16x32xf32>,
    return
  }
  func.func @transform_0(%arg0: i32) -> (i32, i32, i32) {
    %c0_i32 = arith.constant 0 : i32
    %c0_i32_0 = arith.constant 0 : i32
    %c0_i32_1 = arith.constant 0 : i32
    return %arg0, %c0_i32, %c0_i32_0 : i32, i32, i32
  }
  func.func @transform_1(%arg0: i32) -> (i32, i32, i32) {
    %c0_i32 = arith.constant 0 : i32
    %c0_i32_0 = arith.constant 0 : i32
    %c0_i32_1 = arith.constant 0 : i32
    return %arg0, %c0_i32, %c0_i32_0 : i32, i32, i32
  }
  func.func @transform_2(%arg0: i32) -> (i32, i32, i32) {
    %c0_i32 = arith.constant 0 : i32
    %c0_i32_0 = arith.constant 0 : i32
    %c0_i32_1 = arith.constant 0 : i32
    return %arg0, %c0_i32, %c0_i32_0 : i32, i32, i32
  }
  func.func @transform_3(%arg0: i32) -> (i32, i32, i32) {
    %c0_i32 = arith.constant 0 : i32
    %c0_i32_0 = arith.constant 0 : i32
    %c0_i32_1 = arith.constant 0 : i32
    return %arg0, %c0_i32, %c0_i32_0 : i32, i32, i32
  }
}

module attributes {stable_mosaic.version = 11 : i64} {
  func.func @_layernorm_kernel(%arg0: i32, %arg1: memref<16x32xf32, #tpu.memory_space<vmem>>, %arg2: memref<1x32xf32, #tpu.memory_space<vmem>>, %arg3: memref<1x32xf32, #tpu.memory_space<vmem>>, %arg4: memref<16x32xf32, #tpu.memory_space<vmem>>) attributes {dimension_semantics = [#tpu.dimension_semantics<parallel>], iteration_bounds = array<i64: 2>, scalar_prefetch = 0 : i64, scratch_operands = 0 : i64, tpu.core_type = #tpu.core_type<tc>, window_params = [{transform_indices = @transform_0, window_bounds = array<i64: 16, 32>}, {pipeline_mode = #tpu.pipeline_mode<synchronous>, transform_indices = @transform_1, window_bounds = array<i64: 1, 32>}, {pipeline_mode = #tpu.pipeline_mode<synchronous>, transform_indices = @transform_2, window_bounds = array<i64: 1, 32>}, {transform_indices = @transform_3, window_bounds = array<i64: 16, 32>}]} {
    %c0 = arith.constant 0 : index
    %c0_0 = arith.constant 0 : index
    %0 = vector.load %arg1[%c0, %c0_0] : memref<16x32xf32, #tpu.memory_space<vmem>>, vector<16x32xf32>
    %c0_1 = arith.constant 0 : index
    %c0_2 = arith.constant 0 : index
    %1 = vector.load %arg2[%c0_1, %c0_2] : memref<1x32xf32, #tpu.memory_space<vmem>>, vector<1x32xf32>
    %c0_3 = arith.constant 0 : index
    %c0_4 = arith.constant 0 : index
    %2 = vector.load %arg3[%c0_3, %c0_4] : memref<1x32xf32, #tpu.memory_space<vmem>>, vector<1x32xf32>
    %cst = arith.constant dense<0.000000e+00> : vector<16xf32>
    %3 = vector.multi_reduction <add>, %0, %cst [1] : vector<16x32xf32> to vector<16xf32>
    %4 = vector.shape_cast %3 : vector<16xf32> to vector<16x1xf32>
    %cst_5 = arith.constant 3.200000e+01 : f32
    %5 = vector.broadcast %cst_5 : f32 to vector<16x1xf32>
    %6 = arith.divf %4, %5 : vector<16x1xf32>
    %7 = vector.broadcast %6 : vector<16x1xf32> to vector<16x32xf32>
    %8 = arith.subf %0, %7 : vector<16x32xf32>
    %9 = arith.mulf %8, %8 : vector<16x32xf32>
    %cst_6 = arith.constant dense<0.000000e+00> : vector<16xf32>
    %10 = vector.multi_reduction <add>, %9, %cst_6 [1] : vector<16x32xf32> to vector<16xf32>
    %11 = vector.shape_cast %10 : vector<16xf32> to vector<16x1xf32>
    %cst_7 = arith.constant 3.200000e+01 : f32
    %12 = vector.broadcast %cst_7 : f32 to vector<16x1xf32>
    %13 = arith.divf %11, %12 : vector<16x1xf32>
    %cst_8 = arith.constant 9.99999974E-6 : f32
    %14 = vector.broadcast %cst_8 : f32 to vector<16x1xf32>
    %15 = arith.addf %13, %14 : vector<16x1xf32>
    %16 = math.rsqrt %15 : vector<16x1xf32>
    %17 = vector.broadcast %16 : vector<16x1xf32> to vector<16x32xf32>
    %18 = arith.mulf %8, %17 : vector<16x32xf32>
    %19 = vector.broadcast %1 : vector<1x32xf32> to vector<16x32xf32>
    %20 = arith.mulf %18, %19 : vector<16x32xf32>
    %21 = vector.broadcast %2 : vector<1x32xf32> to vector<16x32xf32>
    %22 = arith.addf %20, %21 : vector<16x32xf32>
    %c0_9 = arith.constant 0 : index
    %c0_10 = arith.constant 0 : index
    %23 = vector.load %arg4[%c0_9, %c0_10] : memref<16x32xf32, #tpu.memory_space<vmem>>, vector<16x32xf32>
    tpu.vector_store %arg4[%c0_9, %c0_10], %22 {strides = array<i32>} : memref<16x32xf32, #tpu.memory_space<vmem>>, vector<16x32xf32>,
    return
  }
  func.func @transform_0(%arg0: i32) -> (i32, i32) {
    %c0_i32 = arith.constant 0 : i32
    %c0_i32_0 = arith.constant 0 : i32
    return %arg0, %c0_i32 : i32, i32
  }
  func.func @transform_1(%arg0: i32) -> (i32, i32) {
    %c0_i32 = arith.constant 0 : i32
    %c0_i32_0 = arith.constant 0 : i32
    %c0_i32_1 = arith.constant 0 : i32
    return %c0_i32, %c0_i32_0 : i32, i32
  }
  func.func @transform_2(%arg0: i32) -> (i32, i32) {
    %c0_i32 = arith.constant 0 : i32
    %c0_i32_0 = arith.constant 0 : i32
    %c0_i32_1 = arith.constant 0 : i32
    return %c0_i32, %c0_i32_0 : i32, i32
  }
  func.func @transform_3(%arg0: i32) -> (i32, i32) {
    %c0_i32 = arith.constant 0 : i32
    %c0_i32_0 = arith.constant 0 : i32
    return %arg0, %c0_i32 : i32, i32
  }
}

module attributes {stable_mosaic.version = 11 : i64} {
  func.func @_matmul_bias_kernel(%arg0: i32, %arg1: memref<16x32xbf16, #tpu.memory_space<vmem>>, %arg2: memref<32x4xbf16, #tpu.memory_space<vmem>>, %arg3: memref<1x4xf32, #tpu.memory_space<vmem>>, %arg4: memref<16x4xf32, #tpu.memory_space<vmem>>) attributes {dimension_semantics = [#tpu.dimension_semantics<parallel>], iteration_bounds = array<i64: 2>, scalar_prefetch = 0 : i64, scratch_operands = 0 : i64, tpu.core_type = #tpu.core_type<tc>, window_params = [{transform_indices = @transform_0, window_bounds = array<i64: 16, 32>}, {pipeline_mode = #tpu.pipeline_mode<synchronous>, transform_indices = @transform_1, window_bounds = array<i64: 32, 4>}, {pipeline_mode = #tpu.pipeline_mode<synchronous>, transform_indices = @transform_2, window_bounds = array<i64: 1, 4>}, {transform_indices = @transform_3, window_bounds = array<i64: 16, 4>}]} {
    %c0 = arith.constant 0 : index
    %c0_0 = arith.constant 0 : index
    %0 = vector.load %arg1[%c0, %c0_0] : memref<16x32xbf16, #tpu.memory_space<vmem>>, vector<16x32xbf16>
    %c0_1 = arith.constant 0 : index
    %c0_2 = arith.constant 0 : index
    %1 = vector.load %arg2[%c0_1, %c0_2] : memref<32x4xbf16, #tpu.memory_space<vmem>>, vector<32x4xbf16>
    %cst = arith.constant dense<0.000000e+00> : vector<16x4xf32>
    %2 = tpu.matmul %0, %1, %cst {dimension_numbers = #tpu.dot_dimension_numbers<[1], [0], [0], [1], [0, 0, 1, 1], [], []>} : vector<16x32xbf16>, vector<32x4xbf16>, vector<16x4xf32> -> vector<16x4xf32>
    %c0_3 = arith.constant 0 : index
    %c0_4 = arith.constant 0 : index
    %3 = vector.load %arg3[%c0_3, %c0_4] : memref<1x4xf32, #tpu.memory_space<vmem>>, vector<1x4xf32>
    %4 = vector.broadcast %3 : vector<1x4xf32> to vector<16x4xf32>
    %5 = arith.addf %2, %4 : vector<16x4xf32>
    %c0_5 = arith.constant 0 : index
    %c0_6 = arith.constant 0 : index
    %6 = vector.load %arg4[%c0_5, %c0_6] : memref<16x4xf32, #tpu.memory_space<vmem>>, vector<16x4xf32>
    tpu.vector_store %arg4[%c0_5, %c0_6], %5 {strides = array<i32>} : memref<16x4xf32, #tpu.memory_space<vmem>>, vector<16x4xf32>,
    return
  }
  func.func @transform_0(%arg0: i32) -> (i32, i32) {
    %c0_i32 = arith.constant 0 : i32
    %c0_i32_0 = arith.constant 0 : i32
    return %arg0, %c0_i32 : i32, i32
  }
  func.func @transform_1(%arg0: i32) -> (i32, i32) {
    %c0_i32 = arith.constant 0 : i32
    %c0_i32_0 = arith.constant 0 : i32
    %c0_i32_1 = arith.constant 0 : i32
    return %c0_i32, %c0_i32_0 : i32, i32
  }
  func.func @transform_2(%arg0: i32) -> (i32, i32) {
    %c0_i32 = arith.constant 0 : i32
    %c0_i32_0 = arith.constant 0 : i32
    %c0_i32_1 = arith.constant 0 : i32
    return %c0_i32, %c0_i32_0 : i32, i32
  }
  func.func @transform_3(%arg0: i32) -> (i32, i32) {
    %c0_i32 = arith.constant 0 : i32
    %c0_i32_0 = arith.constant 0 : i32
    return %arg0, %c0_i32 : i32, i32
  }
}

</mosaic_0001>

<llo_original>
// kernel: informer_forward.32
$region0: #{informer_forward.32}
  #allocation0 [shape = 'u32[]', space=smem, size = 0x4, offset = 0x4, fixed_abs, tag = 'smem constant byte address 0x4 - core index']
  #allocation1 [shape = 'u32[72,128]{1,0:T(1,128)}', space=vmem, size = 0x9000, scoped, tag = 'internal scratch']
  %s0 = inlined_call_operand.vmem [shape: bf16[2,18,4], index: 0, kind: input, shape index: {}]
  %s1 = inlined_call_operand.vmem [shape: bf16[12,32], index: 1, kind: input, shape index: {}]
  %s2 = inlined_call_operand.vmem [shape: f32[1,32], index: 2, kind: input, shape index: {}]
  %s3 = inlined_call_operand.vmem [shape: f32[2,16,32], index: 3, kind: output, shape index: {}]
  %s4 = sld [smem:[#allocation0]]
  $region45: #{informer_forward.32} parent=0
    _
  %s6 = ssub.s32 1, %s4
  %s7 = scalar_select 0, %s6, %s4
  loop: start=0, step=1, limit=4
  $region2: #{informer_forward.32} parent=0 // loop_pre_header
    _
  $region3: #{informer_forward.32} parent=0 // loop_header
    %s9 = sphi 0, %s13
    %p10 = scmp.ge.s32.totalorder %s9, 4
    %s19 = sphi 0, %s21
    %s22 = sphi 0, %s19
    %s23 = sphi 0, %s22
    %s39 = sphi 0, %s23
    %s43 = sphi 0, %s43
    %s45 = sphi 0, %s43
    %s46 = sphi 0, %s45
    %s60 = sphi 0, %s46
    %s64 = sphi 0, %s64
    %s66 = sphi 0, %s64
    %s67 = sphi 0, %s66
    %s81 = sphi 0, %s67
    %s87 = sphi 0, %s89
    %s90 = sphi 0, %s87
    %s91 = sphi 0, %s90
    %s107 = sphi 0, %s91
  $region4: #{informer_forward.32} parent=0 // loop_header_branch
    %12 = sbr.rel (%p10) target = $region8
  $region5: #{informer_forward.32} parent=0 // loop_body
    %s14 = ssub.s32 %s9, 1
    %s15 = ssub.s32 %s9, 2
    %s16 = sadd.s32 %s9, 1
    %s17 = ssub.s32 %s9, %s16
    %p18 = scmp.eq.s32.totalorder %s17, 0
    %s20 = sadd.s32 %s19, 1
    %s21 = scalar_select %p18, %s19, %s20
    %p24 = pneg %p18
    %p25 = scmp.eq.s32.totalorder %s9, 1
    %p26 = por %p24, %p25
    %p27 = scmp.ne.s32.totalorder %s19, %s22
    %p28 = scmp.eq.s32.totalorder %s9, 0
    %p29 = por %p27, %p28
    %p30 = scmp.ne.s32.totalorder %s19, %s22
    %p31 = scmp.eq.s32.totalorder %s14, 1
    %p32 = por %p30, %p31
    %p33 = scmp.ne.s32.totalorder %s22, %s23
    %p34 = scmp.eq.s32.totalorder %s14, 0
    %p35 = por %p33, %p34
    %p36 = scmp.ne.s32.totalorder %s22, %s23
    %p37 = scmp.eq.s32.totalorder %s15, 1
    %p38 = por %p36, %p37
    %p40 = scmp.ne.s32.totalorder %s23, %s39
    %p41 = scmp.eq.s32.totalorder %s15, 0
    %p42 = por %p40, %p41
    %s44 = sadd.s32 %s43, 1
    %p47 = scmp.eq.s32.totalorder %s9, 1
    %p48 = scmp.ne.s32.totalorder %s43, %s45
    %p49 = scmp.eq.s32.totalorder %s9, 0
    %p50 = por %p48, %p49
    %p51 = scmp.ne.s32.totalorder %s43, %s45
    %p52 = scmp.eq.s32.totalorder %s14, 1
    %p53 = por %p51, %p52
    %p54 = scmp.ne.s32.totalorder %s45, %s46
    %p55 = scmp.eq.s32.totalorder %s14, 0
    %p56 = por %p54, %p55
    %p57 = scmp.ne.s32.totalorder %s45, %s46
    %p58 = scmp.eq.s32.totalorder %s15, 1
    %p59 = por %p57, %p58
    %p61 = scmp.ne.s32.totalorder %s46, %s60
    %p62 = scmp.eq.s32.totalorder %s15, 0
    %p63 = por %p61, %p62
    %s65 = sadd.s32 %s64, 1
    %p68 = scmp.eq.s32.totalorder %s9, 1
    %p69 = scmp.ne.s32.totalorder %s64, %s66
    %p70 = scmp.eq.s32.totalorder %s9, 0
    %p71 = por %p69, %p70
    %p72 = scmp.ne.s32.totalorder %s64, %s66
    %p73 = scmp.eq.s32.totalorder %s14, 1
    %p74 = por %p72, %p73
    %p75 = scmp.ne.s32.totalorder %s66, %s67
    %p76 = scmp.eq.s32.totalorder %s14, 0
    %p77 = por %p75, %p76
    %p78 = scmp.ne.s32.totalorder %s66, %s67
    %p79 = scmp.eq.s32.totalorder %s15, 1
    %p80 = por %p78, %p79
    %p82 = scmp.ne.s32.totalorder %s67, %s81
    %p83 = scmp.eq.s32.totalorder %s15, 0
    %p84 = por %p82, %p83
    %s85 = ssub.s32 %s9, %s16
    %p86 = scmp.eq.s32.totalorder %s85, 0
    %s88 = sadd.s32 %s87, 1
    %s89 = scalar_select %p86, %s87, %s88
    %p92 = pneg %p86
    %p93 = scmp.eq.s32.totalorder %s9, 1
    %p94 = por %p92, %p93
    %p95 = scmp.ne.s32.totalorder %s87, %s90
    %p96 = scmp.eq.s32.totalorder %s9, 0
    %p97 = por %p95, %p96
    %p98 = scmp.ne.s32.totalorder %s87, %s90
    %p99 = scmp.eq.s32.totalorder %s14, 1
    %p100 = por %p98, %p99
    %p101 = scmp.ne.s32.totalorder %s90, %s91
    %p102 = scmp.eq.s32.totalorder %s14, 0
    %p103 = por %p101, %p102
    %p104 = scmp.ne.s32.totalorder %s90, %s91
    %p105 = scmp.eq.s32.totalorder %s15, 1
    %p106 = por %p104, %p105
    %p108 = scmp.ne.s32.totalorder %s91, %s107
    %p109 = scmp.eq.s32.totalorder %s15, 0
    %p110 = por %p108, %p109
    %p111 = scmp.le.s32.totalorder 1, %s9
    %p112 = scmp.lt.s32.totalorder %s9, 3
    %p113 = pnand %p111, %p112
    %p114 = pneg %p113
    // Predicated region
    $region9: #{informer_forward.32} parent=5 // pred_check
      _
    $region10: #{informer_forward.32} parent=5 // pred_check_branch
      %116 = sbr.rel (%p113) target = $region12
    $region11: #{informer_forward.32} parent=5 // pred_region
      %s117 = ssub.s32 %s9, 1
      // Predicated region
      $region13: #{informer_forward.32} parent=11 // pred_check
        %p118 = pneg %p56
      $region14: #{informer_forward.32} parent=11 // pred_check_branch
        %120 = sbr.rel (%p118) target = $region16
      $region15: #{informer_forward.32} parent=11 // pred_region
        _
      $region16: #{informer_forward.32} parent=11 // pred_fallthru
        _
      // Predicated region
      $region17: #{informer_forward.32} parent=11 // pred_check
        %p121 = pneg %p77
      $region18: #{informer_forward.32} parent=11 // pred_check_branch
        %123 = sbr.rel (%p121) target = $region20
      $region19: #{informer_forward.32} parent=11 // pred_region
        _
      $region20: #{informer_forward.32} parent=11 // pred_fallthru
        _
    $region12: #{informer_forward.32} parent=5 // pred_fallthru
      _
    %p124 = scmp.lt.s32.totalorder %s9, 2
    // Predicated region
    $region21: #{informer_forward.32} parent=5 // pred_check
      %p125 = pneg %p124
    $region22: #{informer_forward.32} parent=5 // pred_check_branch
      %127 = sbr.rel (%p125) target = $region24
    $region23: #{informer_forward.32} parent=5 // pred_region
      // Predicated region
      $region25: #{informer_forward.32} parent=23 // pred_check
        %p128 = pneg %p29
      $region26: #{informer_forward.32} parent=23 // pred_check_branch
        %130 = sbr.rel (%p128) target = $region28
      $region27: #{informer_forward.32} parent=23 // pred_region
        %p131 = scmp.lt.s32.totalorder %s9, 1
        %s132 = scalar_select %p131, %s9, 1
        %s133 = smul.addr %s132, 3
        %s134 = smul.addr %s133, 4
        %s135 = scalar_lea.vmem %s0, %s134
      $region28: #{informer_forward.32} parent=23 // pred_fallthru
        _
    $region24: #{informer_forward.32} parent=5 // pred_fallthru
      _
    %p136 = scmp.le.s32.totalorder 1, %s9
    %p137 = scmp.lt.s32.totalorder %s9, 3
    %p138 = pnand %p136, %p137
    %p139 = pneg %p138
    // Predicated region
    $region29: #{informer_forward.32} parent=5 // pred_check
      _
    $region30: #{informer_forward.32} parent=5 // pred_check_branch
      %141 = sbr.rel (%p138) target = $region32
    $region31: #{informer_forward.32} parent=5 // pred_region
      %s142 = ssub.s32 %s9, 1
      %p143 = scmp.lt.s32.totalorder %s14, 1
      %s144 = scalar_select %p143, %s14, 1
      %s145 = smul.addr %s144, 3
      %s146 = smul.addr %s145, 4
      %s147 = scalar_lea.vmem %s0, %s146
      %p148 = pneg %p35
      %p149 = pneg %p32
      %p150 = pneg %p56
      %p151 = pneg %p53
      %p152 = pneg %p77
      %p153 = pneg %p74
      %p154 = pneg %p103
      %p155 = pneg %p100
      %p156 = scmp.lt.s32.totalorder %s14, 1
      %s157 = scalar_select %p156, %s14, 1
      %s158 = smul.addr %s157, 2
      %s159 = smul.addr %s158, 8
      %s160 = scalar_lea.vmem %s3, %s159
      %p161 = scmp.lt.s32.totalorder %s14, 1
      %s162 = scalar_select %p161, %s14, 1
      %s163 = smul.addr %s162, 3
      %s164 = smul.addr %s163, 4
      %s165 = scalar_lea.vmem %s0, %s164
      %p166 = scmp.lt.s32.totalorder %s14, 1
      %s167 = scalar_select %p166, %s14, 1
      %s168 = smul.addr %s167, 2
      %s169 = smul.addr %s168, 8
      %s170 = scalar_lea.vmem %s3, %s169
      %v172 = vld [vmem:[%s165] sm:$0xf]
      %v173 = vld [vmem:[%s165 + $0x4] sm:$0xf]
      %v174 = vld [vmem:[%s1] sm:$0x3]
      %v175 = vld [vmem:[%s165 + $0x8] sm:$0x1]
      %v176 = vld [vmem:[%s1] sm:$0xc]
      %v180 = vunpack.c.l.b16 %v172
      %v181 = vunpack.c.l.b16 %v173
      %v182 = vunpack.c.l.b16 %v175
      %v183 = vpack.c.b16 %v181, %v180
      %v184 = vpack.c.b16 %v182, %v182
      %vm185 = vsmask.f32 7424
      %v187 = vshrl.u32 %v183, 16
      %v189 = vshll.u32 %v183, 16
      %v191 = vrot.slane %v189, 1
      %v192 = vor.u32 %v187, %v191
      %v194 = vshll.u32 %v184, 16
      %v196 = vrot.slane %v194, 1
      %v197 = vsel %vm185, %v192, %v196
      %v199 = vunpack.c.l.b16 %v176
      %v200 = vpack.c.b16 %v199, %v199
      %v201 = vrot.slane %v200, 2
      %vm202 = vcmask 31744
      %v204 = vsel %vm202, %v197, 0
      %vm206 = vcmask 1041408
      %v208 = vsel %vm206, %v201, 0
      %210 = vmatpush.bf16.msra.mxu0 0
      %211 = vmatpush.bf16.msra.mxu0 0
      %212 = vmatpush.bf16.msra.mxu0 0
      %213 = vmatpush.bf16.msra.mxu0 0
      %214 = vmatpush.bf16.msra.mxu0 0
      %215 = vmatpush.bf16.msra.mxu0 0
      %216 = vmatpush.bf16.msra.mxu0 0
      %217 = vmatpush.bf16.msra.mxu0 %v208
      %218 = vmatmul.bf16.gmra.mxu0 %v204
      %v219 = vpop.f32.mrf.mxu0
      %v220 = vadd.f32 0.0, %v219
      %v221 = vpop.f32.mrf.mxu0
      %v222 = vadd.f32 0.0, %v221
      %223 = vdwg.mxu0
      %v224 = vsel %vm202, %v183, 0
      %v227 = vsel %vm206, %v174, 0
      %229 = vmatpush.bf16.msra.mxu0 0
      %230 = vmatpush.bf16.msra.mxu0 0
      %231 = vmatpush.bf16.msra.mxu0 0
      %232 = vmatpush.bf16.msra.mxu0 0
      %233 = vmatpush.bf16.msra.mxu0 0
      %234 = vmatpush.bf16.msra.mxu0 0
      %235 = vmatpush.bf16.msra.mxu0 0
      %236 = vmatpush.bf16.msra.mxu0 %v227
      %237 = vmatmul.bf16.gmra.mxu0 %v224
      %v238 = vpop.f32.mrf.mxu0
      %v239 = vadd.f32 %v220, %v238
      %v240 = vpop.f32.mrf.mxu0
      %v241 = vadd.f32 %v222, %v240
      %242 = vdwg.mxu0
      %v243 = vld [vmem:[%s165] sm:$0xe]
      %v244 = vld [vmem:[%s1 + $0x4] sm:$0x3]
      %v246 = vunpack.c.l.b16 %v243
      %v247 = vpack.c.b16 %v181, %v246
      %vm248 = vcmask 1046528
      %v249 = vrot.slane %v247, 1
      %v250 = vrot.slane %v184, 1
      %v251 = vsel %vm248, %v249, %v250
      %v253 = vsel %vm202, %v251, 0
      %v256 = vsel %vm206, %v244, 0
      %258 = vmatpush.bf16.msra.mxu0 0
      %259 = vmatpush.bf16.msra.mxu0 0
      %260 = vmatpush.bf16.msra.mxu0 0
      %261 = vmatpush.bf16.msra.mxu0 0
      %262 = vmatpush.bf16.msra.mxu0 0
      %263 = vmatpush.bf16.msra.mxu0 0
      %264 = vmatpush.bf16.msra.mxu0 0
      %265 = vmatpush.bf16.msra.mxu0 %v256
      %266 = vmatmul.bf16.gmra.mxu0 %v253
      %v267 = vpop.f32.mrf.mxu0
      %v268 = vadd.f32 0.0, %v267
      %v269 = vpop.f32.mrf.mxu0
      %v270 = vadd.f32 0.0, %v269
      %271 = vdwg.mxu0
      %v272 = vadd.f32 %v239, %v268
      %v273 = vadd.f32 %v241, %v270
      %v274 = vld [vmem:[%s2] sm:$0x1]
      %v276 = vperm.slane %v274, 0
      %v278 = vadd.f32 %v272, %v276
      %v279 = vadd.f32 %v273, %v276
      %vm280 = vcmask 261120
      %281 = vst.msk [vmem:[%s170] sm:$0xff] %vm280, %v278
      %282 = vst.msk [vmem:[%s170 + $0x8] sm:$0xff] %vm280, %v279
      %p283 = scmp.lt.s32.totalorder %s14, 1
      %s284 = scalar_select %p283, %s14, 1
      %s285 = smul.addr %s284, 2
      %s286 = smul.addr %s285, 8
      %s287 = scalar_lea.vmem %s3, %s286
      // Predicated region
      $region33: #{informer_forward.32} parent=31 // pred_check
        %p288 = pneg %p100
      $region34: #{informer_forward.32} parent=31 // pred_check_branch
        %290 = sbr.rel (%p288) target = $region36
      $region35: #{informer_forward.32} parent=31 // pred_region
        _
      $region36: #{informer_forward.32} parent=31 // pred_fallthru
        _
    $region32: #{informer_forward.32} parent=5 // pred_fallthru
      _
    %p291 = scmp.le.s32.totalorder 2, %s9
    // Predicated region
    $region37: #{informer_forward.32} parent=5 // pred_check
      %p292 = pneg %p291
    $region38: #{informer_forward.32} parent=5 // pred_check_branch
      %294 = sbr.rel (%p292) target = $region40
    $region39: #{informer_forward.32} parent=5 // pred_region
      %s295 = ssub.s32 %s9, 2
      // Predicated region
      $region41: #{informer_forward.32} parent=39 // pred_check
        %p296 = pneg %p106
      $region42: #{informer_forward.32} parent=39 // pred_check_branch
        %298 = sbr.rel (%p296) target = $region44
      $region43: #{informer_forward.32} parent=39 // pred_region
        %p299 = scmp.lt.s32.totalorder %s15, 1
        %s300 = scalar_select %p299, %s15, 1
        %s301 = smul.addr %s300, 2
        %s302 = smul.addr %s301, 8
        %s303 = scalar_lea.vmem %s3, %s302
      $region44: #{informer_forward.32} parent=39 // pred_fallthru
        _
    $region40: #{informer_forward.32} parent=5 // pred_fallthru
      _
  $region6: #{informer_forward.32} parent=0 // loop_footer
    %s13 = sadd.s32 1, %s9
  $region7: #{informer_forward.32} parent=0 // loop_footer_branch
    %8 = sbr.rel target = $region3
  $region8: #{informer_forward.32} parent=0 // loop_exit
    _

// kernel: informer_forward.37
$region0: #{informer_forward.37}
  #allocation0 [shape = 'u32[]', space=smem, size = 0x4, offset = 0x4, fixed_abs, tag = 'smem constant byte address 0x4 - core index']
  #allocation1 [shape = 'u32[72,128]{1,0:T(1,128)}', space=vmem, size = 0x9000, scoped, tag = 'internal scratch']
  %s0 = inlined_call_operand.vmem [shape: f32[32,32], index: 0, kind: input, shape index: {}]
  %s1 = inlined_call_operand.vmem [shape: f32[32,32], index: 1, kind: input, shape index: {}]
  %s2 = inlined_call_operand.vmem [shape: f32[1,32], index: 2, kind: input, shape index: {}]
  %s3 = inlined_call_operand.vmem [shape: f32[1,32], index: 3, kind: input, shape index: {}]
  %s4 = inlined_call_operand.vmem [shape: f32[32,32], index: 4, kind: output, shape index: {}]
  %s5 = sld [smem:[#allocation0]]
  $region49: #{informer_forward.37} parent=0
    _
  %s7 = ssub.s32 1, %s5
  %s8 = scalar_select 0, %s7, %s5
  loop: start=0, step=1, limit=4
  $region2: #{informer_forward.37} parent=0 // loop_pre_header
    _
  $region3: #{informer_forward.37} parent=0 // loop_header
    %s10 = sphi 0, %s14
    %p11 = scmp.ge.s32.totalorder %s10, 4
    %s20 = sphi 0, %s22
    %s23 = sphi 0, %s20
    %s24 = sphi 0, %s23
    %s40 = sphi 0, %s24
    %s46 = sphi 0, %s48
    %s49 = sphi 0, %s46
    %s50 = sphi 0, %s49
    %s66 = sphi 0, %s50
    %s70 = sphi 0, %s70
    %s72 = sphi 0, %s70
    %s73 = sphi 0, %s72
    %s87 = sphi 0, %s73
    %s91 = sphi 0, %s91
    %s93 = sphi 0, %s91
    %s94 = sphi 0, %s93
    %s108 = sphi 0, %s94
    %s114 = sphi 0, %s116
    %s117 = sphi 0, %s114
    %s118 = sphi 0, %s117
    %s134 = sphi 0, %s118
  $region4: #{informer_forward.37} parent=0 // loop_header_branch
    %13 = sbr.rel (%p11) target = $region8
  $region5: #{informer_forward.37} parent=0 // loop_body
    %s15 = ssub.s32 %s10, 1
    %s16 = ssub.s32 %s10, 2
    %s17 = sadd.s32 %s10, 1
    %s18 = ssub.s32 %s10, %s17
    %p19 = scmp.eq.s32.totalorder %s18, 0
    %s21 = sadd.s32 %s20, 1
    %s22 = scalar_select %p19, %s20, %s21
    %p25 = pneg %p19
    %p26 = scmp.eq.s32.totalorder %s10, 1
    %p27 = por %p25, %p26
    %p28 = scmp.ne.s32.totalorder %s20, %s23
    %p29 = scmp.eq.s32.totalorder %s10, 0
    %p30 = por %p28, %p29
    %p31 = scmp.ne.s32.totalorder %s20, %s23
    %p32 = scmp.eq.s32.totalorder %s15, 1
    %p33 = por %p31, %p32
    %p34 = scmp.ne.s32.totalorder %s23, %s24
    %p35 = scmp.eq.s32.totalorder %s15, 0
    %p36 = por %p34, %p35
    %p37 = scmp.ne.s32.totalorder %s23, %s24
    %p38 = scmp.eq.s32.totalorder %s16, 1
    %p39 = por %p37, %p38
    %p41 = scmp.ne.s32.totalorder %s24, %s40
    %p42 = scmp.eq.s32.totalorder %s16, 0
    %p43 = por %p41, %p42
    %s44 = ssub.s32 %s10, %s17
    %p45 = scmp.eq.s32.totalorder %s44, 0
    %s47 = sadd.s32 %s46, 1
    %s48 = scalar_select %p45, %s46, %s47
    %p51 = pneg %p45
    %p52 = scmp.eq.s32.totalorder %s10, 1
    %p53 = por %p51, %p52
    %p54 = scmp.ne.s32.totalorder %s46, %s49
    %p55 = scmp.eq.s32.totalorder %s10, 0
    %p56 = por %p54, %p55
    %p57 = scmp.ne.s32.totalorder %s46, %s49
    %p58 = scmp.eq.s32.totalorder %s15, 1
    %p59 = por %p57, %p58
    %p60 = scmp.ne.s32.totalorder %s49, %s50
    %p61 = scmp.eq.s32.totalorder %s15, 0
    %p62 = por %p60, %p61
    %p63 = scmp.ne.s32.totalorder %s49, %s50
    %p64 = scmp.eq.s32.totalorder %s16, 1
    %p65 = por %p63, %p64
    %p67 = scmp.ne.s32.totalorder %s50, %s66
    %p68 = scmp.eq.s32.totalorder %s16, 0
    %p69 = por %p67, %p68
    %s71 = sadd.s32 %s70, 1
    %p74 = scmp.eq.s32.totalorder %s10, 1
    %p75 = scmp.ne.s32.totalorder %s70, %s72
    %p76 = scmp.eq.s32.totalorder %s10, 0
    %p77 = por %p75, %p76
    %p78 = scmp.ne.s32.totalorder %s70, %s72
    %p79 = scmp.eq.s32.totalorder %s15, 1
    %p80 = por %p78, %p79
    %p81 = scmp.ne.s32.totalorder %s72, %s73
    %p82 = scmp.eq.s32.totalorder %s15, 0
    %p83 = por %p81, %p82
    %p84 = scmp.ne.s32.totalorder %s72, %s73
    %p85 = scmp.eq.s32.totalorder %s16, 1
    %p86 = por %p84, %p85
    %p88 = scmp.ne.s32.totalorder %s73, %s87
    %p89 = scmp.eq.s32.totalorder %s16, 0
    %p90 = por %p88, %p89
    %s92 = sadd.s32 %s91, 1
    %p95 = scmp.eq.s32.totalorder %s10, 1
    %p96 = scmp.ne.s32.totalorder %s91, %s93
    %p97 = scmp.eq.s32.totalorder %s10, 0
    %p98 = por %p96, %p97
    %p99 = scmp.ne.s32.totalorder %s91, %s93
    %p100 = scmp.eq.s32.totalorder %s15, 1
    %p101 = por %p99, %p100
    %p102 = scmp.ne.s32.totalorder %s93, %s94
    %p103 = scmp.eq.s32.totalorder %s15, 0
    %p104 = por %p102, %p103
    %p105 = scmp.ne.s32.totalorder %s93, %s94
    %p106 = scmp.eq.s32.totalorder %s16, 1
    %p107 = por %p105, %p106
    %p109 = scmp.ne.s32.totalorder %s94, %s108
    %p110 = scmp.eq.s32.totalorder %s16, 0
    %p111 = por %p109, %p110
    %s112 = ssub.s32 %s10, %s17
    %p113 = scmp.eq.s32.totalorder %s112, 0
    %s115 = sadd.s32 %s114, 1
    %s116 = scalar_select %p113, %s114, %s115
    %p119 = pneg %p113
    %p120 = scmp.eq.s32.totalorder %s10, 1
    %p121 = por %p119, %p120
    %p122 = scmp.ne.s32.totalorder %s114, %s117
    %p123 = scmp.eq.s32.totalorder %s10, 0
    %p124 = por %p122, %p123
    %p125 = scmp.ne.s32.totalorder %s114, %s117
    %p126 = scmp.eq.s32.totalorder %s15, 1
    %p127 = por %p125, %p126
    %p128 = scmp.ne.s32.totalorder %s117, %s118
    %p129 = scmp.eq.s32.totalorder %s15, 0
    %p130 = por %p128, %p129
    %p131 = scmp.ne.s32.totalorder %s117, %s118
    %p132 = scmp.eq.s32.totalorder %s16, 1
    %p133 = por %p131, %p132
    %p135 = scmp.ne.s32.totalorder %s118, %s134
    %p136 = scmp.eq.s32.totalorder %s16, 0
    %p137 = por %p135, %p136
    %p138 = scmp.le.s32.totalorder 1, %s10
    %p139 = scmp.lt.s32.totalorder %s10, 3
    %p140 = pnand %p138, %p139
    %p141 = pneg %p140
    // Predicated region
    $region9: #{informer_forward.37} parent=5 // pred_check
      _
    $region10: #{informer_forward.37} parent=5 // pred_check_branch
      %143 = sbr.rel (%p140) target = $region12
    $region11: #{informer_forward.37} parent=5 // pred_region
      %s144 = ssub.s32 %s10, 1
      // Predicated region
      $region13: #{informer_forward.37} parent=11 // pred_check
        %p145 = pneg %p83
      $region14: #{informer_forward.37} parent=11 // pred_check_branch
        %147 = sbr.rel (%p145) target = $region16
      $region15: #{informer_forward.37} parent=11 // pred_region
        _
      $region16: #{informer_forward.37} parent=11 // pred_fallthru
        _
      // Predicated region
      $region17: #{informer_forward.37} parent=11 // pred_check
        %p148 = pneg %p104
      $region18: #{informer_forward.37} parent=11 // pred_check_branch
        %150 = sbr.rel (%p148) target = $region20
      $region19: #{informer_forward.37} parent=11 // pred_region
        _
      $region20: #{informer_forward.37} parent=11 // pred_fallthru
        _
    $region12: #{informer_forward.37} parent=5 // pred_fallthru
      _
    %p151 = scmp.lt.s32.totalorder %s10, 2
    // Predicated region
    $region21: #{informer_forward.37} parent=5 // pred_check
      %p152 = pneg %p151
    $region22: #{informer_forward.37} parent=5 // pred_check_branch
      %154 = sbr.rel (%p152) target = $region24
    $region23: #{informer_forward.37} parent=5 // pred_region
      // Predicated region
      $region25: #{informer_forward.37} parent=23 // pred_check
        %p155 = pneg %p30
      $region26: #{informer_forward.37} parent=23 // pred_check_branch
        %157 = sbr.rel (%p155) target = $region28
      $region27: #{informer_forward.37} parent=23 // pred_region
        %s158 = smul.u32 2, %s10
        %p159 = scmp.lt.s32.totalorder %s158, 3
        %s160 = scalar_select %p159, %s158, 3
        %s161 = smul.addr %s160, 8
        %s162 = scalar_lea.vmem %s0, %s161
        %s163 = smul.u32 2, %s10
      $region28: #{informer_forward.37} parent=23 // pred_fallthru
        _
      // Predicated region
      $region29: #{informer_forward.37} parent=23 // pred_check
        %p164 = pneg %p56
      $region30: #{informer_forward.37} parent=23 // pred_check_branch
        %166 = sbr.rel (%p164) target = $region32
      $region31: #{informer_forward.37} parent=23 // pred_region
        %s167 = smul.u32 2, %s10
        %p168 = scmp.lt.s32.totalorder %s167, 3
        %s169 = scalar_select %p168, %s167, 3
        %s170 = smul.addr %s169, 8
        %s171 = scalar_lea.vmem %s1, %s170
        %s172 = smul.u32 2, %s10
      $region32: #{informer_forward.37} parent=23 // pred_fallthru
        _
    $region24: #{informer_forward.37} parent=5 // pred_fallthru
      _
    %p173 = scmp.le.s32.totalorder 1, %s10
    %p174 = scmp.lt.s32.totalorder %s10, 3
    %p175 = pnand %p173, %p174
    %p176 = pneg %p175
    // Predicated region
    $region33: #{informer_forward.37} parent=5 // pred_check
      _
    $region34: #{informer_forward.37} parent=5 // pred_check_branch
      %178 = sbr.rel (%p175) target = $region36
    $region35: #{informer_forward.37} parent=5 // pred_region
      %s179 = ssub.s32 %s10, 1
      %s180 = smul.u32 2, %s15
      %p181 = scmp.lt.s32.totalorder %s180, 3
      %s182 = scalar_select %p181, %s180, 3
      %s183 = smul.addr %s182, 8
      %s184 = scalar_lea.vmem %s0, %s183
      %p185 = pneg %p36
      %p186 = pneg %p33
      %s187 = smul.u32 2, %s15
      %p188 = scmp.lt.s32.totalorder %s187, 3
      %s189 = scalar_select %p188, %s187, 3
      %s190 = smul.addr %s189, 8
      %s191 = scalar_lea.vmem %s1, %s190
      %p192 = pneg %p62
      %p193 = pneg %p59
      %p194 = pneg %p83
      %p195 = pneg %p80
      %p196 = pneg %p104
      %p197 = pneg %p101
      %p198 = pneg %p130
      %p199 = pneg %p127
      %s200 = smul.u32 2, %s15
      %p201 = scmp.lt.s32.totalorder %s200, 3
      %s202 = scalar_select %p201, %s200, 3
      %s203 = smul.addr %s202, 8
      %s204 = scalar_lea.vmem %s4, %s203
      %s205 = smul.u32 2, %s15
      %p206 = scmp.lt.s32.totalorder %s205, 3
      %s207 = scalar_select %p206, %s205, 3
      %s208 = smul.addr %s207, 8
      %s209 = scalar_lea.vmem %s0, %s208
      %s210 = smul.u32 2, %s15
      %s211 = smul.u32 2, %s15
      %p212 = scmp.lt.s32.totalorder %s211, 3
      %s213 = scalar_select %p212, %s211, 3
      %s214 = smul.addr %s213, 8
      %s215 = scalar_lea.vmem %s1, %s214
      %s216 = smul.u32 2, %s15
      %s217 = smul.u32 2, %s15
      %p218 = scmp.lt.s32.totalorder %s217, 3
      %s219 = scalar_select %p218, %s217, 3
      %s220 = smul.addr %s219, 8
      %s221 = scalar_lea.vmem %s4, %s220
      %s222 = smul.u32 2, %s15
      %v223 = vld [vmem:[%s209] sm:$0xff]
      %v224 = vld [vmem:[%s209 + $0x8] sm:$0xff]
      %v225 = vld [vmem:[%s215] sm:$0xff]
      %v226 = vld [vmem:[%s215 + $0x8] sm:$0xff]
      %v227 = vadd.f32 %v223, %v225
      %v228 = vadd.f32 %v224, %v226
      %v229 = vld [vmem:[%s2] sm:$0x1]
      %v230 = vld [vmem:[%s3] sm:$0x1]
      %vm231 = vcmask 261120
      %v232 = vsel %vm231, %v227, 0.0
      %233 = vadd.xlane.f32.xlu0 %v232
      %v234 = vpop.xlane.xlu0 %233
      %v235 = vsel %vm231, %v228, 0.0
      %236 = vadd.xlane.f32.xlu0 %v235
      %v237 = vpop.xlane.xlu0 %236
      %v238 = vrcp.pop 32.0
      %v239 = vmul.f32 32.0, %v238
      %v240 = vsub.f32 1.0, %v239
      %v241 = vmul.f32 %v238, %v240
      %v242 = vadd.f32 %v238, %v241
      %vm243 = vweird.f32 %v238
      %v244 = vsel %vm243, %v238, %v242
      %v245 = vmul.f32 %v234, %v244
      %v246 = vmul.f32 %v237, %v244
      %v247 = vsub.f32 %v227, %v245
      %v248 = vsub.f32 %v228, %v246
      %v249 = vmul.f32 %v247, %v247
      %v250 = vmul.f32 %v248, %v248
      %v251 = vsel %vm231, %v249, 0.0
      %252 = vadd.xlane.f32.xlu0 %v251
      %v253 = vpop.xlane.xlu0 %252
      %v254 = vsel %vm231, %v250, 0.0
      %255 = vadd.xlane.f32.xlu0 %v254
      %v256 = vpop.xlane.xlu0 %255
      %v257 = vmul.f32 %v253, %v244
      %v258 = vmul.f32 %v256, %v244
      %v259 = vadd.f32 %v257, 1e-05
      %v260 = vadd.f32 %v258, 1e-05
      %v261 = vrsqrt.pop %v259
      %v262 = vmul.f32 %v261, %v259
      %v263 = vmul.f32 %v262, %v261
      %v264 = vmul.f32 0.5, %v263
      %v265 = vsub.f32 1.5, %v264
      %v266 = vmul.f32 %v261, %v265
      %vm267 = vweird.f32 %v259
      %vm268 = vweird.f32 %v261
      %vm269 = vmor %vm267, %vm268
      %v270 = vsel %vm269, %v261, %v266
      %v271 = vrsqrt.pop %v260
      %v272 = vmul.f32 %v271, %v260
      %v273 = vmul.f32 %v272, %v271
      %v274 = vmul.f32 0.5, %v273
      %v275 = vsub.f32 1.5, %v274
      %v276 = vmul.f32 %v271, %v275
      %vm277 = vweird.f32 %v260
      %vm278 = vweird.f32 %v271
      %vm279 = vmor %vm277, %vm278
      %v280 = vsel %vm279, %v271, %v276
      %v281 = vmul.f32 %v247, %v270
      %v282 = vmul.f32 %v248, %v280
      %v284 = vperm.slane %v229, 0
      %v286 = vmul.f32 %v281, %v284
      %v287 = vmul.f32 %v282, %v284
      %v289 = vperm.slane %v230, 0
      %v291 = vadd.f32 %v286, %v289
      %v292 = vadd.f32 %v287, %v289
      %293 = vst.msk [vmem:[%s221] sm:$0xff] %vm231, %v291
      %294 = vst.msk [vmem:[%s221 + $0x8] sm:$0xff] %vm231, %v292
      %s295 = smul.u32 2, %s15
      %p296 = scmp.lt.s32.totalorder %s295, 3
      %s297 = scalar_select %p296, %s295, 3
      %s298 = smul.addr %s297, 8
      %s299 = scalar_lea.vmem %s4, %s298
      // Predicated region
      $region37: #{informer_forward.37} parent=35 // pred_check
        %p300 = pneg %p127
      $region38: #{informer_forward.37} parent=35 // pred_check_branch
        %302 = sbr.rel (%p300) target = $region40
      $region39: #{informer_forward.37} parent=35 // pred_region
        %s303 = smul.u32 2, %s15
      $region40: #{informer_forward.37} parent=35 // pred_fallthru
        _
    $region36: #{informer_forward.37} parent=5 // pred_fallthru
      _
    %p304 = scmp.le.s32.totalorder 2, %s10
    // Predicated region
    $region41: #{informer_forward.37} parent=5 // pred_check
      %p305 = pneg %p304
    $region42: #{informer_forward.37} parent=5 // pred_check_branch
      %307 = sbr.rel (%p305) target = $region44
    $region43: #{informer_forward.37} parent=5 // pred_region
      %s308 = ssub.s32 %s10, 2
      // Predicated region
      $region45: #{informer_forward.37} parent=43 // pred_check
        %p309 = pneg %p133
      $region46: #{informer_forward.37} parent=43 // pred_check_branch
        %311 = sbr.rel (%p309) target = $region48
      $region47: #{informer_forward.37} parent=43 // pred_region
        %s312 = smul.u32 2, %s16
        %p313 = scmp.lt.s32.totalorder %s312, 3
        %s314 = scalar_select %p313, %s312, 3
        %s315 = smul.addr %s314, 8
        %s316 = scalar_lea.vmem %s4, %s315
      $region48: #{informer_forward.37} parent=43 // pred_fallthru
        _
    $region44: #{informer_forward.37} parent=5 // pred_fallthru
      _
  $region6: #{informer_forward.37} parent=0 // loop_footer
    %s14 = sadd.s32 1, %s10
  $region7: #{informer_forward.37} parent=0 // loop_footer_branch
    %9 = sbr.rel target = $region3
  $region8: #{informer_forward.37} parent=0 // loop_exit
    _

// kernel: informer_forward.34
$region0: #{informer_forward.34}
  #allocation0 [shape = 'u32[]', space=smem, size = 0x4, offset = 0x4, fixed_abs, tag = 'smem constant byte address 0x4 - core index']
  #allocation1 [shape = 'u32[72,128]{1,0:T(1,128)}', space=vmem, size = 0x9000, scoped, tag = 'internal scratch']
  %s0 = inlined_call_operand.vmem [shape: f32[2,16,32], index: 0, kind: input, shape index: {}]
  %s1 = inlined_call_operand.vmem [shape: f32[1,16,32], index: 1, kind: input, shape index: {}]
  %s2 = inlined_call_operand.vmem [shape: bf16[32,64], index: 2, kind: input, shape index: {}]
  %s3 = inlined_call_operand.vmem [shape: bf16[32,32], index: 3, kind: input, shape index: {}]
  %s4 = inlined_call_operand.vmem [shape: f32[1,96], index: 4, kind: input, shape index: {}]
  %s5 = inlined_call_operand.vmem [shape: f32[2,16,96], index: 5, kind: output, shape index: {}]
  %s6 = sld [smem:[#allocation0]]
  $region53: #{informer_forward.34} parent=0
    _
  %s8 = ssub.s32 1, %s6
  %s9 = scalar_select 0, %s8, %s6
  loop: start=0, step=1, limit=4
  $region2: #{informer_forward.34} parent=0 // loop_pre_header
    _
  $region3: #{informer_forward.34} parent=0 // loop_header
    %s11 = sphi 0, %s15
    %p12 = scmp.ge.s32.totalorder %s11, 4
    %s21 = sphi 0, %s23
    %s24 = sphi 0, %s21
    %s25 = sphi 0, %s24
    %s41 = sphi 0, %s25
    %s45 = sphi 0, %s45
    %s47 = sphi 0, %s45
    %s48 = sphi 0, %s47
    %s62 = sphi 0, %s48
    %s66 = sphi 0, %s66
    %s68 = sphi 0, %s66
    %s69 = sphi 0, %s68
    %s83 = sphi 0, %s69
    %s87 = sphi 0, %s87
    %s89 = sphi 0, %s87
    %s90 = sphi 0, %s89
    %s104 = sphi 0, %s90
    %s108 = sphi 0, %s108
    %s110 = sphi 0, %s108
    %s111 = sphi 0, %s110
    %s125 = sphi 0, %s111
    %s131 = sphi 0, %s133
    %s134 = sphi 0, %s131
    %s135 = sphi 0, %s134
    %s151 = sphi 0, %s135
  $region4: #{informer_forward.34} parent=0 // loop_header_branch
    %14 = sbr.rel (%p12) target = $region8
  $region5: #{informer_forward.34} parent=0 // loop_body
    %s16 = ssub.s32 %s11, 1
    %s17 = ssub.s32 %s11, 2
    %s18 = sadd.s32 %s11, 1
    %s19 = ssub.s32 %s11, %s18
    %p20 = scmp.eq.s32.totalorder %s19, 0
    %s22 = sadd.s32 %s21, 1
    %s23 = scalar_select %p20, %s21, %s22
    %p26 = pneg %p20
    %p27 = scmp.eq.s32.totalorder %s11, 1
    %p28 = por %p26, %p27
    %p29 = scmp.ne.s32.totalorder %s21, %s24
    %p30 = scmp.eq.s32.totalorder %s11, 0
    %p31 = por %p29, %p30
    %p32 = scmp.ne.s32.totalorder %s21, %s24
    %p33 = scmp.eq.s32.totalorder %s16, 1
    %p34 = por %p32, %p33
    %p35 = scmp.ne.s32.totalorder %s24, %s25
    %p36 = scmp.eq.s32.totalorder %s16, 0
    %p37 = por %p35, %p36
    %p38 = scmp.ne.s32.totalorder %s24, %s25
    %p39 = scmp.eq.s32.totalorder %s17, 1
    %p40 = por %p38, %p39
    %p42 = scmp.ne.s32.totalorder %s25, %s41
    %p43 = scmp.eq.s32.totalorder %s17, 0
    %p44 = por %p42, %p43
    %s46 = sadd.s32 %s45, 1
    %p49 = scmp.eq.s32.totalorder %s11, 1
    %p50 = scmp.ne.s32.totalorder %s45, %s47
    %p51 = scmp.eq.s32.totalorder %s11, 0
    %p52 = por %p50, %p51
    %p53 = scmp.ne.s32.totalorder %s45, %s47
    %p54 = scmp.eq.s32.totalorder %s16, 1
    %p55 = por %p53, %p54
    %p56 = scmp.ne.s32.totalorder %s47, %s48
    %p57 = scmp.eq.s32.totalorder %s16, 0
    %p58 = por %p56, %p57
    %p59 = scmp.ne.s32.totalorder %s47, %s48
    %p60 = scmp.eq.s32.totalorder %s17, 1
    %p61 = por %p59, %p60
    %p63 = scmp.ne.s32.totalorder %s48, %s62
    %p64 = scmp.eq.s32.totalorder %s17, 0
    %p65 = por %p63, %p64
    %s67 = sadd.s32 %s66, 1
    %p70 = scmp.eq.s32.totalorder %s11, 1
    %p71 = scmp.ne.s32.totalorder %s66, %s68
    %p72 = scmp.eq.s32.totalorder %s11, 0
    %p73 = por %p71, %p72
    %p74 = scmp.ne.s32.totalorder %s66, %s68
    %p75 = scmp.eq.s32.totalorder %s16, 1
    %p76 = por %p74, %p75
    %p77 = scmp.ne.s32.totalorder %s68, %s69
    %p78 = scmp.eq.s32.totalorder %s16, 0
    %p79 = por %p77, %p78
    %p80 = scmp.ne.s32.totalorder %s68, %s69
    %p81 = scmp.eq.s32.totalorder %s17, 1
    %p82 = por %p80, %p81
    %p84 = scmp.ne.s32.totalorder %s69, %s83
    %p85 = scmp.eq.s32.totalorder %s17, 0
    %p86 = por %p84, %p85
    %s88 = sadd.s32 %s87, 1
    %p91 = scmp.eq.s32.totalorder %s11, 1
    %p92 = scmp.ne.s32.totalorder %s87, %s89
    %p93 = scmp.eq.s32.totalorder %s11, 0
    %p94 = por %p92, %p93
    %p95 = scmp.ne.s32.totalorder %s87, %s89
    %p96 = scmp.eq.s32.totalorder %s16, 1
    %p97 = por %p95, %p96
    %p98 = scmp.ne.s32.totalorder %s89, %s90
    %p99 = scmp.eq.s32.totalorder %s16, 0
    %p100 = por %p98, %p99
    %p101 = scmp.ne.s32.totalorder %s89, %s90
    %p102 = scmp.eq.s32.totalorder %s17, 1
    %p103 = por %p101, %p102
    %p105 = scmp.ne.s32.totalorder %s90, %s104
    %p106 = scmp.eq.s32.totalorder %s17, 0
    %p107 = por %p105, %p106
    %s109 = sadd.s32 %s108, 1
    %p112 = scmp.eq.s32.totalorder %s11, 1
    %p113 = scmp.ne.s32.totalorder %s108, %s110
    %p114 = scmp.eq.s32.totalorder %s11, 0
    %p115 = por %p113, %p114
    %p116 = scmp.ne.s32.totalorder %s108, %s110
    %p117 = scmp.eq.s32.totalorder %s16, 1
    %p118 = por %p116, %p117
    %p119 = scmp.ne.s32.totalorder %s110, %s111
    %p120 = scmp.eq.s32.totalorder %s16, 0
    %p121 = por %p119, %p120
    %p122 = scmp.ne.s32.totalorder %s110, %s111
    %p123 = scmp.eq.s32.totalorder %s17, 1
    %p124 = por %p122, %p123
    %p126 = scmp.ne.s32.totalorder %s111, %s125
    %p127 = scmp.eq.s32.totalorder %s17, 0
    %p128 = por %p126, %p127
    %s129 = ssub.s32 %s11, %s18
    %p130 = scmp.eq.s32.totalorder %s129, 0
    %s132 = sadd.s32 %s131, 1
    %s133 = scalar_select %p130, %s131, %s132
    %p136 = pneg %p130
    %p137 = scmp.eq.s32.totalorder %s11, 1
    %p138 = por %p136, %p137
    %p139 = scmp.ne.s32.totalorder %s131, %s134
    %p140 = scmp.eq.s32.totalorder %s11, 0
    %p141 = por %p139, %p140
    %p142 = scmp.ne.s32.totalorder %s131, %s134
    %p143 = scmp.eq.s32.totalorder %s16, 1
    %p144 = por %p142, %p143
    %p145 = scmp.ne.s32.totalorder %s134, %s135
    %p146 = scmp.eq.s32.totalorder %s16, 0
    %p147 = por %p145, %p146
    %p148 = scmp.ne.s32.totalorder %s134, %s135
    %p149 = scmp.eq.s32.totalorder %s17, 1
    %p150 = por %p148, %p149
    %p152 = scmp.ne.s32.totalorder %s135, %s151
    %p153 = scmp.eq.s32.totalorder %s17, 0
    %p154 = por %p152, %p153
    %p155 = scmp.le.s32.totalorder 1, %s11
    %p156 = scmp.lt.s32.totalorder %s11, 3
    %p157 = pnand %p155, %p156
    %p158 = pneg %p157
    // Predicated region
    $region9: #{informer_forward.34} parent=5 // pred_check
      _
    $region10: #{informer_forward.34} parent=5 // pred_check_branch
      %160 = sbr.rel (%p157) target = $region12
    $region11: #{informer_forward.34} parent=5 // pred_region
      %s161 = ssub.s32 %s11, 1
      // Predicated region
      $region13: #{informer_forward.34} parent=11 // pred_check
        %p162 = pneg %p58
      $region14: #{informer_forward.34} parent=11 // pred_check_branch
        %164 = sbr.rel (%p162) target = $region16
      $region15: #{informer_forward.34} parent=11 // pred_region
        _
      $region16: #{informer_forward.34} parent=11 // pred_fallthru
        _
      // Predicated region
      $region17: #{informer_forward.34} parent=11 // pred_check
        %p165 = pneg %p79
      $region18: #{informer_forward.34} parent=11 // pred_check_branch
        %167 = sbr.rel (%p165) target = $region20
      $region19: #{informer_forward.34} parent=11 // pred_region
        _
      $region20: #{informer_forward.34} parent=11 // pred_fallthru
        _
      // Predicated region
      $region21: #{informer_forward.34} parent=11 // pred_check
        %p168 = pneg %p100
      $region22: #{informer_forward.34} parent=11 // pred_check_branch
        %170 = sbr.rel (%p168) target = $region24
      $region23: #{informer_forward.34} parent=11 // pred_region
        _
      $region24: #{informer_forward.34} parent=11 // pred_fallthru
        _
      // Predicated region
      $region25: #{informer_forward.34} parent=11 // pred_check
        %p171 = pneg %p121
      $region26: #{informer_forward.34} parent=11 // pred_check_branch
        %173 = sbr.rel (%p171) target = $region28
      $region27: #{informer_forward.34} parent=11 // pred_region
        _
      $region28: #{informer_forward.34} parent=11 // pred_fallthru
        _
    $region12: #{informer_forward.34} parent=5 // pred_fallthru
      _
    %p174 = scmp.lt.s32.totalorder %s11, 2
    // Predicated region
    $region29: #{informer_forward.34} parent=5 // pred_check
      %p175 = pneg %p174
    $region30: #{informer_forward.34} parent=5 // pred_check_branch
      %177 = sbr.rel (%p175) target = $region32
    $region31: #{informer_forward.34} parent=5 // pred_region
      // Predicated region
      $region33: #{informer_forward.34} parent=31 // pred_check
        %p178 = pneg %p31
      $region34: #{informer_forward.34} parent=31 // pred_check_branch
        %180 = sbr.rel (%p178) target = $region36
      $region35: #{informer_forward.34} parent=31 // pred_region
        %p181 = scmp.lt.s32.totalorder %s11, 1
        %s182 = scalar_select %p181, %s11, 1
        %s183 = smul.addr %s182, 2
        %s184 = smul.addr %s183, 8
        %s185 = scalar_lea.vmem %s0, %s184
      $region36: #{informer_forward.34} parent=31 // pred_fallthru
        _
    $region32: #{informer_forward.34} parent=5 // pred_fallthru
      _
    %p186 = scmp.le.s32.totalorder 1, %s11
    %p187 = scmp.lt.s32.totalorder %s11, 3
    %p188 = pnand %p186, %p187
    %p189 = pneg %p188
    // Predicated region
    $region37: #{informer_forward.34} parent=5 // pred_check
      _
    $region38: #{informer_forward.34} parent=5 // pred_check_branch
      %191 = sbr.rel (%p188) target = $region40
    $region39: #{informer_forward.34} parent=5 // pred_region
      %s192 = ssub.s32 %s11, 1
      %p193 = scmp.lt.s32.totalorder %s16, 1
      %s194 = scalar_select %p193, %s16, 1
      %s195 = smul.addr %s194, 2
      %s196 = smul.addr %s195, 8
      %s197 = scalar_lea.vmem %s0, %s196
      %p198 = pneg %p37
      %p199 = pneg %p34
      %p200 = pneg %p58
      %p201 = pneg %p55
      %p202 = pneg %p79
      %p203 = pneg %p76
      %p204 = pneg %p100
      %p205 = pneg %p97
      %p206 = pneg %p121
      %p207 = pneg %p118
      %p208 = pneg %p147
      %p209 = pneg %p144
      %p210 = scmp.lt.s32.totalorder %s16, 1
      %s211 = scalar_select %p210, %s16, 1
      %s212 = smul.addr %s211, 2
      %s213 = smul.addr %s212, 8
      %s214 = scalar_lea.vmem %s5, %s213
      %p215 = scmp.lt.s32.totalorder %s16, 1
      %s216 = scalar_select %p215, %s16, 1
      %s217 = smul.addr %s216, 2
      %s218 = smul.addr %s217, 8
      %s219 = scalar_lea.vmem %s0, %s218
      %p220 = scmp.lt.s32.totalorder %s16, 1
      %s221 = scalar_select %p220, %s16, 1
      %s222 = smul.addr %s221, 2
      %s223 = smul.addr %s222, 8
      %s224 = scalar_lea.vmem %s5, %s223
      %v226 = vld [vmem:[%s219] sm:$0xff]
      %v227 = vld [vmem:[%s219 + $0x8] sm:$0xff]
      %v228 = vld [vmem:[%s1] sm:$0xff]
      %v229 = vld [vmem:[%s1 + $0x8] sm:$0xff]
      %v230 = vadd.f32 %v226, %v228
      %v231 = vadd.f32 %v227, %v229
      %v232 = vpack.c.bf16 %v231, %v230
      %v233 = vld [vmem:[%s2] sm:$0xf]
      %v234 = vld [vmem:[%s2 + $0x4] sm:$0xf]
      %v235 = vld [vmem:[%s2 + $0x8] sm:$0xf]
      %v236 = vld [vmem:[%s2 + $0xc] sm:$0xf]
      %v241 = vunpack.c.l.b16 %v233
      %v242 = vunpack.c.l.b16 %v234
      %v243 = vunpack.c.l.b16 %v235
      %v244 = vunpack.c.l.b16 %v236
      %v245 = vpack.c.b16 %v242, %v241
      %v246 = vpack.c.b16 %v244, %v243
      %vm249 = vcmask 261120
      %v251 = vsel %vm249, %v232, 0
      %253 = vmatpush.bf16.msra.mxu0 0
      %254 = vmatpush.bf16.msra.mxu0 0
      %255 = vmatpush.bf16.msra.mxu0 0
      %256 = vmatpush.bf16.msra.mxu0 0
      %257 = vmatpush.bf16.msra.mxu0 0
      %258 = vmatpush.bf16.msra.mxu0 0
      %259 = vmatpush.bf16.msra.mxu0 %v246
      %260 = vmatpush.bf16.msra.mxu0 %v245
      %261 = vmatmul.bf16.gmra.mxu0 %v251
      %v262 = vpop.f32.mrf.mxu0
      %v263 = vadd.f32 0.0, %v262
      %v264 = vpop.f32.mrf.mxu0
      %v265 = vadd.f32 0.0, %v264
      %266 = vdwg.mxu0
      %v267 = vpack.c.bf16 %v227, %v226
      %v268 = vld [vmem:[%s3] sm:$0xf]
      %v269 = vld [vmem:[%s3 + $0x4] sm:$0xf]
      %v270 = vld [vmem:[%s3 + $0x8] sm:$0xf]
      %v271 = vld [vmem:[%s3 + $0xc] sm:$0xf]
      %v276 = vunpack.c.l.b16 %v268
      %v277 = vunpack.c.l.b16 %v269
      %v278 = vunpack.c.l.b16 %v270
      %v279 = vunpack.c.l.b16 %v271
      %v280 = vpack.c.b16 %v277, %v276
      %v281 = vpack.c.b16 %v279, %v278
      %v285 = vsel %vm249, %v267, 0
      %287 = vmatpush.bf16.msra.mxu0 0
      %288 = vmatpush.bf16.msra.mxu0 0
      %289 = vmatpush.bf16.msra.mxu0 0
      %290 = vmatpush.bf16.msra.mxu0 0
      %291 = vmatpush.bf16.msra.mxu0 0
      %292 = vmatpush.bf16.msra.mxu0 0
      %293 = vmatpush.bf16.msra.mxu0 %v281
      %294 = vmatpush.bf16.msra.mxu0 %v280
      %295 = vmatmul.bf16.gmra.mxu0 %v285
      %v296 = vpop.f32.mrf.mxu0
      %v297 = vadd.f32 0.0, %v296
      %v298 = vpop.f32.mrf.mxu0
      %v299 = vadd.f32 0.0, %v298
      %300 = vdwg.mxu0
      %303 = vrot.lane.b32.xlu0 %v297, 64
      %v304 = vpop.permute.xlu0 %303
      %305 = vrot.lane.b32.xlu0 %v299, 64
      %v306 = vpop.permute.xlu0 %305
      %vm309 = vcmask 523264
      %v310 = vsel %vm309, %v263, %v304
      %v311 = vsel %vm309, %v265, %v306
      %v312 = vld [vmem:[%s4] sm:$0x1]
      %v314 = vperm.slane %v312, 0
      %v316 = vadd.f32 %v310, %v314
      %v317 = vadd.f32 %v311, %v314
      %vm318 = vcmask 785408
      %319 = vst.msk [vmem:[%s224] sm:$0xff] %vm318, %v316
      %320 = vst.msk [vmem:[%s224 + $0x8] sm:$0xff] %vm318, %v317
      %p321 = scmp.lt.s32.totalorder %s16, 1
      %s322 = scalar_select %p321, %s16, 1
      %s323 = smul.addr %s322, 2
      %s324 = smul.addr %s323, 8
      %s325 = scalar_lea.vmem %s5, %s324
      // Predicated region
      $region41: #{informer_forward.34} parent=39 // pred_check
        %p326 = pneg %p144
      $region42: #{informer_forward.34} parent=39 // pred_check_branch
        %328 = sbr.rel (%p326) target = $region44
      $region43: #{informer_forward.34} parent=39 // pred_region
        _
      $region44: #{informer_forward.34} parent=39 // pred_fallthru
        _
    $region40: #{informer_forward.34} parent=5 // pred_fallthru
      _
    %p329 = scmp.le.s32.totalorder 2, %s11
    // Predicated region
    $region45: #{informer_forward.34} parent=5 // pred_check
      %p330 = pneg %p329
    $region46: #{informer_forward.34} parent=5 // pred_check_branch
      %332 = sbr.rel (%p330) target = $region48
    $region47: #{informer_forward.34} parent=5 // pred_region
      %s333 = ssub.s32 %s11, 2
      // Predicated region
      $region49: #{informer_forward.34} parent=47 // pred_check
        %p334 = pneg %p150
      $region50: #{informer_forward.34} parent=47 // pred_check_branch
        %336 = sbr.rel (%p334) target = $region52
      $region51: #{informer_forward.34} parent=47 // pred_region
        %p337 = scmp.lt.s32.totalorder %s17, 1
        %s338 = scalar_select %p337, %s17, 1
        %s339 = smul.addr %s338, 2
        %s340 = smul.addr %s339, 8
        %s341 = scalar_lea.vmem %s5, %s340
      $region52: #{informer_forward.34} parent=47 // pred_fallthru
        _
    $region48: #{informer_forward.34} parent=5 // pred_fallthru
      _
  $region6: #{informer_forward.34} parent=0 // loop_footer
    %s15 = sadd.s32 1, %s11
  $region7: #{informer_forward.34} parent=0 // loop_footer_branch
    %10 = sbr.rel target = $region3
  $region8: #{informer_forward.34} parent=0 // loop_exit
    _

// kernel: informer_forward.36
$region0: #{informer_forward.36}
  #allocation0 [shape = 'u32[]', space=smem, size = 0x4, offset = 0x4, fixed_abs, tag = 'smem constant byte address 0x4 - core index']
  #allocation1 [shape = 'u32[72,128]{1,0:T(1,128)}', space=vmem, size = 0x9000, scoped, tag = 'internal scratch']
  %s0 = inlined_call_operand.vmem [shape: bf16[32,32], index: 0, kind: input, shape index: {}]
  %s1 = inlined_call_operand.vmem [shape: bf16[32,32], index: 1, kind: input, shape index: {}]
  %s2 = inlined_call_operand.vmem [shape: f32[1,32], index: 2, kind: input, shape index: {}]
  %s3 = inlined_call_operand.vmem [shape: f32[32,32], index: 3, kind: output, shape index: {}]
  %s4 = sld [smem:[#allocation0]]
  $region45: #{informer_forward.36} parent=0
    _
  %s6 = ssub.s32 1, %s4
  %s7 = scalar_select 0, %s6, %s4
  loop: start=0, step=1, limit=4
  $region2: #{informer_forward.36} parent=0 // loop_pre_header
    _
  $region3: #{informer_forward.36} parent=0 // loop_header
    %s9 = sphi 0, %s13
    %p10 = scmp.ge.s32.totalorder %s9, 4
    %s19 = sphi 0, %s21
    %s22 = sphi 0, %s19
    %s23 = sphi 0, %s22
    %s39 = sphi 0, %s23
    %s43 = sphi 0, %s43
    %s45 = sphi 0, %s43
    %s46 = sphi 0, %s45
    %s60 = sphi 0, %s46
    %s64 = sphi 0, %s64
    %s66 = sphi 0, %s64
    %s67 = sphi 0, %s66
    %s81 = sphi 0, %s67
    %s87 = sphi 0, %s89
    %s90 = sphi 0, %s87
    %s91 = sphi 0, %s90
    %s107 = sphi 0, %s91
  $region4: #{informer_forward.36} parent=0 // loop_header_branch
    %12 = sbr.rel (%p10) target = $region8
  $region5: #{informer_forward.36} parent=0 // loop_body
    %s14 = ssub.s32 %s9, 1
    %s15 = ssub.s32 %s9, 2
    %s16 = sadd.s32 %s9, 1
    %s17 = ssub.s32 %s9, %s16
    %p18 = scmp.eq.s32.totalorder %s17, 0
    %s20 = sadd.s32 %s19, 1
    %s21 = scalar_select %p18, %s19, %s20
    %p24 = pneg %p18
    %p25 = scmp.eq.s32.totalorder %s9, 1
    %p26 = por %p24, %p25
    %p27 = scmp.ne.s32.totalorder %s19, %s22
    %p28 = scmp.eq.s32.totalorder %s9, 0
    %p29 = por %p27, %p28
    %p30 = scmp.ne.s32.totalorder %s19, %s22
    %p31 = scmp.eq.s32.totalorder %s14, 1
    %p32 = por %p30, %p31
    %p33 = scmp.ne.s32.totalorder %s22, %s23
    %p34 = scmp.eq.s32.totalorder %s14, 0
    %p35 = por %p33, %p34
    %p36 = scmp.ne.s32.totalorder %s22, %s23
    %p37 = scmp.eq.s32.totalorder %s15, 1
    %p38 = por %p36, %p37
    %p40 = scmp.ne.s32.totalorder %s23, %s39
    %p41 = scmp.eq.s32.totalorder %s15, 0
    %p42 = por %p40, %p41
    %s44 = sadd.s32 %s43, 1
    %p47 = scmp.eq.s32.totalorder %s9, 1
    %p48 = scmp.ne.s32.totalorder %s43, %s45
    %p49 = scmp.eq.s32.totalorder %s9, 0
    %p50 = por %p48, %p49
    %p51 = scmp.ne.s32.totalorder %s43, %s45
    %p52 = scmp.eq.s32.totalorder %s14, 1
    %p53 = por %p51, %p52
    %p54 = scmp.ne.s32.totalorder %s45, %s46
    %p55 = scmp.eq.s32.totalorder %s14, 0
    %p56 = por %p54, %p55
    %p57 = scmp.ne.s32.totalorder %s45, %s46
    %p58 = scmp.eq.s32.totalorder %s15, 1
    %p59 = por %p57, %p58
    %p61 = scmp.ne.s32.totalorder %s46, %s60
    %p62 = scmp.eq.s32.totalorder %s15, 0
    %p63 = por %p61, %p62
    %s65 = sadd.s32 %s64, 1
    %p68 = scmp.eq.s32.totalorder %s9, 1
    %p69 = scmp.ne.s32.totalorder %s64, %s66
    %p70 = scmp.eq.s32.totalorder %s9, 0
    %p71 = por %p69, %p70
    %p72 = scmp.ne.s32.totalorder %s64, %s66
    %p73 = scmp.eq.s32.totalorder %s14, 1
    %p74 = por %p72, %p73
    %p75 = scmp.ne.s32.totalorder %s66, %s67
    %p76 = scmp.eq.s32.totalorder %s14, 0
    %p77 = por %p75, %p76
    %p78 = scmp.ne.s32.totalorder %s66, %s67
    %p79 = scmp.eq.s32.totalorder %s15, 1
    %p80 = por %p78, %p79
    %p82 = scmp.ne.s32.totalorder %s67, %s81
    %p83 = scmp.eq.s32.totalorder %s15, 0
    %p84 = por %p82, %p83
    %s85 = ssub.s32 %s9, %s16
    %p86 = scmp.eq.s32.totalorder %s85, 0
    %s88 = sadd.s32 %s87, 1
    %s89 = scalar_select %p86, %s87, %s88
    %p92 = pneg %p86
    %p93 = scmp.eq.s32.totalorder %s9, 1
    %p94 = por %p92, %p93
    %p95 = scmp.ne.s32.totalorder %s87, %s90
    %p96 = scmp.eq.s32.totalorder %s9, 0
    %p97 = por %p95, %p96
    %p98 = scmp.ne.s32.totalorder %s87, %s90
    %p99 = scmp.eq.s32.totalorder %s14, 1
    %p100 = por %p98, %p99
    %p101 = scmp.ne.s32.totalorder %s90, %s91
    %p102 = scmp.eq.s32.totalorder %s14, 0
    %p103 = por %p101, %p102
    %p104 = scmp.ne.s32.totalorder %s90, %s91
    %p105 = scmp.eq.s32.totalorder %s15, 1
    %p106 = por %p104, %p105
    %p108 = scmp.ne.s32.totalorder %s91, %s107
    %p109 = scmp.eq.s32.totalorder %s15, 0
    %p110 = por %p108, %p109
    %p111 = scmp.le.s32.totalorder 1, %s9
    %p112 = scmp.lt.s32.totalorder %s9, 3
    %p113 = pnand %p111, %p112
    %p114 = pneg %p113
    // Predicated region
    $region9: #{informer_forward.36} parent=5 // pred_check
      _
    $region10: #{informer_forward.36} parent=5 // pred_check_branch
      %116 = sbr.rel (%p113) target = $region12
    $region11: #{informer_forward.36} parent=5 // pred_region
      %s117 = ssub.s32 %s9, 1
      // Predicated region
      $region13: #{informer_forward.36} parent=11 // pred_check
        %p118 = pneg %p56
      $region14: #{informer_forward.36} parent=11 // pred_check_branch
        %120 = sbr.rel (%p118) target = $region16
      $region15: #{informer_forward.36} parent=11 // pred_region
        _
      $region16: #{informer_forward.36} parent=11 // pred_fallthru
        _
      // Predicated region
      $region17: #{informer_forward.36} parent=11 // pred_check
        %p121 = pneg %p77
      $region18: #{informer_forward.36} parent=11 // pred_check_branch
        %123 = sbr.rel (%p121) target = $region20
      $region19: #{informer_forward.36} parent=11 // pred_region
        _
      $region20: #{informer_forward.36} parent=11 // pred_fallthru
        _
    $region12: #{informer_forward.36} parent=5 // pred_fallthru
      _
    %p124 = scmp.lt.s32.totalorder %s9, 2
    // Predicated region
    $region21: #{informer_forward.36} parent=5 // pred_check
      %p125 = pneg %p124
    $region22: #{informer_forward.36} parent=5 // pred_check_branch
      %127 = sbr.rel (%p125) target = $region24
    $region23: #{informer_forward.36} parent=5 // pred_region
      // Predicated region
      $region25: #{informer_forward.36} parent=23 // pred_check
        %p128 = pneg %p29
      $region26: #{informer_forward.36} parent=23 // pred_check_branch
        %130 = sbr.rel (%p128) target = $region28
      $region27: #{informer_forward.36} parent=23 // pred_region
        %s131 = smul.u32 2, %s9
        %p132 = scmp.lt.s32.totalorder %s131, 3
        %s133 = scalar_select %p132, %s131, 3
        %s134 = smul.addr %s133, 4
        %s135 = scalar_lea.vmem %s0, %s134
        %s136 = smul.u32 2, %s9
      $region28: #{informer_forward.36} parent=23 // pred_fallthru
        _
    $region24: #{informer_forward.36} parent=5 // pred_fallthru
      _
    %p137 = scmp.le.s32.totalorder 1, %s9
    %p138 = scmp.lt.s32.totalorder %s9, 3
    %p139 = pnand %p137, %p138
    %p140 = pneg %p139
    // Predicated region
    $region29: #{informer_forward.36} parent=5 // pred_check
      _
    $region30: #{informer_forward.36} parent=5 // pred_check_branch
      %142 = sbr.rel (%p139) target = $region32
    $region31: #{informer_forward.36} parent=5 // pred_region
      %s143 = ssub.s32 %s9, 1
      %s144 = smul.u32 2, %s14
      %p145 = scmp.lt.s32.totalorder %s144, 3
      %s146 = scalar_select %p145, %s144, 3
      %s147 = smul.addr %s146, 4
      %s148 = scalar_lea.vmem %s0, %s147
      %p149 = pneg %p35
      %p150 = pneg %p32
      %p151 = pneg %p56
      %p152 = pneg %p53
      %p153 = pneg %p77
      %p154 = pneg %p74
      %p155 = pneg %p103
      %p156 = pneg %p100
      %s157 = smul.u32 2, %s14
      %p158 = scmp.lt.s32.totalorder %s157, 3
      %s159 = scalar_select %p158, %s157, 3
      %s160 = smul.addr %s159, 8
      %s161 = scalar_lea.vmem %s3, %s160
      %s162 = smul.u32 2, %s14
      %p163 = scmp.lt.s32.totalorder %s162, 3
      %s164 = scalar_select %p163, %s162, 3
      %s165 = smul.addr %s164, 4
      %s166 = scalar_lea.vmem %s0, %s165
      %s167 = smul.u32 2, %s14
      %s168 = smul.u32 2, %s14
      %p169 = scmp.lt.s32.totalorder %s168, 3
      %s170 = scalar_select %p169, %s168, 3
      %s171 = smul.addr %s170, 8
      %s172 = scalar_lea.vmem %s3, %s171
      %s173 = smul.u32 2, %s14
      %v175 = vld [vmem:[%s166] sm:$0xf]
      %v176 = vld [vmem:[%s166 + $0x4] sm:$0xf]
      %v177 = vld [vmem:[%s1] sm:$0xf]
      %v178 = vld [vmem:[%s1 + $0x4] sm:$0xf]
      %v179 = vld [vmem:[%s1 + $0x8] sm:$0xf]
      %v180 = vld [vmem:[%s1 + $0xc] sm:$0xf]
      %v181 = vld [vmem:[%s2] sm:$0x1]
      %v183 = vperm.slane %v181, 0
      %v187 = vunpack.c.l.b16 %v175
      %v188 = vunpack.c.l.b16 %v176
      %v189 = vpack.c.b16 %v188, %v187
      %v194 = vunpack.c.l.b16 %v177
      %v195 = vunpack.c.l.b16 %v178
      %v196 = vunpack.c.l.b16 %v179
      %v197 = vunpack.c.l.b16 %v180
      %v198 = vpack.c.b16 %v195, %v194
      %v199 = vpack.c.b16 %v197, %v196
      %vm202 = vcmask 261120
      %v204 = vsel %vm202, %v189, 0
      %206 = vmatpush.bf16.msra.mxu0 0
      %207 = vmatpush.bf16.msra.mxu0 0
      %208 = vmatpush.bf16.msra.mxu0 0
      %209 = vmatpush.bf16.msra.mxu0 0
      %210 = vmatpush.bf16.msra.mxu0 0
      %211 = vmatpush.bf16.msra.mxu0 0
      %212 = vmatpush.bf16.msra.mxu0 %v199
      %213 = vmatpush.bf16.msra.mxu0 %v198
      %214 = vmatmul.bf16.gmra.mxu0 %v204
      %v215 = vpop.f32.mrf.mxu0
      %v216 = vadd.f32 %v183, %v215
      %v217 = vpop.f32.mrf.mxu0
      %v218 = vadd.f32 %v183, %v217
      %219 = vdwg.mxu0
      %220 = vst.msk [vmem:[%s172] sm:$0xff] %vm202, %v216
      %221 = vst.msk [vmem:[%s172 + $0x8] sm:$0xff] %vm202, %v218
      %s222 = smul.u32 2, %s14
      %p223 = scmp.lt.s32.totalorder %s222, 3
      %s224 = scalar_select %p223, %s222, 3
      %s225 = smul.addr %s224, 8
      %s226 = scalar_lea.vmem %s3, %s225
      // Predicated region
      $region33: #{informer_forward.36} parent=31 // pred_check
        %p227 = pneg %p100
      $region34: #{informer_forward.36} parent=31 // pred_check_branch
        %229 = sbr.rel (%p227) target = $region36
      $region35: #{informer_forward.36} parent=31 // pred_region
        %s230 = smul.u32 2, %s14
      $region36: #{informer_forward.36} parent=31 // pred_fallthru
        _
    $region32: #{informer_forward.36} parent=5 // pred_fallthru
      _
    %p231 = scmp.le.s32.totalorder 2, %s9
    // Predicated region
    $region37: #{informer_forward.36} parent=5 // pred_check
      %p232 = pneg %p231
    $region38: #{informer_forward.36} parent=5 // pred_check_branch
      %234 = sbr.rel (%p232) target = $region40
    $region39: #{informer_forward.36} parent=5 // pred_region
      %s235 = ssub.s32 %s9, 2
      // Predicated region
      $region41: #{informer_forward.36} parent=39 // pred_check
        %p236 = pneg %p106
      $region42: #{informer_forward.36} parent=39 // pred_check_branch
        %238 = sbr.rel (%p236) target = $region44
      $region43: #{informer_forward.36} parent=39 // pred_region
        %s239 = smul.u32 2, %s15
        %p240 = scmp.lt.s32.totalorder %s239, 3
        %s241 = scalar_select %p240, %s239, 3
        %s242 = smul.addr %s241, 8
        %s243 = scalar_lea.vmem %s3, %s242
      $region44: #{informer_forward.36} parent=39 // pred_fallthru
        _
    $region40: #{informer_forward.36} parent=5 // pred_fallthru
      _
  $region6: #{informer_forward.36} parent=0 // loop_footer
    %s13 = sadd.s32 1, %s9
  $region7: #{informer_forward.36} parent=0 // loop_footer_branch
    %8 = sbr.rel target = $region3
  $region8: #{informer_forward.36} parent=0 // loop_exit
    _

// kernel: informer_forward.35
$region0: #{informer_forward.35}
  #allocation0 [shape = 'u32[]', space=smem, size = 0x4, offset = 0x4, fixed_abs, tag = 'smem constant byte address 0x4 - core index']
  #allocation1 [shape = 'u32[72,128]{1,0:T(1,128)}', space=vmem, size = 0x9000, scoped, tag = 'internal scratch']
  %s0 = inlined_call_operand.vmem [shape: bf16[2,16,32], index: 0, kind: input, shape index: {}]
  %s1 = inlined_call_operand.vmem [shape: bf16[2,16,32], index: 1, kind: input, shape index: {}]
  %s2 = inlined_call_operand.vmem [shape: bf16[2,16,32], index: 2, kind: input, shape index: {}]
  %s3 = inlined_call_operand.vmem [shape: f32[2,16,32], index: 3, kind: output, shape index: {}]
  %s4 = sld [smem:[#allocation0]]
  $region45: #{informer_forward.35} parent=0
    _
  %s6 = ssub.s32 1, %s4
  %s7 = scalar_select 0, %s6, %s4
  loop: start=0, step=1, limit=4
  $region2: #{informer_forward.35} parent=0 // loop_pre_header
    _
  $region3: #{informer_forward.35} parent=0 // loop_header
    %s9 = sphi 0, %s13
    %p10 = scmp.ge.s32.totalorder %s9, 4
    %s19 = sphi 0, %s21
    %s22 = sphi 0, %s19
    %s23 = sphi 0, %s22
    %s39 = sphi 0, %s23
    %s45 = sphi 0, %s47
    %s48 = sphi 0, %s45
    %s49 = sphi 0, %s48
    %s65 = sphi 0, %s49
    %s71 = sphi 0, %s73
    %s74 = sphi 0, %s71
    %s75 = sphi 0, %s74
    %s91 = sphi 0, %s75
    %s97 = sphi 0, %s99
    %s100 = sphi 0, %s97
    %s101 = sphi 0, %s100
    %s117 = sphi 0, %s101
  $region4: #{informer_forward.35} parent=0 // loop_header_branch
    %12 = sbr.rel (%p10) target = $region8
  $region5: #{informer_forward.35} parent=0 // loop_body
    %s14 = ssub.s32 %s9, 1
    %s15 = ssub.s32 %s9, 2
    %s16 = sadd.s32 %s9, 1
    %s17 = ssub.s32 %s9, %s16
    %p18 = scmp.eq.s32.totalorder %s17, 0
    %s20 = sadd.s32 %s19, 1
    %s21 = scalar_select %p18, %s19, %s20
    %p24 = pneg %p18
    %p25 = scmp.eq.s32.totalorder %s9, 1
    %p26 = por %p24, %p25
    %p27 = scmp.ne.s32.totalorder %s19, %s22
    %p28 = scmp.eq.s32.totalorder %s9, 0
    %p29 = por %p27, %p28
    %p30 = scmp.ne.s32.totalorder %s19, %s22
    %p31 = scmp.eq.s32.totalorder %s14, 1
    %p32 = por %p30, %p31
    %p33 = scmp.ne.s32.totalorder %s22, %s23
    %p34 = scmp.eq.s32.totalorder %s14, 0
    %p35 = por %p33, %p34
    %p36 = scmp.ne.s32.totalorder %s22, %s23
    %p37 = scmp.eq.s32.totalorder %s15, 1
    %p38 = por %p36, %p37
    %p40 = scmp.ne.s32.totalorder %s23, %s39
    %p41 = scmp.eq.s32.totalorder %s15, 0
    %p42 = por %p40, %p41
    %s43 = ssub.s32 %s9, %s16
    %p44 = scmp.eq.s32.totalorder %s43, 0
    %s46 = sadd.s32 %s45, 1
    %s47 = scalar_select %p44, %s45, %s46
    %p50 = pneg %p44
    %p51 = scmp.eq.s32.totalorder %s9, 1
    %p52 = por %p50, %p51
    %p53 = scmp.ne.s32.totalorder %s45, %s48
    %p54 = scmp.eq.s32.totalorder %s9, 0
    %p55 = por %p53, %p54
    %p56 = scmp.ne.s32.totalorder %s45, %s48
    %p57 = scmp.eq.s32.totalorder %s14, 1
    %p58 = por %p56, %p57
    %p59 = scmp.ne.s32.totalorder %s48, %s49
    %p60 = scmp.eq.s32.totalorder %s14, 0
    %p61 = por %p59, %p60
    %p62 = scmp.ne.s32.totalorder %s48, %s49
    %p63 = scmp.eq.s32.totalorder %s15, 1
    %p64 = por %p62, %p63
    %p66 = scmp.ne.s32.totalorder %s49, %s65
    %p67 = scmp.eq.s32.totalorder %s15, 0
    %p68 = por %p66, %p67
    %s69 = ssub.s32 %s9, %s16
    %p70 = scmp.eq.s32.totalorder %s69, 0
    %s72 = sadd.s32 %s71, 1
    %s73 = scalar_select %p70, %s71, %s72
    %p76 = pneg %p70
    %p77 = scmp.eq.s32.totalorder %s9, 1
    %p78 = por %p76, %p77
    %p79 = scmp.ne.s32.totalorder %s71, %s74
    %p80 = scmp.eq.s32.totalorder %s9, 0
    %p81 = por %p79, %p80
    %p82 = scmp.ne.s32.totalorder %s71, %s74
    %p83 = scmp.eq.s32.totalorder %s14, 1
    %p84 = por %p82, %p83
    %p85 = scmp.ne.s32.totalorder %s74, %s75
    %p86 = scmp.eq.s32.totalorder %s14, 0
    %p87 = por %p85, %p86
    %p88 = scmp.ne.s32.totalorder %s74, %s75
    %p89 = scmp.eq.s32.totalorder %s15, 1
    %p90 = por %p88, %p89
    %p92 = scmp.ne.s32.totalorder %s75, %s91
    %p93 = scmp.eq.s32.totalorder %s15, 0
    %p94 = por %p92, %p93
    %s95 = ssub.s32 %s9, %s16
    %p96 = scmp.eq.s32.totalorder %s95, 0
    %s98 = sadd.s32 %s97, 1
    %s99 = scalar_select %p96, %s97, %s98
    %p102 = pneg %p96
    %p103 = scmp.eq.s32.totalorder %s9, 1
    %p104 = por %p102, %p103
    %p105 = scmp.ne.s32.totalorder %s97, %s100
    %p106 = scmp.eq.s32.totalorder %s9, 0
    %p107 = por %p105, %p106
    %p108 = scmp.ne.s32.totalorder %s97, %s100
    %p109 = scmp.eq.s32.totalorder %s14, 1
    %p110 = por %p108, %p109
    %p111 = scmp.ne.s32.totalorder %s100, %s101
    %p112 = scmp.eq.s32.totalorder %s14, 0
    %p113 = por %p111, %p112
    %p114 = scmp.ne.s32.totalorder %s100, %s101
    %p115 = scmp.eq.s32.totalorder %s15, 1
    %p116 = por %p114, %p115
    %p118 = scmp.ne.s32.totalorder %s101, %s117
    %p119 = scmp.eq.s32.totalorder %s15, 0
    %p120 = por %p118, %p119
    %p121 = scmp.le.s32.totalorder 1, %s9
    %p122 = scmp.lt.s32.totalorder %s9, 3
    %p123 = pnand %p121, %p122
    %p124 = pneg %p123
    // Predicated region
    $region9: #{informer_forward.35} parent=5 // pred_check
      _
    $region10: #{informer_forward.35} parent=5 // pred_check_branch
      %126 = sbr.rel (%p123) target = $region12
    $region11: #{informer_forward.35} parent=5 // pred_region
      %s127 = ssub.s32 %s9, 1
    $region12: #{informer_forward.35} parent=5 // pred_fallthru
      _
    %p128 = scmp.lt.s32.totalorder %s9, 2
    // Predicated region
    $region13: #{informer_forward.35} parent=5 // pred_check
      %p129 = pneg %p128
    $region14: #{informer_forward.35} parent=5 // pred_check_branch
      %131 = sbr.rel (%p129) target = $region16
    $region15: #{informer_forward.35} parent=5 // pred_region
      // Predicated region
      $region17: #{informer_forward.35} parent=15 // pred_check
        %p132 = pneg %p29
      $region18: #{informer_forward.35} parent=15 // pred_check_branch
        %134 = sbr.rel (%p132) target = $region20
      $region19: #{informer_forward.35} parent=15 // pred_region
        %p135 = scmp.lt.s32.totalorder %s9, 1
        %s136 = scalar_select %p135, %s9, 1
        %s137 = smul.addr %s136, 2
        %s138 = smul.addr %s137, 4
        %s139 = scalar_lea.vmem %s0, %s138
      $region20: #{informer_forward.35} parent=15 // pred_fallthru
        _
      // Predicated region
      $region21: #{informer_forward.35} parent=15 // pred_check
        %p140 = pneg %p55
      $region22: #{informer_forward.35} parent=15 // pred_check_branch
        %142 = sbr.rel (%p140) target = $region24
      $region23: #{informer_forward.35} parent=15 // pred_region
        %p143 = scmp.lt.s32.totalorder %s9, 1
        %s144 = scalar_select %p143, %s9, 1
        %s145 = smul.addr %s144, 2
        %s146 = smul.addr %s145, 4
        %s147 = scalar_lea.vmem %s1, %s146
      $region24: #{informer_forward.35} parent=15 // pred_fallthru
        _
      // Predicated region
      $region25: #{informer_forward.35} parent=15 // pred_check
        %p148 = pneg %p81
      $region26: #{informer_forward.35} parent=15 // pred_check_branch
        %150 = sbr.rel (%p148) target = $region28
      $region27: #{informer_forward.35} parent=15 // pred_region
        %p151 = scmp.lt.s32.totalorder %s9, 1
        %s152 = scalar_select %p151, %s9, 1
        %s153 = smul.addr %s152, 2
        %s154 = smul.addr %s153, 4
        %s155 = scalar_lea.vmem %s2, %s154
      $region28: #{informer_forward.35} parent=15 // pred_fallthru
        _
    $region16: #{informer_forward.35} parent=5 // pred_fallthru
      _
    %p156 = scmp.le.s32.totalorder 1, %s9
    %p157 = scmp.lt.s32.totalorder %s9, 3
    %p158 = pnand %p156, %p157
    %p159 = pneg %p158
    // Predicated region
    $region29: #{informer_forward.35} parent=5 // pred_check
      _
    $region30: #{informer_forward.35} parent=5 // pred_check_branch
      %161 = sbr.rel (%p158) target = $region32
    $region31: #{informer_forward.35} parent=5 // pred_region
      %s162 = ssub.s32 %s9, 1
      %p163 = scmp.lt.s32.totalorder %s14, 1
      %s164 = scalar_select %p163, %s14, 1
      %s165 = smul.addr %s164, 2
      %s166 = smul.addr %s165, 4
      %s167 = scalar_lea.vmem %s0, %s166
      %p168 = pneg %p35
      %p169 = pneg %p32
      %p170 = scmp.lt.s32.totalorder %s14, 1
      %s171 = scalar_select %p170, %s14, 1
      %s172 = smul.addr %s171, 2
      %s173 = smul.addr %s172, 4
      %s174 = scalar_lea.vmem %s1, %s173
      %p175 = pneg %p61
      %p176 = pneg %p58
      %p177 = scmp.lt.s32.totalorder %s14, 1
      %s178 = scalar_select %p177, %s14, 1
      %s179 = smul.addr %s178, 2
      %s180 = smul.addr %s179, 4
      %s181 = scalar_lea.vmem %s2, %s180
      %p182 = pneg %p87
      %p183 = pneg %p84
      %p184 = pneg %p113
      %p185 = pneg %p110
      %p186 = scmp.lt.s32.totalorder %s14, 1
      %s187 = scalar_select %p186, %s14, 1
      %s188 = smul.addr %s187, 2
      %s189 = smul.addr %s188, 8
      %s190 = scalar_lea.vmem %s3, %s189
      %p191 = scmp.lt.s32.totalorder %s14, 1
      %s192 = scalar_select %p191, %s14, 1
      %s193 = smul.addr %s192, 2
      %s194 = smul.addr %s193, 4
      %s195 = scalar_lea.vmem %s0, %s194
      %p196 = scmp.lt.s32.totalorder %s14, 1
      %s197 = scalar_select %p196, %s14, 1
      %s198 = smul.addr %s197, 2
      %s199 = smul.addr %s198, 4
      %s200 = scalar_lea.vmem %s1, %s199
      %p201 = scmp.lt.s32.totalorder %s14, 1
      %s202 = scalar_select %p201, %s14, 1
      %s203 = smul.addr %s202, 2
      %s204 = smul.addr %s203, 4
      %s205 = scalar_lea.vmem %s2, %s204
      %p206 = scmp.lt.s32.totalorder %s14, 1
      %s207 = scalar_select %p206, %s14, 1
      %s208 = smul.addr %s207, 2
      %s209 = smul.addr %s208, 8
      %s210 = scalar_lea.vmem %s3, %s209
      %v212 = vld [vmem:[%s195] sm:$0xf]
      %v213 = vld [vmem:[%s195 + $0x4] sm:$0xf]
      %v214 = vld [vmem:[%s200] sm:$0xf]
      %v215 = vld [vmem:[%s200 + $0x4] sm:$0xf]
      %v216 = vld [vmem:[%s205] sm:$0xf]
      %v217 = vld [vmem:[%s205 + $0x4] sm:$0xf]
      %v220 = vunpack.c.l.b16 %v212
      %v221 = vunpack.c.l.b16 %v213
      %v222 = vpack.c.b16 %v221, %v220
      %v225 = vunpack.c.l.b16 %v214
      %v226 = vunpack.c.l.b16 %v215
      %v227 = vpack.c.b16 %v226, %v225
      %vm228 = vcmask 64512
      %v230 = vsel %vm228, %v222, 0
      %v233 = vsel %vm228, %v227, 0
      %235 = vmatpush.bf16.xpose.msra.mxu0 0
      %236 = vmatpush.bf16.xpose.msra.mxu0 0
      %237 = vmatpush.bf16.xpose.msra.mxu0 0
      %238 = vmatpush.bf16.xpose.msra.mxu0 0
      %239 = vmatpush.bf16.xpose.msra.mxu0 0
      %240 = vmatpush.bf16.xpose.msra.mxu0 0
      %241 = vmatpush.bf16.xpose.msra.mxu0 0
      %242 = vmatpush.bf16.xpose.msra.mxu0 %v233
      %243 = vmatmul.bf16.gmra.mxu0 %v230
      %v244 = vpop.f32.mrf.mxu0
      %v245 = vadd.f32 0.0, %v244
      %v246 = vpop.f32.mrf.mxu0
      %v247 = vadd.f32 0.0, %v246
      %248 = vdwg.mxu0
      %v249 = vmul.f32 %v245, 0.35355338
      %v250 = vmul.f32 %v247, 0.35355338
      %vm251 = vcmask 130048
      %v252 = vsel %vm251, %v249, -inf
      %253 = vmax.xlane.f32.xlu0 %v252
      %v254 = vpop.xlane.xlu0 %253
      %v255 = vsel %vm251, %v250, -inf
      %256 = vmax.xlane.f32.xlu0 %v255
      %v257 = vpop.xlane.xlu0 %256
      %v258 = vsub.f32 %v249, %v254
      %v259 = vsub.f32 %v250, %v257
      %v260 = vmul.f32 %v258, 1.442695
      %v261 = vpow.pop %v260
      %v262 = vmul.f32 %v259, 1.442695
      %v263 = vpow.pop %v262
      %v264 = vsel %vm251, %v261, 0.0
      %265 = vadd.xlane.f32.xlu0 %v264
      %v266 = vpop.xlane.xlu0 %265
      %v267 = vsel %vm251, %v263, 0.0
      %268 = vadd.xlane.f32.xlu0 %v267
      %v269 = vpop.xlane.xlu0 %268
      %v270 = vrcp.pop %v266
      %v271 = vrcp.pop %v269
      %v272 = vmul.f32 %v261, %v270
      %v273 = vmul.f32 %v263, %v271
      %v274 = vpack.c.bf16 %v273, %v272
      %v277 = vunpack.c.l.b16 %v216
      %v278 = vunpack.c.l.b16 %v217
      %v279 = vpack.c.b16 %v278, %v277
      %v282 = vsel %vm251, %v274, 0
      %284 = vmatpush.bf16.msra.mxu0 0
      %285 = vmatpush.bf16.msra.mxu0 0
      %286 = vmatpush.bf16.msra.mxu0 0
      %287 = vmatpush.bf16.msra.mxu0 0
      %288 = vmatpush.bf16.msra.mxu0 0
      %289 = vmatpush.bf16.msra.mxu0 0
      %290 = vmatpush.bf16.msra.mxu0 0
      %291 = vmatpush.bf16.msra.mxu0 %v279
      %292 = vmatmul.bf16.gmra.mxu0 %v282
      %v293 = vpop.f32.mrf.mxu0
      %v294 = vadd.f32 0.0, %v293
      %v295 = vpop.f32.mrf.mxu0
      %v296 = vadd.f32 0.0, %v295
      %297 = vdwg.mxu0
      %298 = vrot.lane.b32.xlu0 %v222, 120
      %v299 = vpop.permute.xlu0 %298
      %300 = vrot.lane.b32.xlu0 %v227, 120
      %v301 = vpop.permute.xlu0 %300
      %v303 = vsel %vm228, %v299, 0
      %v306 = vsel %vm228, %v301, 0
      %308 = vmatpush.bf16.xpose.msra.mxu0 0
      %309 = vmatpush.bf16.xpose.msra.mxu0 0
      %310 = vmatpush.bf16.xpose.msra.mxu0 0
      %311 = vmatpush.bf16.xpose.msra.mxu0 0
      %312 = vmatpush.bf16.xpose.msra.mxu0 0
      %313 = vmatpush.bf16.xpose.msra.mxu0 0
      %314 = vmatpush.bf16.xpose.msra.mxu0 0
      %315 = vmatpush.bf16.xpose.msra.mxu0 %v306
      %316 = vmatmul.bf16.gmra.mxu0 %v303
      %v317 = vpop.f32.mrf.mxu0
      %v318 = vadd.f32 0.0, %v317
      %v319 = vpop.f32.mrf.mxu0
      %v320 = vadd.f32 0.0, %v319
      %321 = vdwg.mxu0
      %v322 = vmul.f32 %v318, 0.35355338
      %v323 = vmul.f32 %v320, 0.35355338
      %v324 = vsel %vm251, %v322, -inf
      %325 = vmax.xlane.f32.xlu0 %v324
      %v326 = vpop.xlane.xlu0 %325
      %v327 = vsel %vm251, %v323, -inf
      %328 = vmax.xlane.f32.xlu0 %v327
      %v329 = vpop.xlane.xlu0 %328
      %v330 = vsub.f32 %v322, %v326
      %v331 = vsub.f32 %v323, %v329
      %v332 = vmul.f32 %v330, 1.442695
      %v333 = vpow.pop %v332
      %v334 = vmul.f32 %v331, 1.442695
      %v335 = vpow.pop %v334
      %v336 = vsel %vm251, %v333, 0.0
      %337 = vadd.xlane.f32.xlu0 %v336
      %v338 = vpop.xlane.xlu0 %337
      %v339 = vsel %vm251, %v335, 0.0
      %340 = vadd.xlane.f32.xlu0 %v339
      %v341 = vpop.xlane.xlu0 %340
      %v342 = vrcp.pop %v338
      %v343 = vrcp.pop %v341
      %v344 = vmul.f32 %v333, %v342
      %v345 = vmul.f32 %v335, %v343
      %v346 = vpack.c.bf16 %v345, %v344
      %347 = vrot.lane.b32.xlu0 %v279, 120
      %v348 = vpop.permute.xlu0 %347
      %v351 = vsel %vm251, %v346, 0
      %353 = vmatpush.bf16.msra.mxu0 0
      %354 = vmatpush.bf16.msra.mxu0 0
      %355 = vmatpush.bf16.msra.mxu0 0
      %356 = vmatpush.bf16.msra.mxu0 0
      %357 = vmatpush.bf16.msra.mxu0 0
      %358 = vmatpush.bf16.msra.mxu0 0
      %359 = vmatpush.bf16.msra.mxu0 0
      %360 = vmatpush.bf16.msra.mxu0 %v348
      %361 = vmatmul.bf16.gmra.mxu0 %v351
      %v362 = vpop.f32.mrf.mxu0
      %v363 = vadd.f32 0.0, %v362
      %v364 = vpop.f32.mrf.mxu0
      %v365 = vadd.f32 0.0, %v364
      %366 = vdwg.mxu0
      %367 = vrot.lane.b32.xlu0 %v222, 112
      %v368 = vpop.permute.xlu0 %367
      %369 = vrot.lane.b32.xlu0 %v227, 112
      %v370 = vpop.permute.xlu0 %369
      %v372 = vsel %vm228, %v368, 0
      %v375 = vsel %vm228, %v370, 0
      %377 = vmatpush.bf16.xpose.msra.mxu0 0
      %378 = vmatpush.bf16.xpose.msra.mxu0 0
      %379 = vmatpush.bf16.xpose.msra.mxu0 0
      %380 = vmatpush.bf16.xpose.msra.mxu0 0
      %381 = vmatpush.bf16.xpose.msra.mxu0 0
      %382 = vmatpush.bf16.xpose.msra.mxu0 0
      %383 = vmatpush.bf16.xpose.msra.mxu0 0
      %384 = vmatpush.bf16.xpose.msra.mxu0 %v375
      %385 = vmatmul.bf16.gmra.mxu0 %v372
      %v386 = vpop.f32.mrf.mxu0
      %v387 = vadd.f32 0.0, %v386
      %v388 = vpop.f32.mrf.mxu0
      %v389 = vadd.f32 0.0, %v388
      %390 = vdwg.mxu0
      %v391 = vmul.f32 %v387, 0.35355338
      %v392 = vmul.f32 %v389, 0.35355338
      %v393 = vsel %vm251, %v391, -inf
      %394 = vmax.xlane.f32.xlu0 %v393
      %v395 = vpop.xlane.xlu0 %394
      %v396 = vsel %vm251, %v392, -inf
      %397 = vmax.xlane.f32.xlu0 %v396
      %v398 = vpop.xlane.xlu0 %397
      %v399 = vsub.f32 %v391, %v395
      %v400 = vsub.f32 %v392, %v398
      %v401 = vmul.f32 %v399, 1.442695
      %v402 = vpow.pop %v401
      %v403 = vmul.f32 %v400, 1.442695
      %v404 = vpow.pop %v403
      %v405 = vsel %vm251, %v402, 0.0
      %406 = vadd.xlane.f32.xlu0 %v405
      %v407 = vpop.xlane.xlu0 %406
      %v408 = vsel %vm251, %v404, 0.0
      %409 = vadd.xlane.f32.xlu0 %v408
      %v410 = vpop.xlane.xlu0 %409
      %v411 = vrcp.pop %v407
      %v412 = vrcp.pop %v410
      %v413 = vmul.f32 %v402, %v411
      %v414 = vmul.f32 %v404, %v412
      %v415 = vpack.c.bf16 %v414, %v413
      %416 = vrot.lane.b32.xlu0 %v279, 112
      %v417 = vpop.permute.xlu0 %416
      %v420 = vsel %vm251, %v415, 0
      %422 = vmatpush.bf16.msra.mxu0 0
      %423 = vmatpush.bf16.msra.mxu0 0
      %424 = vmatpush.bf16.msra.mxu0 0
      %425 = vmatpush.bf16.msra.mxu0 0
      %426 = vmatpush.bf16.msra.mxu0 0
      %427 = vmatpush.bf16.msra.mxu0 0
      %428 = vmatpush.bf16.msra.mxu0 0
      %429 = vmatpush.bf16.msra.mxu0 %v417
      %430 = vmatmul.bf16.gmra.mxu0 %v420
      %v431 = vpop.f32.mrf.mxu0
      %v432 = vadd.f32 0.0, %v431
      %v433 = vpop.f32.mrf.mxu0
      %v434 = vadd.f32 0.0, %v433
      %435 = vdwg.mxu0
      %436 = vrot.lane.b32.xlu0 %v222, 104
      %v437 = vpop.permute.xlu0 %436
      %438 = vrot.lane.b32.xlu0 %v227, 104
      %v439 = vpop.permute.xlu0 %438
      %v441 = vsel %vm228, %v437, 0
      %v444 = vsel %vm228, %v439, 0
      %446 = vmatpush.bf16.xpose.msra.mxu0 0
      %447 = vmatpush.bf16.xpose.msra.mxu0 0
      %448 = vmatpush.bf16.xpose.msra.mxu0 0
      %449 = vmatpush.bf16.xpose.msra.mxu0 0
      %450 = vmatpush.bf16.xpose.msra.mxu0 0
      %451 = vmatpush.bf16.xpose.msra.mxu0 0
      %452 = vmatpush.bf16.xpose.msra.mxu0 0
      %453 = vmatpush.bf16.xpose.msra.mxu0 %v444
      %454 = vmatmul.bf16.gmra.mxu0 %v441
      %v455 = vpop.f32.mrf.mxu0
      %v456 = vadd.f32 0.0, %v455
      %v457 = vpop.f32.mrf.mxu0
      %v458 = vadd.f32 0.0, %v457
      %459 = vdwg.mxu0
      %v460 = vmul.f32 %v456, 0.35355338
      %v461 = vmul.f32 %v458, 0.35355338
      %v462 = vsel %vm251, %v460, -inf
      %463 = vmax.xlane.f32.xlu0 %v462
      %v464 = vpop.xlane.xlu0 %463
      %v465 = vsel %vm251, %v461, -inf
      %466 = vmax.xlane.f32.xlu0 %v465
      %v467 = vpop.xlane.xlu0 %466
      %v468 = vsub.f32 %v460, %v464
      %v469 = vsub.f32 %v461, %v467
      %v470 = vmul.f32 %v468, 1.442695
      %v471 = vpow.pop %v470
      %v472 = vmul.f32 %v469, 1.442695
      %v473 = vpow.pop %v472
      %v474 = vsel %vm251, %v471, 0.0
      %475 = vadd.xlane.f32.xlu0 %v474
      %v476 = vpop.xlane.xlu0 %475
      %v477 = vsel %vm251, %v473, 0.0
      %478 = vadd.xlane.f32.xlu0 %v477
      %v479 = vpop.xlane.xlu0 %478
      %v480 = vrcp.pop %v476
      %v481 = vrcp.pop %v479
      %v482 = vmul.f32 %v471, %v480
      %v483 = vmul.f32 %v473, %v481
      %v484 = vpack.c.bf16 %v483, %v482
      %485 = vrot.lane.b32.xlu0 %v279, 104
      %v486 = vpop.permute.xlu0 %485
      %v489 = vsel %vm251, %v484, 0
      %491 = vmatpush.bf16.msra.mxu0 0
      %492 = vmatpush.bf16.msra.mxu0 0
      %493 = vmatpush.bf16.msra.mxu0 0
      %494 = vmatpush.bf16.msra.mxu0 0
      %495 = vmatpush.bf16.msra.mxu0 0
      %496 = vmatpush.bf16.msra.mxu0 0
      %497 = vmatpush.bf16.msra.mxu0 0
      %498 = vmatpush.bf16.msra.mxu0 %v486
      %499 = vmatmul.bf16.gmra.mxu0 %v489
      %v500 = vpop.f32.mrf.mxu0
      %v501 = vadd.f32 0.0, %v500
      %v502 = vpop.f32.mrf.mxu0
      %v503 = vadd.f32 0.0, %v502
      %504 = vdwg.mxu0
      %507 = vrot.lane.b32.xlu0 %v363, 8
      %v508 = vpop.permute.xlu0 %507
      %509 = vrot.lane.b32.xlu0 %v365, 8
      %v510 = vpop.permute.xlu0 %509
      %515 = vrot.lane.b32.xlu0 %v432, 16
      %v516 = vpop.permute.xlu0 %515
      %517 = vrot.lane.b32.xlu0 %v434, 16
      %v518 = vpop.permute.xlu0 %517
      %523 = vrot.lane.b32.xlu0 %v501, 24
      %v524 = vpop.permute.xlu0 %523
      %525 = vrot.lane.b32.xlu0 %v503, 24
      %v526 = vpop.permute.xlu0 %525
      %v529 = vsel %vm228, %v294, %v508
      %v530 = vsel %vm228, %v296, %v510
      %v531 = vsel %vm251, %v529, %v516
      %v532 = vsel %vm251, %v530, %v518
      %vm533 = vcmask 195584
      %v534 = vsel %vm533, %v531, %v524
      %v535 = vsel %vm533, %v532, %v526
      %vm536 = vcmask 261120
      %537 = vst.msk [vmem:[%s210] sm:$0xff] %vm536, %v534
      %538 = vst.msk [vmem:[%s210 + $0x8] sm:$0xff] %vm536, %v535
      %p539 = scmp.lt.s32.totalorder %s14, 1
      %s540 = scalar_select %p539, %s14, 1
      %s541 = smul.addr %s540, 2
      %s542 = smul.addr %s541, 8
      %s543 = scalar_lea.vmem %s3, %s542
      // Predicated region
      $region33: #{informer_forward.35} parent=31 // pred_check
        %p544 = pneg %p110
      $region34: #{informer_forward.35} parent=31 // pred_check_branch
        %546 = sbr.rel (%p544) target = $region36
      $region35: #{informer_forward.35} parent=31 // pred_region
        _
      $region36: #{informer_forward.35} parent=31 // pred_fallthru
        _
    $region32: #{informer_forward.35} parent=5 // pred_fallthru
      _
    %p547 = scmp.le.s32.totalorder 2, %s9
    // Predicated region
    $region37: #{informer_forward.35} parent=5 // pred_check
      %p548 = pneg %p547
    $region38: #{informer_forward.35} parent=5 // pred_check_branch
      %550 = sbr.rel (%p548) target = $region40
    $region39: #{informer_forward.35} parent=5 // pred_region
      %s551 = ssub.s32 %s9, 2
      // Predicated region
      $region41: #{informer_forward.35} parent=39 // pred_check
        %p552 = pneg %p116
      $region42: #{informer_forward.35} parent=39 // pred_check_branch
        %554 = sbr.rel (%p552) target = $region44
      $region43: #{informer_forward.35} parent=39 // pred_region
        %p555 = scmp.lt.s32.totalorder %s15, 1
        %s556 = scalar_select %p555, %s15, 1
        %s557 = smul.addr %s556, 2
        %s558 = smul.addr %s557, 8
        %s559 = scalar_lea.vmem %s3, %s558
      $region44: #{informer_forward.35} parent=39 // pred_fallthru
        _
    $region40: #{informer_forward.35} parent=5 // pred_fallthru
      _
  $region6: #{informer_forward.35} parent=0 // loop_footer
    %s13 = sadd.s32 1, %s9
  $region7: #{informer_forward.35} parent=0 // loop_footer_branch
    %8 = sbr.rel target = $region3
  $region8: #{informer_forward.35} parent=0 // loop_exit
    _

// kernel: informer_forward.41
$region0: #{informer_forward.41}
  #allocation0 [shape = 'u32[]', space=smem, size = 0x4, offset = 0x4, fixed_abs, tag = 'smem constant byte address 0x4 - core index']
  #allocation1 [shape = 'u32[72,128]{1,0:T(1,128)}', space=vmem, size = 0x9000, scoped, tag = 'internal scratch']
  %s0 = inlined_call_operand.vmem [shape: bf16[2,18,32], index: 0, kind: input, shape index: {}]
  %s1 = inlined_call_operand.vmem [shape: bf16[96,32], index: 1, kind: input, shape index: {}]
  %s2 = inlined_call_operand.vmem [shape: f32[1,32], index: 2, kind: input, shape index: {}]
  %s3 = inlined_call_operand.vmem [shape: f32[2,16,32], index: 3, kind: output, shape index: {}]
  %s4 = sld [smem:[#allocation0]]
  $region45: #{informer_forward.41} parent=0
    _
  %s6 = ssub.s32 1, %s4
  %s7 = scalar_select 0, %s6, %s4
  loop: start=0, step=1, limit=4
  $region2: #{informer_forward.41} parent=0 // loop_pre_header
    _
  $region3: #{informer_forward.41} parent=0 // loop_header
    %s9 = sphi 0, %s13
    %p10 = scmp.ge.s32.totalorder %s9, 4
    %s19 = sphi 0, %s21
    %s22 = sphi 0, %s19
    %s23 = sphi 0, %s22
    %s39 = sphi 0, %s23
    %s43 = sphi 0, %s43
    %s45 = sphi 0, %s43
    %s46 = sphi 0, %s45
    %s60 = sphi 0, %s46
    %s64 = sphi 0, %s64
    %s66 = sphi 0, %s64
    %s67 = sphi 0, %s66
    %s81 = sphi 0, %s67
    %s87 = sphi 0, %s89
    %s90 = sphi 0, %s87
    %s91 = sphi 0, %s90
    %s107 = sphi 0, %s91
  $region4: #{informer_forward.41} parent=0 // loop_header_branch
    %12 = sbr.rel (%p10) target = $region8
  $region5: #{informer_forward.41} parent=0 // loop_body
    %s14 = ssub.s32 %s9, 1
    %s15 = ssub.s32 %s9, 2
    %s16 = sadd.s32 %s9, 1
    %s17 = ssub.s32 %s9, %s16
    %p18 = scmp.eq.s32.totalorder %s17, 0
    %s20 = sadd.s32 %s19, 1
    %s21 = scalar_select %p18, %s19, %s20
    %p24 = pneg %p18
    %p25 = scmp.eq.s32.totalorder %s9, 1
    %p26 = por %p24, %p25
    %p27 = scmp.ne.s32.totalorder %s19, %s22
    %p28 = scmp.eq.s32.totalorder %s9, 0
    %p29 = por %p27, %p28
    %p30 = scmp.ne.s32.totalorder %s19, %s22
    %p31 = scmp.eq.s32.totalorder %s14, 1
    %p32 = por %p30, %p31
    %p33 = scmp.ne.s32.totalorder %s22, %s23
    %p34 = scmp.eq.s32.totalorder %s14, 0
    %p35 = por %p33, %p34
    %p36 = scmp.ne.s32.totalorder %s22, %s23
    %p37 = scmp.eq.s32.totalorder %s15, 1
    %p38 = por %p36, %p37
    %p40 = scmp.ne.s32.totalorder %s23, %s39
    %p41 = scmp.eq.s32.totalorder %s15, 0
    %p42 = por %p40, %p41
    %s44 = sadd.s32 %s43, 1
    %p47 = scmp.eq.s32.totalorder %s9, 1
    %p48 = scmp.ne.s32.totalorder %s43, %s45
    %p49 = scmp.eq.s32.totalorder %s9, 0
    %p50 = por %p48, %p49
    %p51 = scmp.ne.s32.totalorder %s43, %s45
    %p52 = scmp.eq.s32.totalorder %s14, 1
    %p53 = por %p51, %p52
    %p54 = scmp.ne.s32.totalorder %s45, %s46
    %p55 = scmp.eq.s32.totalorder %s14, 0
    %p56 = por %p54, %p55
    %p57 = scmp.ne.s32.totalorder %s45, %s46
    %p58 = scmp.eq.s32.totalorder %s15, 1
    %p59 = por %p57, %p58
    %p61 = scmp.ne.s32.totalorder %s46, %s60
    %p62 = scmp.eq.s32.totalorder %s15, 0
    %p63 = por %p61, %p62
    %s65 = sadd.s32 %s64, 1
    %p68 = scmp.eq.s32.totalorder %s9, 1
    %p69 = scmp.ne.s32.totalorder %s64, %s66
    %p70 = scmp.eq.s32.totalorder %s9, 0
    %p71 = por %p69, %p70
    %p72 = scmp.ne.s32.totalorder %s64, %s66
    %p73 = scmp.eq.s32.totalorder %s14, 1
    %p74 = por %p72, %p73
    %p75 = scmp.ne.s32.totalorder %s66, %s67
    %p76 = scmp.eq.s32.totalorder %s14, 0
    %p77 = por %p75, %p76
    %p78 = scmp.ne.s32.totalorder %s66, %s67
    %p79 = scmp.eq.s32.totalorder %s15, 1
    %p80 = por %p78, %p79
    %p82 = scmp.ne.s32.totalorder %s67, %s81
    %p83 = scmp.eq.s32.totalorder %s15, 0
    %p84 = por %p82, %p83
    %s85 = ssub.s32 %s9, %s16
    %p86 = scmp.eq.s32.totalorder %s85, 0
    %s88 = sadd.s32 %s87, 1
    %s89 = scalar_select %p86, %s87, %s88
    %p92 = pneg %p86
    %p93 = scmp.eq.s32.totalorder %s9, 1
    %p94 = por %p92, %p93
    %p95 = scmp.ne.s32.totalorder %s87, %s90
    %p96 = scmp.eq.s32.totalorder %s9, 0
    %p97 = por %p95, %p96
    %p98 = scmp.ne.s32.totalorder %s87, %s90
    %p99 = scmp.eq.s32.totalorder %s14, 1
    %p100 = por %p98, %p99
    %p101 = scmp.ne.s32.totalorder %s90, %s91
    %p102 = scmp.eq.s32.totalorder %s14, 0
    %p103 = por %p101, %p102
    %p104 = scmp.ne.s32.totalorder %s90, %s91
    %p105 = scmp.eq.s32.totalorder %s15, 1
    %p106 = por %p104, %p105
    %p108 = scmp.ne.s32.totalorder %s91, %s107
    %p109 = scmp.eq.s32.totalorder %s15, 0
    %p110 = por %p108, %p109
    %p111 = scmp.le.s32.totalorder 1, %s9
    %p112 = scmp.lt.s32.totalorder %s9, 3
    %p113 = pnand %p111, %p112
    %p114 = pneg %p113
    // Predicated region
    $region9: #{informer_forward.41} parent=5 // pred_check
      _
    $region10: #{informer_forward.41} parent=5 // pred_check_branch
      %116 = sbr.rel (%p113) target = $region12
    $region11: #{informer_forward.41} parent=5 // pred_region
      %s117 = ssub.s32 %s9, 1
      // Predicated region
      $region13: #{informer_forward.41} parent=11 // pred_check
        %p118 = pneg %p56
      $region14: #{informer_forward.41} parent=11 // pred_check_branch
        %120 = sbr.rel (%p118) target = $region16
      $region15: #{informer_forward.41} parent=11 // pred_region
        _
      $region16: #{informer_forward.41} parent=11 // pred_fallthru
        _
      // Predicated region
      $region17: #{informer_forward.41} parent=11 // pred_check
        %p121 = pneg %p77
      $region18: #{informer_forward.41} parent=11 // pred_check_branch
        %123 = sbr.rel (%p121) target = $region20
      $region19: #{informer_forward.41} parent=11 // pred_region
        _
      $region20: #{informer_forward.41} parent=11 // pred_fallthru
        _
    $region12: #{informer_forward.41} parent=5 // pred_fallthru
      _
    %p124 = scmp.lt.s32.totalorder %s9, 2
    // Predicated region
    $region21: #{informer_forward.41} parent=5 // pred_check
      %p125 = pneg %p124
    $region22: #{informer_forward.41} parent=5 // pred_check_branch
      %127 = sbr.rel (%p125) target = $region24
    $region23: #{informer_forward.41} parent=5 // pred_region
      // Predicated region
      $region25: #{informer_forward.41} parent=23 // pred_check
        %p128 = pneg %p29
      $region26: #{informer_forward.41} parent=23 // pred_check_branch
        %130 = sbr.rel (%p128) target = $region28
      $region27: #{informer_forward.41} parent=23 // pred_region
        %p131 = scmp.lt.s32.totalorder %s9, 1
        %s132 = scalar_select %p131, %s9, 1
        %s133 = smul.addr %s132, 3
        %s134 = smul.addr %s133, 4
        %s135 = scalar_lea.vmem %s0, %s134
      $region28: #{informer_forward.41} parent=23 // pred_fallthru
        _
    $region24: #{informer_forward.41} parent=5 // pred_fallthru
      _
    %p136 = scmp.le.s32.totalorder 1, %s9
    %p137 = scmp.lt.s32.totalorder %s9, 3
    %p138 = pnand %p136, %p137
    %p139 = pneg %p138
    // Predicated region
    $region29: #{informer_forward.41} parent=5 // pred_check
      _
    $region30: #{informer_forward.41} parent=5 // pred_check_branch
      %141 = sbr.rel (%p138) target = $region32
    $region31: #{informer_forward.41} parent=5 // pred_region
      %s142 = ssub.s32 %s9, 1
      %p143 = scmp.lt.s32.totalorder %s14, 1
      %s144 = scalar_select %p143, %s14, 1
      %s145 = smul.addr %s144, 3
      %s146 = smul.addr %s145, 4
      %s147 = scalar_lea.vmem %s0, %s146
      %p148 = pneg %p35
      %p149 = pneg %p32
      %p150 = pneg %p56
      %p151 = pneg %p53
      %p152 = pneg %p77
      %p153 = pneg %p74
      %p154 = pneg %p103
      %p155 = pneg %p100
      %p156 = scmp.lt.s32.totalorder %s14, 1
      %s157 = scalar_select %p156, %s14, 1
      %s158 = smul.addr %s157, 2
      %s159 = smul.addr %s158, 8
      %s160 = scalar_lea.vmem %s3, %s159
      %p161 = scmp.lt.s32.totalorder %s14, 1
      %s162 = scalar_select %p161, %s14, 1
      %s163 = smul.addr %s162, 3
      %s164 = smul.addr %s163, 4
      %s165 = scalar_lea.vmem %s0, %s164
      %p166 = scmp.lt.s32.totalorder %s14, 1
      %s167 = scalar_select %p166, %s14, 1
      %s168 = smul.addr %s167, 2
      %s169 = smul.addr %s168, 8
      %s170 = scalar_lea.vmem %s3, %s169
      %v172 = vld [vmem:[%s165] sm:$0xf]
      %v173 = vld [vmem:[%s165 + $0x4] sm:$0xf]
      %v174 = vld [vmem:[%s1] sm:$0xf]
      %v175 = vld [vmem:[%s1 + $0x4] sm:$0xf]
      %v176 = vld [vmem:[%s1 + $0x8] sm:$0xf]
      %v177 = vld [vmem:[%s1 + $0xc] sm:$0xf]
      %v178 = vld [vmem:[%s165 + $0x8] sm:$0x1]
      %v179 = vld [vmem:[%s1 + $0x10] sm:$0xf]
      %v180 = vld [vmem:[%s1 + $0x14] sm:$0xf]
      %v181 = vld [vmem:[%s1 + $0x18] sm:$0xf]
      %v182 = vld [vmem:[%s1 + $0x1c] sm:$0xf]
      %v186 = vunpack.c.l.b16 %v172
      %v187 = vunpack.c.l.b16 %v173
      %v188 = vunpack.c.l.b16 %v178
      %v189 = vpack.c.b16 %v187, %v186
      %v190 = vpack.c.b16 %v188, %v188
      %vm191 = vsmask.f32 7424
      %v193 = vshrl.u32 %v189, 16
      %v195 = vshll.u32 %v189, 16
      %v197 = vrot.slane %v195, 1
      %v198 = vor.u32 %v193, %v197
      %v200 = vshll.u32 %v190, 16
      %v202 = vrot.slane %v200, 1
      %v203 = vsel %vm191, %v198, %v202
      %v208 = vunpack.c.l.b16 %v179
      %v209 = vunpack.c.l.b16 %v180
      %v210 = vunpack.c.l.b16 %v181
      %v211 = vunpack.c.l.b16 %v182
      %v212 = vpack.c.b16 %v209, %v208
      %v213 = vpack.c.b16 %v211, %v210
      %vm216 = vcmask 261120
      %v218 = vsel %vm216, %v203, 0
      %220 = vmatpush.bf16.msra.mxu0 0
      %221 = vmatpush.bf16.msra.mxu0 0
      %222 = vmatpush.bf16.msra.mxu0 0
      %223 = vmatpush.bf16.msra.mxu0 0
      %224 = vmatpush.bf16.msra.mxu0 0
      %225 = vmatpush.bf16.msra.mxu0 0
      %226 = vmatpush.bf16.msra.mxu0 %v213
      %227 = vmatpush.bf16.msra.mxu0 %v212
      %228 = vmatmul.bf16.gmra.mxu0 %v218
      %v229 = vpop.f32.mrf.mxu0
      %v230 = vadd.f32 0.0, %v229
      %v231 = vpop.f32.mrf.mxu0
      %v232 = vadd.f32 0.0, %v231
      %233 = vdwg.mxu0
      %v238 = vunpack.c.l.b16 %v174
      %v239 = vunpack.c.l.b16 %v175
      %v240 = vunpack.c.l.b16 %v176
      %v241 = vunpack.c.l.b16 %v177
      %v242 = vpack.c.b16 %v239, %v238
      %v243 = vpack.c.b16 %v241, %v240
      %v246 = vsel %vm216, %v189, 0
      %248 = vmatpush.bf16.msra.mxu0 0
      %249 = vmatpush.bf16.msra.mxu0 0
      %250 = vmatpush.bf16.msra.mxu0 0
      %251 = vmatpush.bf16.msra.mxu0 0
      %252 = vmatpush.bf16.msra.mxu0 0
      %253 = vmatpush.bf16.msra.mxu0 0
      %254 = vmatpush.bf16.msra.mxu0 %v243
      %255 = vmatpush.bf16.msra.mxu0 %v242
      %256 = vmatmul.bf16.gmra.mxu0 %v246
      %v257 = vpop.f32.mrf.mxu0
      %v258 = vadd.f32 %v230, %v257
      %v259 = vpop.f32.mrf.mxu0
      %v260 = vadd.f32 %v232, %v259
      %261 = vdwg.mxu0
      %v262 = vld [vmem:[%s165] sm:$0xe]
      %v263 = vld [vmem:[%s1 + $0x20] sm:$0xf]
      %v264 = vld [vmem:[%s1 + $0x24] sm:$0xf]
      %v265 = vld [vmem:[%s1 + $0x28] sm:$0xf]
      %v266 = vld [vmem:[%s1 + $0x2c] sm:$0xf]
      %v268 = vunpack.c.l.b16 %v262
      %v269 = vpack.c.b16 %v187, %v268
      %vm270 = vcmask 1046528
      %v271 = vrot.slane %v269, 1
      %v272 = vrot.slane %v190, 1
      %v273 = vsel %vm270, %v271, %v272
      %v278 = vunpack.c.l.b16 %v263
      %v279 = vunpack.c.l.b16 %v264
      %v280 = vunpack.c.l.b16 %v265
      %v281 = vunpack.c.l.b16 %v266
      %v282 = vpack.c.b16 %v279, %v278
      %v283 = vpack.c.b16 %v281, %v280
      %v287 = vsel %vm216, %v273, 0
      %289 = vmatpush.bf16.msra.mxu0 0
      %290 = vmatpush.bf16.msra.mxu0 0
      %291 = vmatpush.bf16.msra.mxu0 0
      %292 = vmatpush.bf16.msra.mxu0 0
      %293 = vmatpush.bf16.msra.mxu0 0
      %294 = vmatpush.bf16.msra.mxu0 0
      %295 = vmatpush.bf16.msra.mxu0 %v283
      %296 = vmatpush.bf16.msra.mxu0 %v282
      %297 = vmatmul.bf16.gmra.mxu0 %v287
      %v298 = vpop.f32.mrf.mxu0
      %v299 = vadd.f32 0.0, %v298
      %v300 = vpop.f32.mrf.mxu0
      %v301 = vadd.f32 0.0, %v300
      %302 = vdwg.mxu0
      %v303 = vadd.f32 %v258, %v299
      %v304 = vadd.f32 %v260, %v301
      %v305 = vld [vmem:[%s2] sm:$0x1]
      %v307 = vperm.slane %v305, 0
      %v309 = vadd.f32 %v303, %v307
      %v310 = vadd.f32 %v304, %v307
      %311 = vst.msk [vmem:[%s170] sm:$0xff] %vm216, %v309
      %312 = vst.msk [vmem:[%s170 + $0x8] sm:$0xff] %vm216, %v310
      %p313 = scmp.lt.s32.totalorder %s14, 1
      %s314 = scalar_select %p313, %s14, 1
      %s315 = smul.addr %s314, 2
      %s316 = smul.addr %s315, 8
      %s317 = scalar_lea.vmem %s3, %s316
      // Predicated region
      $region33: #{informer_forward.41} parent=31 // pred_check
        %p318 = pneg %p100
      $region34: #{informer_forward.41} parent=31 // pred_check_branch
        %320 = sbr.rel (%p318) target = $region36
      $region35: #{informer_forward.41} parent=31 // pred_region
        _
      $region36: #{informer_forward.41} parent=31 // pred_fallthru
        _
    $region32: #{informer_forward.41} parent=5 // pred_fallthru
      _
    %p321 = scmp.le.s32.totalorder 2, %s9
    // Predicated region
    $region37: #{informer_forward.41} parent=5 // pred_check
      %p322 = pneg %p321
    $region38: #{informer_forward.41} parent=5 // pred_check_branch
      %324 = sbr.rel (%p322) target = $region40
    $region39: #{informer_forward.41} parent=5 // pred_region
      %s325 = ssub.s32 %s9, 2
      // Predicated region
      $region41: #{informer_forward.41} parent=39 // pred_check
        %p326 = pneg %p106
      $region42: #{informer_forward.41} parent=39 // pred_check_branch
        %328 = sbr.rel (%p326) target = $region44
      $region43: #{informer_forward.41} parent=39 // pred_region
        %p329 = scmp.lt.s32.totalorder %s15, 1
        %s330 = scalar_select %p329, %s15, 1
        %s331 = smul.addr %s330, 2
        %s332 = smul.addr %s331, 8
        %s333 = scalar_lea.vmem %s3, %s332
      $region44: #{informer_forward.41} parent=39 // pred_fallthru
        _
    $region40: #{informer_forward.41} parent=5 // pred_fallthru
      _
  $region6: #{informer_forward.41} parent=0 // loop_footer
    %s13 = sadd.s32 1, %s9
  $region7: #{informer_forward.41} parent=0 // loop_footer_branch
    %8 = sbr.rel target = $region3
  $region8: #{informer_forward.41} parent=0 // loop_exit
    _

// kernel: informer_forward.42
$region0: #{informer_forward.42}
  #allocation0 [shape = 'u32[]', space=smem, size = 0x4, offset = 0x4, fixed_abs, tag = 'smem constant byte address 0x4 - core index']
  #allocation1 [shape = 'u32[72,128]{1,0:T(1,128)}', space=vmem, size = 0x9000, scoped, tag = 'internal scratch']
  %s0 = inlined_call_operand.vmem [shape: f32[2,8,32], index: 0, kind: input, shape index: {}]
  %s1 = inlined_call_operand.vmem [shape: f32[1,8,32], index: 1, kind: input, shape index: {}]
  %s2 = inlined_call_operand.vmem [shape: bf16[32,64], index: 2, kind: input, shape index: {}]
  %s3 = inlined_call_operand.vmem [shape: bf16[32,32], index: 3, kind: input, shape index: {}]
  %s4 = inlined_call_operand.vmem [shape: f32[1,96], index: 4, kind: input, shape index: {}]
  %s5 = inlined_call_operand.vmem [shape: f32[2,8,96], index: 5, kind: output, shape index: {}]
  %s6 = sld [smem:[#allocation0]]
  $region53: #{informer_forward.42} parent=0
    _
  %s8 = ssub.s32 1, %s6
  %s9 = scalar_select 0, %s8, %s6
  loop: start=0, step=1, limit=4
  $region2: #{informer_forward.42} parent=0 // loop_pre_header
    _
  $region3: #{informer_forward.42} parent=0 // loop_header
    %s11 = sphi 0, %s15
    %p12 = scmp.ge.s32.totalorder %s11, 4
    %s21 = sphi 0, %s23
    %s24 = sphi 0, %s21
    %s25 = sphi 0, %s24
    %s41 = sphi 0, %s25
    %s45 = sphi 0, %s45
    %s47 = sphi 0, %s45
    %s48 = sphi 0, %s47
    %s62 = sphi 0, %s48
    %s66 = sphi 0, %s66
    %s68 = sphi 0, %s66
    %s69 = sphi 0, %s68
    %s83 = sphi 0, %s69
    %s87 = sphi 0, %s87
    %s89 = sphi 0, %s87
    %s90 = sphi 0, %s89
    %s104 = sphi 0, %s90
    %s108 = sphi 0, %s108
    %s110 = sphi 0, %s108
    %s111 = sphi 0, %s110
    %s125 = sphi 0, %s111
    %s131 = sphi 0, %s133
    %s134 = sphi 0, %s131
    %s135 = sphi 0, %s134
    %s151 = sphi 0, %s135
  $region4: #{informer_forward.42} parent=0 // loop_header_branch
    %14 = sbr.rel (%p12) target = $region8
  $region5: #{informer_forward.42} parent=0 // loop_body
    %s16 = ssub.s32 %s11, 1
    %s17 = ssub.s32 %s11, 2
    %s18 = sadd.s32 %s11, 1
    %s19 = ssub.s32 %s11, %s18
    %p20 = scmp.eq.s32.totalorder %s19, 0
    %s22 = sadd.s32 %s21, 1
    %s23 = scalar_select %p20, %s21, %s22
    %p26 = pneg %p20
    %p27 = scmp.eq.s32.totalorder %s11, 1
    %p28 = por %p26, %p27
    %p29 = scmp.ne.s32.totalorder %s21, %s24
    %p30 = scmp.eq.s32.totalorder %s11, 0
    %p31 = por %p29, %p30
    %p32 = scmp.ne.s32.totalorder %s21, %s24
    %p33 = scmp.eq.s32.totalorder %s16, 1
    %p34 = por %p32, %p33
    %p35 = scmp.ne.s32.totalorder %s24, %s25
    %p36 = scmp.eq.s32.totalorder %s16, 0
    %p37 = por %p35, %p36
    %p38 = scmp.ne.s32.totalorder %s24, %s25
    %p39 = scmp.eq.s32.totalorder %s17, 1
    %p40 = por %p38, %p39
    %p42 = scmp.ne.s32.totalorder %s25, %s41
    %p43 = scmp.eq.s32.totalorder %s17, 0
    %p44 = por %p42, %p43
    %s46 = sadd.s32 %s45, 1
    %p49 = scmp.eq.s32.totalorder %s11, 1
    %p50 = scmp.ne.s32.totalorder %s45, %s47
    %p51 = scmp.eq.s32.totalorder %s11, 0
    %p52 = por %p50, %p51
    %p53 = scmp.ne.s32.totalorder %s45, %s47
    %p54 = scmp.eq.s32.totalorder %s16, 1
    %p55 = por %p53, %p54
    %p56 = scmp.ne.s32.totalorder %s47, %s48
    %p57 = scmp.eq.s32.totalorder %s16, 0
    %p58 = por %p56, %p57
    %p59 = scmp.ne.s32.totalorder %s47, %s48
    %p60 = scmp.eq.s32.totalorder %s17, 1
    %p61 = por %p59, %p60
    %p63 = scmp.ne.s32.totalorder %s48, %s62
    %p64 = scmp.eq.s32.totalorder %s17, 0
    %p65 = por %p63, %p64
    %s67 = sadd.s32 %s66, 1
    %p70 = scmp.eq.s32.totalorder %s11, 1
    %p71 = scmp.ne.s32.totalorder %s66, %s68
    %p72 = scmp.eq.s32.totalorder %s11, 0
    %p73 = por %p71, %p72
    %p74 = scmp.ne.s32.totalorder %s66, %s68
    %p75 = scmp.eq.s32.totalorder %s16, 1
    %p76 = por %p74, %p75
    %p77 = scmp.ne.s32.totalorder %s68, %s69
    %p78 = scmp.eq.s32.totalorder %s16, 0
    %p79 = por %p77, %p78
    %p80 = scmp.ne.s32.totalorder %s68, %s69
    %p81 = scmp.eq.s32.totalorder %s17, 1
    %p82 = por %p80, %p81
    %p84 = scmp.ne.s32.totalorder %s69, %s83
    %p85 = scmp.eq.s32.totalorder %s17, 0
    %p86 = por %p84, %p85
    %s88 = sadd.s32 %s87, 1
    %p91 = scmp.eq.s32.totalorder %s11, 1
    %p92 = scmp.ne.s32.totalorder %s87, %s89
    %p93 = scmp.eq.s32.totalorder %s11, 0
    %p94 = por %p92, %p93
    %p95 = scmp.ne.s32.totalorder %s87, %s89
    %p96 = scmp.eq.s32.totalorder %s16, 1
    %p97 = por %p95, %p96
    %p98 = scmp.ne.s32.totalorder %s89, %s90
    %p99 = scmp.eq.s32.totalorder %s16, 0
    %p100 = por %p98, %p99
    %p101 = scmp.ne.s32.totalorder %s89, %s90
    %p102 = scmp.eq.s32.totalorder %s17, 1
    %p103 = por %p101, %p102
    %p105 = scmp.ne.s32.totalorder %s90, %s104
    %p106 = scmp.eq.s32.totalorder %s17, 0
    %p107 = por %p105, %p106
    %s109 = sadd.s32 %s108, 1
    %p112 = scmp.eq.s32.totalorder %s11, 1
    %p113 = scmp.ne.s32.totalorder %s108, %s110
    %p114 = scmp.eq.s32.totalorder %s11, 0
    %p115 = por %p113, %p114
    %p116 = scmp.ne.s32.totalorder %s108, %s110
    %p117 = scmp.eq.s32.totalorder %s16, 1
    %p118 = por %p116, %p117
    %p119 = scmp.ne.s32.totalorder %s110, %s111
    %p120 = scmp.eq.s32.totalorder %s16, 0
    %p121 = por %p119, %p120
    %p122 = scmp.ne.s32.totalorder %s110, %s111
    %p123 = scmp.eq.s32.totalorder %s17, 1
    %p124 = por %p122, %p123
    %p126 = scmp.ne.s32.totalorder %s111, %s125
    %p127 = scmp.eq.s32.totalorder %s17, 0
    %p128 = por %p126, %p127
    %s129 = ssub.s32 %s11, %s18
    %p130 = scmp.eq.s32.totalorder %s129, 0
    %s132 = sadd.s32 %s131, 1
    %s133 = scalar_select %p130, %s131, %s132
    %p136 = pneg %p130
    %p137 = scmp.eq.s32.totalorder %s11, 1
    %p138 = por %p136, %p137
    %p139 = scmp.ne.s32.totalorder %s131, %s134
    %p140 = scmp.eq.s32.totalorder %s11, 0
    %p141 = por %p139, %p140
    %p142 = scmp.ne.s32.totalorder %s131, %s134
    %p143 = scmp.eq.s32.totalorder %s16, 1
    %p144 = por %p142, %p143
    %p145 = scmp.ne.s32.totalorder %s134, %s135
    %p146 = scmp.eq.s32.totalorder %s16, 0
    %p147 = por %p145, %p146
    %p148 = scmp.ne.s32.totalorder %s134, %s135
    %p149 = scmp.eq.s32.totalorder %s17, 1
    %p150 = por %p148, %p149
    %p152 = scmp.ne.s32.totalorder %s135, %s151
    %p153 = scmp.eq.s32.totalorder %s17, 0
    %p154 = por %p152, %p153
    %p155 = scmp.le.s32.totalorder 1, %s11
    %p156 = scmp.lt.s32.totalorder %s11, 3
    %p157 = pnand %p155, %p156
    %p158 = pneg %p157
    // Predicated region
    $region9: #{informer_forward.42} parent=5 // pred_check
      _
    $region10: #{informer_forward.42} parent=5 // pred_check_branch
      %160 = sbr.rel (%p157) target = $region12
    $region11: #{informer_forward.42} parent=5 // pred_region
      %s161 = ssub.s32 %s11, 1
      // Predicated region
      $region13: #{informer_forward.42} parent=11 // pred_check
        %p162 = pneg %p58
      $region14: #{informer_forward.42} parent=11 // pred_check_branch
        %164 = sbr.rel (%p162) target = $region16
      $region15: #{informer_forward.42} parent=11 // pred_region
        _
      $region16: #{informer_forward.42} parent=11 // pred_fallthru
        _
      // Predicated region
      $region17: #{informer_forward.42} parent=11 // pred_check
        %p165 = pneg %p79
      $region18: #{informer_forward.42} parent=11 // pred_check_branch
        %167 = sbr.rel (%p165) target = $region20
      $region19: #{informer_forward.42} parent=11 // pred_region
        _
      $region20: #{informer_forward.42} parent=11 // pred_fallthru
        _
      // Predicated region
      $region21: #{informer_forward.42} parent=11 // pred_check
        %p168 = pneg %p100
      $region22: #{informer_forward.42} parent=11 // pred_check_branch
        %170 = sbr.rel (%p168) target = $region24
      $region23: #{informer_forward.42} parent=11 // pred_region
        _
      $region24: #{informer_forward.42} parent=11 // pred_fallthru
        _
      // Predicated region
      $region25: #{informer_forward.42} parent=11 // pred_check
        %p171 = pneg %p121
      $region26: #{informer_forward.42} parent=11 // pred_check_branch
        %173 = sbr.rel (%p171) target = $region28
      $region27: #{informer_forward.42} parent=11 // pred_region
        _
      $region28: #{informer_forward.42} parent=11 // pred_fallthru
        _
    $region12: #{informer_forward.42} parent=5 // pred_fallthru
      _
    %p174 = scmp.lt.s32.totalorder %s11, 2
    // Predicated region
    $region29: #{informer_forward.42} parent=5 // pred_check
      %p175 = pneg %p174
    $region30: #{informer_forward.42} parent=5 // pred_check_branch
      %177 = sbr.rel (%p175) target = $region32
    $region31: #{informer_forward.42} parent=5 // pred_region
      // Predicated region
      $region33: #{informer_forward.42} parent=31 // pred_check
        %p178 = pneg %p31
      $region34: #{informer_forward.42} parent=31 // pred_check_branch
        %180 = sbr.rel (%p178) target = $region36
      $region35: #{informer_forward.42} parent=31 // pred_region
        %p181 = scmp.lt.s32.totalorder %s11, 1
        %s182 = scalar_select %p181, %s11, 1
        %s183 = smul.addr %s182, 8
        %s184 = scalar_lea.vmem %s0, %s183
      $region36: #{informer_forward.42} parent=31 // pred_fallthru
        _
    $region32: #{informer_forward.42} parent=5 // pred_fallthru
      _
    %p185 = scmp.le.s32.totalorder 1, %s11
    %p186 = scmp.lt.s32.totalorder %s11, 3
    %p187 = pnand %p185, %p186
    %p188 = pneg %p187
    // Predicated region
    $region37: #{informer_forward.42} parent=5 // pred_check
      _
    $region38: #{informer_forward.42} parent=5 // pred_check_branch
      %190 = sbr.rel (%p187) target = $region40
    $region39: #{informer_forward.42} parent=5 // pred_region
      %s191 = ssub.s32 %s11, 1
      %p192 = scmp.lt.s32.totalorder %s16, 1
      %s193 = scalar_select %p192, %s16, 1
      %s194 = smul.addr %s193, 8
      %s195 = scalar_lea.vmem %s0, %s194
      %p196 = pneg %p37
      %p197 = pneg %p34
      %p198 = pneg %p58
      %p199 = pneg %p55
      %p200 = pneg %p79
      %p201 = pneg %p76
      %p202 = pneg %p100
      %p203 = pneg %p97
      %p204 = pneg %p121
      %p205 = pneg %p118
      %p206 = pneg %p147
      %p207 = pneg %p144
      %p208 = scmp.lt.s32.totalorder %s16, 1
      %s209 = scalar_select %p208, %s16, 1
      %s210 = smul.addr %s209, 8
      %s211 = scalar_lea.vmem %s5, %s210
      %p212 = scmp.lt.s32.totalorder %s16, 1
      %s213 = scalar_select %p212, %s16, 1
      %s214 = smul.addr %s213, 8
      %s215 = scalar_lea.vmem %s0, %s214
      %p216 = scmp.lt.s32.totalorder %s16, 1
      %s217 = scalar_select %p216, %s16, 1
      %s218 = smul.addr %s217, 8
      %s219 = scalar_lea.vmem %s5, %s218
      %v221 = vld [vmem:[%s215] sm:$0xff]
      %v222 = vld [vmem:[%s1] sm:$0xff]
      %v223 = vadd.f32 %v221, %v222
      %v224 = vpack.c.bf16 %v223, %v223
      %v225 = vld [vmem:[%s2] sm:$0xf]
      %v226 = vld [vmem:[%s2 + $0x4] sm:$0xf]
      %v227 = vld [vmem:[%s2 + $0x8] sm:$0xf]
      %v228 = vld [vmem:[%s2 + $0xc] sm:$0xf]
      %v233 = vunpack.c.l.b16 %v225
      %v234 = vunpack.c.l.b16 %v226
      %v235 = vunpack.c.l.b16 %v227
      %v236 = vunpack.c.l.b16 %v228
      %v237 = vpack.c.b16 %v234, %v233
      %v238 = vpack.c.b16 %v236, %v235
      %vm241 = vcmask 261120
      %v243 = vsel %vm241, %v224, 0
      %245 = vmatpush.bf16.msra.mxu0 0
      %246 = vmatpush.bf16.msra.mxu0 0
      %247 = vmatpush.bf16.msra.mxu0 0
      %248 = vmatpush.bf16.msra.mxu0 0
      %249 = vmatpush.bf16.msra.mxu0 0
      %250 = vmatpush.bf16.msra.mxu0 0
      %251 = vmatpush.bf16.msra.mxu0 %v238
      %252 = vmatpush.bf16.msra.mxu0 %v237
      %253 = vmatmul.bf16.gmra.mxu0 %v243
      %v254 = vpop.f32.mrf.mxu0
      %v255 = vadd.f32 0.0, %v254
      %v256 = vpop.f32.mrf.mxu0
      %257 = vdwg.mxu0
      %v258 = vpack.c.bf16 %v221, %v221
      %v259 = vld [vmem:[%s3] sm:$0xf]
      %v260 = vld [vmem:[%s3 + $0x4] sm:$0xf]
      %v261 = vld [vmem:[%s3 + $0x8] sm:$0xf]
      %v262 = vld [vmem:[%s3 + $0xc] sm:$0xf]
      %v267 = vunpack.c.l.b16 %v259
      %v268 = vunpack.c.l.b16 %v260
      %v269 = vunpack.c.l.b16 %v261
      %v270 = vunpack.c.l.b16 %v262
      %v271 = vpack.c.b16 %v268, %v267
      %v272 = vpack.c.b16 %v270, %v269
      %v276 = vsel %vm241, %v258, 0
      %278 = vmatpush.bf16.msra.mxu0 0
      %279 = vmatpush.bf16.msra.mxu0 0
      %280 = vmatpush.bf16.msra.mxu0 0
      %281 = vmatpush.bf16.msra.mxu0 0
      %282 = vmatpush.bf16.msra.mxu0 0
      %283 = vmatpush.bf16.msra.mxu0 0
      %284 = vmatpush.bf16.msra.mxu0 %v272
      %285 = vmatpush.bf16.msra.mxu0 %v271
      %286 = vmatmul.bf16.gmra.mxu0 %v276
      %v287 = vpop.f32.mrf.mxu0
      %v288 = vadd.f32 0.0, %v287
      %v289 = vpop.f32.mrf.mxu0
      %290 = vdwg.mxu0
      %292 = vrot.lane.b32.xlu0 %v288, 64
      %v293 = vpop.permute.xlu0 %292
      %vm295 = vcmask 523264
      %v296 = vsel %vm295, %v255, %v293
      %v297 = vld [vmem:[%s4] sm:$0x1]
      %v299 = vperm.slane %v297, 0
      %v301 = vadd.f32 %v296, %v299
      %vm302 = vcmask 785408
      %303 = vst.msk [vmem:[%s219] sm:$0xff] %vm302, %v301
      %p304 = scmp.lt.s32.totalorder %s16, 1
      %s305 = scalar_select %p304, %s16, 1
      %s306 = smul.addr %s305, 8
      %s307 = scalar_lea.vmem %s5, %s306
      // Predicated region
      $region41: #{informer_forward.42} parent=39 // pred_check
        %p308 = pneg %p144
      $region42: #{informer_forward.42} parent=39 // pred_check_branch
        %310 = sbr.rel (%p308) target = $region44
      $region43: #{informer_forward.42} parent=39 // pred_region
        _
      $region44: #{informer_forward.42} parent=39 // pred_fallthru
        _
    $region40: #{informer_forward.42} parent=5 // pred_fallthru
      _
    %p311 = scmp.le.s32.totalorder 2, %s11
    // Predicated region
    $region45: #{informer_forward.42} parent=5 // pred_check
      %p312 = pneg %p311
    $region46: #{informer_forward.42} parent=5 // pred_check_branch
      %314 = sbr.rel (%p312) target = $region48
    $region47: #{informer_forward.42} parent=5 // pred_region
      %s315 = ssub.s32 %s11, 2
      // Predicated region
      $region49: #{informer_forward.42} parent=47 // pred_check
        %p316 = pneg %p150
      $region50: #{informer_forward.42} parent=47 // pred_check_branch
        %318 = sbr.rel (%p316) target = $region52
      $region51: #{informer_forward.42} parent=47 // pred_region
        %p319 = scmp.lt.s32.totalorder %s17, 1
        %s320 = scalar_select %p319, %s17, 1
        %s321 = smul.addr %s320, 8
        %s322 = scalar_lea.vmem %s5, %s321
      $region52: #{informer_forward.42} parent=47 // pred_fallthru
        _
    $region48: #{informer_forward.42} parent=5 // pred_fallthru
      _
  $region6: #{informer_forward.42} parent=0 // loop_footer
    %s15 = sadd.s32 1, %s11
  $region7: #{informer_forward.42} parent=0 // loop_footer_branch
    %10 = sbr.rel target = $region3
  $region8: #{informer_forward.42} parent=0 // loop_exit
    _

// kernel: informer_forward.43
$region0: #{informer_forward.43}
  #allocation0 [shape = 'u32[]', space=smem, size = 0x4, offset = 0x4, fixed_abs, tag = 'smem constant byte address 0x4 - core index']
  #allocation1 [shape = 'u32[72,128]{1,0:T(1,128)}', space=vmem, size = 0x9000, scoped, tag = 'internal scratch']
  %s0 = inlined_call_operand.vmem [shape: bf16[2,8,32], index: 0, kind: input, shape index: {}]
  %s1 = inlined_call_operand.vmem [shape: bf16[2,8,32], index: 1, kind: input, shape index: {}]
  %s2 = inlined_call_operand.vmem [shape: bf16[2,8,32], index: 2, kind: input, shape index: {}]
  %s3 = inlined_call_operand.vmem [shape: f32[2,8,32], index: 3, kind: output, shape index: {}]
  %s4 = sld [smem:[#allocation0]]
  $region45: #{informer_forward.43} parent=0
    _
  %s6 = ssub.s32 1, %s4
  %s7 = scalar_select 0, %s6, %s4
  loop: start=0, step=1, limit=4
  $region2: #{informer_forward.43} parent=0 // loop_pre_header
    _
  $region3: #{informer_forward.43} parent=0 // loop_header
    %s9 = sphi 0, %s13
    %p10 = scmp.ge.s32.totalorder %s9, 4
    %s19 = sphi 0, %s21
    %s22 = sphi 0, %s19
    %s23 = sphi 0, %s22
    %s39 = sphi 0, %s23
    %s45 = sphi 0, %s47
    %s48 = sphi 0, %s45
    %s49 = sphi 0, %s48
    %s65 = sphi 0, %s49
    %s71 = sphi 0, %s73
    %s74 = sphi 0, %s71
    %s75 = sphi 0, %s74
    %s91 = sphi 0, %s75
    %s97 = sphi 0, %s99
    %s100 = sphi 0, %s97
    %s101 = sphi 0, %s100
    %s117 = sphi 0, %s101
  $region4: #{informer_forward.43} parent=0 // loop_header_branch
    %12 = sbr.rel (%p10) target = $region8
  $region5: #{informer_forward.43} parent=0 // loop_body
    %s14 = ssub.s32 %s9, 1
    %s15 = ssub.s32 %s9, 2
    %s16 = sadd.s32 %s9, 1
    %s17 = ssub.s32 %s9, %s16
    %p18 = scmp.eq.s32.totalorder %s17, 0
    %s20 = sadd.s32 %s19, 1
    %s21 = scalar_select %p18, %s19, %s20
    %p24 = pneg %p18
    %p25 = scmp.eq.s32.totalorder %s9, 1
    %p26 = por %p24, %p25
    %p27 = scmp.ne.s32.totalorder %s19, %s22
    %p28 = scmp.eq.s32.totalorder %s9, 0
    %p29 = por %p27, %p28
    %p30 = scmp.ne.s32.totalorder %s19, %s22
    %p31 = scmp.eq.s32.totalorder %s14, 1
    %p32 = por %p30, %p31
    %p33 = scmp.ne.s32.totalorder %s22, %s23
    %p34 = scmp.eq.s32.totalorder %s14, 0
    %p35 = por %p33, %p34
    %p36 = scmp.ne.s32.totalorder %s22, %s23
    %p37 = scmp.eq.s32.totalorder %s15, 1
    %p38 = por %p36, %p37
    %p40 = scmp.ne.s32.totalorder %s23, %s39
    %p41 = scmp.eq.s32.totalorder %s15, 0
    %p42 = por %p40, %p41
    %s43 = ssub.s32 %s9, %s16
    %p44 = scmp.eq.s32.totalorder %s43, 0
    %s46 = sadd.s32 %s45, 1
    %s47 = scalar_select %p44, %s45, %s46
    %p50 = pneg %p44
    %p51 = scmp.eq.s32.totalorder %s9, 1
    %p52 = por %p50, %p51
    %p53 = scmp.ne.s32.totalorder %s45, %s48
    %p54 = scmp.eq.s32.totalorder %s9, 0
    %p55 = por %p53, %p54
    %p56 = scmp.ne.s32.totalorder %s45, %s48
    %p57 = scmp.eq.s32.totalorder %s14, 1
    %p58 = por %p56, %p57
    %p59 = scmp.ne.s32.totalorder %s48, %s49
    %p60 = scmp.eq.s32.totalorder %s14, 0
    %p61 = por %p59, %p60
    %p62 = scmp.ne.s32.totalorder %s48, %s49
    %p63 = scmp.eq.s32.totalorder %s15, 1
    %p64 = por %p62, %p63
    %p66 = scmp.ne.s32.totalorder %s49, %s65
    %p67 = scmp.eq.s32.totalorder %s15, 0
    %p68 = por %p66, %p67
    %s69 = ssub.s32 %s9, %s16
    %p70 = scmp.eq.s32.totalorder %s69, 0
    %s72 = sadd.s32 %s71, 1
    %s73 = scalar_select %p70, %s71, %s72
    %p76 = pneg %p70
    %p77 = scmp.eq.s32.totalorder %s9, 1
    %p78 = por %p76, %p77
    %p79 = scmp.ne.s32.totalorder %s71, %s74
    %p80 = scmp.eq.s32.totalorder %s9, 0
    %p81 = por %p79, %p80
    %p82 = scmp.ne.s32.totalorder %s71, %s74
    %p83 = scmp.eq.s32.totalorder %s14, 1
    %p84 = por %p82, %p83
    %p85 = scmp.ne.s32.totalorder %s74, %s75
    %p86 = scmp.eq.s32.totalorder %s14, 0
    %p87 = por %p85, %p86
    %p88 = scmp.ne.s32.totalorder %s74, %s75
    %p89 = scmp.eq.s32.totalorder %s15, 1
    %p90 = por %p88, %p89
    %p92 = scmp.ne.s32.totalorder %s75, %s91
    %p93 = scmp.eq.s32.totalorder %s15, 0
    %p94 = por %p92, %p93
    %s95 = ssub.s32 %s9, %s16
    %p96 = scmp.eq.s32.totalorder %s95, 0
    %s98 = sadd.s32 %s97, 1
    %s99 = scalar_select %p96, %s97, %s98
    %p102 = pneg %p96
    %p103 = scmp.eq.s32.totalorder %s9, 1
    %p104 = por %p102, %p103
    %p105 = scmp.ne.s32.totalorder %s97, %s100
    %p106 = scmp.eq.s32.totalorder %s9, 0
    %p107 = por %p105, %p106
    %p108 = scmp.ne.s32.totalorder %s97, %s100
    %p109 = scmp.eq.s32.totalorder %s14, 1
    %p110 = por %p108, %p109
    %p111 = scmp.ne.s32.totalorder %s100, %s101
    %p112 = scmp.eq.s32.totalorder %s14, 0
    %p113 = por %p111, %p112
    %p114 = scmp.ne.s32.totalorder %s100, %s101
    %p115 = scmp.eq.s32.totalorder %s15, 1
    %p116 = por %p114, %p115
    %p118 = scmp.ne.s32.totalorder %s101, %s117
    %p119 = scmp.eq.s32.totalorder %s15, 0
    %p120 = por %p118, %p119
    %p121 = scmp.le.s32.totalorder 1, %s9
    %p122 = scmp.lt.s32.totalorder %s9, 3
    %p123 = pnand %p121, %p122
    %p124 = pneg %p123
    // Predicated region
    $region9: #{informer_forward.43} parent=5 // pred_check
      _
    $region10: #{informer_forward.43} parent=5 // pred_check_branch
      %126 = sbr.rel (%p123) target = $region12
    $region11: #{informer_forward.43} parent=5 // pred_region
      %s127 = ssub.s32 %s9, 1
    $region12: #{informer_forward.43} parent=5 // pred_fallthru
      _
    %p128 = scmp.lt.s32.totalorder %s9, 2
    // Predicated region
    $region13: #{informer_forward.43} parent=5 // pred_check
      %p129 = pneg %p128
    $region14: #{informer_forward.43} parent=5 // pred_check_branch
      %131 = sbr.rel (%p129) target = $region16
    $region15: #{informer_forward.43} parent=5 // pred_region
      // Predicated region
      $region17: #{informer_forward.43} parent=15 // pred_check
        %p132 = pneg %p29
      $region18: #{informer_forward.43} parent=15 // pred_check_branch
        %134 = sbr.rel (%p132) target = $region20
      $region19: #{informer_forward.43} parent=15 // pred_region
        %p135 = scmp.lt.s32.totalorder %s9, 1
        %s136 = scalar_select %p135, %s9, 1
        %s137 = smul.addr %s136, 4
        %s138 = scalar_lea.vmem %s0, %s137
      $region20: #{informer_forward.43} parent=15 // pred_fallthru
        _
      // Predicated region
      $region21: #{informer_forward.43} parent=15 // pred_check
        %p139 = pneg %p55
      $region22: #{informer_forward.43} parent=15 // pred_check_branch
        %141 = sbr.rel (%p139) target = $region24
      $region23: #{informer_forward.43} parent=15 // pred_region
        %p142 = scmp.lt.s32.totalorder %s9, 1
        %s143 = scalar_select %p142, %s9, 1
        %s144 = smul.addr %s143, 4
        %s145 = scalar_lea.vmem %s1, %s144
      $region24: #{informer_forward.43} parent=15 // pred_fallthru
        _
      // Predicated region
      $region25: #{informer_forward.43} parent=15 // pred_check
        %p146 = pneg %p81
      $region26: #{informer_forward.43} parent=15 // pred_check_branch
        %148 = sbr.rel (%p146) target = $region28
      $region27: #{informer_forward.43} parent=15 // pred_region
        %p149 = scmp.lt.s32.totalorder %s9, 1
        %s150 = scalar_select %p149, %s9, 1
        %s151 = smul.addr %s150, 4
        %s152 = scalar_lea.vmem %s2, %s151
      $region28: #{informer_forward.43} parent=15 // pred_fallthru
        _
    $region16: #{informer_forward.43} parent=5 // pred_fallthru
      _
    %p153 = scmp.le.s32.totalorder 1, %s9
    %p154 = scmp.lt.s32.totalorder %s9, 3
    %p155 = pnand %p153, %p154
    %p156 = pneg %p155
    // Predicated region
    $region29: #{informer_forward.43} parent=5 // pred_check
      _
    $region30: #{informer_forward.43} parent=5 // pred_check_branch
      %158 = sbr.rel (%p155) target = $region32
    $region31: #{informer_forward.43} parent=5 // pred_region
      %s159 = ssub.s32 %s9, 1
      %p160 = scmp.lt.s32.totalorder %s14, 1
      %s161 = scalar_select %p160, %s14, 1
      %s162 = smul.addr %s161, 4
      %s163 = scalar_lea.vmem %s0, %s162
      %p164 = pneg %p35
      %p165 = pneg %p32
      %p166 = scmp.lt.s32.totalorder %s14, 1
      %s167 = scalar_select %p166, %s14, 1
      %s168 = smul.addr %s167, 4
      %s169 = scalar_lea.vmem %s1, %s168
      %p170 = pneg %p61
      %p171 = pneg %p58
      %p172 = scmp.lt.s32.totalorder %s14, 1
      %s173 = scalar_select %p172, %s14, 1
      %s174 = smul.addr %s173, 4
      %s175 = scalar_lea.vmem %s2, %s174
      %p176 = pneg %p87
      %p177 = pneg %p84
      %p178 = pneg %p113
      %p179 = pneg %p110
      %p180 = scmp.lt.s32.totalorder %s14, 1
      %s181 = scalar_select %p180, %s14, 1
      %s182 = smul.addr %s181, 8
      %s183 = scalar_lea.vmem %s3, %s182
      %p184 = scmp.lt.s32.totalorder %s14, 1
      %s185 = scalar_select %p184, %s14, 1
      %s186 = smul.addr %s185, 4
      %s187 = scalar_lea.vmem %s0, %s186
      %p188 = scmp.lt.s32.totalorder %s14, 1
      %s189 = scalar_select %p188, %s14, 1
      %s190 = smul.addr %s189, 4
      %s191 = scalar_lea.vmem %s1, %s190
      %p192 = scmp.lt.s32.totalorder %s14, 1
      %s193 = scalar_select %p192, %s14, 1
      %s194 = smul.addr %s193, 4
      %s195 = scalar_lea.vmem %s2, %s194
      %p196 = scmp.lt.s32.totalorder %s14, 1
      %s197 = scalar_select %p196, %s14, 1
      %s198 = smul.addr %s197, 8
      %s199 = scalar_lea.vmem %s3, %s198
      %v201 = vld [vmem:[%s187] sm:$0xf]
      %v202 = vld [vmem:[%s191] sm:$0xf]
      %v203 = vld [vmem:[%s195] sm:$0xf]
      %vm204 = vcmask 64512
      %v206 = vsel %vm204, %v201, 0
      %v209 = vsel %vm204, %v202, 0
      %211 = vmatpush.bf16.xpose.msra.mxu0 0
      %212 = vmatpush.bf16.xpose.msra.mxu0 0
      %213 = vmatpush.bf16.xpose.msra.mxu0 0
      %214 = vmatpush.bf16.xpose.msra.mxu0 0
      %215 = vmatpush.bf16.xpose.msra.mxu0 0
      %216 = vmatpush.bf16.xpose.msra.mxu0 0
      %217 = vmatpush.bf16.xpose.msra.mxu0 0
      %218 = vmatpush.bf16.xpose.msra.mxu0 %v209
      %219 = vmatmul.bf16.gmra.mxu0 %v206
      %v220 = vpop.f32.mrf.mxu0
      %v221 = vadd.f32 0.0, %v220
      %v222 = vpop.f32.mrf.mxu0
      %223 = vdwg.mxu0
      %v224 = vmul.f32 %v221, 0.35355338
      %v225 = vsel %vm204, %v224, -inf
      %226 = vmax.xlane.f32.xlu0 %v225
      %v227 = vpop.xlane.xlu0 %226
      %v228 = vsub.f32 %v224, %v227
      %v229 = vmul.f32 %v228, 1.442695
      %v230 = vpow.pop %v229
      %v231 = vsel %vm204, %v230, 0.0
      %232 = vadd.xlane.f32.xlu0 %v231
      %v233 = vpop.xlane.xlu0 %232
      %v234 = vrcp.pop %v233
      %v235 = vmul.f32 %v230, %v234
      %v236 = vpack.c.bf16 %v235, %v235
      %v238 = vsel %vm204, %v236, 0
      %vm240 = vcmask 1043456
      %v242 = vsel %vm240, %v203, 0
      %244 = vmatpush.bf16.msra.mxu0 0
      %245 = vmatpush.bf16.msra.mxu0 0
      %246 = vmatpush.bf16.msra.mxu0 0
      %247 = vmatpush.bf16.msra.mxu0 0
      %248 = vmatpush.bf16.msra.mxu0 0
      %249 = vmatpush.bf16.msra.mxu0 0
      %250 = vmatpush.bf16.msra.mxu0 0
      %251 = vmatpush.bf16.msra.mxu0 %v242
      %252 = vmatmul.bf16.gmra.mxu0 %v238
      %v253 = vpop.f32.mrf.mxu0
      %v254 = vadd.f32 0.0, %v253
      %v255 = vpop.f32.mrf.mxu0
      %256 = vdwg.mxu0
      %v258 = vunpack.c.l.b16 %v201
      %v259 = vpack.c.b16 %v258, %v258
      %260 = vrot.lane.b32.xlu0 %v259, 120
      %v261 = vpop.permute.xlu0 %260
      %v263 = vunpack.c.l.b16 %v202
      %v264 = vpack.c.b16 %v263, %v263
      %265 = vrot.lane.b32.xlu0 %v264, 120
      %v266 = vpop.permute.xlu0 %265
      %v268 = vsel %vm204, %v261, 0
      %v271 = vsel %vm204, %v266, 0
      %273 = vmatpush.bf16.xpose.msra.mxu0 0
      %274 = vmatpush.bf16.xpose.msra.mxu0 0
      %275 = vmatpush.bf16.xpose.msra.mxu0 0
      %276 = vmatpush.bf16.xpose.msra.mxu0 0
      %277 = vmatpush.bf16.xpose.msra.mxu0 0
      %278 = vmatpush.bf16.xpose.msra.mxu0 0
      %279 = vmatpush.bf16.xpose.msra.mxu0 0
      %280 = vmatpush.bf16.xpose.msra.mxu0 %v271
      %281 = vmatmul.bf16.gmra.mxu0 %v268
      %v282 = vpop.f32.mrf.mxu0
      %v283 = vadd.f32 0.0, %v282
      %v284 = vpop.f32.mrf.mxu0
      %285 = vdwg.mxu0
      %v286 = vmul.f32 %v283, 0.35355338
      %v287 = vsel %vm204, %v286, -inf
      %288 = vmax.xlane.f32.xlu0 %v287
      %v289 = vpop.xlane.xlu0 %288
      %v290 = vsub.f32 %v286, %v289
      %v291 = vmul.f32 %v290, 1.442695
      %v292 = vpow.pop %v291
      %v293 = vsel %vm204, %v292, 0.0
      %294 = vadd.xlane.f32.xlu0 %v293
      %v295 = vpop.xlane.xlu0 %294
      %v296 = vrcp.pop %v295
      %v297 = vmul.f32 %v292, %v296
      %v298 = vpack.c.bf16 %v297, %v297
      %v300 = vunpack.c.l.b16 %v203
      %v301 = vpack.c.b16 %v300, %v300
      %302 = vrot.lane.b32.xlu0 %v301, 120
      %v303 = vpop.permute.xlu0 %302
      %v305 = vsel %vm204, %v298, 0
      %v308 = vsel %vm240, %v303, 0
      %310 = vmatpush.bf16.msra.mxu0 0
      %311 = vmatpush.bf16.msra.mxu0 0
      %312 = vmatpush.bf16.msra.mxu0 0
      %313 = vmatpush.bf16.msra.mxu0 0
      %314 = vmatpush.bf16.msra.mxu0 0
      %315 = vmatpush.bf16.msra.mxu0 0
      %316 = vmatpush.bf16.msra.mxu0 0
      %317 = vmatpush.bf16.msra.mxu0 %v308
      %318 = vmatmul.bf16.gmra.mxu0 %v305
      %v319 = vpop.f32.mrf.mxu0
      %v320 = vadd.f32 0.0, %v319
      %v321 = vpop.f32.mrf.mxu0
      %322 = vdwg.mxu0
      %323 = vrot.lane.b32.xlu0 %v259, 112
      %v324 = vpop.permute.xlu0 %323
      %325 = vrot.lane.b32.xlu0 %v264, 112
      %v326 = vpop.permute.xlu0 %325
      %v328 = vsel %vm204, %v324, 0
      %v331 = vsel %vm204, %v326, 0
      %333 = vmatpush.bf16.xpose.msra.mxu0 0
      %334 = vmatpush.bf16.xpose.msra.mxu0 0
      %335 = vmatpush.bf16.xpose.msra.mxu0 0
      %336 = vmatpush.bf16.xpose.msra.mxu0 0
      %337 = vmatpush.bf16.xpose.msra.mxu0 0
      %338 = vmatpush.bf16.xpose.msra.mxu0 0
      %339 = vmatpush.bf16.xpose.msra.mxu0 0
      %340 = vmatpush.bf16.xpose.msra.mxu0 %v331
      %341 = vmatmul.bf16.gmra.mxu0 %v328
      %v342 = vpop.f32.mrf.mxu0
      %v343 = vadd.f32 0.0, %v342
      %v344 = vpop.f32.mrf.mxu0
      %345 = vdwg.mxu0
      %v346 = vmul.f32 %v343, 0.35355338
      %v347 = vsel %vm204, %v346, -inf
      %348 = vmax.xlane.f32.xlu0 %v347
      %v349 = vpop.xlane.xlu0 %348
      %v350 = vsub.f32 %v346, %v349
      %v351 = vmul.f32 %v350, 1.442695
      %v352 = vpow.pop %v351
      %v353 = vsel %vm204, %v352, 0.0
      %354 = vadd.xlane.f32.xlu0 %v353
      %v355 = vpop.xlane.xlu0 %354
      %v356 = vrcp.pop %v355
      %v357 = vmul.f32 %v352, %v356
      %v358 = vpack.c.bf16 %v357, %v357
      %359 = vrot.lane.b32.xlu0 %v301, 112
      %v360 = vpop.permute.xlu0 %359
      %v362 = vsel %vm204, %v358, 0
      %v365 = vsel %vm240, %v360, 0
      %367 = vmatpush.bf16.msra.mxu0 0
      %368 = vmatpush.bf16.msra.mxu0 0
      %369 = vmatpush.bf16.msra.mxu0 0
      %370 = vmatpush.bf16.msra.mxu0 0
      %371 = vmatpush.bf16.msra.mxu0 0
      %372 = vmatpush.bf16.msra.mxu0 0
      %373 = vmatpush.bf16.msra.mxu0 0
      %374 = vmatpush.bf16.msra.mxu0 %v365
      %375 = vmatmul.bf16.gmra.mxu0 %v362
      %v376 = vpop.f32.mrf.mxu0
      %v377 = vadd.f32 0.0, %v376
      %v378 = vpop.f32.mrf.mxu0
      %379 = vdwg.mxu0
      %380 = vrot.lane.b32.xlu0 %v259, 104
      %v381 = vpop.permute.xlu0 %380
      %382 = vrot.lane.b32.xlu0 %v264, 104
      %v383 = vpop.permute.xlu0 %382
      %v385 = vsel %vm204, %v381, 0
      %v388 = vsel %vm204, %v383, 0
      %390 = vmatpush.bf16.xpose.msra.mxu0 0
      %391 = vmatpush.bf16.xpose.msra.mxu0 0
      %392 = vmatpush.bf16.xpose.msra.mxu0 0
      %393 = vmatpush.bf16.xpose.msra.mxu0 0
      %394 = vmatpush.bf16.xpose.msra.mxu0 0
      %395 = vmatpush.bf16.xpose.msra.mxu0 0
      %396 = vmatpush.bf16.xpose.msra.mxu0 0
      %397 = vmatpush.bf16.xpose.msra.mxu0 %v388
      %398 = vmatmul.bf16.gmra.mxu0 %v385
      %v399 = vpop.f32.mrf.mxu0
      %v400 = vadd.f32 0.0, %v399
      %v401 = vpop.f32.mrf.mxu0
      %402 = vdwg.mxu0
      %v403 = vmul.f32 %v400, 0.35355338
      %v404 = vsel %vm204, %v403, -inf
      %405 = vmax.xlane.f32.xlu0 %v404
      %v406 = vpop.xlane.xlu0 %405
      %v407 = vsub.f32 %v403, %v406
      %v408 = vmul.f32 %v407, 1.442695
      %v409 = vpow.pop %v408
      %v410 = vsel %vm204, %v409, 0.0
      %411 = vadd.xlane.f32.xlu0 %v410
      %v412 = vpop.xlane.xlu0 %411
      %v413 = vrcp.pop %v412
      %v414 = vmul.f32 %v409, %v413
      %v415 = vpack.c.bf16 %v414, %v414
      %416 = vrot.lane.b32.xlu0 %v301, 104
      %v417 = vpop.permute.xlu0 %416
      %v419 = vsel %vm204, %v415, 0
      %v422 = vsel %vm240, %v417, 0
      %424 = vmatpush.bf16.msra.mxu0 0
      %425 = vmatpush.bf16.msra.mxu0 0
      %426 = vmatpush.bf16.msra.mxu0 0
      %427 = vmatpush.bf16.msra.mxu0 0
      %428 = vmatpush.bf16.msra.mxu0 0
      %429 = vmatpush.bf16.msra.mxu0 0
      %430 = vmatpush.bf16.msra.mxu0 0
      %431 = vmatpush.bf16.msra.mxu0 %v422
      %432 = vmatmul.bf16.gmra.mxu0 %v419
      %v433 = vpop.f32.mrf.mxu0
      %v434 = vadd.f32 0.0, %v433
      %v435 = vpop.f32.mrf.mxu0
      %436 = vdwg.mxu0
      %438 = vrot.lane.b32.xlu0 %v320, 8
      %v439 = vpop.permute.xlu0 %438
      %442 = vrot.lane.b32.xlu0 %v377, 16
      %v443 = vpop.permute.xlu0 %442
      %446 = vrot.lane.b32.xlu0 %v434, 24
      %v447 = vpop.permute.xlu0 %446
      %v449 = vsel %vm204, %v254, %v439
      %vm450 = vcmask 130048
      %v451 = vsel %vm450, %v449, %v443
      %vm452 = vcmask 195584
      %v453 = vsel %vm452, %v451, %v447
      %vm454 = vcmask 261120
      %455 = vst.msk [vmem:[%s199] sm:$0xff] %vm454, %v453
      %p456 = scmp.lt.s32.totalorder %s14, 1
      %s457 = scalar_select %p456, %s14, 1
      %s458 = smul.addr %s457, 8
      %s459 = scalar_lea.vmem %s3, %s458
      // Predicated region
      $region33: #{informer_forward.43} parent=31 // pred_check
        %p460 = pneg %p110
      $region34: #{informer_forward.43} parent=31 // pred_check_branch
        %462 = sbr.rel (%p460) target = $region36
      $region35: #{informer_forward.43} parent=31 // pred_region
        _
      $region36: #{informer_forward.43} parent=31 // pred_fallthru
        _
    $region32: #{informer_forward.43} parent=5 // pred_fallthru
      _
    %p463 = scmp.le.s32.totalorder 2, %s9
    // Predicated region
    $region37: #{informer_forward.43} parent=5 // pred_check
      %p464 = pneg %p463
    $region38: #{informer_forward.43} parent=5 // pred_check_branch
      %466 = sbr.rel (%p464) target = $region40
    $region39: #{informer_forward.43} parent=5 // pred_region
      %s467 = ssub.s32 %s9, 2
      // Predicated region
      $region41: #{informer_forward.43} parent=39 // pred_check
        %p468 = pneg %p116
      $region42: #{informer_forward.43} parent=39 // pred_check_branch
        %470 = sbr.rel (%p468) target = $region44
      $region43: #{informer_forward.43} parent=39 // pred_region
        %p471 = scmp.lt.s32.totalorder %s15, 1
        %s472 = scalar_select %p471, %s15, 1
        %s473 = smul.addr %s472, 8
        %s474 = scalar_lea.vmem %s3, %s473
      $region44: #{informer_forward.43} parent=39 // pred_fallthru
        _
    $region40: #{informer_forward.43} parent=5 // pred_fallthru
      _
  $region6: #{informer_forward.43} parent=0 // loop_footer
    %s13 = sadd.s32 1, %s9
  $region7: #{informer_forward.43} parent=0 // loop_footer_branch
    %8 = sbr.rel target = $region3
  $region8: #{informer_forward.43} parent=0 // loop_exit
    _

// kernel: informer_forward.44
$region0: #{informer_forward.44}
  #allocation0 [shape = 'u32[]', space=smem, size = 0x4, offset = 0x4, fixed_abs, tag = 'smem constant byte address 0x4 - core index']
  #allocation1 [shape = 'u32[72,128]{1,0:T(1,128)}', space=vmem, size = 0x9000, scoped, tag = 'internal scratch']
  %s0 = inlined_call_operand.vmem [shape: bf16[16,32], index: 0, kind: input, shape index: {}]
  %s1 = inlined_call_operand.vmem [shape: bf16[32,32], index: 1, kind: input, shape index: {}]
  %s2 = inlined_call_operand.vmem [shape: f32[1,32], index: 2, kind: input, shape index: {}]
  %s3 = inlined_call_operand.vmem [shape: f32[16,32], index: 3, kind: output, shape index: {}]
  %s4 = sld [smem:[#allocation0]]
  $region45: #{informer_forward.44} parent=0
    _
  %s6 = ssub.s32 1, %s4
  %s7 = scalar_select 0, %s6, %s4
  loop: start=0, step=1, limit=4
  $region2: #{informer_forward.44} parent=0 // loop_pre_header
    _
  $region3: #{informer_forward.44} parent=0 // loop_header
    %s9 = sphi 0, %s13
    %p10 = scmp.ge.s32.totalorder %s9, 4
    %s19 = sphi 0, %s21
    %s22 = sphi 0, %s19
    %s23 = sphi 0, %s22
    %s39 = sphi 0, %s23
    %s43 = sphi 0, %s43
    %s45 = sphi 0, %s43
    %s46 = sphi 0, %s45
    %s60 = sphi 0, %s46
    %s64 = sphi 0, %s64
    %s66 = sphi 0, %s64
    %s67 = sphi 0, %s66
    %s81 = sphi 0, %s67
    %s87 = sphi 0, %s89
    %s90 = sphi 0, %s87
    %s91 = sphi 0, %s90
    %s107 = sphi 0, %s91
  $region4: #{informer_forward.44} parent=0 // loop_header_branch
    %12 = sbr.rel (%p10) target = $region8
  $region5: #{informer_forward.44} parent=0 // loop_body
    %s14 = ssub.s32 %s9, 1
    %s15 = ssub.s32 %s9, 2
    %s16 = sadd.s32 %s9, 1
    %s17 = ssub.s32 %s9, %s16
    %p18 = scmp.eq.s32.totalorder %s17, 0
    %s20 = sadd.s32 %s19, 1
    %s21 = scalar_select %p18, %s19, %s20
    %p24 = pneg %p18
    %p25 = scmp.eq.s32.totalorder %s9, 1
    %p26 = por %p24, %p25
    %p27 = scmp.ne.s32.totalorder %s19, %s22
    %p28 = scmp.eq.s32.totalorder %s9, 0
    %p29 = por %p27, %p28
    %p30 = scmp.ne.s32.totalorder %s19, %s22
    %p31 = scmp.eq.s32.totalorder %s14, 1
    %p32 = por %p30, %p31
    %p33 = scmp.ne.s32.totalorder %s22, %s23
    %p34 = scmp.eq.s32.totalorder %s14, 0
    %p35 = por %p33, %p34
    %p36 = scmp.ne.s32.totalorder %s22, %s23
    %p37 = scmp.eq.s32.totalorder %s15, 1
    %p38 = por %p36, %p37
    %p40 = scmp.ne.s32.totalorder %s23, %s39
    %p41 = scmp.eq.s32.totalorder %s15, 0
    %p42 = por %p40, %p41
    %s44 = sadd.s32 %s43, 1
    %p47 = scmp.eq.s32.totalorder %s9, 1
    %p48 = scmp.ne.s32.totalorder %s43, %s45
    %p49 = scmp.eq.s32.totalorder %s9, 0
    %p50 = por %p48, %p49
    %p51 = scmp.ne.s32.totalorder %s43, %s45
    %p52 = scmp.eq.s32.totalorder %s14, 1
    %p53 = por %p51, %p52
    %p54 = scmp.ne.s32.totalorder %s45, %s46
    %p55 = scmp.eq.s32.totalorder %s14, 0
    %p56 = por %p54, %p55
    %p57 = scmp.ne.s32.totalorder %s45, %s46
    %p58 = scmp.eq.s32.totalorder %s15, 1
    %p59 = por %p57, %p58
    %p61 = scmp.ne.s32.totalorder %s46, %s60
    %p62 = scmp.eq.s32.totalorder %s15, 0
    %p63 = por %p61, %p62
    %s65 = sadd.s32 %s64, 1
    %p68 = scmp.eq.s32.totalorder %s9, 1
    %p69 = scmp.ne.s32.totalorder %s64, %s66
    %p70 = scmp.eq.s32.totalorder %s9, 0
    %p71 = por %p69, %p70
    %p72 = scmp.ne.s32.totalorder %s64, %s66
    %p73 = scmp.eq.s32.totalorder %s14, 1
    %p74 = por %p72, %p73
    %p75 = scmp.ne.s32.totalorder %s66, %s67
    %p76 = scmp.eq.s32.totalorder %s14, 0
    %p77 = por %p75, %p76
    %p78 = scmp.ne.s32.totalorder %s66, %s67
    %p79 = scmp.eq.s32.totalorder %s15, 1
    %p80 = por %p78, %p79
    %p82 = scmp.ne.s32.totalorder %s67, %s81
    %p83 = scmp.eq.s32.totalorder %s15, 0
    %p84 = por %p82, %p83
    %s85 = ssub.s32 %s9, %s16
    %p86 = scmp.eq.s32.totalorder %s85, 0
    %s88 = sadd.s32 %s87, 1
    %s89 = scalar_select %p86, %s87, %s88
    %p92 = pneg %p86
    %p93 = scmp.eq.s32.totalorder %s9, 1
    %p94 = por %p92, %p93
    %p95 = scmp.ne.s32.totalorder %s87, %s90
    %p96 = scmp.eq.s32.totalorder %s9, 0
    %p97 = por %p95, %p96
    %p98 = scmp.ne.s32.totalorder %s87, %s90
    %p99 = scmp.eq.s32.totalorder %s14, 1
    %p100 = por %p98, %p99
    %p101 = scmp.ne.s32.totalorder %s90, %s91
    %p102 = scmp.eq.s32.totalorder %s14, 0
    %p103 = por %p101, %p102
    %p104 = scmp.ne.s32.totalorder %s90, %s91
    %p105 = scmp.eq.s32.totalorder %s15, 1
    %p106 = por %p104, %p105
    %p108 = scmp.ne.s32.totalorder %s91, %s107
    %p109 = scmp.eq.s32.totalorder %s15, 0
    %p110 = por %p108, %p109
    %p111 = scmp.le.s32.totalorder 1, %s9
    %p112 = scmp.lt.s32.totalorder %s9, 3
    %p113 = pnand %p111, %p112
    %p114 = pneg %p113
    // Predicated region
    $region9: #{informer_forward.44} parent=5 // pred_check
      _
    $region10: #{informer_forward.44} parent=5 // pred_check_branch
      %116 = sbr.rel (%p113) target = $region12
    $region11: #{informer_forward.44} parent=5 // pred_region
      %s117 = ssub.s32 %s9, 1
      // Predicated region
      $region13: #{informer_forward.44} parent=11 // pred_check
        %p118 = pneg %p56
      $region14: #{informer_forward.44} parent=11 // pred_check_branch
        %120 = sbr.rel (%p118) target = $region16
      $region15: #{informer_forward.44} parent=11 // pred_region
        _
      $region16: #{informer_forward.44} parent=11 // pred_fallthru
        _
      // Predicated region
      $region17: #{informer_forward.44} parent=11 // pred_check
        %p121 = pneg %p77
      $region18: #{informer_forward.44} parent=11 // pred_check_branch
        %123 = sbr.rel (%p121) target = $region20
      $region19: #{informer_forward.44} parent=11 // pred_region
        _
      $region20: #{informer_forward.44} parent=11 // pred_fallthru
        _
    $region12: #{informer_forward.44} parent=5 // pred_fallthru
      _
    %p124 = scmp.lt.s32.totalorder %s9, 2
    // Predicated region
    $region21: #{informer_forward.44} parent=5 // pred_check
      %p125 = pneg %p124
    $region22: #{informer_forward.44} parent=5 // pred_check_branch
      %127 = sbr.rel (%p125) target = $region24
    $region23: #{informer_forward.44} parent=5 // pred_region
      // Predicated region
      $region25: #{informer_forward.44} parent=23 // pred_check
        %p128 = pneg %p29
      $region26: #{informer_forward.44} parent=23 // pred_check_branch
        %130 = sbr.rel (%p128) target = $region28
      $region27: #{informer_forward.44} parent=23 // pred_region
        %p131 = scmp.lt.s32.totalorder %s9, 1
        %s132 = scalar_select %p131, %s9, 1
        %s133 = smul.addr %s132, 4
        %s134 = scalar_lea.vmem %s0, %s133
      $region28: #{informer_forward.44} parent=23 // pred_fallthru
        _
    $region24: #{informer_forward.44} parent=5 // pred_fallthru
      _
    %p135 = scmp.le.s32.totalorder 1, %s9
    %p136 = scmp.lt.s32.totalorder %s9, 3
    %p137 = pnand %p135, %p136
    %p138 = pneg %p137
    // Predicated region
    $region29: #{informer_forward.44} parent=5 // pred_check
      _
    $region30: #{informer_forward.44} parent=5 // pred_check_branch
      %140 = sbr.rel (%p137) target = $region32
    $region31: #{informer_forward.44} parent=5 // pred_region
      %s141 = ssub.s32 %s9, 1
      %p142 = scmp.lt.s32.totalorder %s14, 1
      %s143 = scalar_select %p142, %s14, 1
      %s144 = smul.addr %s143, 4
      %s145 = scalar_lea.vmem %s0, %s144
      %p146 = pneg %p35
      %p147 = pneg %p32
      %p148 = pneg %p56
      %p149 = pneg %p53
      %p150 = pneg %p77
      %p151 = pneg %p74
      %p152 = pneg %p103
      %p153 = pneg %p100
      %p154 = scmp.lt.s32.totalorder %s14, 1
      %s155 = scalar_select %p154, %s14, 1
      %s156 = smul.addr %s155, 8
      %s157 = scalar_lea.vmem %s3, %s156
      %p158 = scmp.lt.s32.totalorder %s14, 1
      %s159 = scalar_select %p158, %s14, 1
      %s160 = smul.addr %s159, 4
      %s161 = scalar_lea.vmem %s0, %s160
      %p162 = scmp.lt.s32.totalorder %s14, 1
      %s163 = scalar_select %p162, %s14, 1
      %s164 = smul.addr %s163, 8
      %s165 = scalar_lea.vmem %s3, %s164
      %v167 = vld [vmem:[%s161] sm:$0xf]
      %v168 = vld [vmem:[%s1] sm:$0xf]
      %v169 = vld [vmem:[%s1 + $0x4] sm:$0xf]
      %v170 = vld [vmem:[%s1 + $0x8] sm:$0xf]
      %v171 = vld [vmem:[%s1 + $0xc] sm:$0xf]
      %v172 = vld [vmem:[%s2] sm:$0x1]
      %v174 = vperm.slane %v172, 0
      %v180 = vunpack.c.l.b16 %v168
      %v181 = vunpack.c.l.b16 %v169
      %v182 = vunpack.c.l.b16 %v170
      %v183 = vunpack.c.l.b16 %v171
      %v184 = vpack.c.b16 %v181, %v180
      %v185 = vpack.c.b16 %v183, %v182
      %vm188 = vcmask 261120
      %v190 = vsel %vm188, %v167, 0
      %192 = vmatpush.bf16.msra.mxu0 0
      %193 = vmatpush.bf16.msra.mxu0 0
      %194 = vmatpush.bf16.msra.mxu0 0
      %195 = vmatpush.bf16.msra.mxu0 0
      %196 = vmatpush.bf16.msra.mxu0 0
      %197 = vmatpush.bf16.msra.mxu0 0
      %198 = vmatpush.bf16.msra.mxu0 %v185
      %199 = vmatpush.bf16.msra.mxu0 %v184
      %200 = vmatmul.bf16.gmra.mxu0 %v190
      %v201 = vpop.f32.mrf.mxu0
      %v202 = vadd.f32 %v174, %v201
      %v203 = vpop.f32.mrf.mxu0
      %204 = vdwg.mxu0
      %205 = vst.msk [vmem:[%s165] sm:$0xff] %vm188, %v202
      %p206 = scmp.lt.s32.totalorder %s14, 1
      %s207 = scalar_select %p206, %s14, 1
      %s208 = smul.addr %s207, 8
      %s209 = scalar_lea.vmem %s3, %s208
      // Predicated region
      $region33: #{informer_forward.44} parent=31 // pred_check
        %p210 = pneg %p100
      $region34: #{informer_forward.44} parent=31 // pred_check_branch
        %212 = sbr.rel (%p210) target = $region36
      $region35: #{informer_forward.44} parent=31 // pred_region
        _
      $region36: #{informer_forward.44} parent=31 // pred_fallthru
        _
    $region32: #{informer_forward.44} parent=5 // pred_fallthru
      _
    %p213 = scmp.le.s32.totalorder 2, %s9
    // Predicated region
    $region37: #{informer_forward.44} parent=5 // pred_check
      %p214 = pneg %p213
    $region38: #{informer_forward.44} parent=5 // pred_check_branch
      %216 = sbr.rel (%p214) target = $region40
    $region39: #{informer_forward.44} parent=5 // pred_region
      %s217 = ssub.s32 %s9, 2
      // Predicated region
      $region41: #{informer_forward.44} parent=39 // pred_check
        %p218 = pneg %p106
      $region42: #{informer_forward.44} parent=39 // pred_check_branch
        %220 = sbr.rel (%p218) target = $region44
      $region43: #{informer_forward.44} parent=39 // pred_region
        %p221 = scmp.lt.s32.totalorder %s15, 1
        %s222 = scalar_select %p221, %s15, 1
        %s223 = smul.addr %s222, 8
        %s224 = scalar_lea.vmem %s3, %s223
      $region44: #{informer_forward.44} parent=39 // pred_fallthru
        _
    $region40: #{informer_forward.44} parent=5 // pred_fallthru
      _
  $region6: #{informer_forward.44} parent=0 // loop_footer
    %s13 = sadd.s32 1, %s9
  $region7: #{informer_forward.44} parent=0 // loop_footer_branch
    %8 = sbr.rel target = $region3
  $region8: #{informer_forward.44} parent=0 // loop_exit
    _

// kernel: informer_forward.45
$region0: #{informer_forward.45}
  #allocation0 [shape = 'u32[]', space=smem, size = 0x4, offset = 0x4, fixed_abs, tag = 'smem constant byte address 0x4 - core index']
  #allocation1 [shape = 'u32[72,128]{1,0:T(1,128)}', space=vmem, size = 0x9000, scoped, tag = 'internal scratch']
  %s0 = inlined_call_operand.vmem [shape: f32[16,32], index: 0, kind: input, shape index: {}]
  %s1 = inlined_call_operand.vmem [shape: f32[16,32], index: 1, kind: input, shape index: {}]
  %s2 = inlined_call_operand.vmem [shape: f32[1,32], index: 2, kind: input, shape index: {}]
  %s3 = inlined_call_operand.vmem [shape: f32[1,32], index: 3, kind: input, shape index: {}]
  %s4 = inlined_call_operand.vmem [shape: f32[16,32], index: 4, kind: output, shape index: {}]
  %s5 = sld [smem:[#allocation0]]
  $region49: #{informer_forward.45} parent=0
    _
  %s7 = ssub.s32 1, %s5
  %s8 = scalar_select 0, %s7, %s5
  loop: start=0, step=1, limit=4
  $region2: #{informer_forward.45} parent=0 // loop_pre_header
    _
  $region3: #{informer_forward.45} parent=0 // loop_header
    %s10 = sphi 0, %s14
    %p11 = scmp.ge.s32.totalorder %s10, 4
    %s20 = sphi 0, %s22
    %s23 = sphi 0, %s20
    %s24 = sphi 0, %s23
    %s40 = sphi 0, %s24
    %s46 = sphi 0, %s48
    %s49 = sphi 0, %s46
    %s50 = sphi 0, %s49
    %s66 = sphi 0, %s50
    %s70 = sphi 0, %s70
    %s72 = sphi 0, %s70
    %s73 = sphi 0, %s72
    %s87 = sphi 0, %s73
    %s91 = sphi 0, %s91
    %s93 = sphi 0, %s91
    %s94 = sphi 0, %s93
    %s108 = sphi 0, %s94
    %s114 = sphi 0, %s116
    %s117 = sphi 0, %s114
    %s118 = sphi 0, %s117
    %s134 = sphi 0, %s118
  $region4: #{informer_forward.45} parent=0 // loop_header_branch
    %13 = sbr.rel (%p11) target = $region8
  $region5: #{informer_forward.45} parent=0 // loop_body
    %s15 = ssub.s32 %s10, 1
    %s16 = ssub.s32 %s10, 2
    %s17 = sadd.s32 %s10, 1
    %s18 = ssub.s32 %s10, %s17
    %p19 = scmp.eq.s32.totalorder %s18, 0
    %s21 = sadd.s32 %s20, 1
    %s22 = scalar_select %p19, %s20, %s21
    %p25 = pneg %p19
    %p26 = scmp.eq.s32.totalorder %s10, 1
    %p27 = por %p25, %p26
    %p28 = scmp.ne.s32.totalorder %s20, %s23
    %p29 = scmp.eq.s32.totalorder %s10, 0
    %p30 = por %p28, %p29
    %p31 = scmp.ne.s32.totalorder %s20, %s23
    %p32 = scmp.eq.s32.totalorder %s15, 1
    %p33 = por %p31, %p32
    %p34 = scmp.ne.s32.totalorder %s23, %s24
    %p35 = scmp.eq.s32.totalorder %s15, 0
    %p36 = por %p34, %p35
    %p37 = scmp.ne.s32.totalorder %s23, %s24
    %p38 = scmp.eq.s32.totalorder %s16, 1
    %p39 = por %p37, %p38
    %p41 = scmp.ne.s32.totalorder %s24, %s40
    %p42 = scmp.eq.s32.totalorder %s16, 0
    %p43 = por %p41, %p42
    %s44 = ssub.s32 %s10, %s17
    %p45 = scmp.eq.s32.totalorder %s44, 0
    %s47 = sadd.s32 %s46, 1
    %s48 = scalar_select %p45, %s46, %s47
    %p51 = pneg %p45
    %p52 = scmp.eq.s32.totalorder %s10, 1
    %p53 = por %p51, %p52
    %p54 = scmp.ne.s32.totalorder %s46, %s49
    %p55 = scmp.eq.s32.totalorder %s10, 0
    %p56 = por %p54, %p55
    %p57 = scmp.ne.s32.totalorder %s46, %s49
    %p58 = scmp.eq.s32.totalorder %s15, 1
    %p59 = por %p57, %p58
    %p60 = scmp.ne.s32.totalorder %s49, %s50
    %p61 = scmp.eq.s32.totalorder %s15, 0
    %p62 = por %p60, %p61
    %p63 = scmp.ne.s32.totalorder %s49, %s50
    %p64 = scmp.eq.s32.totalorder %s16, 1
    %p65 = por %p63, %p64
    %p67 = scmp.ne.s32.totalorder %s50, %s66
    %p68 = scmp.eq.s32.totalorder %s16, 0
    %p69 = por %p67, %p68
    %s71 = sadd.s32 %s70, 1
    %p74 = scmp.eq.s32.totalorder %s10, 1
    %p75 = scmp.ne.s32.totalorder %s70, %s72
    %p76 = scmp.eq.s32.totalorder %s10, 0
    %p77 = por %p75, %p76
    %p78 = scmp.ne.s32.totalorder %s70, %s72
    %p79 = scmp.eq.s32.totalorder %s15, 1
    %p80 = por %p78, %p79
    %p81 = scmp.ne.s32.totalorder %s72, %s73
    %p82 = scmp.eq.s32.totalorder %s15, 0
    %p83 = por %p81, %p82
    %p84 = scmp.ne.s32.totalorder %s72, %s73
    %p85 = scmp.eq.s32.totalorder %s16, 1
    %p86 = por %p84, %p85
    %p88 = scmp.ne.s32.totalorder %s73, %s87
    %p89 = scmp.eq.s32.totalorder %s16, 0
    %p90 = por %p88, %p89
    %s92 = sadd.s32 %s91, 1
    %p95 = scmp.eq.s32.totalorder %s10, 1
    %p96 = scmp.ne.s32.totalorder %s91, %s93
    %p97 = scmp.eq.s32.totalorder %s10, 0
    %p98 = por %p96, %p97
    %p99 = scmp.ne.s32.totalorder %s91, %s93
    %p100 = scmp.eq.s32.totalorder %s15, 1
    %p101 = por %p99, %p100
    %p102 = scmp.ne.s32.totalorder %s93, %s94
    %p103 = scmp.eq.s32.totalorder %s15, 0
    %p104 = por %p102, %p103
    %p105 = scmp.ne.s32.totalorder %s93, %s94
    %p106 = scmp.eq.s32.totalorder %s16, 1
    %p107 = por %p105, %p106
    %p109 = scmp.ne.s32.totalorder %s94, %s108
    %p110 = scmp.eq.s32.totalorder %s16, 0
    %p111 = por %p109, %p110
    %s112 = ssub.s32 %s10, %s17
    %p113 = scmp.eq.s32.totalorder %s112, 0
    %s115 = sadd.s32 %s114, 1
    %s116 = scalar_select %p113, %s114, %s115
    %p119 = pneg %p113
    %p120 = scmp.eq.s32.totalorder %s10, 1
    %p121 = por %p119, %p120
    %p122 = scmp.ne.s32.totalorder %s114, %s117
    %p123 = scmp.eq.s32.totalorder %s10, 0
    %p124 = por %p122, %p123
    %p125 = scmp.ne.s32.totalorder %s114, %s117
    %p126 = scmp.eq.s32.totalorder %s15, 1
    %p127 = por %p125, %p126
    %p128 = scmp.ne.s32.totalorder %s117, %s118
    %p129 = scmp.eq.s32.totalorder %s15, 0
    %p130 = por %p128, %p129
    %p131 = scmp.ne.s32.totalorder %s117, %s118
    %p132 = scmp.eq.s32.totalorder %s16, 1
    %p133 = por %p131, %p132
    %p135 = scmp.ne.s32.totalorder %s118, %s134
    %p136 = scmp.eq.s32.totalorder %s16, 0
    %p137 = por %p135, %p136
    %p138 = scmp.le.s32.totalorder 1, %s10
    %p139 = scmp.lt.s32.totalorder %s10, 3
    %p140 = pnand %p138, %p139
    %p141 = pneg %p140
    // Predicated region
    $region9: #{informer_forward.45} parent=5 // pred_check
      _
    $region10: #{informer_forward.45} parent=5 // pred_check_branch
      %143 = sbr.rel (%p140) target = $region12
    $region11: #{informer_forward.45} parent=5 // pred_region
      %s144 = ssub.s32 %s10, 1
      // Predicated region
      $region13: #{informer_forward.45} parent=11 // pred_check
        %p145 = pneg %p83
      $region14: #{informer_forward.45} parent=11 // pred_check_branch
        %147 = sbr.rel (%p145) target = $region16
      $region15: #{informer_forward.45} parent=11 // pred_region
        _
      $region16: #{informer_forward.45} parent=11 // pred_fallthru
        _
      // Predicated region
      $region17: #{informer_forward.45} parent=11 // pred_check
        %p148 = pneg %p104
      $region18: #{informer_forward.45} parent=11 // pred_check_branch
        %150 = sbr.rel (%p148) target = $region20
      $region19: #{informer_forward.45} parent=11 // pred_region
        _
      $region20: #{informer_forward.45} parent=11 // pred_fallthru
        _
    $region12: #{informer_forward.45} parent=5 // pred_fallthru
      _
    %p151 = scmp.lt.s32.totalorder %s10, 2
    // Predicated region
    $region21: #{informer_forward.45} parent=5 // pred_check
      %p152 = pneg %p151
    $region22: #{informer_forward.45} parent=5 // pred_check_branch
      %154 = sbr.rel (%p152) target = $region24
    $region23: #{informer_forward.45} parent=5 // pred_region
      // Predicated region
      $region25: #{informer_forward.45} parent=23 // pred_check
        %p155 = pneg %p30
      $region26: #{informer_forward.45} parent=23 // pred_check_branch
        %157 = sbr.rel (%p155) target = $region28
      $region27: #{informer_forward.45} parent=23 // pred_region
        %p158 = scmp.lt.s32.totalorder %s10, 1
        %s159 = scalar_select %p158, %s10, 1
        %s160 = smul.addr %s159, 8
        %s161 = scalar_lea.vmem %s0, %s160
      $region28: #{informer_forward.45} parent=23 // pred_fallthru
        _
      // Predicated region
      $region29: #{informer_forward.45} parent=23 // pred_check
        %p162 = pneg %p56
      $region30: #{informer_forward.45} parent=23 // pred_check_branch
        %164 = sbr.rel (%p162) target = $region32
      $region31: #{informer_forward.45} parent=23 // pred_region
        %p165 = scmp.lt.s32.totalorder %s10, 1
        %s166 = scalar_select %p165, %s10, 1
        %s167 = smul.addr %s166, 8
        %s168 = scalar_lea.vmem %s1, %s167
      $region32: #{informer_forward.45} parent=23 // pred_fallthru
        _
    $region24: #{informer_forward.45} parent=5 // pred_fallthru
      _
    %p169 = scmp.le.s32.totalorder 1, %s10
    %p170 = scmp.lt.s32.totalorder %s10, 3
    %p171 = pnand %p169, %p170
    %p172 = pneg %p171
    // Predicated region
    $region33: #{informer_forward.45} parent=5 // pred_check
      _
    $region34: #{informer_forward.45} parent=5 // pred_check_branch
      %174 = sbr.rel (%p171) target = $region36
    $region35: #{informer_forward.45} parent=5 // pred_region
      %s175 = ssub.s32 %s10, 1
      %p176 = scmp.lt.s32.totalorder %s15, 1
      %s177 = scalar_select %p176, %s15, 1
      %s178 = smul.addr %s177, 8
      %s179 = scalar_lea.vmem %s0, %s178
      %p180 = pneg %p36
      %p181 = pneg %p33
      %p182 = scmp.lt.s32.totalorder %s15, 1
      %s183 = scalar_select %p182, %s15, 1
      %s184 = smul.addr %s183, 8
      %s185 = scalar_lea.vmem %s1, %s184
      %p186 = pneg %p62
      %p187 = pneg %p59
      %p188 = pneg %p83
      %p189 = pneg %p80
      %p190 = pneg %p104
      %p191 = pneg %p101
      %p192 = pneg %p130
      %p193 = pneg %p127
      %p194 = scmp.lt.s32.totalorder %s15, 1
      %s195 = scalar_select %p194, %s15, 1
      %s196 = smul.addr %s195, 8
      %s197 = scalar_lea.vmem %s4, %s196
      %p198 = scmp.lt.s32.totalorder %s15, 1
      %s199 = scalar_select %p198, %s15, 1
      %s200 = smul.addr %s199, 8
      %s201 = scalar_lea.vmem %s0, %s200
      %p202 = scmp.lt.s32.totalorder %s15, 1
      %s203 = scalar_select %p202, %s15, 1
      %s204 = smul.addr %s203, 8
      %s205 = scalar_lea.vmem %s1, %s204
      %p206 = scmp.lt.s32.totalorder %s15, 1
      %s207 = scalar_select %p206, %s15, 1
      %s208 = smul.addr %s207, 8
      %s209 = scalar_lea.vmem %s4, %s208
      %v210 = vld [vmem:[%s201] sm:$0xff]
      %v211 = vld [vmem:[%s205] sm:$0xff]
      %v212 = vadd.f32 %v210, %v211
      %v213 = vld [vmem:[%s2] sm:$0x1]
      %v214 = vld [vmem:[%s3] sm:$0x1]
      %vm215 = vcmask 261120
      %v216 = vsel %vm215, %v212, 0.0
      %217 = vadd.xlane.f32.xlu0 %v216
      %v218 = vpop.xlane.xlu0 %217
      %v219 = vrcp.pop 32.0
      %v220 = vmul.f32 32.0, %v219
      %v221 = vsub.f32 1.0, %v220
      %v222 = vmul.f32 %v219, %v221
      %v223 = vadd.f32 %v219, %v222
      %vm224 = vweird.f32 %v219
      %v225 = vsel %vm224, %v219, %v223
      %v226 = vmul.f32 %v218, %v225
      %v227 = vsub.f32 %v212, %v226
      %v228 = vmul.f32 %v227, %v227
      %v229 = vsel %vm215, %v228, 0.0
      %230 = vadd.xlane.f32.xlu0 %v229
      %v231 = vpop.xlane.xlu0 %230
      %v232 = vmul.f32 %v231, %v225
      %v233 = vadd.f32 %v232, 1e-05
      %v234 = vrsqrt.pop %v233
      %v235 = vmul.f32 %v234, %v233
      %v236 = vmul.f32 %v235, %v234
      %v237 = vmul.f32 0.5, %v236
      %v238 = vsub.f32 1.5, %v237
      %v239 = vmul.f32 %v234, %v238
      %vm240 = vweird.f32 %v233
      %vm241 = vweird.f32 %v234
      %vm242 = vmor %vm240, %vm241
      %v243 = vsel %vm242, %v234, %v239
      %v244 = vmul.f32 %v227, %v243
      %v246 = vperm.slane %v213, 0
      %v248 = vmul.f32 %v244, %v246
      %v250 = vperm.slane %v214, 0
      %v252 = vadd.f32 %v248, %v250
      %253 = vst.msk [vmem:[%s209] sm:$0xff] %vm215, %v252
      %p254 = scmp.lt.s32.totalorder %s15, 1
      %s255 = scalar_select %p254, %s15, 1
      %s256 = smul.addr %s255, 8
      %s257 = scalar_lea.vmem %s4, %s256
      // Predicated region
      $region37: #{informer_forward.45} parent=35 // pred_check
        %p258 = pneg %p127
      $region38: #{informer_forward.45} parent=35 // pred_check_branch
        %260 = sbr.rel (%p258) target = $region40
      $region39: #{informer_forward.45} parent=35 // pred_region
        _
      $region40: #{informer_forward.45} parent=35 // pred_fallthru
        _
    $region36: #{informer_forward.45} parent=5 // pred_fallthru
      _
    %p261 = scmp.le.s32.totalorder 2, %s10
    // Predicated region
    $region41: #{informer_forward.45} parent=5 // pred_check
      %p262 = pneg %p261
    $region42: #{informer_forward.45} parent=5 // pred_check_branch
      %264 = sbr.rel (%p262) target = $region44
    $region43: #{informer_forward.45} parent=5 // pred_region
      %s265 = ssub.s32 %s10, 2
      // Predicated region
      $region45: #{informer_forward.45} parent=43 // pred_check
        %p266 = pneg %p133
      $region46: #{informer_forward.45} parent=43 // pred_check_branch
        %268 = sbr.rel (%p266) target = $region48
      $region47: #{informer_forward.45} parent=43 // pred_region
        %p269 = scmp.lt.s32.totalorder %s16, 1
        %s270 = scalar_select %p269, %s16, 1
        %s271 = smul.addr %s270, 8
        %s272 = scalar_lea.vmem %s4, %s271
      $region48: #{informer_forward.45} parent=43 // pred_fallthru
        _
    $region44: #{informer_forward.45} parent=5 // pred_fallthru
      _
  $region6: #{informer_forward.45} parent=0 // loop_footer
    %s14 = sadd.s32 1, %s10
  $region7: #{informer_forward.45} parent=0 // loop_footer_branch
    %9 = sbr.rel target = $region3
  $region8: #{informer_forward.45} parent=0 // loop_exit
    _

// kernel: informer_forward.49
$region0: #{informer_forward.49}
  #allocation0 [shape = 'u32[]', space=smem, size = 0x4, offset = 0x4, fixed_abs, tag = 'smem constant byte address 0x4 - core index']
  #allocation1 [shape = 'u32[72,128]{1,0:T(1,128)}', space=vmem, size = 0x9000, scoped, tag = 'internal scratch']
  %s0 = inlined_call_operand.vmem [shape: f32[16,32], index: 0, kind: input, shape index: {}]
  %s1 = inlined_call_operand.vmem [shape: f32[1,32], index: 1, kind: input, shape index: {}]
  %s2 = inlined_call_operand.vmem [shape: f32[1,32], index: 2, kind: input, shape index: {}]
  %s3 = inlined_call_operand.vmem [shape: f32[16,32], index: 3, kind: output, shape index: {}]
  %s4 = sld [smem:[#allocation0]]
  $region45: #{informer_forward.49} parent=0
    _
  %s6 = ssub.s32 1, %s4
  %s7 = scalar_select 0, %s6, %s4
  loop: start=0, step=1, limit=4
  $region2: #{informer_forward.49} parent=0 // loop_pre_header
    _
  $region3: #{informer_forward.49} parent=0 // loop_header
    %s9 = sphi 0, %s13
    %p10 = scmp.ge.s32.totalorder %s9, 4
    %s19 = sphi 0, %s21
    %s22 = sphi 0, %s19
    %s23 = sphi 0, %s22
    %s39 = sphi 0, %s23
    %s43 = sphi 0, %s43
    %s45 = sphi 0, %s43
    %s46 = sphi 0, %s45
    %s60 = sphi 0, %s46
    %s64 = sphi 0, %s64
    %s66 = sphi 0, %s64
    %s67 = sphi 0, %s66
    %s81 = sphi 0, %s67
    %s87 = sphi 0, %s89
    %s90 = sphi 0, %s87
    %s91 = sphi 0, %s90
    %s107 = sphi 0, %s91
  $region4: #{informer_forward.49} parent=0 // loop_header_branch
    %12 = sbr.rel (%p10) target = $region8
  $region5: #{informer_forward.49} parent=0 // loop_body
    %s14 = ssub.s32 %s9, 1
    %s15 = ssub.s32 %s9, 2
    %s16 = sadd.s32 %s9, 1
    %s17 = ssub.s32 %s9, %s16
    %p18 = scmp.eq.s32.totalorder %s17, 0
    %s20 = sadd.s32 %s19, 1
    %s21 = scalar_select %p18, %s19, %s20
    %p24 = pneg %p18
    %p25 = scmp.eq.s32.totalorder %s9, 1
    %p26 = por %p24, %p25
    %p27 = scmp.ne.s32.totalorder %s19, %s22
    %p28 = scmp.eq.s32.totalorder %s9, 0
    %p29 = por %p27, %p28
    %p30 = scmp.ne.s32.totalorder %s19, %s22
    %p31 = scmp.eq.s32.totalorder %s14, 1
    %p32 = por %p30, %p31
    %p33 = scmp.ne.s32.totalorder %s22, %s23
    %p34 = scmp.eq.s32.totalorder %s14, 0
    %p35 = por %p33, %p34
    %p36 = scmp.ne.s32.totalorder %s22, %s23
    %p37 = scmp.eq.s32.totalorder %s15, 1
    %p38 = por %p36, %p37
    %p40 = scmp.ne.s32.totalorder %s23, %s39
    %p41 = scmp.eq.s32.totalorder %s15, 0
    %p42 = por %p40, %p41
    %s44 = sadd.s32 %s43, 1
    %p47 = scmp.eq.s32.totalorder %s9, 1
    %p48 = scmp.ne.s32.totalorder %s43, %s45
    %p49 = scmp.eq.s32.totalorder %s9, 0
    %p50 = por %p48, %p49
    %p51 = scmp.ne.s32.totalorder %s43, %s45
    %p52 = scmp.eq.s32.totalorder %s14, 1
    %p53 = por %p51, %p52
    %p54 = scmp.ne.s32.totalorder %s45, %s46
    %p55 = scmp.eq.s32.totalorder %s14, 0
    %p56 = por %p54, %p55
    %p57 = scmp.ne.s32.totalorder %s45, %s46
    %p58 = scmp.eq.s32.totalorder %s15, 1
    %p59 = por %p57, %p58
    %p61 = scmp.ne.s32.totalorder %s46, %s60
    %p62 = scmp.eq.s32.totalorder %s15, 0
    %p63 = por %p61, %p62
    %s65 = sadd.s32 %s64, 1
    %p68 = scmp.eq.s32.totalorder %s9, 1
    %p69 = scmp.ne.s32.totalorder %s64, %s66
    %p70 = scmp.eq.s32.totalorder %s9, 0
    %p71 = por %p69, %p70
    %p72 = scmp.ne.s32.totalorder %s64, %s66
    %p73 = scmp.eq.s32.totalorder %s14, 1
    %p74 = por %p72, %p73
    %p75 = scmp.ne.s32.totalorder %s66, %s67
    %p76 = scmp.eq.s32.totalorder %s14, 0
    %p77 = por %p75, %p76
    %p78 = scmp.ne.s32.totalorder %s66, %s67
    %p79 = scmp.eq.s32.totalorder %s15, 1
    %p80 = por %p78, %p79
    %p82 = scmp.ne.s32.totalorder %s67, %s81
    %p83 = scmp.eq.s32.totalorder %s15, 0
    %p84 = por %p82, %p83
    %s85 = ssub.s32 %s9, %s16
    %p86 = scmp.eq.s32.totalorder %s85, 0
    %s88 = sadd.s32 %s87, 1
    %s89 = scalar_select %p86, %s87, %s88
    %p92 = pneg %p86
    %p93 = scmp.eq.s32.totalorder %s9, 1
    %p94 = por %p92, %p93
    %p95 = scmp.ne.s32.totalorder %s87, %s90
    %p96 = scmp.eq.s32.totalorder %s9, 0
    %p97 = por %p95, %p96
    %p98 = scmp.ne.s32.totalorder %s87, %s90
    %p99 = scmp.eq.s32.totalorder %s14, 1
    %p100 = por %p98, %p99
    %p101 = scmp.ne.s32.totalorder %s90, %s91
    %p102 = scmp.eq.s32.totalorder %s14, 0
    %p103 = por %p101, %p102
    %p104 = scmp.ne.s32.totalorder %s90, %s91
    %p105 = scmp.eq.s32.totalorder %s15, 1
    %p106 = por %p104, %p105
    %p108 = scmp.ne.s32.totalorder %s91, %s107
    %p109 = scmp.eq.s32.totalorder %s15, 0
    %p110 = por %p108, %p109
    %p111 = scmp.le.s32.totalorder 1, %s9
    %p112 = scmp.lt.s32.totalorder %s9, 3
    %p113 = pnand %p111, %p112
    %p114 = pneg %p113
    // Predicated region
    $region9: #{informer_forward.49} parent=5 // pred_check
      _
    $region10: #{informer_forward.49} parent=5 // pred_check_branch
      %116 = sbr.rel (%p113) target = $region12
    $region11: #{informer_forward.49} parent=5 // pred_region
      %s117 = ssub.s32 %s9, 1
      // Predicated region
      $region13: #{informer_forward.49} parent=11 // pred_check
        %p118 = pneg %p56
      $region14: #{informer_forward.49} parent=11 // pred_check_branch
        %120 = sbr.rel (%p118) target = $region16
      $region15: #{informer_forward.49} parent=11 // pred_region
        _
      $region16: #{informer_forward.49} parent=11 // pred_fallthru
        _
      // Predicated region
      $region17: #{informer_forward.49} parent=11 // pred_check
        %p121 = pneg %p77
      $region18: #{informer_forward.49} parent=11 // pred_check_branch
        %123 = sbr.rel (%p121) target = $region20
      $region19: #{informer_forward.49} parent=11 // pred_region
        _
      $region20: #{informer_forward.49} parent=11 // pred_fallthru
        _
    $region12: #{informer_forward.49} parent=5 // pred_fallthru
      _
    %p124 = scmp.lt.s32.totalorder %s9, 2
    // Predicated region
    $region21: #{informer_forward.49} parent=5 // pred_check
      %p125 = pneg %p124
    $region22: #{informer_forward.49} parent=5 // pred_check_branch
      %127 = sbr.rel (%p125) target = $region24
    $region23: #{informer_forward.49} parent=5 // pred_region
      // Predicated region
      $region25: #{informer_forward.49} parent=23 // pred_check
        %p128 = pneg %p29
      $region26: #{informer_forward.49} parent=23 // pred_check_branch
        %130 = sbr.rel (%p128) target = $region28
      $region27: #{informer_forward.49} parent=23 // pred_region
        %p131 = scmp.lt.s32.totalorder %s9, 1
        %s132 = scalar_select %p131, %s9, 1
        %s133 = smul.addr %s132, 8
        %s134 = scalar_lea.vmem %s0, %s133
      $region28: #{informer_forward.49} parent=23 // pred_fallthru
        _
    $region24: #{informer_forward.49} parent=5 // pred_fallthru
      _
    %p135 = scmp.le.s32.totalorder 1, %s9
    %p136 = scmp.lt.s32.totalorder %s9, 3
    %p137 = pnand %p135, %p136
    %p138 = pneg %p137
    // Predicated region
    $region29: #{informer_forward.49} parent=5 // pred_check
      _
    $region30: #{informer_forward.49} parent=5 // pred_check_branch
      %140 = sbr.rel (%p137) target = $region32
    $region31: #{informer_forward.49} parent=5 // pred_region
      %s141 = ssub.s32 %s9, 1
      %p142 = scmp.lt.s32.totalorder %s14, 1
      %s143 = scalar_select %p142, %s14, 1
      %s144 = smul.addr %s143, 8
      %s145 = scalar_lea.vmem %s0, %s144
      %p146 = pneg %p35
      %p147 = pneg %p32
      %p148 = pneg %p56
      %p149 = pneg %p53
      %p150 = pneg %p77
      %p151 = pneg %p74
      %p152 = pneg %p103
      %p153 = pneg %p100
      %p154 = scmp.lt.s32.totalorder %s14, 1
      %s155 = scalar_select %p154, %s14, 1
      %s156 = smul.addr %s155, 8
      %s157 = scalar_lea.vmem %s3, %s156
      %p158 = scmp.lt.s32.totalorder %s14, 1
      %s159 = scalar_select %p158, %s14, 1
      %s160 = smul.addr %s159, 8
      %s161 = scalar_lea.vmem %s0, %s160
      %p162 = scmp.lt.s32.totalorder %s14, 1
      %s163 = scalar_select %p162, %s14, 1
      %s164 = smul.addr %s163, 8
      %s165 = scalar_lea.vmem %s3, %s164
      %v166 = vld [vmem:[%s161] sm:$0xff]
      %v167 = vld [vmem:[%s1] sm:$0x1]
      %v168 = vld [vmem:[%s2] sm:$0x1]
      %vm169 = vcmask 261120
      %v170 = vsel %vm169, %v166, 0.0
      %171 = vadd.xlane.f32.xlu0 %v170
      %v172 = vpop.xlane.xlu0 %171
      %v173 = vrcp.pop 32.0
      %v174 = vmul.f32 32.0, %v173
      %v175 = vsub.f32 1.0, %v174
      %v176 = vmul.f32 %v173, %v175
      %v177 = vadd.f32 %v173, %v176
      %vm178 = vweird.f32 %v173
      %v179 = vsel %vm178, %v173, %v177
      %v180 = vmul.f32 %v172, %v179
      %v181 = vsub.f32 %v166, %v180
      %v182 = vmul.f32 %v181, %v181
      %v183 = vsel %vm169, %v182, 0.0
      %184 = vadd.xlane.f32.xlu0 %v183
      %v185 = vpop.xlane.xlu0 %184
      %v186 = vmul.f32 %v185, %v179
      %v187 = vadd.f32 %v186, 1e-05
      %v188 = vrsqrt.pop %v187
      %v189 = vmul.f32 %v188, %v187
      %v190 = vmul.f32 %v189, %v188
      %v191 = vmul.f32 0.5, %v190
      %v192 = vsub.f32 1.5, %v191
      %v193 = vmul.f32 %v188, %v192
      %vm194 = vweird.f32 %v187
      %vm195 = vweird.f32 %v188
      %vm196 = vmor %vm194, %vm195
      %v197 = vsel %vm196, %v188, %v193
      %v198 = vmul.f32 %v181, %v197
      %v200 = vperm.slane %v167, 0
      %v202 = vmul.f32 %v198, %v200
      %v204 = vperm.slane %v168, 0
      %v206 = vadd.f32 %v202, %v204
      %207 = vst.msk [vmem:[%s165] sm:$0xff] %vm169, %v206
      %p208 = scmp.lt.s32.totalorder %s14, 1
      %s209 = scalar_select %p208, %s14, 1
      %s210 = smul.addr %s209, 8
      %s211 = scalar_lea.vmem %s3, %s210
      // Predicated region
      $region33: #{informer_forward.49} parent=31 // pred_check
        %p212 = pneg %p100
      $region34: #{informer_forward.49} parent=31 // pred_check_branch
        %214 = sbr.rel (%p212) target = $region36
      $region35: #{informer_forward.49} parent=31 // pred_region
        _
      $region36: #{informer_forward.49} parent=31 // pred_fallthru
        _
    $region32: #{informer_forward.49} parent=5 // pred_fallthru
      _
    %p215 = scmp.le.s32.totalorder 2, %s9
    // Predicated region
    $region37: #{informer_forward.49} parent=5 // pred_check
      %p216 = pneg %p215
    $region38: #{informer_forward.49} parent=5 // pred_check_branch
      %218 = sbr.rel (%p216) target = $region40
    $region39: #{informer_forward.49} parent=5 // pred_region
      %s219 = ssub.s32 %s9, 2
      // Predicated region
      $region41: #{informer_forward.49} parent=39 // pred_check
        %p220 = pneg %p106
      $region42: #{informer_forward.49} parent=39 // pred_check_branch
        %222 = sbr.rel (%p220) target = $region44
      $region43: #{informer_forward.49} parent=39 // pred_region
        %p223 = scmp.lt.s32.totalorder %s15, 1
        %s224 = scalar_select %p223, %s15, 1
        %s225 = smul.addr %s224, 8
        %s226 = scalar_lea.vmem %s3, %s225
      $region44: #{informer_forward.49} parent=39 // pred_fallthru
        _
    $region40: #{informer_forward.49} parent=5 // pred_fallthru
      _
  $region6: #{informer_forward.49} parent=0 // loop_footer
    %s13 = sadd.s32 1, %s9
  $region7: #{informer_forward.49} parent=0 // loop_footer_branch
    %8 = sbr.rel target = $region3
  $region8: #{informer_forward.49} parent=0 // loop_exit
    _

// kernel: informer_forward.55
$region0: #{informer_forward.55}
  #allocation0 [shape = 'u32[]', space=smem, size = 0x4, offset = 0x4, fixed_abs, tag = 'smem constant byte address 0x4 - core index']
  #allocation1 [shape = 'u32[72,128]{1,0:T(1,128)}', space=vmem, size = 0x9000, scoped, tag = 'internal scratch']
  %s0 = inlined_call_operand.vmem [shape: f32[2,8,32], index: 0, kind: input, shape index: {}]
  %s1 = inlined_call_operand.vmem [shape: f32[1,8,32], index: 1, kind: input, shape index: {}]
  %s2 = inlined_call_operand.vmem [shape: bf16[32,32], index: 2, kind: input, shape index: {}]
  %s3 = inlined_call_operand.vmem [shape: bf16[32,32], index: 3, kind: input, shape index: {}]
  %s4 = inlined_call_operand.vmem [shape: f32[1,64], index: 4, kind: input, shape index: {}]
  %s5 = inlined_call_operand.vmem [shape: f32[2,8,64], index: 5, kind: output, shape index: {}]
  %s6 = sld [smem:[#allocation0]]
  $region53: #{informer_forward.55} parent=0
    _
  %s8 = ssub.s32 1, %s6
  %s9 = scalar_select 0, %s8, %s6
  loop: start=0, step=1, limit=4
  $region2: #{informer_forward.55} parent=0 // loop_pre_header
    _
  $region3: #{informer_forward.55} parent=0 // loop_header
    %s11 = sphi 0, %s15
    %p12 = scmp.ge.s32.totalorder %s11, 4
    %s21 = sphi 0, %s23
    %s24 = sphi 0, %s21
    %s25 = sphi 0, %s24
    %s41 = sphi 0, %s25
    %s45 = sphi 0, %s45
    %s47 = sphi 0, %s45
    %s48 = sphi 0, %s47
    %s62 = sphi 0, %s48
    %s66 = sphi 0, %s66
    %s68 = sphi 0, %s66
    %s69 = sphi 0, %s68
    %s83 = sphi 0, %s69
    %s87 = sphi 0, %s87
    %s89 = sphi 0, %s87
    %s90 = sphi 0, %s89
    %s104 = sphi 0, %s90
    %s108 = sphi 0, %s108
    %s110 = sphi 0, %s108
    %s111 = sphi 0, %s110
    %s125 = sphi 0, %s111
    %s131 = sphi 0, %s133
    %s134 = sphi 0, %s131
    %s135 = sphi 0, %s134
    %s151 = sphi 0, %s135
  $region4: #{informer_forward.55} parent=0 // loop_header_branch
    %14 = sbr.rel (%p12) target = $region8
  $region5: #{informer_forward.55} parent=0 // loop_body
    %s16 = ssub.s32 %s11, 1
    %s17 = ssub.s32 %s11, 2
    %s18 = sadd.s32 %s11, 1
    %s19 = ssub.s32 %s11, %s18
    %p20 = scmp.eq.s32.totalorder %s19, 0
    %s22 = sadd.s32 %s21, 1
    %s23 = scalar_select %p20, %s21, %s22
    %p26 = pneg %p20
    %p27 = scmp.eq.s32.totalorder %s11, 1
    %p28 = por %p26, %p27
    %p29 = scmp.ne.s32.totalorder %s21, %s24
    %p30 = scmp.eq.s32.totalorder %s11, 0
    %p31 = por %p29, %p30
    %p32 = scmp.ne.s32.totalorder %s21, %s24
    %p33 = scmp.eq.s32.totalorder %s16, 1
    %p34 = por %p32, %p33
    %p35 = scmp.ne.s32.totalorder %s24, %s25
    %p36 = scmp.eq.s32.totalorder %s16, 0
    %p37 = por %p35, %p36
    %p38 = scmp.ne.s32.totalorder %s24, %s25
    %p39 = scmp.eq.s32.totalorder %s17, 1
    %p40 = por %p38, %p39
    %p42 = scmp.ne.s32.totalorder %s25, %s41
    %p43 = scmp.eq.s32.totalorder %s17, 0
    %p44 = por %p42, %p43
    %s46 = sadd.s32 %s45, 1
    %p49 = scmp.eq.s32.totalorder %s11, 1
    %p50 = scmp.ne.s32.totalorder %s45, %s47
    %p51 = scmp.eq.s32.totalorder %s11, 0
    %p52 = por %p50, %p51
    %p53 = scmp.ne.s32.totalorder %s45, %s47
    %p54 = scmp.eq.s32.totalorder %s16, 1
    %p55 = por %p53, %p54
    %p56 = scmp.ne.s32.totalorder %s47, %s48
    %p57 = scmp.eq.s32.totalorder %s16, 0
    %p58 = por %p56, %p57
    %p59 = scmp.ne.s32.totalorder %s47, %s48
    %p60 = scmp.eq.s32.totalorder %s17, 1
    %p61 = por %p59, %p60
    %p63 = scmp.ne.s32.totalorder %s48, %s62
    %p64 = scmp.eq.s32.totalorder %s17, 0
    %p65 = por %p63, %p64
    %s67 = sadd.s32 %s66, 1
    %p70 = scmp.eq.s32.totalorder %s11, 1
    %p71 = scmp.ne.s32.totalorder %s66, %s68
    %p72 = scmp.eq.s32.totalorder %s11, 0
    %p73 = por %p71, %p72
    %p74 = scmp.ne.s32.totalorder %s66, %s68
    %p75 = scmp.eq.s32.totalorder %s16, 1
    %p76 = por %p74, %p75
    %p77 = scmp.ne.s32.totalorder %s68, %s69
    %p78 = scmp.eq.s32.totalorder %s16, 0
    %p79 = por %p77, %p78
    %p80 = scmp.ne.s32.totalorder %s68, %s69
    %p81 = scmp.eq.s32.totalorder %s17, 1
    %p82 = por %p80, %p81
    %p84 = scmp.ne.s32.totalorder %s69, %s83
    %p85 = scmp.eq.s32.totalorder %s17, 0
    %p86 = por %p84, %p85
    %s88 = sadd.s32 %s87, 1
    %p91 = scmp.eq.s32.totalorder %s11, 1
    %p92 = scmp.ne.s32.totalorder %s87, %s89
    %p93 = scmp.eq.s32.totalorder %s11, 0
    %p94 = por %p92, %p93
    %p95 = scmp.ne.s32.totalorder %s87, %s89
    %p96 = scmp.eq.s32.totalorder %s16, 1
    %p97 = por %p95, %p96
    %p98 = scmp.ne.s32.totalorder %s89, %s90
    %p99 = scmp.eq.s32.totalorder %s16, 0
    %p100 = por %p98, %p99
    %p101 = scmp.ne.s32.totalorder %s89, %s90
    %p102 = scmp.eq.s32.totalorder %s17, 1
    %p103 = por %p101, %p102
    %p105 = scmp.ne.s32.totalorder %s90, %s104
    %p106 = scmp.eq.s32.totalorder %s17, 0
    %p107 = por %p105, %p106
    %s109 = sadd.s32 %s108, 1
    %p112 = scmp.eq.s32.totalorder %s11, 1
    %p113 = scmp.ne.s32.totalorder %s108, %s110
    %p114 = scmp.eq.s32.totalorder %s11, 0
    %p115 = por %p113, %p114
    %p116 = scmp.ne.s32.totalorder %s108, %s110
    %p117 = scmp.eq.s32.totalorder %s16, 1
    %p118 = por %p116, %p117
    %p119 = scmp.ne.s32.totalorder %s110, %s111
    %p120 = scmp.eq.s32.totalorder %s16, 0
    %p121 = por %p119, %p120
    %p122 = scmp.ne.s32.totalorder %s110, %s111
    %p123 = scmp.eq.s32.totalorder %s17, 1
    %p124 = por %p122, %p123
    %p126 = scmp.ne.s32.totalorder %s111, %s125
    %p127 = scmp.eq.s32.totalorder %s17, 0
    %p128 = por %p126, %p127
    %s129 = ssub.s32 %s11, %s18
    %p130 = scmp.eq.s32.totalorder %s129, 0
    %s132 = sadd.s32 %s131, 1
    %s133 = scalar_select %p130, %s131, %s132
    %p136 = pneg %p130
    %p137 = scmp.eq.s32.totalorder %s11, 1
    %p138 = por %p136, %p137
    %p139 = scmp.ne.s32.totalorder %s131, %s134
    %p140 = scmp.eq.s32.totalorder %s11, 0
    %p141 = por %p139, %p140
    %p142 = scmp.ne.s32.totalorder %s131, %s134
    %p143 = scmp.eq.s32.totalorder %s16, 1
    %p144 = por %p142, %p143
    %p145 = scmp.ne.s32.totalorder %s134, %s135
    %p146 = scmp.eq.s32.totalorder %s16, 0
    %p147 = por %p145, %p146
    %p148 = scmp.ne.s32.totalorder %s134, %s135
    %p149 = scmp.eq.s32.totalorder %s17, 1
    %p150 = por %p148, %p149
    %p152 = scmp.ne.s32.totalorder %s135, %s151
    %p153 = scmp.eq.s32.totalorder %s17, 0
    %p154 = por %p152, %p153
    %p155 = scmp.le.s32.totalorder 1, %s11
    %p156 = scmp.lt.s32.totalorder %s11, 3
    %p157 = pnand %p155, %p156
    %p158 = pneg %p157
    // Predicated region
    $region9: #{informer_forward.55} parent=5 // pred_check
      _
    $region10: #{informer_forward.55} parent=5 // pred_check_branch
      %160 = sbr.rel (%p157) target = $region12
    $region11: #{informer_forward.55} parent=5 // pred_region
      %s161 = ssub.s32 %s11, 1
      // Predicated region
      $region13: #{informer_forward.55} parent=11 // pred_check
        %p162 = pneg %p58
      $region14: #{informer_forward.55} parent=11 // pred_check_branch
        %164 = sbr.rel (%p162) target = $region16
      $region15: #{informer_forward.55} parent=11 // pred_region
        _
      $region16: #{informer_forward.55} parent=11 // pred_fallthru
        _
      // Predicated region
      $region17: #{informer_forward.55} parent=11 // pred_check
        %p165 = pneg %p79
      $region18: #{informer_forward.55} parent=11 // pred_check_branch
        %167 = sbr.rel (%p165) target = $region20
      $region19: #{informer_forward.55} parent=11 // pred_region
        _
      $region20: #{informer_forward.55} parent=11 // pred_fallthru
        _
      // Predicated region
      $region21: #{informer_forward.55} parent=11 // pred_check
        %p168 = pneg %p100
      $region22: #{informer_forward.55} parent=11 // pred_check_branch
        %170 = sbr.rel (%p168) target = $region24
      $region23: #{informer_forward.55} parent=11 // pred_region
        _
      $region24: #{informer_forward.55} parent=11 // pred_fallthru
        _
      // Predicated region
      $region25: #{informer_forward.55} parent=11 // pred_check
        %p171 = pneg %p121
      $region26: #{informer_forward.55} parent=11 // pred_check_branch
        %173 = sbr.rel (%p171) target = $region28
      $region27: #{informer_forward.55} parent=11 // pred_region
        _
      $region28: #{informer_forward.55} parent=11 // pred_fallthru
        _
    $region12: #{informer_forward.55} parent=5 // pred_fallthru
      _
    %p174 = scmp.lt.s32.totalorder %s11, 2
    // Predicated region
    $region29: #{informer_forward.55} parent=5 // pred_check
      %p175 = pneg %p174
    $region30: #{informer_forward.55} parent=5 // pred_check_branch
      %177 = sbr.rel (%p175) target = $region32
    $region31: #{informer_forward.55} parent=5 // pred_region
      // Predicated region
      $region33: #{informer_forward.55} parent=31 // pred_check
        %p178 = pneg %p31
      $region34: #{informer_forward.55} parent=31 // pred_check_branch
        %180 = sbr.rel (%p178) target = $region36
      $region35: #{informer_forward.55} parent=31 // pred_region
        %p181 = scmp.lt.s32.totalorder %s11, 1
        %s182 = scalar_select %p181, %s11, 1
        %s183 = smul.addr %s182, 8
        %s184 = scalar_lea.vmem %s0, %s183
      $region36: #{informer_forward.55} parent=31 // pred_fallthru
        _
    $region32: #{informer_forward.55} parent=5 // pred_fallthru
      _
    %p185 = scmp.le.s32.totalorder 1, %s11
    %p186 = scmp.lt.s32.totalorder %s11, 3
    %p187 = pnand %p185, %p186
    %p188 = pneg %p187
    // Predicated region
    $region37: #{informer_forward.55} parent=5 // pred_check
      _
    $region38: #{informer_forward.55} parent=5 // pred_check_branch
      %190 = sbr.rel (%p187) target = $region40
    $region39: #{informer_forward.55} parent=5 // pred_region
      %s191 = ssub.s32 %s11, 1
      %p192 = scmp.lt.s32.totalorder %s16, 1
      %s193 = scalar_select %p192, %s16, 1
      %s194 = smul.addr %s193, 8
      %s195 = scalar_lea.vmem %s0, %s194
      %p196 = pneg %p37
      %p197 = pneg %p34
      %p198 = pneg %p58
      %p199 = pneg %p55
      %p200 = pneg %p79
      %p201 = pneg %p76
      %p202 = pneg %p100
      %p203 = pneg %p97
      %p204 = pneg %p121
      %p205 = pneg %p118
      %p206 = pneg %p147
      %p207 = pneg %p144
      %p208 = scmp.lt.s32.totalorder %s16, 1
      %s209 = scalar_select %p208, %s16, 1
      %s210 = smul.addr %s209, 8
      %s211 = scalar_lea.vmem %s5, %s210
      %p212 = scmp.lt.s32.totalorder %s16, 1
      %s213 = scalar_select %p212, %s16, 1
      %s214 = smul.addr %s213, 8
      %s215 = scalar_lea.vmem %s0, %s214
      %p216 = scmp.lt.s32.totalorder %s16, 1
      %s217 = scalar_select %p216, %s16, 1
      %s218 = smul.addr %s217, 8
      %s219 = scalar_lea.vmem %s5, %s218
      %v221 = vld [vmem:[%s215] sm:$0xff]
      %v222 = vld [vmem:[%s1] sm:$0xff]
      %v223 = vadd.f32 %v221, %v222
      %v224 = vpack.c.bf16 %v223, %v223
      %v225 = vld [vmem:[%s2] sm:$0xf]
      %v226 = vld [vmem:[%s2 + $0x4] sm:$0xf]
      %v227 = vld [vmem:[%s2 + $0x8] sm:$0xf]
      %v228 = vld [vmem:[%s2 + $0xc] sm:$0xf]
      %v233 = vunpack.c.l.b16 %v225
      %v234 = vunpack.c.l.b16 %v226
      %v235 = vunpack.c.l.b16 %v227
      %v236 = vunpack.c.l.b16 %v228
      %v237 = vpack.c.b16 %v234, %v233
      %v238 = vpack.c.b16 %v236, %v235
      %vm241 = vcmask 261120
      %v243 = vsel %vm241, %v224, 0
      %245 = vmatpush.bf16.msra.mxu0 0
      %246 = vmatpush.bf16.msra.mxu0 0
      %247 = vmatpush.bf16.msra.mxu0 0
      %248 = vmatpush.bf16.msra.mxu0 0
      %249 = vmatpush.bf16.msra.mxu0 0
      %250 = vmatpush.bf16.msra.mxu0 0
      %251 = vmatpush.bf16.msra.mxu0 %v238
      %252 = vmatpush.bf16.msra.mxu0 %v237
      %253 = vmatmul.bf16.gmra.mxu0 %v243
      %v254 = vpop.f32.mrf.mxu0
      %v255 = vadd.f32 0.0, %v254
      %v256 = vpop.f32.mrf.mxu0
      %257 = vdwg.mxu0
      %v258 = vpack.c.bf16 %v221, %v221
      %v259 = vld [vmem:[%s3] sm:$0xf]
      %v260 = vld [vmem:[%s3 + $0x4] sm:$0xf]
      %v261 = vld [vmem:[%s3 + $0x8] sm:$0xf]
      %v262 = vld [vmem:[%s3 + $0xc] sm:$0xf]
      %v267 = vunpack.c.l.b16 %v259
      %v268 = vunpack.c.l.b16 %v260
      %v269 = vunpack.c.l.b16 %v261
      %v270 = vunpack.c.l.b16 %v262
      %v271 = vpack.c.b16 %v268, %v267
      %v272 = vpack.c.b16 %v270, %v269
      %v276 = vsel %vm241, %v258, 0
      %278 = vmatpush.bf16.msra.mxu0 0
      %279 = vmatpush.bf16.msra.mxu0 0
      %280 = vmatpush.bf16.msra.mxu0 0
      %281 = vmatpush.bf16.msra.mxu0 0
      %282 = vmatpush.bf16.msra.mxu0 0
      %283 = vmatpush.bf16.msra.mxu0 0
      %284 = vmatpush.bf16.msra.mxu0 %v272
      %285 = vmatpush.bf16.msra.mxu0 %v271
      %286 = vmatmul.bf16.gmra.mxu0 %v276
      %v287 = vpop.f32.mrf.mxu0
      %v288 = vadd.f32 0.0, %v287
      %v289 = vpop.f32.mrf.mxu0
      %290 = vdwg.mxu0
      %292 = vrot.lane.b32.xlu0 %v288, 32
      %v293 = vpop.permute.xlu0 %292
      %v295 = vsel %vm241, %v255, %v293
      %v296 = vld [vmem:[%s4] sm:$0x1]
      %v298 = vperm.slane %v296, 0
      %v300 = vadd.f32 %v295, %v298
      %vm301 = vcmask 523264
      %302 = vst.msk [vmem:[%s219] sm:$0xff] %vm301, %v300
      %p303 = scmp.lt.s32.totalorder %s16, 1
      %s304 = scalar_select %p303, %s16, 1
      %s305 = smul.addr %s304, 8
      %s306 = scalar_lea.vmem %s5, %s305
      // Predicated region
      $region41: #{informer_forward.55} parent=39 // pred_check
        %p307 = pneg %p144
      $region42: #{informer_forward.55} parent=39 // pred_check_branch
        %309 = sbr.rel (%p307) target = $region44
      $region43: #{informer_forward.55} parent=39 // pred_region
        _
      $region44: #{informer_forward.55} parent=39 // pred_fallthru
        _
    $region40: #{informer_forward.55} parent=5 // pred_fallthru
      _
    %p310 = scmp.le.s32.totalorder 2, %s11
    // Predicated region
    $region45: #{informer_forward.55} parent=5 // pred_check
      %p311 = pneg %p310
    $region46: #{informer_forward.55} parent=5 // pred_check_branch
      %313 = sbr.rel (%p311) target = $region48
    $region47: #{informer_forward.55} parent=5 // pred_region
      %s314 = ssub.s32 %s11, 2
      // Predicated region
      $region49: #{informer_forward.55} parent=47 // pred_check
        %p315 = pneg %p150
      $region50: #{informer_forward.55} parent=47 // pred_check_branch
        %317 = sbr.rel (%p315) target = $region52
      $region51: #{informer_forward.55} parent=47 // pred_region
        %p318 = scmp.lt.s32.totalorder %s17, 1
        %s319 = scalar_select %p318, %s17, 1
        %s320 = smul.addr %s319, 8
        %s321 = scalar_lea.vmem %s5, %s320
      $region52: #{informer_forward.55} parent=47 // pred_fallthru
        _
    $region48: #{informer_forward.55} parent=5 // pred_fallthru
      _
  $region6: #{informer_forward.55} parent=0 // loop_footer
    %s15 = sadd.s32 1, %s11
  $region7: #{informer_forward.55} parent=0 // loop_footer_branch
    %10 = sbr.rel target = $region3
  $region8: #{informer_forward.55} parent=0 // loop_exit
    _

// kernel: informer_forward.54
$region0: #{informer_forward.54}
  #allocation0 [shape = 'u32[]', space=smem, size = 0x4, offset = 0x4, fixed_abs, tag = 'smem constant byte address 0x4 - core index']
  #allocation1 [shape = 'u32[72,128]{1,0:T(1,128)}', space=vmem, size = 0x9000, scoped, tag = 'internal scratch']
  %s0 = inlined_call_operand.vmem [shape: f32[2,16,32], index: 0, kind: input, shape index: {}]
  %s1 = inlined_call_operand.vmem [shape: f32[1,16,32], index: 1, kind: input, shape index: {}]
  %s2 = inlined_call_operand.vmem [shape: bf16[32,32], index: 2, kind: input, shape index: {}]
  %s3 = inlined_call_operand.vmem [shape: f32[1,32], index: 3, kind: input, shape index: {}]
  %s4 = inlined_call_operand.vmem [shape: f32[2,16,32], index: 4, kind: output, shape index: {}]
  %s5 = sld [smem:[#allocation0]]
  $region49: #{informer_forward.54} parent=0
    _
  %s7 = ssub.s32 1, %s5
  %s8 = scalar_select 0, %s7, %s5
  loop: start=0, step=1, limit=4
  $region2: #{informer_forward.54} parent=0 // loop_pre_header
    _
  $region3: #{informer_forward.54} parent=0 // loop_header
    %s10 = sphi 0, %s14
    %p11 = scmp.ge.s32.totalorder %s10, 4
    %s20 = sphi 0, %s22
    %s23 = sphi 0, %s20
    %s24 = sphi 0, %s23
    %s40 = sphi 0, %s24
    %s44 = sphi 0, %s44
    %s46 = sphi 0, %s44
    %s47 = sphi 0, %s46
    %s61 = sphi 0, %s47
    %s65 = sphi 0, %s65
    %s67 = sphi 0, %s65
    %s68 = sphi 0, %s67
    %s82 = sphi 0, %s68
    %s86 = sphi 0, %s86
    %s88 = sphi 0, %s86
    %s89 = sphi 0, %s88
    %s103 = sphi 0, %s89
    %s109 = sphi 0, %s111
    %s112 = sphi 0, %s109
    %s113 = sphi 0, %s112
    %s129 = sphi 0, %s113
  $region4: #{informer_forward.54} parent=0 // loop_header_branch
    %13 = sbr.rel (%p11) target = $region8
  $region5: #{informer_forward.54} parent=0 // loop_body
    %s15 = ssub.s32 %s10, 1
    %s16 = ssub.s32 %s10, 2
    %s17 = sadd.s32 %s10, 1
    %s18 = ssub.s32 %s10, %s17
    %p19 = scmp.eq.s32.totalorder %s18, 0
    %s21 = sadd.s32 %s20, 1
    %s22 = scalar_select %p19, %s20, %s21
    %p25 = pneg %p19
    %p26 = scmp.eq.s32.totalorder %s10, 1
    %p27 = por %p25, %p26
    %p28 = scmp.ne.s32.totalorder %s20, %s23
    %p29 = scmp.eq.s32.totalorder %s10, 0
    %p30 = por %p28, %p29
    %p31 = scmp.ne.s32.totalorder %s20, %s23
    %p32 = scmp.eq.s32.totalorder %s15, 1
    %p33 = por %p31, %p32
    %p34 = scmp.ne.s32.totalorder %s23, %s24
    %p35 = scmp.eq.s32.totalorder %s15, 0
    %p36 = por %p34, %p35
    %p37 = scmp.ne.s32.totalorder %s23, %s24
    %p38 = scmp.eq.s32.totalorder %s16, 1
    %p39 = por %p37, %p38
    %p41 = scmp.ne.s32.totalorder %s24, %s40
    %p42 = scmp.eq.s32.totalorder %s16, 0
    %p43 = por %p41, %p42
    %s45 = sadd.s32 %s44, 1
    %p48 = scmp.eq.s32.totalorder %s10, 1
    %p49 = scmp.ne.s32.totalorder %s44, %s46
    %p50 = scmp.eq.s32.totalorder %s10, 0
    %p51 = por %p49, %p50
    %p52 = scmp.ne.s32.totalorder %s44, %s46
    %p53 = scmp.eq.s32.totalorder %s15, 1
    %p54 = por %p52, %p53
    %p55 = scmp.ne.s32.totalorder %s46, %s47
    %p56 = scmp.eq.s32.totalorder %s15, 0
    %p57 = por %p55, %p56
    %p58 = scmp.ne.s32.totalorder %s46, %s47
    %p59 = scmp.eq.s32.totalorder %s16, 1
    %p60 = por %p58, %p59
    %p62 = scmp.ne.s32.totalorder %s47, %s61
    %p63 = scmp.eq.s32.totalorder %s16, 0
    %p64 = por %p62, %p63
    %s66 = sadd.s32 %s65, 1
    %p69 = scmp.eq.s32.totalorder %s10, 1
    %p70 = scmp.ne.s32.totalorder %s65, %s67
    %p71 = scmp.eq.s32.totalorder %s10, 0
    %p72 = por %p70, %p71
    %p73 = scmp.ne.s32.totalorder %s65, %s67
    %p74 = scmp.eq.s32.totalorder %s15, 1
    %p75 = por %p73, %p74
    %p76 = scmp.ne.s32.totalorder %s67, %s68
    %p77 = scmp.eq.s32.totalorder %s15, 0
    %p78 = por %p76, %p77
    %p79 = scmp.ne.s32.totalorder %s67, %s68
    %p80 = scmp.eq.s32.totalorder %s16, 1
    %p81 = por %p79, %p80
    %p83 = scmp.ne.s32.totalorder %s68, %s82
    %p84 = scmp.eq.s32.totalorder %s16, 0
    %p85 = por %p83, %p84
    %s87 = sadd.s32 %s86, 1
    %p90 = scmp.eq.s32.totalorder %s10, 1
    %p91 = scmp.ne.s32.totalorder %s86, %s88
    %p92 = scmp.eq.s32.totalorder %s10, 0
    %p93 = por %p91, %p92
    %p94 = scmp.ne.s32.totalorder %s86, %s88
    %p95 = scmp.eq.s32.totalorder %s15, 1
    %p96 = por %p94, %p95
    %p97 = scmp.ne.s32.totalorder %s88, %s89
    %p98 = scmp.eq.s32.totalorder %s15, 0
    %p99 = por %p97, %p98
    %p100 = scmp.ne.s32.totalorder %s88, %s89
    %p101 = scmp.eq.s32.totalorder %s16, 1
    %p102 = por %p100, %p101
    %p104 = scmp.ne.s32.totalorder %s89, %s103
    %p105 = scmp.eq.s32.totalorder %s16, 0
    %p106 = por %p104, %p105
    %s107 = ssub.s32 %s10, %s17
    %p108 = scmp.eq.s32.totalorder %s107, 0
    %s110 = sadd.s32 %s109, 1
    %s111 = scalar_select %p108, %s109, %s110
    %p114 = pneg %p108
    %p115 = scmp.eq.s32.totalorder %s10, 1
    %p116 = por %p114, %p115
    %p117 = scmp.ne.s32.totalorder %s109, %s112
    %p118 = scmp.eq.s32.totalorder %s10, 0
    %p119 = por %p117, %p118
    %p120 = scmp.ne.s32.totalorder %s109, %s112
    %p121 = scmp.eq.s32.totalorder %s15, 1
    %p122 = por %p120, %p121
    %p123 = scmp.ne.s32.totalorder %s112, %s113
    %p124 = scmp.eq.s32.totalorder %s15, 0
    %p125 = por %p123, %p124
    %p126 = scmp.ne.s32.totalorder %s112, %s113
    %p127 = scmp.eq.s32.totalorder %s16, 1
    %p128 = por %p126, %p127
    %p130 = scmp.ne.s32.totalorder %s113, %s129
    %p131 = scmp.eq.s32.totalorder %s16, 0
    %p132 = por %p130, %p131
    %p133 = scmp.le.s32.totalorder 1, %s10
    %p134 = scmp.lt.s32.totalorder %s10, 3
    %p135 = pnand %p133, %p134
    %p136 = pneg %p135
    // Predicated region
    $region9: #{informer_forward.54} parent=5 // pred_check
      _
    $region10: #{informer_forward.54} parent=5 // pred_check_branch
      %138 = sbr.rel (%p135) target = $region12
    $region11: #{informer_forward.54} parent=5 // pred_region
      %s139 = ssub.s32 %s10, 1
      // Predicated region
      $region13: #{informer_forward.54} parent=11 // pred_check
        %p140 = pneg %p57
      $region14: #{informer_forward.54} parent=11 // pred_check_branch
        %142 = sbr.rel (%p140) target = $region16
      $region15: #{informer_forward.54} parent=11 // pred_region
        _
      $region16: #{informer_forward.54} parent=11 // pred_fallthru
        _
      // Predicated region
      $region17: #{informer_forward.54} parent=11 // pred_check
        %p143 = pneg %p78
      $region18: #{informer_forward.54} parent=11 // pred_check_branch
        %145 = sbr.rel (%p143) target = $region20
      $region19: #{informer_forward.54} parent=11 // pred_region
        _
      $region20: #{informer_forward.54} parent=11 // pred_fallthru
        _
      // Predicated region
      $region21: #{informer_forward.54} parent=11 // pred_check
        %p146 = pneg %p99
      $region22: #{informer_forward.54} parent=11 // pred_check_branch
        %148 = sbr.rel (%p146) target = $region24
      $region23: #{informer_forward.54} parent=11 // pred_region
        _
      $region24: #{informer_forward.54} parent=11 // pred_fallthru
        _
    $region12: #{informer_forward.54} parent=5 // pred_fallthru
      _
    %p149 = scmp.lt.s32.totalorder %s10, 2
    // Predicated region
    $region25: #{informer_forward.54} parent=5 // pred_check
      %p150 = pneg %p149
    $region26: #{informer_forward.54} parent=5 // pred_check_branch
      %152 = sbr.rel (%p150) target = $region28
    $region27: #{informer_forward.54} parent=5 // pred_region
      // Predicated region
      $region29: #{informer_forward.54} parent=27 // pred_check
        %p153 = pneg %p30
      $region30: #{informer_forward.54} parent=27 // pred_check_branch
        %155 = sbr.rel (%p153) target = $region32
      $region31: #{informer_forward.54} parent=27 // pred_region
        %p156 = scmp.lt.s32.totalorder %s10, 1
        %s157 = scalar_select %p156, %s10, 1
        %s158 = smul.addr %s157, 2
        %s159 = smul.addr %s158, 8
        %s160 = scalar_lea.vmem %s0, %s159
      $region32: #{informer_forward.54} parent=27 // pred_fallthru
        _
    $region28: #{informer_forward.54} parent=5 // pred_fallthru
      _
    %p161 = scmp.le.s32.totalorder 1, %s10
    %p162 = scmp.lt.s32.totalorder %s10, 3
    %p163 = pnand %p161, %p162
    %p164 = pneg %p163
    // Predicated region
    $region33: #{informer_forward.54} parent=5 // pred_check
      _
    $region34: #{informer_forward.54} parent=5 // pred_check_branch
      %166 = sbr.rel (%p163) target = $region36
    $region35: #{informer_forward.54} parent=5 // pred_region
      %s167 = ssub.s32 %s10, 1
      %p168 = scmp.lt.s32.totalorder %s15, 1
      %s169 = scalar_select %p168, %s15, 1
      %s170 = smul.addr %s169, 2
      %s171 = smul.addr %s170, 8
      %s172 = scalar_lea.vmem %s0, %s171
      %p173 = pneg %p36
      %p174 = pneg %p33
      %p175 = pneg %p57
      %p176 = pneg %p54
      %p177 = pneg %p78
      %p178 = pneg %p75
      %p179 = pneg %p99
      %p180 = pneg %p96
      %p181 = pneg %p125
      %p182 = pneg %p122
      %p183 = scmp.lt.s32.totalorder %s15, 1
      %s184 = scalar_select %p183, %s15, 1
      %s185 = smul.addr %s184, 2
      %s186 = smul.addr %s185, 8
      %s187 = scalar_lea.vmem %s4, %s186
      %p188 = scmp.lt.s32.totalorder %s15, 1
      %s189 = scalar_select %p188, %s15, 1
      %s190 = smul.addr %s189, 2
      %s191 = smul.addr %s190, 8
      %s192 = scalar_lea.vmem %s0, %s191
      %p193 = scmp.lt.s32.totalorder %s15, 1
      %s194 = scalar_select %p193, %s15, 1
      %s195 = smul.addr %s194, 2
      %s196 = smul.addr %s195, 8
      %s197 = scalar_lea.vmem %s4, %s196
      %v199 = vld [vmem:[%s192] sm:$0xff]
      %v200 = vld [vmem:[%s192 + $0x8] sm:$0xff]
      %v201 = vld [vmem:[%s1] sm:$0xff]
      %v202 = vld [vmem:[%s1 + $0x8] sm:$0xff]
      %v203 = vadd.f32 %v199, %v201
      %v204 = vadd.f32 %v200, %v202
      %v205 = vpack.c.bf16 %v204, %v203
      %v206 = vld [vmem:[%s2] sm:$0xf]
      %v207 = vld [vmem:[%s2 + $0x4] sm:$0xf]
      %v208 = vld [vmem:[%s2 + $0x8] sm:$0xf]
      %v209 = vld [vmem:[%s2 + $0xc] sm:$0xf]
      %v210 = vld [vmem:[%s3] sm:$0x1]
      %v212 = vperm.slane %v210, 0
      %v218 = vunpack.c.l.b16 %v206
      %v219 = vunpack.c.l.b16 %v207
      %v220 = vunpack.c.l.b16 %v208
      %v221 = vunpack.c.l.b16 %v209
      %v222 = vpack.c.b16 %v219, %v218
      %v223 = vpack.c.b16 %v221, %v220
      %vm226 = vcmask 261120
      %v228 = vsel %vm226, %v205, 0
      %230 = vmatpush.bf16.msra.mxu0 0
      %231 = vmatpush.bf16.msra.mxu0 0
      %232 = vmatpush.bf16.msra.mxu0 0
      %233 = vmatpush.bf16.msra.mxu0 0
      %234 = vmatpush.bf16.msra.mxu0 0
      %235 = vmatpush.bf16.msra.mxu0 0
      %236 = vmatpush.bf16.msra.mxu0 %v223
      %237 = vmatpush.bf16.msra.mxu0 %v222
      %238 = vmatmul.bf16.gmra.mxu0 %v228
      %v239 = vpop.f32.mrf.mxu0
      %v240 = vadd.f32 %v212, %v239
      %v241 = vpop.f32.mrf.mxu0
      %v242 = vadd.f32 %v212, %v241
      %243 = vdwg.mxu0
      %244 = vst.msk [vmem:[%s197] sm:$0xff] %vm226, %v240
      %245 = vst.msk [vmem:[%s197 + $0x8] sm:$0xff] %vm226, %v242
      %p246 = scmp.lt.s32.totalorder %s15, 1
      %s247 = scalar_select %p246, %s15, 1
      %s248 = smul.addr %s247, 2
      %s249 = smul.addr %s248, 8
      %s250 = scalar_lea.vmem %s4, %s249
      // Predicated region
      $region37: #{informer_forward.54} parent=35 // pred_check
        %p251 = pneg %p122
      $region38: #{informer_forward.54} parent=35 // pred_check_branch
        %253 = sbr.rel (%p251) target = $region40
      $region39: #{informer_forward.54} parent=35 // pred_region
        _
      $region40: #{informer_forward.54} parent=35 // pred_fallthru
        _
    $region36: #{informer_forward.54} parent=5 // pred_fallthru
      _
    %p254 = scmp.le.s32.totalorder 2, %s10
    // Predicated region
    $region41: #{informer_forward.54} parent=5 // pred_check
      %p255 = pneg %p254
    $region42: #{informer_forward.54} parent=5 // pred_check_branch
      %257 = sbr.rel (%p255) target = $region44
    $region43: #{informer_forward.54} parent=5 // pred_region
      %s258 = ssub.s32 %s10, 2
      // Predicated region
      $region45: #{informer_forward.54} parent=43 // pred_check
        %p259 = pneg %p128
      $region46: #{informer_forward.54} parent=43 // pred_check_branch
        %261 = sbr.rel (%p259) target = $region48
      $region47: #{informer_forward.54} parent=43 // pred_region
        %p262 = scmp.lt.s32.totalorder %s16, 1
        %s263 = scalar_select %p262, %s16, 1
        %s264 = smul.addr %s263, 2
        %s265 = smul.addr %s264, 8
        %s266 = scalar_lea.vmem %s4, %s265
      $region48: #{informer_forward.54} parent=43 // pred_fallthru
        _
    $region44: #{informer_forward.54} parent=5 // pred_fallthru
      _
  $region6: #{informer_forward.54} parent=0 // loop_footer
    %s14 = sadd.s32 1, %s10
  $region7: #{informer_forward.54} parent=0 // loop_footer_branch
    %9 = sbr.rel target = $region3
  $region8: #{informer_forward.54} parent=0 // loop_exit
    _

// kernel: informer_forward.51
$region0: #{informer_forward.51}
  #allocation0 [shape = 'u32[]', space=smem, size = 0x4, offset = 0x4, fixed_abs, tag = 'smem constant byte address 0x4 - core index']
  #allocation1 [shape = 'u32[72,128]{1,0:T(1,128)}', space=vmem, size = 0x9000, scoped, tag = 'internal scratch']
  %s0 = inlined_call_operand.vmem [shape: bf16[2,16,32], index: 0, kind: input, shape index: {}]
  %s1 = inlined_call_operand.vmem [shape: bf16[2,16,32], index: 1, kind: input, shape index: {}]
  %s2 = inlined_call_operand.vmem [shape: bf16[2,16,32], index: 2, kind: input, shape index: {}]
  %s3 = inlined_call_operand.vmem [shape: f32[2,16,32], index: 3, kind: output, shape index: {}]
  %s4 = sld [smem:[#allocation0]]
  $region45: #{informer_forward.51} parent=0
    _
  %s6 = ssub.s32 1, %s4
  %s7 = scalar_select 0, %s6, %s4
  loop: start=0, step=1, limit=4
  $region2: #{informer_forward.51} parent=0 // loop_pre_header
    _
  $region3: #{informer_forward.51} parent=0 // loop_header
    %s9 = sphi 0, %s13
    %p10 = scmp.ge.s32.totalorder %s9, 4
    %s19 = sphi 0, %s21
    %s22 = sphi 0, %s19
    %s23 = sphi 0, %s22
    %s39 = sphi 0, %s23
    %s45 = sphi 0, %s47
    %s48 = sphi 0, %s45
    %s49 = sphi 0, %s48
    %s65 = sphi 0, %s49
    %s71 = sphi 0, %s73
    %s74 = sphi 0, %s71
    %s75 = sphi 0, %s74
    %s91 = sphi 0, %s75
    %s97 = sphi 0, %s99
    %s100 = sphi 0, %s97
    %s101 = sphi 0, %s100
    %s117 = sphi 0, %s101
  $region4: #{informer_forward.51} parent=0 // loop_header_branch
    %12 = sbr.rel (%p10) target = $region8
  $region5: #{informer_forward.51} parent=0 // loop_body
    %s14 = ssub.s32 %s9, 1
    %s15 = ssub.s32 %s9, 2
    %s16 = sadd.s32 %s9, 1
    %s17 = ssub.s32 %s9, %s16
    %p18 = scmp.eq.s32.totalorder %s17, 0
    %s20 = sadd.s32 %s19, 1
    %s21 = scalar_select %p18, %s19, %s20
    %p24 = pneg %p18
    %p25 = scmp.eq.s32.totalorder %s9, 1
    %p26 = por %p24, %p25
    %p27 = scmp.ne.s32.totalorder %s19, %s22
    %p28 = scmp.eq.s32.totalorder %s9, 0
    %p29 = por %p27, %p28
    %p30 = scmp.ne.s32.totalorder %s19, %s22
    %p31 = scmp.eq.s32.totalorder %s14, 1
    %p32 = por %p30, %p31
    %p33 = scmp.ne.s32.totalorder %s22, %s23
    %p34 = scmp.eq.s32.totalorder %s14, 0
    %p35 = por %p33, %p34
    %p36 = scmp.ne.s32.totalorder %s22, %s23
    %p37 = scmp.eq.s32.totalorder %s15, 1
    %p38 = por %p36, %p37
    %p40 = scmp.ne.s32.totalorder %s23, %s39
    %p41 = scmp.eq.s32.totalorder %s15, 0
    %p42 = por %p40, %p41
    %s43 = ssub.s32 %s9, %s16
    %p44 = scmp.eq.s32.totalorder %s43, 0
    %s46 = sadd.s32 %s45, 1
    %s47 = scalar_select %p44, %s45, %s46
    %p50 = pneg %p44
    %p51 = scmp.eq.s32.totalorder %s9, 1
    %p52 = por %p50, %p51
    %p53 = scmp.ne.s32.totalorder %s45, %s48
    %p54 = scmp.eq.s32.totalorder %s9, 0
    %p55 = por %p53, %p54
    %p56 = scmp.ne.s32.totalorder %s45, %s48
    %p57 = scmp.eq.s32.totalorder %s14, 1
    %p58 = por %p56, %p57
    %p59 = scmp.ne.s32.totalorder %s48, %s49
    %p60 = scmp.eq.s32.totalorder %s14, 0
    %p61 = por %p59, %p60
    %p62 = scmp.ne.s32.totalorder %s48, %s49
    %p63 = scmp.eq.s32.totalorder %s15, 1
    %p64 = por %p62, %p63
    %p66 = scmp.ne.s32.totalorder %s49, %s65
    %p67 = scmp.eq.s32.totalorder %s15, 0
    %p68 = por %p66, %p67
    %s69 = ssub.s32 %s9, %s16
    %p70 = scmp.eq.s32.totalorder %s69, 0
    %s72 = sadd.s32 %s71, 1
    %s73 = scalar_select %p70, %s71, %s72
    %p76 = pneg %p70
    %p77 = scmp.eq.s32.totalorder %s9, 1
    %p78 = por %p76, %p77
    %p79 = scmp.ne.s32.totalorder %s71, %s74
    %p80 = scmp.eq.s32.totalorder %s9, 0
    %p81 = por %p79, %p80
    %p82 = scmp.ne.s32.totalorder %s71, %s74
    %p83 = scmp.eq.s32.totalorder %s14, 1
    %p84 = por %p82, %p83
    %p85 = scmp.ne.s32.totalorder %s74, %s75
    %p86 = scmp.eq.s32.totalorder %s14, 0
    %p87 = por %p85, %p86
    %p88 = scmp.ne.s32.totalorder %s74, %s75
    %p89 = scmp.eq.s32.totalorder %s15, 1
    %p90 = por %p88, %p89
    %p92 = scmp.ne.s32.totalorder %s75, %s91
    %p93 = scmp.eq.s32.totalorder %s15, 0
    %p94 = por %p92, %p93
    %s95 = ssub.s32 %s9, %s16
    %p96 = scmp.eq.s32.totalorder %s95, 0
    %s98 = sadd.s32 %s97, 1
    %s99 = scalar_select %p96, %s97, %s98
    %p102 = pneg %p96
    %p103 = scmp.eq.s32.totalorder %s9, 1
    %p104 = por %p102, %p103
    %p105 = scmp.ne.s32.totalorder %s97, %s100
    %p106 = scmp.eq.s32.totalorder %s9, 0
    %p107 = por %p105, %p106
    %p108 = scmp.ne.s32.totalorder %s97, %s100
    %p109 = scmp.eq.s32.totalorder %s14, 1
    %p110 = por %p108, %p109
    %p111 = scmp.ne.s32.totalorder %s100, %s101
    %p112 = scmp.eq.s32.totalorder %s14, 0
    %p113 = por %p111, %p112
    %p114 = scmp.ne.s32.totalorder %s100, %s101
    %p115 = scmp.eq.s32.totalorder %s15, 1
    %p116 = por %p114, %p115
    %p118 = scmp.ne.s32.totalorder %s101, %s117
    %p119 = scmp.eq.s32.totalorder %s15, 0
    %p120 = por %p118, %p119
    %p121 = scmp.le.s32.totalorder 1, %s9
    %p122 = scmp.lt.s32.totalorder %s9, 3
    %p123 = pnand %p121, %p122
    %p124 = pneg %p123
    // Predicated region
    $region9: #{informer_forward.51} parent=5 // pred_check
      _
    $region10: #{informer_forward.51} parent=5 // pred_check_branch
      %126 = sbr.rel (%p123) target = $region12
    $region11: #{informer_forward.51} parent=5 // pred_region
      %s127 = ssub.s32 %s9, 1
    $region12: #{informer_forward.51} parent=5 // pred_fallthru
      _
    %p128 = scmp.lt.s32.totalorder %s9, 2
    // Predicated region
    $region13: #{informer_forward.51} parent=5 // pred_check
      %p129 = pneg %p128
    $region14: #{informer_forward.51} parent=5 // pred_check_branch
      %131 = sbr.rel (%p129) target = $region16
    $region15: #{informer_forward.51} parent=5 // pred_region
      // Predicated region
      $region17: #{informer_forward.51} parent=15 // pred_check
        %p132 = pneg %p29
      $region18: #{informer_forward.51} parent=15 // pred_check_branch
        %134 = sbr.rel (%p132) target = $region20
      $region19: #{informer_forward.51} parent=15 // pred_region
        %p135 = scmp.lt.s32.totalorder %s9, 1
        %s136 = scalar_select %p135, %s9, 1
        %s137 = smul.addr %s136, 2
        %s138 = smul.addr %s137, 4
        %s139 = scalar_lea.vmem %s0, %s138
      $region20: #{informer_forward.51} parent=15 // pred_fallthru
        _
      // Predicated region
      $region21: #{informer_forward.51} parent=15 // pred_check
        %p140 = pneg %p55
      $region22: #{informer_forward.51} parent=15 // pred_check_branch
        %142 = sbr.rel (%p140) target = $region24
      $region23: #{informer_forward.51} parent=15 // pred_region
        %p143 = scmp.lt.s32.totalorder %s9, 1
        %s144 = scalar_select %p143, %s9, 1
        %s145 = smul.addr %s144, 2
        %s146 = smul.addr %s145, 4
        %s147 = scalar_lea.vmem %s1, %s146
      $region24: #{informer_forward.51} parent=15 // pred_fallthru
        _
      // Predicated region
      $region25: #{informer_forward.51} parent=15 // pred_check
        %p148 = pneg %p81
      $region26: #{informer_forward.51} parent=15 // pred_check_branch
        %150 = sbr.rel (%p148) target = $region28
      $region27: #{informer_forward.51} parent=15 // pred_region
        %p151 = scmp.lt.s32.totalorder %s9, 1
        %s152 = scalar_select %p151, %s9, 1
        %s153 = smul.addr %s152, 2
        %s154 = smul.addr %s153, 4
        %s155 = scalar_lea.vmem %s2, %s154
      $region28: #{informer_forward.51} parent=15 // pred_fallthru
        _
    $region16: #{informer_forward.51} parent=5 // pred_fallthru
      _
    %p156 = scmp.le.s32.totalorder 1, %s9
    %p157 = scmp.lt.s32.totalorder %s9, 3
    %p158 = pnand %p156, %p157
    %p159 = pneg %p158
    // Predicated region
    $region29: #{informer_forward.51} parent=5 // pred_check
      _
    $region30: #{informer_forward.51} parent=5 // pred_check_branch
      %161 = sbr.rel (%p158) target = $region32
    $region31: #{informer_forward.51} parent=5 // pred_region
      %s162 = ssub.s32 %s9, 1
      %p163 = scmp.lt.s32.totalorder %s14, 1
      %s164 = scalar_select %p163, %s14, 1
      %s165 = smul.addr %s164, 2
      %s166 = smul.addr %s165, 4
      %s167 = scalar_lea.vmem %s0, %s166
      %p168 = pneg %p35
      %p169 = pneg %p32
      %p170 = scmp.lt.s32.totalorder %s14, 1
      %s171 = scalar_select %p170, %s14, 1
      %s172 = smul.addr %s171, 2
      %s173 = smul.addr %s172, 4
      %s174 = scalar_lea.vmem %s1, %s173
      %p175 = pneg %p61
      %p176 = pneg %p58
      %p177 = scmp.lt.s32.totalorder %s14, 1
      %s178 = scalar_select %p177, %s14, 1
      %s179 = smul.addr %s178, 2
      %s180 = smul.addr %s179, 4
      %s181 = scalar_lea.vmem %s2, %s180
      %p182 = pneg %p87
      %p183 = pneg %p84
      %p184 = pneg %p113
      %p185 = pneg %p110
      %p186 = scmp.lt.s32.totalorder %s14, 1
      %s187 = scalar_select %p186, %s14, 1
      %s188 = smul.addr %s187, 2
      %s189 = smul.addr %s188, 8
      %s190 = scalar_lea.vmem %s3, %s189
      %p191 = scmp.lt.s32.totalorder %s14, 1
      %s192 = scalar_select %p191, %s14, 1
      %s193 = smul.addr %s192, 2
      %s194 = smul.addr %s193, 4
      %s195 = scalar_lea.vmem %s0, %s194
      %p196 = scmp.lt.s32.totalorder %s14, 1
      %s197 = scalar_select %p196, %s14, 1
      %s198 = smul.addr %s197, 2
      %s199 = smul.addr %s198, 4
      %s200 = scalar_lea.vmem %s1, %s199
      %p201 = scmp.lt.s32.totalorder %s14, 1
      %s202 = scalar_select %p201, %s14, 1
      %s203 = smul.addr %s202, 2
      %s204 = smul.addr %s203, 4
      %s205 = scalar_lea.vmem %s2, %s204
      %p206 = scmp.lt.s32.totalorder %s14, 1
      %s207 = scalar_select %p206, %s14, 1
      %s208 = smul.addr %s207, 2
      %s209 = smul.addr %s208, 8
      %s210 = scalar_lea.vmem %s3, %s209
      %v212 = vld [vmem:[%s195] sm:$0xf]
      %v213 = vld [vmem:[%s195 + $0x4] sm:$0xf]
      %v214 = vld [vmem:[%s200] sm:$0xf]
      %v215 = vld [vmem:[%s200 + $0x4] sm:$0xf]
      %v216 = vld [vmem:[%s205] sm:$0xf]
      %v217 = vld [vmem:[%s205 + $0x4] sm:$0xf]
      %v218 = vlaneseq
      %v219 = vshrl.u32 %v218, 7
      %v220 = vadd.s32 %v219, 8
      %v221 = vlaneseq
      %v222 = vand.u32 %v221, 127
      %vm223 = vcmp.gt.s32.totalorder %v222, %v219
      %vm224 = vcmp.gt.s32.totalorder %v222, %v220
      %v227 = vunpack.c.l.b16 %v212
      %v228 = vunpack.c.l.b16 %v213
      %v229 = vpack.c.b16 %v228, %v227
      %v232 = vunpack.c.l.b16 %v214
      %v233 = vunpack.c.l.b16 %v215
      %v234 = vpack.c.b16 %v233, %v232
      %vm235 = vcmask 64512
      %v237 = vsel %vm235, %v229, 0
      %v240 = vsel %vm235, %v234, 0
      %242 = vmatpush.bf16.xpose.msra.mxu0 0
      %243 = vmatpush.bf16.xpose.msra.mxu0 0
      %244 = vmatpush.bf16.xpose.msra.mxu0 0
      %245 = vmatpush.bf16.xpose.msra.mxu0 0
      %246 = vmatpush.bf16.xpose.msra.mxu0 0
      %247 = vmatpush.bf16.xpose.msra.mxu0 0
      %248 = vmatpush.bf16.xpose.msra.mxu0 0
      %249 = vmatpush.bf16.xpose.msra.mxu0 %v240
      %250 = vmatmul.bf16.gmra.mxu0 %v237
      %v251 = vpop.f32.mrf.mxu0
      %v252 = vadd.f32 0.0, %v251
      %v253 = vpop.f32.mrf.mxu0
      %v254 = vadd.f32 0.0, %v253
      %255 = vdwg.mxu0
      %v256 = vsel %vm223, -inf, %v252
      %v257 = vsel %vm224, -inf, %v254
      %v258 = vmul.f32 %v256, 0.35355338
      %v259 = vmul.f32 %v257, 0.35355338
      %vm260 = vcmask 130048
      %v261 = vsel %vm260, %v258, -inf
      %262 = vmax.xlane.f32.xlu0 %v261
      %v263 = vpop.xlane.xlu0 %262
      %v264 = vsel %vm260, %v259, -inf
      %265 = vmax.xlane.f32.xlu0 %v264
      %v266 = vpop.xlane.xlu0 %265
      %v267 = vsub.f32 %v258, %v263
      %v268 = vsub.f32 %v259, %v266
      %v269 = vmul.f32 %v267, 1.442695
      %v270 = vpow.pop %v269
      %v271 = vmul.f32 %v268, 1.442695
      %v272 = vpow.pop %v271
      %v273 = vsel %vm260, %v270, 0.0
      %274 = vadd.xlane.f32.xlu0 %v273
      %v275 = vpop.xlane.xlu0 %274
      %v276 = vsel %vm260, %v272, 0.0
      %277 = vadd.xlane.f32.xlu0 %v276
      %v278 = vpop.xlane.xlu0 %277
      %v279 = vrcp.pop %v275
      %v280 = vrcp.pop %v278
      %v281 = vmul.f32 %v270, %v279
      %v282 = vmul.f32 %v272, %v280
      %v283 = vpack.c.bf16 %v282, %v281
      %v286 = vunpack.c.l.b16 %v216
      %v287 = vunpack.c.l.b16 %v217
      %v288 = vpack.c.b16 %v287, %v286
      %v291 = vsel %vm260, %v283, 0
      %293 = vmatpush.bf16.msra.mxu0 0
      %294 = vmatpush.bf16.msra.mxu0 0
      %295 = vmatpush.bf16.msra.mxu0 0
      %296 = vmatpush.bf16.msra.mxu0 0
      %297 = vmatpush.bf16.msra.mxu0 0
      %298 = vmatpush.bf16.msra.mxu0 0
      %299 = vmatpush.bf16.msra.mxu0 0
      %300 = vmatpush.bf16.msra.mxu0 %v288
      %301 = vmatmul.bf16.gmra.mxu0 %v291
      %v302 = vpop.f32.mrf.mxu0
      %v303 = vadd.f32 0.0, %v302
      %v304 = vpop.f32.mrf.mxu0
      %v305 = vadd.f32 0.0, %v304
      %306 = vdwg.mxu0
      %307 = vrot.lane.b32.xlu0 %v229, 120
      %v308 = vpop.permute.xlu0 %307
      %309 = vrot.lane.b32.xlu0 %v234, 120
      %v310 = vpop.permute.xlu0 %309
      %v312 = vsel %vm235, %v308, 0
      %v315 = vsel %vm235, %v310, 0
      %317 = vmatpush.bf16.xpose.msra.mxu0 0
      %318 = vmatpush.bf16.xpose.msra.mxu0 0
      %319 = vmatpush.bf16.xpose.msra.mxu0 0
      %320 = vmatpush.bf16.xpose.msra.mxu0 0
      %321 = vmatpush.bf16.xpose.msra.mxu0 0
      %322 = vmatpush.bf16.xpose.msra.mxu0 0
      %323 = vmatpush.bf16.xpose.msra.mxu0 0
      %324 = vmatpush.bf16.xpose.msra.mxu0 %v315
      %325 = vmatmul.bf16.gmra.mxu0 %v312
      %v326 = vpop.f32.mrf.mxu0
      %v327 = vadd.f32 0.0, %v326
      %v328 = vpop.f32.mrf.mxu0
      %v329 = vadd.f32 0.0, %v328
      %330 = vdwg.mxu0
      %v331 = vsel %vm223, -inf, %v327
      %v332 = vsel %vm224, -inf, %v329
      %v333 = vmul.f32 %v331, 0.35355338
      %v334 = vmul.f32 %v332, 0.35355338
      %v335 = vsel %vm260, %v333, -inf
      %336 = vmax.xlane.f32.xlu0 %v335
      %v337 = vpop.xlane.xlu0 %336
      %v338 = vsel %vm260, %v334, -inf
      %339 = vmax.xlane.f32.xlu0 %v338
      %v340 = vpop.xlane.xlu0 %339
      %v341 = vsub.f32 %v333, %v337
      %v342 = vsub.f32 %v334, %v340
      %v343 = vmul.f32 %v341, 1.442695
      %v344 = vpow.pop %v343
      %v345 = vmul.f32 %v342, 1.442695
      %v346 = vpow.pop %v345
      %v347 = vsel %vm260, %v344, 0.0
      %348 = vadd.xlane.f32.xlu0 %v347
      %v349 = vpop.xlane.xlu0 %348
      %v350 = vsel %vm260, %v346, 0.0
      %351 = vadd.xlane.f32.xlu0 %v350
      %v352 = vpop.xlane.xlu0 %351
      %v353 = vrcp.pop %v349
      %v354 = vrcp.pop %v352
      %v355 = vmul.f32 %v344, %v353
      %v356 = vmul.f32 %v346, %v354
      %v357 = vpack.c.bf16 %v356, %v355
      %358 = vrot.lane.b32.xlu0 %v288, 120
      %v359 = vpop.permute.xlu0 %358
      %v362 = vsel %vm260, %v357, 0
      %364 = vmatpush.bf16.msra.mxu0 0
      %365 = vmatpush.bf16.msra.mxu0 0
      %366 = vmatpush.bf16.msra.mxu0 0
      %367 = vmatpush.bf16.msra.mxu0 0
      %368 = vmatpush.bf16.msra.mxu0 0
      %369 = vmatpush.bf16.msra.mxu0 0
      %370 = vmatpush.bf16.msra.mxu0 0
      %371 = vmatpush.bf16.msra.mxu0 %v359
      %372 = vmatmul.bf16.gmra.mxu0 %v362
      %v373 = vpop.f32.mrf.mxu0
      %v374 = vadd.f32 0.0, %v373
      %v375 = vpop.f32.mrf.mxu0
      %v376 = vadd.f32 0.0, %v375
      %377 = vdwg.mxu0
      %378 = vrot.lane.b32.xlu0 %v229, 112
      %v379 = vpop.permute.xlu0 %378
      %380 = vrot.lane.b32.xlu0 %v234, 112
      %v381 = vpop.permute.xlu0 %380
      %v383 = vsel %vm235, %v379, 0
      %v386 = vsel %vm235, %v381, 0
      %388 = vmatpush.bf16.xpose.msra.mxu0 0
      %389 = vmatpush.bf16.xpose.msra.mxu0 0
      %390 = vmatpush.bf16.xpose.msra.mxu0 0
      %391 = vmatpush.bf16.xpose.msra.mxu0 0
      %392 = vmatpush.bf16.xpose.msra.mxu0 0
      %393 = vmatpush.bf16.xpose.msra.mxu0 0
      %394 = vmatpush.bf16.xpose.msra.mxu0 0
      %395 = vmatpush.bf16.xpose.msra.mxu0 %v386
      %396 = vmatmul.bf16.gmra.mxu0 %v383
      %v397 = vpop.f32.mrf.mxu0
      %v398 = vadd.f32 0.0, %v397
      %v399 = vpop.f32.mrf.mxu0
      %v400 = vadd.f32 0.0, %v399
      %401 = vdwg.mxu0
      %v402 = vsel %vm223, -inf, %v398
      %v403 = vsel %vm224, -inf, %v400
      %v404 = vmul.f32 %v402, 0.35355338
      %v405 = vmul.f32 %v403, 0.35355338
      %v406 = vsel %vm260, %v404, -inf
      %407 = vmax.xlane.f32.xlu0 %v406
      %v408 = vpop.xlane.xlu0 %407
      %v409 = vsel %vm260, %v405, -inf
      %410 = vmax.xlane.f32.xlu0 %v409
      %v411 = vpop.xlane.xlu0 %410
      %v412 = vsub.f32 %v404, %v408
      %v413 = vsub.f32 %v405, %v411
      %v414 = vmul.f32 %v412, 1.442695
      %v415 = vpow.pop %v414
      %v416 = vmul.f32 %v413, 1.442695
      %v417 = vpow.pop %v416
      %v418 = vsel %vm260, %v415, 0.0
      %419 = vadd.xlane.f32.xlu0 %v418
      %v420 = vpop.xlane.xlu0 %419
      %v421 = vsel %vm260, %v417, 0.0
      %422 = vadd.xlane.f32.xlu0 %v421
      %v423 = vpop.xlane.xlu0 %422
      %v424 = vrcp.pop %v420
      %v425 = vrcp.pop %v423
      %v426 = vmul.f32 %v415, %v424
      %v427 = vmul.f32 %v417, %v425
      %v428 = vpack.c.bf16 %v427, %v426
      %429 = vrot.lane.b32.xlu0 %v288, 112
      %v430 = vpop.permute.xlu0 %429
      %v433 = vsel %vm260, %v428, 0
      %435 = vmatpush.bf16.msra.mxu0 0
      %436 = vmatpush.bf16.msra.mxu0 0
      %437 = vmatpush.bf16.msra.mxu0 0
      %438 = vmatpush.bf16.msra.mxu0 0
      %439 = vmatpush.bf16.msra.mxu0 0
      %440 = vmatpush.bf16.msra.mxu0 0
      %441 = vmatpush.bf16.msra.mxu0 0
      %442 = vmatpush.bf16.msra.mxu0 %v430
      %443 = vmatmul.bf16.gmra.mxu0 %v433
      %v444 = vpop.f32.mrf.mxu0
      %v445 = vadd.f32 0.0, %v444
      %v446 = vpop.f32.mrf.mxu0
      %v447 = vadd.f32 0.0, %v446
      %448 = vdwg.mxu0
      %449 = vrot.lane.b32.xlu0 %v229, 104
      %v450 = vpop.permute.xlu0 %449
      %451 = vrot.lane.b32.xlu0 %v234, 104
      %v452 = vpop.permute.xlu0 %451
      %v454 = vsel %vm235, %v450, 0
      %v457 = vsel %vm235, %v452, 0
      %459 = vmatpush.bf16.xpose.msra.mxu0 0
      %460 = vmatpush.bf16.xpose.msra.mxu0 0
      %461 = vmatpush.bf16.xpose.msra.mxu0 0
      %462 = vmatpush.bf16.xpose.msra.mxu0 0
      %463 = vmatpush.bf16.xpose.msra.mxu0 0
      %464 = vmatpush.bf16.xpose.msra.mxu0 0
      %465 = vmatpush.bf16.xpose.msra.mxu0 0
      %466 = vmatpush.bf16.xpose.msra.mxu0 %v457
      %467 = vmatmul.bf16.gmra.mxu0 %v454
      %v468 = vpop.f32.mrf.mxu0
      %v469 = vadd.f32 0.0, %v468
      %v470 = vpop.f32.mrf.mxu0
      %v471 = vadd.f32 0.0, %v470
      %472 = vdwg.mxu0
      %v473 = vsel %vm223, -inf, %v469
      %v474 = vsel %vm224, -inf, %v471
      %v475 = vmul.f32 %v473, 0.35355338
      %v476 = vmul.f32 %v474, 0.35355338
      %v477 = vsel %vm260, %v475, -inf
      %478 = vmax.xlane.f32.xlu0 %v477
      %v479 = vpop.xlane.xlu0 %478
      %v480 = vsel %vm260, %v476, -inf
      %481 = vmax.xlane.f32.xlu0 %v480
      %v482 = vpop.xlane.xlu0 %481
      %v483 = vsub.f32 %v475, %v479
      %v484 = vsub.f32 %v476, %v482
      %v485 = vmul.f32 %v483, 1.442695
      %v486 = vpow.pop %v485
      %v487 = vmul.f32 %v484, 1.442695
      %v488 = vpow.pop %v487
      %v489 = vsel %vm260, %v486, 0.0
      %490 = vadd.xlane.f32.xlu0 %v489
      %v491 = vpop.xlane.xlu0 %490
      %v492 = vsel %vm260, %v488, 0.0
      %493 = vadd.xlane.f32.xlu0 %v492
      %v494 = vpop.xlane.xlu0 %493
      %v495 = vrcp.pop %v491
      %v496 = vrcp.pop %v494
      %v497 = vmul.f32 %v486, %v495
      %v498 = vmul.f32 %v488, %v496
      %v499 = vpack.c.bf16 %v498, %v497
      %500 = vrot.lane.b32.xlu0 %v288, 104
      %v501 = vpop.permute.xlu0 %500
      %v504 = vsel %vm260, %v499, 0
      %506 = vmatpush.bf16.msra.mxu0 0
      %507 = vmatpush.bf16.msra.mxu0 0
      %508 = vmatpush.bf16.msra.mxu0 0
      %509 = vmatpush.bf16.msra.mxu0 0
      %510 = vmatpush.bf16.msra.mxu0 0
      %511 = vmatpush.bf16.msra.mxu0 0
      %512 = vmatpush.bf16.msra.mxu0 0
      %513 = vmatpush.bf16.msra.mxu0 %v501
      %514 = vmatmul.bf16.gmra.mxu0 %v504
      %v515 = vpop.f32.mrf.mxu0
      %v516 = vadd.f32 0.0, %v515
      %v517 = vpop.f32.mrf.mxu0
      %v518 = vadd.f32 0.0, %v517
      %519 = vdwg.mxu0
      %522 = vrot.lane.b32.xlu0 %v374, 8
      %v523 = vpop.permute.xlu0 %522
      %524 = vrot.lane.b32.xlu0 %v376, 8
      %v525 = vpop.permute.xlu0 %524
      %530 = vrot.lane.b32.xlu0 %v445, 16
      %v531 = vpop.permute.xlu0 %530
      %532 = vrot.lane.b32.xlu0 %v447, 16
      %v533 = vpop.permute.xlu0 %532
      %538 = vrot.lane.b32.xlu0 %v516, 24
      %v539 = vpop.permute.xlu0 %538
      %540 = vrot.lane.b32.xlu0 %v518, 24
      %v541 = vpop.permute.xlu0 %540
      %v544 = vsel %vm235, %v303, %v523
      %v545 = vsel %vm235, %v305, %v525
      %v546 = vsel %vm260, %v544, %v531
      %v547 = vsel %vm260, %v545, %v533
      %vm548 = vcmask 195584
      %v549 = vsel %vm548, %v546, %v539
      %v550 = vsel %vm548, %v547, %v541
      %vm551 = vcmask 261120
      %552 = vst.msk [vmem:[%s210] sm:$0xff] %vm551, %v549
      %553 = vst.msk [vmem:[%s210 + $0x8] sm:$0xff] %vm551, %v550
      %p554 = scmp.lt.s32.totalorder %s14, 1
      %s555 = scalar_select %p554, %s14, 1
      %s556 = smul.addr %s555, 2
      %s557 = smul.addr %s556, 8
      %s558 = scalar_lea.vmem %s3, %s557
      // Predicated region
      $region33: #{informer_forward.51} parent=31 // pred_check
        %p559 = pneg %p110
      $region34: #{informer_forward.51} parent=31 // pred_check_branch
        %561 = sbr.rel (%p559) target = $region36
      $region35: #{informer_forward.51} parent=31 // pred_region
        _
      $region36: #{informer_forward.51} parent=31 // pred_fallthru
        _
    $region32: #{informer_forward.51} parent=5 // pred_fallthru
      _
    %p562 = scmp.le.s32.totalorder 2, %s9
    // Predicated region
    $region37: #{informer_forward.51} parent=5 // pred_check
      %p563 = pneg %p562
    $region38: #{informer_forward.51} parent=5 // pred_check_branch
      %565 = sbr.rel (%p563) target = $region40
    $region39: #{informer_forward.51} parent=5 // pred_region
      %s566 = ssub.s32 %s9, 2
      // Predicated region
      $region41: #{informer_forward.51} parent=39 // pred_check
        %p567 = pneg %p116
      $region42: #{informer_forward.51} parent=39 // pred_check_branch
        %569 = sbr.rel (%p567) target = $region44
      $region43: #{informer_forward.51} parent=39 // pred_region
        %p570 = scmp.lt.s32.totalorder %s15, 1
        %s571 = scalar_select %p570, %s15, 1
        %s572 = smul.addr %s571, 2
        %s573 = smul.addr %s572, 8
        %s574 = scalar_lea.vmem %s3, %s573
      $region44: #{informer_forward.51} parent=39 // pred_fallthru
        _
    $region40: #{informer_forward.51} parent=5 // pred_fallthru
      _
  $region6: #{informer_forward.51} parent=0 // loop_footer
    %s13 = sadd.s32 1, %s9
  $region7: #{informer_forward.51} parent=0 // loop_footer_branch
    %8 = sbr.rel target = $region3
  $region8: #{informer_forward.51} parent=0 // loop_exit
    _

// kernel: informer_forward.62
$region0: #{informer_forward.62}
  #allocation0 [shape = 'u32[]', space=smem, size = 0x4, offset = 0x4, fixed_abs, tag = 'smem constant byte address 0x4 - core index']
  #allocation1 [shape = 'u32[72,128]{1,0:T(1,128)}', space=vmem, size = 0x9000, scoped, tag = 'internal scratch']
  %s0 = inlined_call_operand.vmem [shape: f32[32,32], index: 0, kind: input, shape index: {}]
  %s1 = inlined_call_operand.vmem [shape: f32[1,32], index: 1, kind: input, shape index: {}]
  %s2 = inlined_call_operand.vmem [shape: f32[1,32], index: 2, kind: input, shape index: {}]
  %s3 = inlined_call_operand.vmem [shape: f32[32,32], index: 3, kind: output, shape index: {}]
  %s4 = sld [smem:[#allocation0]]
  $region45: #{informer_forward.62} parent=0
    _
  %s6 = ssub.s32 1, %s4
  %s7 = scalar_select 0, %s6, %s4
  loop: start=0, step=1, limit=4
  $region2: #{informer_forward.62} parent=0 // loop_pre_header
    _
  $region3: #{informer_forward.62} parent=0 // loop_header
    %s9 = sphi 0, %s13
    %p10 = scmp.ge.s32.totalorder %s9, 4
    %s19 = sphi 0, %s21
    %s22 = sphi 0, %s19
    %s23 = sphi 0, %s22
    %s39 = sphi 0, %s23
    %s43 = sphi 0, %s43
    %s45 = sphi 0, %s43
    %s46 = sphi 0, %s45
    %s60 = sphi 0, %s46
    %s64 = sphi 0, %s64
    %s66 = sphi 0, %s64
    %s67 = sphi 0, %s66
    %s81 = sphi 0, %s67
    %s87 = sphi 0, %s89
    %s90 = sphi 0, %s87
    %s91 = sphi 0, %s90
    %s107 = sphi 0, %s91
  $region4: #{informer_forward.62} parent=0 // loop_header_branch
    %12 = sbr.rel (%p10) target = $region8
  $region5: #{informer_forward.62} parent=0 // loop_body
    %s14 = ssub.s32 %s9, 1
    %s15 = ssub.s32 %s9, 2
    %s16 = sadd.s32 %s9, 1
    %s17 = ssub.s32 %s9, %s16
    %p18 = scmp.eq.s32.totalorder %s17, 0
    %s20 = sadd.s32 %s19, 1
    %s21 = scalar_select %p18, %s19, %s20
    %p24 = pneg %p18
    %p25 = scmp.eq.s32.totalorder %s9, 1
    %p26 = por %p24, %p25
    %p27 = scmp.ne.s32.totalorder %s19, %s22
    %p28 = scmp.eq.s32.totalorder %s9, 0
    %p29 = por %p27, %p28
    %p30 = scmp.ne.s32.totalorder %s19, %s22
    %p31 = scmp.eq.s32.totalorder %s14, 1
    %p32 = por %p30, %p31
    %p33 = scmp.ne.s32.totalorder %s22, %s23
    %p34 = scmp.eq.s32.totalorder %s14, 0
    %p35 = por %p33, %p34
    %p36 = scmp.ne.s32.totalorder %s22, %s23
    %p37 = scmp.eq.s32.totalorder %s15, 1
    %p38 = por %p36, %p37
    %p40 = scmp.ne.s32.totalorder %s23, %s39
    %p41 = scmp.eq.s32.totalorder %s15, 0
    %p42 = por %p40, %p41
    %s44 = sadd.s32 %s43, 1
    %p47 = scmp.eq.s32.totalorder %s9, 1
    %p48 = scmp.ne.s32.totalorder %s43, %s45
    %p49 = scmp.eq.s32.totalorder %s9, 0
    %p50 = por %p48, %p49
    %p51 = scmp.ne.s32.totalorder %s43, %s45
    %p52 = scmp.eq.s32.totalorder %s14, 1
    %p53 = por %p51, %p52
    %p54 = scmp.ne.s32.totalorder %s45, %s46
    %p55 = scmp.eq.s32.totalorder %s14, 0
    %p56 = por %p54, %p55
    %p57 = scmp.ne.s32.totalorder %s45, %s46
    %p58 = scmp.eq.s32.totalorder %s15, 1
    %p59 = por %p57, %p58
    %p61 = scmp.ne.s32.totalorder %s46, %s60
    %p62 = scmp.eq.s32.totalorder %s15, 0
    %p63 = por %p61, %p62
    %s65 = sadd.s32 %s64, 1
    %p68 = scmp.eq.s32.totalorder %s9, 1
    %p69 = scmp.ne.s32.totalorder %s64, %s66
    %p70 = scmp.eq.s32.totalorder %s9, 0
    %p71 = por %p69, %p70
    %p72 = scmp.ne.s32.totalorder %s64, %s66
    %p73 = scmp.eq.s32.totalorder %s14, 1
    %p74 = por %p72, %p73
    %p75 = scmp.ne.s32.totalorder %s66, %s67
    %p76 = scmp.eq.s32.totalorder %s14, 0
    %p77 = por %p75, %p76
    %p78 = scmp.ne.s32.totalorder %s66, %s67
    %p79 = scmp.eq.s32.totalorder %s15, 1
    %p80 = por %p78, %p79
    %p82 = scmp.ne.s32.totalorder %s67, %s81
    %p83 = scmp.eq.s32.totalorder %s15, 0
    %p84 = por %p82, %p83
    %s85 = ssub.s32 %s9, %s16
    %p86 = scmp.eq.s32.totalorder %s85, 0
    %s88 = sadd.s32 %s87, 1
    %s89 = scalar_select %p86, %s87, %s88
    %p92 = pneg %p86
    %p93 = scmp.eq.s32.totalorder %s9, 1
    %p94 = por %p92, %p93
    %p95 = scmp.ne.s32.totalorder %s87, %s90
    %p96 = scmp.eq.s32.totalorder %s9, 0
    %p97 = por %p95, %p96
    %p98 = scmp.ne.s32.totalorder %s87, %s90
    %p99 = scmp.eq.s32.totalorder %s14, 1
    %p100 = por %p98, %p99
    %p101 = scmp.ne.s32.totalorder %s90, %s91
    %p102 = scmp.eq.s32.totalorder %s14, 0
    %p103 = por %p101, %p102
    %p104 = scmp.ne.s32.totalorder %s90, %s91
    %p105 = scmp.eq.s32.totalorder %s15, 1
    %p106 = por %p104, %p105
    %p108 = scmp.ne.s32.totalorder %s91, %s107
    %p109 = scmp.eq.s32.totalorder %s15, 0
    %p110 = por %p108, %p109
    %p111 = scmp.le.s32.totalorder 1, %s9
    %p112 = scmp.lt.s32.totalorder %s9, 3
    %p113 = pnand %p111, %p112
    %p114 = pneg %p113
    // Predicated region
    $region9: #{informer_forward.62} parent=5 // pred_check
      _
    $region10: #{informer_forward.62} parent=5 // pred_check_branch
      %116 = sbr.rel (%p113) target = $region12
    $region11: #{informer_forward.62} parent=5 // pred_region
      %s117 = ssub.s32 %s9, 1
      // Predicated region
      $region13: #{informer_forward.62} parent=11 // pred_check
        %p118 = pneg %p56
      $region14: #{informer_forward.62} parent=11 // pred_check_branch
        %120 = sbr.rel (%p118) target = $region16
      $region15: #{informer_forward.62} parent=11 // pred_region
        _
      $region16: #{informer_forward.62} parent=11 // pred_fallthru
        _
      // Predicated region
      $region17: #{informer_forward.62} parent=11 // pred_check
        %p121 = pneg %p77
      $region18: #{informer_forward.62} parent=11 // pred_check_branch
        %123 = sbr.rel (%p121) target = $region20
      $region19: #{informer_forward.62} parent=11 // pred_region
        _
      $region20: #{informer_forward.62} parent=11 // pred_fallthru
        _
    $region12: #{informer_forward.62} parent=5 // pred_fallthru
      _
    %p124 = scmp.lt.s32.totalorder %s9, 2
    // Predicated region
    $region21: #{informer_forward.62} parent=5 // pred_check
      %p125 = pneg %p124
    $region22: #{informer_forward.62} parent=5 // pred_check_branch
      %127 = sbr.rel (%p125) target = $region24
    $region23: #{informer_forward.62} parent=5 // pred_region
      // Predicated region
      $region25: #{informer_forward.62} parent=23 // pred_check
        %p128 = pneg %p29
      $region26: #{informer_forward.62} parent=23 // pred_check_branch
        %130 = sbr.rel (%p128) target = $region28
      $region27: #{informer_forward.62} parent=23 // pred_region
        %s131 = smul.u32 2, %s9
        %p132 = scmp.lt.s32.totalorder %s131, 3
        %s133 = scalar_select %p132, %s131, 3
        %s134 = smul.addr %s133, 8
        %s135 = scalar_lea.vmem %s0, %s134
        %s136 = smul.u32 2, %s9
      $region28: #{informer_forward.62} parent=23 // pred_fallthru
        _
    $region24: #{informer_forward.62} parent=5 // pred_fallthru
      _
    %p137 = scmp.le.s32.totalorder 1, %s9
    %p138 = scmp.lt.s32.totalorder %s9, 3
    %p139 = pnand %p137, %p138
    %p140 = pneg %p139
    // Predicated region
    $region29: #{informer_forward.62} parent=5 // pred_check
      _
    $region30: #{informer_forward.62} parent=5 // pred_check_branch
      %142 = sbr.rel (%p139) target = $region32
    $region31: #{informer_forward.62} parent=5 // pred_region
      %s143 = ssub.s32 %s9, 1
      %s144 = smul.u32 2, %s14
      %p145 = scmp.lt.s32.totalorder %s144, 3
      %s146 = scalar_select %p145, %s144, 3
      %s147 = smul.addr %s146, 8
      %s148 = scalar_lea.vmem %s0, %s147
      %p149 = pneg %p35
      %p150 = pneg %p32
      %p151 = pneg %p56
      %p152 = pneg %p53
      %p153 = pneg %p77
      %p154 = pneg %p74
      %p155 = pneg %p103
      %p156 = pneg %p100
      %s157 = smul.u32 2, %s14
      %p158 = scmp.lt.s32.totalorder %s157, 3
      %s159 = scalar_select %p158, %s157, 3
      %s160 = smul.addr %s159, 8
      %s161 = scalar_lea.vmem %s3, %s160
      %s162 = smul.u32 2, %s14
      %p163 = scmp.lt.s32.totalorder %s162, 3
      %s164 = scalar_select %p163, %s162, 3
      %s165 = smul.addr %s164, 8
      %s166 = scalar_lea.vmem %s0, %s165
      %s167 = smul.u32 2, %s14
      %s168 = smul.u32 2, %s14
      %p169 = scmp.lt.s32.totalorder %s168, 3
      %s170 = scalar_select %p169, %s168, 3
      %s171 = smul.addr %s170, 8
      %s172 = scalar_lea.vmem %s3, %s171
      %s173 = smul.u32 2, %s14
      %v174 = vld [vmem:[%s166] sm:$0xff]
      %v175 = vld [vmem:[%s166 + $0x8] sm:$0xff]
      %v176 = vld [vmem:[%s1] sm:$0x1]
      %v177 = vld [vmem:[%s2] sm:$0x1]
      %vm178 = vcmask 261120
      %v179 = vsel %vm178, %v174, 0.0
      %180 = vadd.xlane.f32.xlu0 %v179
      %v181 = vpop.xlane.xlu0 %180
      %v182 = vsel %vm178, %v175, 0.0
      %183 = vadd.xlane.f32.xlu0 %v182
      %v184 = vpop.xlane.xlu0 %183
      %v185 = vrcp.pop 32.0
      %v186 = vmul.f32 32.0, %v185
      %v187 = vsub.f32 1.0, %v186
      %v188 = vmul.f32 %v185, %v187
      %v189 = vadd.f32 %v185, %v188
      %vm190 = vweird.f32 %v185
      %v191 = vsel %vm190, %v185, %v189
      %v192 = vmul.f32 %v181, %v191
      %v193 = vmul.f32 %v184, %v191
      %v194 = vsub.f32 %v174, %v192
      %v195 = vsub.f32 %v175, %v193
      %v196 = vmul.f32 %v194, %v194
      %v197 = vmul.f32 %v195, %v195
      %v198 = vsel %vm178, %v196, 0.0
      %199 = vadd.xlane.f32.xlu0 %v198
      %v200 = vpop.xlane.xlu0 %199
      %v201 = vsel %vm178, %v197, 0.0
      %202 = vadd.xlane.f32.xlu0 %v201
      %v203 = vpop.xlane.xlu0 %202
      %v204 = vmul.f32 %v200, %v191
      %v205 = vmul.f32 %v203, %v191
      %v206 = vadd.f32 %v204, 1e-05
      %v207 = vadd.f32 %v205, 1e-05
      %v208 = vrsqrt.pop %v206
      %v209 = vmul.f32 %v208, %v206
      %v210 = vmul.f32 %v209, %v208
      %v211 = vmul.f32 0.5, %v210
      %v212 = vsub.f32 1.5, %v211
      %v213 = vmul.f32 %v208, %v212
      %vm214 = vweird.f32 %v206
      %vm215 = vweird.f32 %v208
      %vm216 = vmor %vm214, %vm215
      %v217 = vsel %vm216, %v208, %v213
      %v218 = vrsqrt.pop %v207
      %v219 = vmul.f32 %v218, %v207
      %v220 = vmul.f32 %v219, %v218
      %v221 = vmul.f32 0.5, %v220
      %v222 = vsub.f32 1.5, %v221
      %v223 = vmul.f32 %v218, %v222
      %vm224 = vweird.f32 %v207
      %vm225 = vweird.f32 %v218
      %vm226 = vmor %vm224, %vm225
      %v227 = vsel %vm226, %v218, %v223
      %v228 = vmul.f32 %v194, %v217
      %v229 = vmul.f32 %v195, %v227
      %v231 = vperm.slane %v176, 0
      %v233 = vmul.f32 %v228, %v231
      %v234 = vmul.f32 %v229, %v231
      %v236 = vperm.slane %v177, 0
      %v238 = vadd.f32 %v233, %v236
      %v239 = vadd.f32 %v234, %v236
      %240 = vst.msk [vmem:[%s172] sm:$0xff] %vm178, %v238
      %241 = vst.msk [vmem:[%s172 + $0x8] sm:$0xff] %vm178, %v239
      %s242 = smul.u32 2, %s14
      %p243 = scmp.lt.s32.totalorder %s242, 3
      %s244 = scalar_select %p243, %s242, 3
      %s245 = smul.addr %s244, 8
      %s246 = scalar_lea.vmem %s3, %s245
      // Predicated region
      $region33: #{informer_forward.62} parent=31 // pred_check
        %p247 = pneg %p100
      $region34: #{informer_forward.62} parent=31 // pred_check_branch
        %249 = sbr.rel (%p247) target = $region36
      $region35: #{informer_forward.62} parent=31 // pred_region
        %s250 = smul.u32 2, %s14
      $region36: #{informer_forward.62} parent=31 // pred_fallthru
        _
    $region32: #{informer_forward.62} parent=5 // pred_fallthru
      _
    %p251 = scmp.le.s32.totalorder 2, %s9
    // Predicated region
    $region37: #{informer_forward.62} parent=5 // pred_check
      %p252 = pneg %p251
    $region38: #{informer_forward.62} parent=5 // pred_check_branch
      %254 = sbr.rel (%p252) target = $region40
    $region39: #{informer_forward.62} parent=5 // pred_region
      %s255 = ssub.s32 %s9, 2
      // Predicated region
      $region41: #{informer_forward.62} parent=39 // pred_check
        %p256 = pneg %p106
      $region42: #{informer_forward.62} parent=39 // pred_check_branch
        %258 = sbr.rel (%p256) target = $region44
      $region43: #{informer_forward.62} parent=39 // pred_region
        %s259 = smul.u32 2, %s15
        %p260 = scmp.lt.s32.totalorder %s259, 3
        %s261 = scalar_select %p260, %s259, 3
        %s262 = smul.addr %s261, 8
        %s263 = scalar_lea.vmem %s3, %s262
      $region44: #{informer_forward.62} parent=39 // pred_fallthru
        _
    $region40: #{informer_forward.62} parent=5 // pred_fallthru
      _
  $region6: #{informer_forward.62} parent=0 // loop_footer
    %s13 = sadd.s32 1, %s9
  $region7: #{informer_forward.62} parent=0 // loop_footer_branch
    %8 = sbr.rel target = $region3
  $region8: #{informer_forward.62} parent=0 // loop_exit
    _

// kernel: informer_forward.56
$region0: #{informer_forward.56}
  #allocation0 [shape = 'u32[]', space=smem, size = 0x4, offset = 0x4, fixed_abs, tag = 'smem constant byte address 0x4 - core index']
  #allocation1 [shape = 'u32[72,128]{1,0:T(1,128)}', space=vmem, size = 0x9000, scoped, tag = 'internal scratch']
  %s0 = inlined_call_operand.vmem [shape: bf16[2,16,32], index: 0, kind: input, shape index: {}]
  %s1 = inlined_call_operand.vmem [shape: bf16[2,8,32], index: 1, kind: input, shape index: {}]
  %s2 = inlined_call_operand.vmem [shape: bf16[2,8,32], index: 2, kind: input, shape index: {}]
  %s3 = inlined_call_operand.vmem [shape: f32[2,16,32], index: 3, kind: output, shape index: {}]
  %s4 = sld [smem:[#allocation0]]
  $region45: #{informer_forward.56} parent=0
    _
  %s6 = ssub.s32 1, %s4
  %s7 = scalar_select 0, %s6, %s4
  loop: start=0, step=1, limit=4
  $region2: #{informer_forward.56} parent=0 // loop_pre_header
    _
  $region3: #{informer_forward.56} parent=0 // loop_header
    %s9 = sphi 0, %s13
    %p10 = scmp.ge.s32.totalorder %s9, 4
    %s19 = sphi 0, %s21
    %s22 = sphi 0, %s19
    %s23 = sphi 0, %s22
    %s39 = sphi 0, %s23
    %s45 = sphi 0, %s47
    %s48 = sphi 0, %s45
    %s49 = sphi 0, %s48
    %s65 = sphi 0, %s49
    %s71 = sphi 0, %s73
    %s74 = sphi 0, %s71
    %s75 = sphi 0, %s74
    %s91 = sphi 0, %s75
    %s97 = sphi 0, %s99
    %s100 = sphi 0, %s97
    %s101 = sphi 0, %s100
    %s117 = sphi 0, %s101
  $region4: #{informer_forward.56} parent=0 // loop_header_branch
    %12 = sbr.rel (%p10) target = $region8
  $region5: #{informer_forward.56} parent=0 // loop_body
    %s14 = ssub.s32 %s9, 1
    %s15 = ssub.s32 %s9, 2
    %s16 = sadd.s32 %s9, 1
    %s17 = ssub.s32 %s9, %s16
    %p18 = scmp.eq.s32.totalorder %s17, 0
    %s20 = sadd.s32 %s19, 1
    %s21 = scalar_select %p18, %s19, %s20
    %p24 = pneg %p18
    %p25 = scmp.eq.s32.totalorder %s9, 1
    %p26 = por %p24, %p25
    %p27 = scmp.ne.s32.totalorder %s19, %s22
    %p28 = scmp.eq.s32.totalorder %s9, 0
    %p29 = por %p27, %p28
    %p30 = scmp.ne.s32.totalorder %s19, %s22
    %p31 = scmp.eq.s32.totalorder %s14, 1
    %p32 = por %p30, %p31
    %p33 = scmp.ne.s32.totalorder %s22, %s23
    %p34 = scmp.eq.s32.totalorder %s14, 0
    %p35 = por %p33, %p34
    %p36 = scmp.ne.s32.totalorder %s22, %s23
    %p37 = scmp.eq.s32.totalorder %s15, 1
    %p38 = por %p36, %p37
    %p40 = scmp.ne.s32.totalorder %s23, %s39
    %p41 = scmp.eq.s32.totalorder %s15, 0
    %p42 = por %p40, %p41
    %s43 = ssub.s32 %s9, %s16
    %p44 = scmp.eq.s32.totalorder %s43, 0
    %s46 = sadd.s32 %s45, 1
    %s47 = scalar_select %p44, %s45, %s46
    %p50 = pneg %p44
    %p51 = scmp.eq.s32.totalorder %s9, 1
    %p52 = por %p50, %p51
    %p53 = scmp.ne.s32.totalorder %s45, %s48
    %p54 = scmp.eq.s32.totalorder %s9, 0
    %p55 = por %p53, %p54
    %p56 = scmp.ne.s32.totalorder %s45, %s48
    %p57 = scmp.eq.s32.totalorder %s14, 1
    %p58 = por %p56, %p57
    %p59 = scmp.ne.s32.totalorder %s48, %s49
    %p60 = scmp.eq.s32.totalorder %s14, 0
    %p61 = por %p59, %p60
    %p62 = scmp.ne.s32.totalorder %s48, %s49
    %p63 = scmp.eq.s32.totalorder %s15, 1
    %p64 = por %p62, %p63
    %p66 = scmp.ne.s32.totalorder %s49, %s65
    %p67 = scmp.eq.s32.totalorder %s15, 0
    %p68 = por %p66, %p67
    %s69 = ssub.s32 %s9, %s16
    %p70 = scmp.eq.s32.totalorder %s69, 0
    %s72 = sadd.s32 %s71, 1
    %s73 = scalar_select %p70, %s71, %s72
    %p76 = pneg %p70
    %p77 = scmp.eq.s32.totalorder %s9, 1
    %p78 = por %p76, %p77
    %p79 = scmp.ne.s32.totalorder %s71, %s74
    %p80 = scmp.eq.s32.totalorder %s9, 0
    %p81 = por %p79, %p80
    %p82 = scmp.ne.s32.totalorder %s71, %s74
    %p83 = scmp.eq.s32.totalorder %s14, 1
    %p84 = por %p82, %p83
    %p85 = scmp.ne.s32.totalorder %s74, %s75
    %p86 = scmp.eq.s32.totalorder %s14, 0
    %p87 = por %p85, %p86
    %p88 = scmp.ne.s32.totalorder %s74, %s75
    %p89 = scmp.eq.s32.totalorder %s15, 1
    %p90 = por %p88, %p89
    %p92 = scmp.ne.s32.totalorder %s75, %s91
    %p93 = scmp.eq.s32.totalorder %s15, 0
    %p94 = por %p92, %p93
    %s95 = ssub.s32 %s9, %s16
    %p96 = scmp.eq.s32.totalorder %s95, 0
    %s98 = sadd.s32 %s97, 1
    %s99 = scalar_select %p96, %s97, %s98
    %p102 = pneg %p96
    %p103 = scmp.eq.s32.totalorder %s9, 1
    %p104 = por %p102, %p103
    %p105 = scmp.ne.s32.totalorder %s97, %s100
    %p106 = scmp.eq.s32.totalorder %s9, 0
    %p107 = por %p105, %p106
    %p108 = scmp.ne.s32.totalorder %s97, %s100
    %p109 = scmp.eq.s32.totalorder %s14, 1
    %p110 = por %p108, %p109
    %p111 = scmp.ne.s32.totalorder %s100, %s101
    %p112 = scmp.eq.s32.totalorder %s14, 0
    %p113 = por %p111, %p112
    %p114 = scmp.ne.s32.totalorder %s100, %s101
    %p115 = scmp.eq.s32.totalorder %s15, 1
    %p116 = por %p114, %p115
    %p118 = scmp.ne.s32.totalorder %s101, %s117
    %p119 = scmp.eq.s32.totalorder %s15, 0
    %p120 = por %p118, %p119
    %p121 = scmp.le.s32.totalorder 1, %s9
    %p122 = scmp.lt.s32.totalorder %s9, 3
    %p123 = pnand %p121, %p122
    %p124 = pneg %p123
    // Predicated region
    $region9: #{informer_forward.56} parent=5 // pred_check
      _
    $region10: #{informer_forward.56} parent=5 // pred_check_branch
      %126 = sbr.rel (%p123) target = $region12
    $region11: #{informer_forward.56} parent=5 // pred_region
      %s127 = ssub.s32 %s9, 1
    $region12: #{informer_forward.56} parent=5 // pred_fallthru
      _
    %p128 = scmp.lt.s32.totalorder %s9, 2
    // Predicated region
    $region13: #{informer_forward.56} parent=5 // pred_check
      %p129 = pneg %p128
    $region14: #{informer_forward.56} parent=5 // pred_check_branch
      %131 = sbr.rel (%p129) target = $region16
    $region15: #{informer_forward.56} parent=5 // pred_region
      // Predicated region
      $region17: #{informer_forward.56} parent=15 // pred_check
        %p132 = pneg %p29
      $region18: #{informer_forward.56} parent=15 // pred_check_branch
        %134 = sbr.rel (%p132) target = $region20
      $region19: #{informer_forward.56} parent=15 // pred_region
        %p135 = scmp.lt.s32.totalorder %s9, 1
        %s136 = scalar_select %p135, %s9, 1
        %s137 = smul.addr %s136, 2
        %s138 = smul.addr %s137, 4
        %s139 = scalar_lea.vmem %s0, %s138
      $region20: #{informer_forward.56} parent=15 // pred_fallthru
        _
      // Predicated region
      $region21: #{informer_forward.56} parent=15 // pred_check
        %p140 = pneg %p55
      $region22: #{informer_forward.56} parent=15 // pred_check_branch
        %142 = sbr.rel (%p140) target = $region24
      $region23: #{informer_forward.56} parent=15 // pred_region
        %p143 = scmp.lt.s32.totalorder %s9, 1
        %s144 = scalar_select %p143, %s9, 1
        %s145 = smul.addr %s144, 4
        %s146 = scalar_lea.vmem %s1, %s145
      $region24: #{informer_forward.56} parent=15 // pred_fallthru
        _
      // Predicated region
      $region25: #{informer_forward.56} parent=15 // pred_check
        %p147 = pneg %p81
      $region26: #{informer_forward.56} parent=15 // pred_check_branch
        %149 = sbr.rel (%p147) target = $region28
      $region27: #{informer_forward.56} parent=15 // pred_region
        %p150 = scmp.lt.s32.totalorder %s9, 1
        %s151 = scalar_select %p150, %s9, 1
        %s152 = smul.addr %s151, 4
        %s153 = scalar_lea.vmem %s2, %s152
      $region28: #{informer_forward.56} parent=15 // pred_fallthru
        _
    $region16: #{informer_forward.56} parent=5 // pred_fallthru
      _
    %p154 = scmp.le.s32.totalorder 1, %s9
    %p155 = scmp.lt.s32.totalorder %s9, 3
    %p156 = pnand %p154, %p155
    %p157 = pneg %p156
    // Predicated region
    $region29: #{informer_forward.56} parent=5 // pred_check
      _
    $region30: #{informer_forward.56} parent=5 // pred_check_branch
      %159 = sbr.rel (%p156) target = $region32
    $region31: #{informer_forward.56} parent=5 // pred_region
      %s160 = ssub.s32 %s9, 1
      %p161 = scmp.lt.s32.totalorder %s14, 1
      %s162 = scalar_select %p161, %s14, 1
      %s163 = smul.addr %s162, 2
      %s164 = smul.addr %s163, 4
      %s165 = scalar_lea.vmem %s0, %s164
      %p166 = pneg %p35
      %p167 = pneg %p32
      %p168 = scmp.lt.s32.totalorder %s14, 1
      %s169 = scalar_select %p168, %s14, 1
      %s170 = smul.addr %s169, 4
      %s171 = scalar_lea.vmem %s1, %s170
      %p172 = pneg %p61
      %p173 = pneg %p58
      %p174 = scmp.lt.s32.totalorder %s14, 1
      %s175 = scalar_select %p174, %s14, 1
      %s176 = smul.addr %s175, 4
      %s177 = scalar_lea.vmem %s2, %s176
      %p178 = pneg %p87
      %p179 = pneg %p84
      %p180 = pneg %p113
      %p181 = pneg %p110
      %p182 = scmp.lt.s32.totalorder %s14, 1
      %s183 = scalar_select %p182, %s14, 1
      %s184 = smul.addr %s183, 2
      %s185 = smul.addr %s184, 8
      %s186 = scalar_lea.vmem %s3, %s185
      %p187 = scmp.lt.s32.totalorder %s14, 1
      %s188 = scalar_select %p187, %s14, 1
      %s189 = smul.addr %s188, 2
      %s190 = smul.addr %s189, 4
      %s191 = scalar_lea.vmem %s0, %s190
      %p192 = scmp.lt.s32.totalorder %s14, 1
      %s193 = scalar_select %p192, %s14, 1
      %s194 = smul.addr %s193, 4
      %s195 = scalar_lea.vmem %s1, %s194
      %p196 = scmp.lt.s32.totalorder %s14, 1
      %s197 = scalar_select %p196, %s14, 1
      %s198 = smul.addr %s197, 4
      %s199 = scalar_lea.vmem %s2, %s198
      %p200 = scmp.lt.s32.totalorder %s14, 1
      %s201 = scalar_select %p200, %s14, 1
      %s202 = smul.addr %s201, 2
      %s203 = smul.addr %s202, 8
      %s204 = scalar_lea.vmem %s3, %s203
      %v206 = vld [vmem:[%s191] sm:$0xf]
      %v207 = vld [vmem:[%s191 + $0x4] sm:$0xf]
      %v208 = vld [vmem:[%s195] sm:$0xf]
      %v209 = vld [vmem:[%s199] sm:$0xf]
      %v212 = vunpack.c.l.b16 %v206
      %v213 = vunpack.c.l.b16 %v207
      %v214 = vpack.c.b16 %v213, %v212
      %vm215 = vcmask 64512
      %v217 = vsel %vm215, %v214, 0
      %v220 = vsel %vm215, %v208, 0
      %222 = vmatpush.bf16.xpose.msra.mxu0 0
      %223 = vmatpush.bf16.xpose.msra.mxu0 0
      %224 = vmatpush.bf16.xpose.msra.mxu0 0
      %225 = vmatpush.bf16.xpose.msra.mxu0 0
      %226 = vmatpush.bf16.xpose.msra.mxu0 0
      %227 = vmatpush.bf16.xpose.msra.mxu0 0
      %228 = vmatpush.bf16.xpose.msra.mxu0 0
      %229 = vmatpush.bf16.xpose.msra.mxu0 %v220
      %230 = vmatmul.bf16.gmra.mxu0 %v217
      %v231 = vpop.f32.mrf.mxu0
      %v232 = vadd.f32 0.0, %v231
      %v233 = vpop.f32.mrf.mxu0
      %v234 = vadd.f32 0.0, %v233
      %235 = vdwg.mxu0
      %v236 = vmul.f32 %v232, 0.35355338
      %v237 = vmul.f32 %v234, 0.35355338
      %v238 = vsel %vm215, %v236, -inf
      %239 = vmax.xlane.f32.xlu0 %v238
      %v240 = vpop.xlane.xlu0 %239
      %v241 = vsel %vm215, %v237, -inf
      %242 = vmax.xlane.f32.xlu0 %v241
      %v243 = vpop.xlane.xlu0 %242
      %v244 = vsub.f32 %v236, %v240
      %v245 = vsub.f32 %v237, %v243
      %v246 = vmul.f32 %v244, 1.442695
      %v247 = vpow.pop %v246
      %v248 = vmul.f32 %v245, 1.442695
      %v249 = vpow.pop %v248
      %v250 = vsel %vm215, %v247, 0.0
      %251 = vadd.xlane.f32.xlu0 %v250
      %v252 = vpop.xlane.xlu0 %251
      %v253 = vsel %vm215, %v249, 0.0
      %254 = vadd.xlane.f32.xlu0 %v253
      %v255 = vpop.xlane.xlu0 %254
      %v256 = vrcp.pop %v252
      %v257 = vrcp.pop %v255
      %v258 = vmul.f32 %v247, %v256
      %v259 = vmul.f32 %v249, %v257
      %v260 = vpack.c.bf16 %v259, %v258
      %v262 = vsel %vm215, %v260, 0
      %vm264 = vcmask 1043456
      %v266 = vsel %vm264, %v209, 0
      %268 = vmatpush.bf16.msra.mxu0 0
      %269 = vmatpush.bf16.msra.mxu0 0
      %270 = vmatpush.bf16.msra.mxu0 0
      %271 = vmatpush.bf16.msra.mxu0 0
      %272 = vmatpush.bf16.msra.mxu0 0
      %273 = vmatpush.bf16.msra.mxu0 0
      %274 = vmatpush.bf16.msra.mxu0 0
      %275 = vmatpush.bf16.msra.mxu0 %v266
      %276 = vmatmul.bf16.gmra.mxu0 %v262
      %v277 = vpop.f32.mrf.mxu0
      %v278 = vadd.f32 0.0, %v277
      %v279 = vpop.f32.mrf.mxu0
      %v280 = vadd.f32 0.0, %v279
      %281 = vdwg.mxu0
      %282 = vrot.lane.b32.xlu0 %v214, 120
      %v283 = vpop.permute.xlu0 %282
      %v285 = vunpack.c.l.b16 %v208
      %v286 = vpack.c.b16 %v285, %v285
      %287 = vrot.lane.b32.xlu0 %v286, 120
      %v288 = vpop.permute.xlu0 %287
      %v290 = vsel %vm215, %v283, 0
      %v293 = vsel %vm215, %v288, 0
      %295 = vmatpush.bf16.xpose.msra.mxu0 0
      %296 = vmatpush.bf16.xpose.msra.mxu0 0
      %297 = vmatpush.bf16.xpose.msra.mxu0 0
      %298 = vmatpush.bf16.xpose.msra.mxu0 0
      %299 = vmatpush.bf16.xpose.msra.mxu0 0
      %300 = vmatpush.bf16.xpose.msra.mxu0 0
      %301 = vmatpush.bf16.xpose.msra.mxu0 0
      %302 = vmatpush.bf16.xpose.msra.mxu0 %v293
      %303 = vmatmul.bf16.gmra.mxu0 %v290
      %v304 = vpop.f32.mrf.mxu0
      %v305 = vadd.f32 0.0, %v304
      %v306 = vpop.f32.mrf.mxu0
      %v307 = vadd.f32 0.0, %v306
      %308 = vdwg.mxu0
      %v309 = vmul.f32 %v305, 0.35355338
      %v310 = vmul.f32 %v307, 0.35355338
      %v311 = vsel %vm215, %v309, -inf
      %312 = vmax.xlane.f32.xlu0 %v311
      %v313 = vpop.xlane.xlu0 %312
      %v314 = vsel %vm215, %v310, -inf
      %315 = vmax.xlane.f32.xlu0 %v314
      %v316 = vpop.xlane.xlu0 %315
      %v317 = vsub.f32 %v309, %v313
      %v318 = vsub.f32 %v310, %v316
      %v319 = vmul.f32 %v317, 1.442695
      %v320 = vpow.pop %v319
      %v321 = vmul.f32 %v318, 1.442695
      %v322 = vpow.pop %v321
      %v323 = vsel %vm215, %v320, 0.0
      %324 = vadd.xlane.f32.xlu0 %v323
      %v325 = vpop.xlane.xlu0 %324
      %v326 = vsel %vm215, %v322, 0.0
      %327 = vadd.xlane.f32.xlu0 %v326
      %v328 = vpop.xlane.xlu0 %327
      %v329 = vrcp.pop %v325
      %v330 = vrcp.pop %v328
      %v331 = vmul.f32 %v320, %v329
      %v332 = vmul.f32 %v322, %v330
      %v333 = vpack.c.bf16 %v332, %v331
      %v335 = vunpack.c.l.b16 %v209
      %v336 = vpack.c.b16 %v335, %v335
      %337 = vrot.lane.b32.xlu0 %v336, 120
      %v338 = vpop.permute.xlu0 %337
      %v340 = vsel %vm215, %v333, 0
      %v343 = vsel %vm264, %v338, 0
      %345 = vmatpush.bf16.msra.mxu0 0
      %346 = vmatpush.bf16.msra.mxu0 0
      %347 = vmatpush.bf16.msra.mxu0 0
      %348 = vmatpush.bf16.msra.mxu0 0
      %349 = vmatpush.bf16.msra.mxu0 0
      %350 = vmatpush.bf16.msra.mxu0 0
      %351 = vmatpush.bf16.msra.mxu0 0
      %352 = vmatpush.bf16.msra.mxu0 %v343
      %353 = vmatmul.bf16.gmra.mxu0 %v340
      %v354 = vpop.f32.mrf.mxu0
      %v355 = vadd.f32 0.0, %v354
      %v356 = vpop.f32.mrf.mxu0
      %v357 = vadd.f32 0.0, %v356
      %358 = vdwg.mxu0
      %359 = vrot.lane.b32.xlu0 %v214, 112
      %v360 = vpop.permute.xlu0 %359
      %361 = vrot.lane.b32.xlu0 %v286, 112
      %v362 = vpop.permute.xlu0 %361
      %v364 = vsel %vm215, %v360, 0
      %v367 = vsel %vm215, %v362, 0
      %369 = vmatpush.bf16.xpose.msra.mxu0 0
      %370 = vmatpush.bf16.xpose.msra.mxu0 0
      %371 = vmatpush.bf16.xpose.msra.mxu0 0
      %372 = vmatpush.bf16.xpose.msra.mxu0 0
      %373 = vmatpush.bf16.xpose.msra.mxu0 0
      %374 = vmatpush.bf16.xpose.msra.mxu0 0
      %375 = vmatpush.bf16.xpose.msra.mxu0 0
      %376 = vmatpush.bf16.xpose.msra.mxu0 %v367
      %377 = vmatmul.bf16.gmra.mxu0 %v364
      %v378 = vpop.f32.mrf.mxu0
      %v379 = vadd.f32 0.0, %v378
      %v380 = vpop.f32.mrf.mxu0
      %v381 = vadd.f32 0.0, %v380
      %382 = vdwg.mxu0
      %v383 = vmul.f32 %v379, 0.35355338
      %v384 = vmul.f32 %v381, 0.35355338
      %v385 = vsel %vm215, %v383, -inf
      %386 = vmax.xlane.f32.xlu0 %v385
      %v387 = vpop.xlane.xlu0 %386
      %v388 = vsel %vm215, %v384, -inf
      %389 = vmax.xlane.f32.xlu0 %v388
      %v390 = vpop.xlane.xlu0 %389
      %v391 = vsub.f32 %v383, %v387
      %v392 = vsub.f32 %v384, %v390
      %v393 = vmul.f32 %v391, 1.442695
      %v394 = vpow.pop %v393
      %v395 = vmul.f32 %v392, 1.442695
      %v396 = vpow.pop %v395
      %v397 = vsel %vm215, %v394, 0.0
      %398 = vadd.xlane.f32.xlu0 %v397
      %v399 = vpop.xlane.xlu0 %398
      %v400 = vsel %vm215, %v396, 0.0
      %401 = vadd.xlane.f32.xlu0 %v400
      %v402 = vpop.xlane.xlu0 %401
      %v403 = vrcp.pop %v399
      %v404 = vrcp.pop %v402
      %v405 = vmul.f32 %v394, %v403
      %v406 = vmul.f32 %v396, %v404
      %v407 = vpack.c.bf16 %v406, %v405
      %408 = vrot.lane.b32.xlu0 %v336, 112
      %v409 = vpop.permute.xlu0 %408
      %v411 = vsel %vm215, %v407, 0
      %v414 = vsel %vm264, %v409, 0
      %416 = vmatpush.bf16.msra.mxu0 0
      %417 = vmatpush.bf16.msra.mxu0 0
      %418 = vmatpush.bf16.msra.mxu0 0
      %419 = vmatpush.bf16.msra.mxu0 0
      %420 = vmatpush.bf16.msra.mxu0 0
      %421 = vmatpush.bf16.msra.mxu0 0
      %422 = vmatpush.bf16.msra.mxu0 0
      %423 = vmatpush.bf16.msra.mxu0 %v414
      %424 = vmatmul.bf16.gmra.mxu0 %v411
      %v425 = vpop.f32.mrf.mxu0
      %v426 = vadd.f32 0.0, %v425
      %v427 = vpop.f32.mrf.mxu0
      %v428 = vadd.f32 0.0, %v427
      %429 = vdwg.mxu0
      %430 = vrot.lane.b32.xlu0 %v214, 104
      %v431 = vpop.permute.xlu0 %430
      %432 = vrot.lane.b32.xlu0 %v286, 104
      %v433 = vpop.permute.xlu0 %432
      %v435 = vsel %vm215, %v431, 0
      %v438 = vsel %vm215, %v433, 0
      %440 = vmatpush.bf16.xpose.msra.mxu0 0
      %441 = vmatpush.bf16.xpose.msra.mxu0 0
      %442 = vmatpush.bf16.xpose.msra.mxu0 0
      %443 = vmatpush.bf16.xpose.msra.mxu0 0
      %444 = vmatpush.bf16.xpose.msra.mxu0 0
      %445 = vmatpush.bf16.xpose.msra.mxu0 0
      %446 = vmatpush.bf16.xpose.msra.mxu0 0
      %447 = vmatpush.bf16.xpose.msra.mxu0 %v438
      %448 = vmatmul.bf16.gmra.mxu0 %v435
      %v449 = vpop.f32.mrf.mxu0
      %v450 = vadd.f32 0.0, %v449
      %v451 = vpop.f32.mrf.mxu0
      %v452 = vadd.f32 0.0, %v451
      %453 = vdwg.mxu0
      %v454 = vmul.f32 %v450, 0.35355338
      %v455 = vmul.f32 %v452, 0.35355338
      %v456 = vsel %vm215, %v454, -inf
      %457 = vmax.xlane.f32.xlu0 %v456
      %v458 = vpop.xlane.xlu0 %457
      %v459 = vsel %vm215, %v455, -inf
      %460 = vmax.xlane.f32.xlu0 %v459
      %v461 = vpop.xlane.xlu0 %460
      %v462 = vsub.f32 %v454, %v458
      %v463 = vsub.f32 %v455, %v461
      %v464 = vmul.f32 %v462, 1.442695
      %v465 = vpow.pop %v464
      %v466 = vmul.f32 %v463, 1.442695
      %v467 = vpow.pop %v466
      %v468 = vsel %vm215, %v465, 0.0
      %469 = vadd.xlane.f32.xlu0 %v468
      %v470 = vpop.xlane.xlu0 %469
      %v471 = vsel %vm215, %v467, 0.0
      %472 = vadd.xlane.f32.xlu0 %v471
      %v473 = vpop.xlane.xlu0 %472
      %v474 = vrcp.pop %v470
      %v475 = vrcp.pop %v473
      %v476 = vmul.f32 %v465, %v474
      %v477 = vmul.f32 %v467, %v475
      %v478 = vpack.c.bf16 %v477, %v476
      %479 = vrot.lane.b32.xlu0 %v336, 104
      %v480 = vpop.permute.xlu0 %479
      %v482 = vsel %vm215, %v478, 0
      %v485 = vsel %vm264, %v480, 0
      %487 = vmatpush.bf16.msra.mxu0 0
      %488 = vmatpush.bf16.msra.mxu0 0
      %489 = vmatpush.bf16.msra.mxu0 0
      %490 = vmatpush.bf16.msra.mxu0 0
      %491 = vmatpush.bf16.msra.mxu0 0
      %492 = vmatpush.bf16.msra.mxu0 0
      %493 = vmatpush.bf16.msra.mxu0 0
      %494 = vmatpush.bf16.msra.mxu0 %v485
      %495 = vmatmul.bf16.gmra.mxu0 %v482
      %v496 = vpop.f32.mrf.mxu0
      %v497 = vadd.f32 0.0, %v496
      %v498 = vpop.f32.mrf.mxu0
      %v499 = vadd.f32 0.0, %v498
      %500 = vdwg.mxu0
      %503 = vrot.lane.b32.xlu0 %v355, 8
      %v504 = vpop.permute.xlu0 %503
      %505 = vrot.lane.b32.xlu0 %v357, 8
      %v506 = vpop.permute.xlu0 %505
      %511 = vrot.lane.b32.xlu0 %v426, 16
      %v512 = vpop.permute.xlu0 %511
      %513 = vrot.lane.b32.xlu0 %v428, 16
      %v514 = vpop.permute.xlu0 %513
      %519 = vrot.lane.b32.xlu0 %v497, 24
      %v520 = vpop.permute.xlu0 %519
      %521 = vrot.lane.b32.xlu0 %v499, 24
      %v522 = vpop.permute.xlu0 %521
      %v525 = vsel %vm215, %v278, %v504
      %v526 = vsel %vm215, %v280, %v506
      %vm527 = vcmask 130048
      %v528 = vsel %vm527, %v525, %v512
      %v529 = vsel %vm527, %v526, %v514
      %vm530 = vcmask 195584
      %v531 = vsel %vm530, %v528, %v520
      %v532 = vsel %vm530, %v529, %v522
      %vm533 = vcmask 261120
      %534 = vst.msk [vmem:[%s204] sm:$0xff] %vm533, %v531
      %535 = vst.msk [vmem:[%s204 + $0x8] sm:$0xff] %vm533, %v532
      %p536 = scmp.lt.s32.totalorder %s14, 1
      %s537 = scalar_select %p536, %s14, 1
      %s538 = smul.addr %s537, 2
      %s539 = smul.addr %s538, 8
      %s540 = scalar_lea.vmem %s3, %s539
      // Predicated region
      $region33: #{informer_forward.56} parent=31 // pred_check
        %p541 = pneg %p110
      $region34: #{informer_forward.56} parent=31 // pred_check_branch
        %543 = sbr.rel (%p541) target = $region36
      $region35: #{informer_forward.56} parent=31 // pred_region
        _
      $region36: #{informer_forward.56} parent=31 // pred_fallthru
        _
    $region32: #{informer_forward.56} parent=5 // pred_fallthru
      _
    %p544 = scmp.le.s32.totalorder 2, %s9
    // Predicated region
    $region37: #{informer_forward.56} parent=5 // pred_check
      %p545 = pneg %p544
    $region38: #{informer_forward.56} parent=5 // pred_check_branch
      %547 = sbr.rel (%p545) target = $region40
    $region39: #{informer_forward.56} parent=5 // pred_region
      %s548 = ssub.s32 %s9, 2
      // Predicated region
      $region41: #{informer_forward.56} parent=39 // pred_check
        %p549 = pneg %p116
      $region42: #{informer_forward.56} parent=39 // pred_check_branch
        %551 = sbr.rel (%p549) target = $region44
      $region43: #{informer_forward.56} parent=39 // pred_region
        %p552 = scmp.lt.s32.totalorder %s15, 1
        %s553 = scalar_select %p552, %s15, 1
        %s554 = smul.addr %s553, 2
        %s555 = smul.addr %s554, 8
        %s556 = scalar_lea.vmem %s3, %s555
      $region44: #{informer_forward.56} parent=39 // pred_fallthru
        _
    $region40: #{informer_forward.56} parent=5 // pred_fallthru
      _
  $region6: #{informer_forward.56} parent=0 // loop_footer
    %s13 = sadd.s32 1, %s9
  $region7: #{informer_forward.56} parent=0 // loop_footer_branch
    %8 = sbr.rel target = $region3
  $region8: #{informer_forward.56} parent=0 // loop_exit
    _

// kernel: informer_forward.63
$region0: #{informer_forward.63}
  #allocation0 [shape = 'u32[]', space=smem, size = 0x4, offset = 0x4, fixed_abs, tag = 'smem constant byte address 0x4 - core index']
  #allocation1 [shape = 'u32[72,128]{1,0:T(1,128)}', space=vmem, size = 0x9000, scoped, tag = 'internal scratch']
  %s0 = inlined_call_operand.vmem [shape: bf16[32,32], index: 0, kind: input, shape index: {}]
  %s1 = inlined_call_operand.vmem [shape: bf16[32,4], index: 1, kind: input, shape index: {}]
  %s2 = inlined_call_operand.vmem [shape: f32[1,4], index: 2, kind: input, shape index: {}]
  %s3 = inlined_call_operand.vmem [shape: f32[32,4], index: 3, kind: output, shape index: {}]
  %s4 = sld [smem:[#allocation0]]
  $region45: #{informer_forward.63} parent=0
    _
  %s6 = ssub.s32 1, %s4
  %s7 = scalar_select 0, %s6, %s4
  loop: start=0, step=1, limit=4
  $region2: #{informer_forward.63} parent=0 // loop_pre_header
    _
  $region3: #{informer_forward.63} parent=0 // loop_header
    %s9 = sphi 0, %s13
    %p10 = scmp.ge.s32.totalorder %s9, 4
    %s19 = sphi 0, %s21
    %s22 = sphi 0, %s19
    %s23 = sphi 0, %s22
    %s39 = sphi 0, %s23
    %s43 = sphi 0, %s43
    %s45 = sphi 0, %s43
    %s46 = sphi 0, %s45
    %s60 = sphi 0, %s46
    %s64 = sphi 0, %s64
    %s66 = sphi 0, %s64
    %s67 = sphi 0, %s66
    %s81 = sphi 0, %s67
    %s87 = sphi 0, %s89
    %s90 = sphi 0, %s87
    %s91 = sphi 0, %s90
    %s107 = sphi 0, %s91
  $region4: #{informer_forward.63} parent=0 // loop_header_branch
    %12 = sbr.rel (%p10) target = $region8
  $region5: #{informer_forward.63} parent=0 // loop_body
    %s14 = ssub.s32 %s9, 1
    %s15 = ssub.s32 %s9, 2
    %s16 = sadd.s32 %s9, 1
    %s17 = ssub.s32 %s9, %s16
    %p18 = scmp.eq.s32.totalorder %s17, 0
    %s20 = sadd.s32 %s19, 1
    %s21 = scalar_select %p18, %s19, %s20
    %p24 = pneg %p18
    %p25 = scmp.eq.s32.totalorder %s9, 1
    %p26 = por %p24, %p25
    %p27 = scmp.ne.s32.totalorder %s19, %s22
    %p28 = scmp.eq.s32.totalorder %s9, 0
    %p29 = por %p27, %p28
    %p30 = scmp.ne.s32.totalorder %s19, %s22
    %p31 = scmp.eq.s32.totalorder %s14, 1
    %p32 = por %p30, %p31
    %p33 = scmp.ne.s32.totalorder %s22, %s23
    %p34 = scmp.eq.s32.totalorder %s14, 0
    %p35 = por %p33, %p34
    %p36 = scmp.ne.s32.totalorder %s22, %s23
    %p37 = scmp.eq.s32.totalorder %s15, 1
    %p38 = por %p36, %p37
    %p40 = scmp.ne.s32.totalorder %s23, %s39
    %p41 = scmp.eq.s32.totalorder %s15, 0
    %p42 = por %p40, %p41
    %s44 = sadd.s32 %s43, 1
    %p47 = scmp.eq.s32.totalorder %s9, 1
    %p48 = scmp.ne.s32.totalorder %s43, %s45
    %p49 = scmp.eq.s32.totalorder %s9, 0
    %p50 = por %p48, %p49
    %p51 = scmp.ne.s32.totalorder %s43, %s45
    %p52 = scmp.eq.s32.totalorder %s14, 1
    %p53 = por %p51, %p52
    %p54 = scmp.ne.s32.totalorder %s45, %s46
    %p55 = scmp.eq.s32.totalorder %s14, 0
    %p56 = por %p54, %p55
    %p57 = scmp.ne.s32.totalorder %s45, %s46
    %p58 = scmp.eq.s32.totalorder %s15, 1
    %p59 = por %p57, %p58
    %p61 = scmp.ne.s32.totalorder %s46, %s60
    %p62 = scmp.eq.s32.totalorder %s15, 0
    %p63 = por %p61, %p62
    %s65 = sadd.s32 %s64, 1
    %p68 = scmp.eq.s32.totalorder %s9, 1
    %p69 = scmp.ne.s32.totalorder %s64, %s66
    %p70 = scmp.eq.s32.totalorder %s9, 0
    %p71 = por %p69, %p70
    %p72 = scmp.ne.s32.totalorder %s64, %s66
    %p73 = scmp.eq.s32.totalorder %s14, 1
    %p74 = por %p72, %p73
    %p75 = scmp.ne.s32.totalorder %s66, %s67
    %p76 = scmp.eq.s32.totalorder %s14, 0
    %p77 = por %p75, %p76
    %p78 = scmp.ne.s32.totalorder %s66, %s67
    %p79 = scmp.eq.s32.totalorder %s15, 1
    %p80 = por %p78, %p79
    %p82 = scmp.ne.s32.totalorder %s67, %s81
    %p83 = scmp.eq.s32.totalorder %s15, 0
    %p84 = por %p82, %p83
    %s85 = ssub.s32 %s9, %s16
    %p86 = scmp.eq.s32.totalorder %s85, 0
    %s88 = sadd.s32 %s87, 1
    %s89 = scalar_select %p86, %s87, %s88
    %p92 = pneg %p86
    %p93 = scmp.eq.s32.totalorder %s9, 1
    %p94 = por %p92, %p93
    %p95 = scmp.ne.s32.totalorder %s87, %s90
    %p96 = scmp.eq.s32.totalorder %s9, 0
    %p97 = por %p95, %p96
    %p98 = scmp.ne.s32.totalorder %s87, %s90
    %p99 = scmp.eq.s32.totalorder %s14, 1
    %p100 = por %p98, %p99
    %p101 = scmp.ne.s32.totalorder %s90, %s91
    %p102 = scmp.eq.s32.totalorder %s14, 0
    %p103 = por %p101, %p102
    %p104 = scmp.ne.s32.totalorder %s90, %s91
    %p105 = scmp.eq.s32.totalorder %s15, 1
    %p106 = por %p104, %p105
    %p108 = scmp.ne.s32.totalorder %s91, %s107
    %p109 = scmp.eq.s32.totalorder %s15, 0
    %p110 = por %p108, %p109
    %p111 = scmp.le.s32.totalorder 1, %s9
    %p112 = scmp.lt.s32.totalorder %s9, 3
    %p113 = pnand %p111, %p112
    %p114 = pneg %p113
    // Predicated region
    $region9: #{informer_forward.63} parent=5 // pred_check
      _
    $region10: #{informer_forward.63} parent=5 // pred_check_branch
      %116 = sbr.rel (%p113) target = $region12
    $region11: #{informer_forward.63} parent=5 // pred_region
      %s117 = ssub.s32 %s9, 1
      // Predicated region
      $region13: #{informer_forward.63} parent=11 // pred_check
        %p118 = pneg %p56
      $region14: #{informer_forward.63} parent=11 // pred_check_branch
        %120 = sbr.rel (%p118) target = $region16
      $region15: #{informer_forward.63} parent=11 // pred_region
        _
      $region16: #{informer_forward.63} parent=11 // pred_fallthru
        _
      // Predicated region
      $region17: #{informer_forward.63} parent=11 // pred_check
        %p121 = pneg %p77
      $region18: #{informer_forward.63} parent=11 // pred_check_branch
        %123 = sbr.rel (%p121) target = $region20
      $region19: #{informer_forward.63} parent=11 // pred_region
        _
      $region20: #{informer_forward.63} parent=11 // pred_fallthru
        _
    $region12: #{informer_forward.63} parent=5 // pred_fallthru
      _
    %p124 = scmp.lt.s32.totalorder %s9, 2
    // Predicated region
    $region21: #{informer_forward.63} parent=5 // pred_check
      %p125 = pneg %p124
    $region22: #{informer_forward.63} parent=5 // pred_check_branch
      %127 = sbr.rel (%p125) target = $region24
    $region23: #{informer_forward.63} parent=5 // pred_region
      // Predicated region
      $region25: #{informer_forward.63} parent=23 // pred_check
        %p128 = pneg %p29
      $region26: #{informer_forward.63} parent=23 // pred_check_branch
        %130 = sbr.rel (%p128) target = $region28
      $region27: #{informer_forward.63} parent=23 // pred_region
        %s131 = smul.u32 2, %s9
        %p132 = scmp.lt.s32.totalorder %s131, 3
        %s133 = scalar_select %p132, %s131, 3
        %s134 = smul.addr %s133, 4
        %s135 = scalar_lea.vmem %s0, %s134
        %s136 = smul.u32 2, %s9
      $region28: #{informer_forward.63} parent=23 // pred_fallthru
        _
    $region24: #{informer_forward.63} parent=5 // pred_fallthru
      _
    %p137 = scmp.le.s32.totalorder 1, %s9
    %p138 = scmp.lt.s32.totalorder %s9, 3
    %p139 = pnand %p137, %p138
    %p140 = pneg %p139
    // Predicated region
    $region29: #{informer_forward.63} parent=5 // pred_check
      _
    $region30: #{informer_forward.63} parent=5 // pred_check_branch
      %142 = sbr.rel (%p139) target = $region32
    $region31: #{informer_forward.63} parent=5 // pred_region
      %s143 = ssub.s32 %s9, 1
      %s144 = smul.u32 2, %s14
      %p145 = scmp.lt.s32.totalorder %s144, 3
      %s146 = scalar_select %p145, %s144, 3
      %s147 = smul.addr %s146, 4
      %s148 = scalar_lea.vmem %s0, %s147
      %p149 = pneg %p35
      %p150 = pneg %p32
      %p151 = pneg %p56
      %p152 = pneg %p53
      %p153 = pneg %p77
      %p154 = pneg %p74
      %p155 = pneg %p103
      %p156 = pneg %p100
      %s157 = smul.u32 2, %s14
      %p158 = scmp.lt.s32.totalorder %s157, 3
      %s159 = scalar_select %p158, %s157, 3
      %s160 = smul.addr %s159, 8
      %s161 = scalar_lea.vmem %s3, %s160
      %s162 = smul.u32 2, %s14
      %p163 = scmp.lt.s32.totalorder %s162, 3
      %s164 = scalar_select %p163, %s162, 3
      %s165 = smul.addr %s164, 4
      %s166 = scalar_lea.vmem %s0, %s165
      %s167 = smul.u32 2, %s14
      %s168 = smul.u32 2, %s14
      %p169 = scmp.lt.s32.totalorder %s168, 3
      %s170 = scalar_select %p169, %s168, 3
      %s171 = smul.addr %s170, 8
      %s172 = scalar_lea.vmem %s3, %s171
      %s173 = smul.u32 2, %s14
      %v175 = vld [vmem:[%s166] sm:$0xf]
      %v176 = vld [vmem:[%s166 + $0x4] sm:$0xf]
      %v177 = vld [vmem:[%s1] sm:$0xf]
      %v178 = vld [vmem:[%s1 + $0x4] sm:$0xf]
      %v179 = vld [vmem:[%s1 + $0x8] sm:$0xf]
      %v180 = vld [vmem:[%s1 + $0xc] sm:$0xf]
      %v181 = vld [vmem:[%s2] sm:$0x1]
      %v183 = vperm.slane %v181, 0
      %v187 = vunpack.c.l.b16 %v175
      %v188 = vunpack.c.l.b16 %v176
      %v189 = vpack.c.b16 %v188, %v187
      %v194 = vunpack.c.l.b16 %v177
      %v195 = vunpack.c.l.b16 %v178
      %v196 = vunpack.c.l.b16 %v179
      %v197 = vunpack.c.l.b16 %v180
      %v198 = vpack.c.b16 %v195, %v194
      %v199 = vpack.c.b16 %v197, %v196
      %vm202 = vcmask 261120
      %v204 = vsel %vm202, %v189, 0
      %206 = vmatpush.bf16.msra.mxu0 0
      %207 = vmatpush.bf16.msra.mxu0 0
      %208 = vmatpush.bf16.msra.mxu0 0
      %209 = vmatpush.bf16.msra.mxu0 0
      %210 = vmatpush.bf16.msra.mxu0 0
      %211 = vmatpush.bf16.msra.mxu0 0
      %212 = vmatpush.bf16.msra.mxu0 %v199
      %213 = vmatpush.bf16.msra.mxu0 %v198
      %214 = vmatmul.bf16.gmra.mxu0 %v204
      %v215 = vpop.f32.mrf.mxu0
      %v216 = vadd.f32 %v183, %v215
      %v217 = vpop.f32.mrf.mxu0
      %v218 = vadd.f32 %v183, %v217
      %219 = vdwg.mxu0
      %vm220 = vcmask 31744
      %221 = vst.msk [vmem:[%s172] sm:$0xff] %vm220, %v216
      %222 = vst.msk [vmem:[%s172 + $0x8] sm:$0xff] %vm220, %v218
      %s223 = smul.u32 2, %s14
      %p224 = scmp.lt.s32.totalorder %s223, 3
      %s225 = scalar_select %p224, %s223, 3
      %s226 = smul.addr %s225, 8
      %s227 = scalar_lea.vmem %s3, %s226
      // Predicated region
      $region33: #{informer_forward.63} parent=31 // pred_check
        %p228 = pneg %p100
      $region34: #{informer_forward.63} parent=31 // pred_check_branch
        %230 = sbr.rel (%p228) target = $region36
      $region35: #{informer_forward.63} parent=31 // pred_region
        %s231 = smul.u32 2, %s14
      $region36: #{informer_forward.63} parent=31 // pred_fallthru
        _
    $region32: #{informer_forward.63} parent=5 // pred_fallthru
      _
    %p232 = scmp.le.s32.totalorder 2, %s9
    // Predicated region
    $region37: #{informer_forward.63} parent=5 // pred_check
      %p233 = pneg %p232
    $region38: #{informer_forward.63} parent=5 // pred_check_branch
      %235 = sbr.rel (%p233) target = $region40
    $region39: #{informer_forward.63} parent=5 // pred_region
      %s236 = ssub.s32 %s9, 2
      // Predicated region
      $region41: #{informer_forward.63} parent=39 // pred_check
        %p237 = pneg %p106
      $region42: #{informer_forward.63} parent=39 // pred_check_branch
        %239 = sbr.rel (%p237) target = $region44
      $region43: #{informer_forward.63} parent=39 // pred_region
        %s240 = smul.u32 2, %s15
        %p241 = scmp.lt.s32.totalorder %s240, 3
        %s242 = scalar_select %p241, %s240, 3
        %s243 = smul.addr %s242, 8
        %s244 = scalar_lea.vmem %s3, %s243
      $region44: #{informer_forward.63} parent=39 // pred_fallthru
        _
    $region40: #{informer_forward.63} parent=5 // pred_fallthru
      _
  $region6: #{informer_forward.63} parent=0 // loop_footer
    %s13 = sadd.s32 1, %s9
  $region7: #{informer_forward.63} parent=0 // loop_footer_branch
    %8 = sbr.rel target = $region3
  $region8: #{informer_forward.63} parent=0 // loop_exit
    _

</llo_original>
